<compile_context>
chip_gen: v7x
topology: tpu7x:2x2x1
jax: 0.10.0
libtpu: 0.0.40
codegen_flags: <defaults>
</compile_context>

<pallas_src>
import math

import jax
import jax.numpy as jnp
from jax import lax
from jax.experimental import pallas as pl
from jax.experimental.pallas import tpu as pltpu


def _round_up(x, m):
    return ((x + m - 1) // m) * m


# ----------------------------------------------------------------------------
# Kernel 1: lane-dense matmul + bias (block_1 Toeplitz conv+BN, primaryCaps conv).
#           bf16 operands, f32 accumulation, fixed row tile with zero-padded rows.
# ----------------------------------------------------------------------------
def _matmul_bias_kernel(x_ref, w_ref, b_ref, o_ref):
    o_ref[...] = (
        jnp.dot(x_ref[...], w_ref[...], preferred_element_type=jnp.float32)
        + b_ref[...]
    )


def matmul_bias(x, w, b, row_tile=256):
    M, K = x.shape
    C = w.shape[1]
    bm = row_tile if M >= row_tile else _round_up(M, 8)
    Mp = _round_up(M, bm)
    if Mp != M:
        x = jnp.pad(x, ((0, Mp - M), (0, 0)))
    out = pl.pallas_call(
        _matmul_bias_kernel,
        out_shape=jax.ShapeDtypeStruct((Mp, C), jnp.float32),
        grid=(Mp // bm,),
        in_specs=[
            pl.BlockSpec((bm, K), lambda i: (i, 0)),
            pl.BlockSpec((K, C), lambda i: (0, 0)),
            pl.BlockSpec((1, C), lambda i: (0, 0)),
        ],
        out_specs=pl.BlockSpec((bm, C), lambda i: (i, 0)),
        compiler_params=pltpu.CompilerParams(dimension_semantics=("parallel",)),
    )(x, w, b)
    return out[:M] if Mp != M else out


# ----------------------------------------------------------------------------
# Kernel 2: block_2 — block-diag grouped conv (BN scale folded) + bias + ELU +
#           AvgPool(1,4) as a pooling matmul.  B samples per grid step, unrolled
#           via an in-kernel loop (amortises per-step pipeline overhead).
# ----------------------------------------------------------------------------
def _block2_kernel(x_ref, w_ref, s_ref, pool_ref, o_ref):
    B = x_ref.shape[0]

    @pl.loop(0, B)
    def _(b):
        z = (
            jnp.dot(w_ref[...], x_ref[b], preferred_element_type=jnp.float32)
            + s_ref[...]
        )                                                               # (16, 128)
        y = jnp.where(z > 0, z, jnp.exp(jnp.minimum(z, 0.0)) - 1.0)     # ELU(alpha=1)
        o_ref[b] = jnp.dot(y, pool_ref[...], preferred_element_type=jnp.float32)


def block2_call(xb, w2f, s2, pool, batch_tile=8):
    N, R, Wd = xb.shape
    OC = w2f.shape[0]
    P = pool.shape[1]
    B = batch_tile if N >= batch_tile else N
    Np = _round_up(N, B)
    if Np != N:
        xb = jnp.pad(xb, ((0, Np - N), (0, 0), (0, 0)))
    out = pl.pallas_call(
        _block2_kernel,
        out_shape=jax.ShapeDtypeStruct((Np, OC, P), jnp.float32),
        grid=(Np // B,),
        in_specs=[
            pl.BlockSpec((B, R, Wd), lambda i: (i, 0, 0)),
            pl.BlockSpec((OC, R), lambda i: (0, 0)),
            pl.BlockSpec((OC, 1), lambda i: (0, 0)),
            pl.BlockSpec((Wd, P), lambda i: (0, 0)),
        ],
        out_specs=pl.BlockSpec((B, OC, P), lambda i: (i, 0, 0)),
        compiler_params=pltpu.CompilerParams(dimension_semantics=("parallel",)),
    )(xb, w2f, s2, pool)
    return out[:N]


# ----------------------------------------------------------------------------
# Kernel 3: capsule head — primary-caps squash, digitCaps u_predict, agreement
#           routing (MXU contractions), output squash, Linear + exact softmax.
#           B samples per grid step; capsule axis padded to I_pad = 896 lanes.
# ----------------------------------------------------------------------------
def _make_caps_head_kernel(n_iterations):
    def kernel(caps_ref, wt_ref, b0_ref, e_ref, et_ref, wout_ref, bout_ref,
               probs_ref, feat_ref):
        eps = 1e-8
        B = caps_ref.shape[0]
        Din = caps_ref.shape[1]          # 8
        OD = e_ref.shape[0]              # 48

        @pl.loop(0, B)
        def _(b):
            E = e_ref[...]               # (48, 3)
            Et = et_ref[...]             # (3, 48)

            # --- squash primary capsules over the Din (sublane) axis
            caps = caps_ref[b]                                           # (8, I_pad)
            l2 = jnp.sum(caps * caps, axis=0, keepdims=True)             # (1, I_pad)
            caps = caps * (l2 / (1.0 + l2) * lax.rsqrt(l2 + eps))

            # --- u_predict[j, i] = sum_d caps[d, i] * W[i, d, j] (per-lane weights)
            u = caps[0:1, :] * wt_ref[0:OD, :]
            for d in range(1, Din):
                u = u + caps[d:d + 1, :] * wt_ref[d * OD:(d + 1) * OD, :]  # (48, I_pad)

            def softmax_o(z):            # exact softmax over the class (sublane) axis
                m = jnp.max(z, axis=0, keepdims=True)
                ez = jnp.exp(z - m)
                return ez / jnp.sum(ez, axis=0, keepdims=True)

            def squash_v(s):             # s: (48, 1); groups of 16 per class
                l2v = jnp.dot(Et, s * s, preferred_element_type=jnp.float32)   # (3,1)
                scv = l2v / (1.0 + l2v) * lax.rsqrt(l2v + eps)
                return s * jnp.dot(E, scv, preferred_element_type=jnp.float32)

            def route_s(c):              # MXU: s[j] = sum_i c[o(j), i] * u[j, i]
                m = lax.dot_general(u, c, (((1,), (1,)), ((), ())),
                                    preferred_element_type=jnp.float32)  # (48, 3)
                return jnp.sum(m * E, axis=1, keepdims=True)             # (48, 1)

            bmat = b0_ref[...]                                           # (3, I_pad)
            c = softmax_o(bmat)
            v = squash_v(route_s(c))
            for _ in range(n_iterations):
                # b[o, i] += sum_j E[j, o] * v[j] * u[j, i]   (MXU (3,48)x(48,I))
                bmat = bmat + lax.dot_general(E * v, u, (((0,), (0,)), ((), ())),
                                              preferred_element_type=jnp.float32)
                c = softmax_o(bmat)
                v = squash_v(route_s(c))

            feat_ref[b] = v                                              # (48, 1)
            logits = jnp.dot(wout_ref[...], v,
                             preferred_element_type=jnp.float32) + bout_ref[...]
            m = jnp.max(logits, axis=0, keepdims=True)
            el = jnp.exp(logits - m)
            probs_ref[b] = el / jnp.sum(el, axis=0, keepdims=True)       # exact softmax

    return kernel


def caps_head_call(capsT, WT, bT, E, Et, wout, bout, n_iterations, batch_tile=8):
    N, Din, I = capsT.shape
    O = Et.shape[0]
    OD = E.shape[0]
    B = batch_tile if N >= batch_tile else N
    Np = _round_up(N, B)
    if Np != N:
        capsT = jnp.pad(capsT, ((0, Np - N), (0, 0), (0, 0)))
    probs, feats = pl.pallas_call(
        _make_caps_head_kernel(n_iterations),
        out_shape=(jax.ShapeDtypeStruct((Np, O, 1), jnp.float32),
                   jax.ShapeDtypeStruct((Np, OD, 1), jnp.float32)),
        grid=(Np // B,),
        in_specs=[
            pl.BlockSpec((B, Din, I), lambda i: (i, 0, 0)),
            pl.BlockSpec(WT.shape, lambda i: (0, 0)),
            pl.BlockSpec(bT.shape, lambda i: (0, 0)),
            pl.BlockSpec(E.shape, lambda i: (0, 0)),
            pl.BlockSpec(Et.shape, lambda i: (0, 0)),
            pl.BlockSpec(wout.shape, lambda i: (0, 0)),
            pl.BlockSpec(bout.shape, lambda i: (0, 0)),
        ],
        out_specs=(pl.BlockSpec((B, O, 1), lambda i: (i, 0, 0)),
                   pl.BlockSpec((B, OD, 1), lambda i: (i, 0, 0))),
        compiler_params=pltpu.CompilerParams(dimension_semantics=("parallel",)),
    )(capsT, WT, bT, E, Et, wout, bout)
    return probs[:N], feats[:N]


# ----------------------------------------------------------------------------
# Full forward (weight rearrangement / free reshapes in JAX, hot paths in Pallas)
# ----------------------------------------------------------------------------
def selfnet_forward(x, p, routing_iterations):
    N = x.shape[0]
    eps = 1e-5
    W_in = x.shape[3]                          # 256
    KW = 128
    W_conv = W_in - KW + 1                     # 129 conv positions
    W_use = (W_conv // 4) * 4                  # 128 — the 129th is dead (pool drops it)
    W_pool = W_use // 4                        # 32

    # ---- block_1: Conv2d(1,8,(1,128)) + BN(8) as a banded (Toeplitz) matmul,
    #      BN folded into weight & bias.  Output lanes = (channel, position) = 1024.
    a1 = p["bn1_gamma"] / jnp.sqrt(p["bn1_var"] + eps)
    s1 = (p["b1"] - p["bn1_mean"]) * a1 + p["bn1_beta"]
    w1f = p["w1"].reshape(8, KW)
    t = jnp.arange(W_in)[:, None]                       # (256, 1)
    col = jnp.arange(8 * W_use)[None, :]                # (1, 1024)
    cch = col // W_use
    pos = col % W_use
    k = t - pos
    W1T = jnp.where((k >= 0) & (k < KW),
                    w1f[cch, jnp.clip(k, 0, KW - 1)] * a1[cch],
                    0.0).astype(jnp.bfloat16)           # (256, 1024) bf16 resident weight
    bias1 = s1[jnp.arange(8 * W_use) // W_use][None, :].astype(jnp.float32)  # (1, 1024)

    X2 = x[:, 0].reshape(N * 24, W_in).astype(jnp.bfloat16)     # (N*24, 256), no im2col
    out1 = matmul_bias(X2, W1T, bias1)                  # (N*24, 1024) f32

    # ---- block_2: grouped Conv2d(8,16,(24,1),groups=8)+BN+ELU+AvgPool(1,4)+Dropout(eval)
    Xb2 = out1.reshape(N, 24 * 8, W_use)                # free reshape: rows = h*8 + c
    a2 = p["bn2_gamma"] / jnp.sqrt(p["bn2_var"] + eps)
    s2 = (p["b2"] - p["bn2_mean"]) * a2 + p["bn2_beta"]
    w2h = p["w2"].reshape(16, 24)
    oc = jnp.arange(16)[:, None]
    hc = jnp.arange(24 * 8)[None, :]
    Wb2 = jnp.where((hc % 8) == (oc // 2),
                    w2h[oc, hc // 8] * a2[oc],
                    0.0).astype(jnp.float32)            # (16, 192), BN scale folded
    pool = ((jnp.arange(W_use)[:, None] // 4 == jnp.arange(W_pool)[None, :])
            .astype(jnp.float32) * 0.25)                # (128, 32)
    x_pool = block2_call(Xb2, Wb2, s2[:, None], pool)   # (N, 16, 32)
    x_middle = x_pool.reshape(N, 16, 1, W_pool)         # block_2 output (NCHW)

    # ---- primaryCaps: Conv2d(16,256,(1,8)) as lane-dense bf16 matmul (256 lanes)
    W_pc = W_pool - 8 + 1                               # 25
    idx2 = jnp.arange(W_pc)[:, None] + jnp.arange(8)[None, :]
    pc_patches = (jnp.transpose(x_pool[:, :, idx2], (0, 2, 1, 3))
                  .reshape(N * W_pc, 16 * 8).astype(jnp.bfloat16))
    wpm = p["wp"].reshape(256, 128).T.astype(jnp.bfloat16)       # (128, 256)
    out_pc = matmul_bias(pc_patches, wpm, p["bp"][None, :].astype(jnp.float32))

    # capsule-transposed layout: capsT[n, d, kcap*25 + p]  (I on lanes), pad 800 -> 896
    I = 32 * W_pc                                        # 800
    I_pad = _round_up(I, 128)                            # 896
    capsT = (jnp.transpose(out_pc.reshape(N, W_pc, 32, 8), (0, 3, 2, 1))
             .reshape(N, 8, I))
    capsT = jnp.pad(capsT, ((0, 0), (0, 0), (0, I_pad - I)))

    # ---- digitCaps + AgreementRouting + Linear(48, classes) + softmax (one kernel)
    classes = p["b_routing"].shape[1]
    OD = classes * 16
    WT = jnp.transpose(p["w_caps"], (1, 2, 0)).reshape(8 * OD, I)   # [d*OD + j, i]
    WT = jnp.pad(WT, ((0, 0), (0, I_pad - I))).astype(jnp.float32)  # (384, 896)
    bT = jnp.pad(p["b_routing"].T, ((0, 0), (0, I_pad - I))).astype(jnp.float32)
    E = (jnp.arange(OD)[:, None] // 16 == jnp.arange(classes)[None, :]).astype(jnp.float32)
    Et = E.T
    probs3, feats3 = caps_head_call(capsT, WT, bT, E, Et,
                                    p["w_out"], p["b_out"][:, None], routing_iterations)
    return probs3.reshape(N, classes), feats3.reshape(N, OD), x_middle


# ----------------------------------------------------------------------------
# Pure-JAX reference (direct transcription of the PyTorch forward, eval mode)
# ----------------------------------------------------------------------------
def selfnet_reference(x, p, routing_iterations):
    N = x.shape[0]
    eps = 1e-5
    x2 = x[:, 0]                                        # (N, 24, 256)
    W1 = x.shape[3] - 128 + 1
    idx = jnp.arange(W1)[:, None] + jnp.arange(128)[None, :]
    patches = x2[:, :, idx]                             # (N, 24, 129, 128)
    conv1 = jnp.einsum('nhpt,ct->nchp', patches, p["w1"].reshape(8, 128)) \
        + p["b1"][None, :, None, None]
    a1 = p["bn1_gamma"] / jnp.sqrt(p["bn1_var"] + eps)
    y1 = (conv1 - p["bn1_mean"][None, :, None, None]) * a1[None, :, None, None] \
        + p["bn1_beta"][None, :, None, None]
    w2h = p["w2"].reshape(16, 24)
    xg = y1[:, jnp.arange(16) // 2]                     # (N, 16, 24, 129)
    z = jnp.einsum('nohp,oh->nop', xg, w2h) + p["b2"][None, :, None]
    a2 = p["bn2_gamma"] / jnp.sqrt(p["bn2_var"] + eps)
    y2 = (z - p["bn2_mean"][None, :, None]) * a2[None, :, None] + p["bn2_beta"][None, :, None]
    y2 = jnp.where(y2 > 0, y2, jnp.exp(jnp.minimum(y2, 0.0)) - 1.0)
    y2p = y2[:, :, :128].reshape(N, 16, 32, 4).mean(-1)
    x_middle = y2p.reshape(N, 16, 1, 32)
    idx2 = jnp.arange(25)[:, None] + jnp.arange(8)[None, :]
    pc = jnp.einsum('ncpt,kct->nkp', y2p[:, :, idx2], p["wp"].reshape(256, 16, 8)) \
        + p["bp"][None, :, None]
    caps = jnp.transpose(pc.reshape(N, 32, 8, 25), (0, 1, 3, 2)).reshape(N, 800, 8)

    def squash_ref(v):
        l2 = jnp.sum(v * v, axis=-1, keepdims=True)
        return v * (l2 / (1 + l2) / jnp.sqrt(l2))

    caps = squash_ref(caps)
    classes = p["b_routing"].shape[1]
    u = jnp.einsum('nid,idj->nij', caps, p["w_caps"]).reshape(N, 800, classes, 16)
    b = p["b_routing"]
    c = jax.nn.softmax(b, axis=1)
    s = jnp.einsum('io,niod->nod', c, u)
    v = squash_ref(s)
    b_batch = jnp.broadcast_to(b[None], (N, 800, classes))
    for _ in range(routing_iterations):
        b_batch = b_batch + jnp.einsum('niod,nod->nio', u, v)
        c2 = jax.nn.softmax(b_batch, axis=2)
        s = jnp.einsum('nio,niod->nod', c2, u)
        v = squash_ref(s)
    feats = v.reshape(N, classes * 16)
    logits = feats @ p["w_out"].T + p["b_out"]
    return jax.nn.softmax(logits, axis=1), feats, x_middle


# ----------------------------------------------------------------------------
# Parameter init (matches the PyTorch module's shapes)
# ----------------------------------------------------------------------------
def init_params(key, classes_num=3):
    ks = jax.random.split(key, 16)
    p = {}
    p["w1"] = 0.05 * jax.random.normal(ks[0], (8, 1, 1, 128), jnp.float32)
    p["b1"] = 0.05 * jax.random.normal(ks[1], (8,), jnp.float32)
    p["bn1_gamma"] = 1.0 + 0.1 * jax.random.normal(ks[2], (8,), jnp.float32)
    p["bn1_beta"] = 0.1 * jax.random.normal(ks[3], (8,), jnp.float32)
    p["bn1_mean"] = 0.1 * jax.random.normal(ks[4], (8,), jnp.float32)
    p["bn1_var"] = 1.0 + 0.1 * jnp.abs(jax.random.normal(ks[5], (8,), jnp.float32))
    p["w2"] = 0.1 * jax.random.normal(ks[6], (16, 1, 24, 1), jnp.float32)
    p["b2"] = 0.05 * jax.random.normal(ks[7], (16,), jnp.float32)
    p["bn2_gamma"] = 1.0 + 0.1 * jax.random.normal(ks[8], (16,), jnp.float32)
    p["bn2_beta"] = 0.1 * jax.random.normal(ks[9], (16,), jnp.float32)
    p["bn2_mean"] = 0.1 * jax.random.normal(ks[10], (16,), jnp.float32)
    p["bn2_var"] = 1.0 + 0.1 * jnp.abs(jax.random.normal(ks[11], (16,), jnp.float32))
    p["wp"] = 0.05 * jax.random.normal(ks[12], (256, 16, 1, 8), jnp.float32)
    p["bp"] = 0.05 * jax.random.normal(ks[13], (256,), jnp.float32)
    p["b_routing"] = jnp.zeros((800, classes_num), jnp.float32)
    stdv = 1.0 / math.sqrt(800.0)
    p["w_caps"] = jax.random.uniform(ks[14], (800, 8, classes_num * 16),
                                     jnp.float32, minval=-stdv, maxval=stdv)
    k_out = jax.random.split(ks[15], 2)
    p["w_out"] = 0.1 * jax.random.normal(k_out[0], (classes_num, 48), jnp.float32)
    p["b_out"] = 0.1 * jax.random.normal(k_out[1], (classes_num,), jnp.float32)
    return p


if __name__ == "__main__":
    classes_num = 3            # forced by nn.Linear(48, classes_num) with 16-dim digit caps
    routing_iterations = 3

    key = jax.random.PRNGKey(0)
    k_param, k_input = jax.random.split(key)
    params = init_params(k_param, classes_num)
    # smallest input consistent with the module's hard-coded sizes (num_primaryCaps=800)
    x = jax.random.normal(k_input, (2, 1, 24, 256), jnp.float32)

    fwd = jax.jit(selfnet_forward, static_argnums=2)
    probs, feats, x_middle = fwd(x, params, routing_iterations)
    probs, feats, x_middle = jax.block_until_ready((probs, feats, x_middle))

    assert probs.shape == (2, classes_num)
    assert feats.shape == (2, classes_num * 16)
    assert x_middle.shape == (2, 16, 1, 32)
    assert bool(jnp.all(jnp.isfinite(probs)))
    assert bool(jnp.allclose(jnp.sum(probs, axis=1), 1.0, atol=1e-4))

    # cross-check against the pure-JAX reference (tol covers bf16 MXU operands)
    r_probs, r_feats, r_mid = selfnet_reference(x, params, routing_iterations)
    assert bool(jnp.allclose(probs, r_probs, atol=2e-2))
    assert bool(jnp.allclose(feats, r_feats, atol=2e-2))
    assert bool(jnp.allclose(x_middle, r_mid, atol=2e-2))

    print("KERNEL_OK")
</pallas_src>

<mosaic_0001>
module attributes {stable_mosaic.version = 11 : i64} {
  func.func @_matmul_bias_kernel(%arg0: i32, %arg1: memref<48x256xbf16, #tpu.memory_space<vmem>>, %arg2: memref<256x1024xbf16, #tpu.memory_space<vmem>>, %arg3: memref<1x1024xf32, #tpu.memory_space<vmem>>, %arg4: memref<48x1024xf32, #tpu.memory_space<vmem>>) attributes {dimension_semantics = [#tpu.dimension_semantics<parallel>], iteration_bounds = array<i64: 1>, scalar_prefetch = 0 : i64, scratch_operands = 0 : i64, tpu.core_type = #tpu.core_type<tc>, window_params = [{transform_indices = @transform_0, window_bounds = array<i64: 48, 256>}, {pipeline_mode = #tpu.pipeline_mode<synchronous>, transform_indices = @transform_1, window_bounds = array<i64: 256, 1024>}, {pipeline_mode = #tpu.pipeline_mode<synchronous>, transform_indices = @transform_2, window_bounds = array<i64: 1, 1024>}, {transform_indices = @transform_3, window_bounds = array<i64: 48, 1024>}]} {
    %c0 = arith.constant 0 : index
    %c0_0 = arith.constant 0 : index
    %0 = vector.load %arg1[%c0, %c0_0] : memref<48x256xbf16, #tpu.memory_space<vmem>>, vector<48x256xbf16>
    %c0_1 = arith.constant 0 : index
    %c0_2 = arith.constant 0 : index
    %1 = vector.load %arg2[%c0_1, %c0_2] : memref<256x1024xbf16, #tpu.memory_space<vmem>>, vector<256x1024xbf16>
    %cst = arith.constant dense<0.000000e+00> : vector<48x1024xf32>
    %2 = tpu.matmul %0, %1, %cst {dimension_numbers = #tpu.dot_dimension_numbers<[1], [0], [0], [1], [0, 0, 1, 1], [], []>} : vector<48x256xbf16>, vector<256x1024xbf16>, vector<48x1024xf32> -> vector<48x1024xf32>
    %c0_3 = arith.constant 0 : index
    %c0_4 = arith.constant 0 : index
    %3 = vector.load %arg3[%c0_3, %c0_4] : memref<1x1024xf32, #tpu.memory_space<vmem>>, vector<1x1024xf32>
    %4 = vector.broadcast %3 : vector<1x1024xf32> to vector<48x1024xf32>
    %5 = arith.addf %2, %4 : vector<48x1024xf32>
    %c0_5 = arith.constant 0 : index
    %c0_6 = arith.constant 0 : index
    %6 = vector.load %arg4[%c0_5, %c0_6] : memref<48x1024xf32, #tpu.memory_space<vmem>>, vector<48x1024xf32>
    tpu.vector_store %arg4[%c0_5, %c0_6], %5 {strides = array<i32>} : memref<48x1024xf32, #tpu.memory_space<vmem>>, vector<48x1024xf32>,
    return
  }
  func.func @transform_0(%arg0: i32) -> (i32, i32) {
    %c0_i32 = arith.constant 0 : i32
    %c0_i32_0 = arith.constant 0 : i32
    return %arg0, %c0_i32 : i32, i32
  }
  func.func @transform_1(%arg0: i32) -> (i32, i32) {
    %c0_i32 = arith.constant 0 : i32
    %c0_i32_0 = arith.constant 0 : i32
    %c0_i32_1 = arith.constant 0 : i32
    return %c0_i32, %c0_i32_0 : i32, i32
  }
  func.func @transform_2(%arg0: i32) -> (i32, i32) {
    %c0_i32 = arith.constant 0 : i32
    %c0_i32_0 = arith.constant 0 : i32
    %c0_i32_1 = arith.constant 0 : i32
    return %c0_i32, %c0_i32_0 : i32, i32
  }
  func.func @transform_3(%arg0: i32) -> (i32, i32) {
    %c0_i32 = arith.constant 0 : i32
    %c0_i32_0 = arith.constant 0 : i32
    return %arg0, %c0_i32 : i32, i32
  }
}

module attributes {stable_mosaic.version = 11 : i64} {
  func.func @_block2_kernel(%arg0: i32, %arg1: memref<2x192x128xf32, #tpu.memory_space<vmem>>, %arg2: memref<16x192xf32, #tpu.memory_space<vmem>>, %arg3: memref<16x1xf32, #tpu.memory_space<vmem>>, %arg4: memref<128x32xf32, #tpu.memory_space<vmem>>, %arg5: memref<2x16x32xf32, #tpu.memory_space<vmem>>) attributes {dimension_semantics = [#tpu.dimension_semantics<parallel>], iteration_bounds = array<i64: 1>, scalar_prefetch = 0 : i64, scratch_operands = 0 : i64, tpu.core_type = #tpu.core_type<tc>, window_params = [{transform_indices = @transform_0, window_bounds = array<i64: 2, 192, 128>}, {pipeline_mode = #tpu.pipeline_mode<synchronous>, transform_indices = @transform_1, window_bounds = array<i64: 16, 192>}, {pipeline_mode = #tpu.pipeline_mode<synchronous>, transform_indices = @transform_2, window_bounds = array<i64: 16, 1>}, {pipeline_mode = #tpu.pipeline_mode<synchronous>, transform_indices = @transform_3, window_bounds = array<i64: 128, 32>}, {transform_indices = @transform_4, window_bounds = array<i64: 2, 16, 32>}]} {
    %c0_i32 = arith.constant 0 : i32
    %c2_i32 = arith.constant 2 : i32
    %0 = arith.addi %c0_i32, %c2_i32 : i32
    %c1_i32 = arith.constant 1 : i32
    scf.for %arg6 = %c0_i32 to %0 step %c1_i32  : i32 {
      %c1_i32_1 = arith.constant 1 : i32
      %1 = arith.muli %arg6, %c1_i32_1 : i32
      %c0_i32_2 = arith.constant 0 : i32
      %2 = arith.addi %c0_i32_2, %1 : i32
      %c0 = arith.constant 0 : index
      %c0_3 = arith.constant 0 : index
      %3 = vector.load %arg2[%c0, %c0_3] : memref<16x192xf32, #tpu.memory_space<vmem>>, vector<16x192xf32>
      %4 = arith.index_cast %2 : i32 to index
      %c0_4 = arith.constant 0 : index
      %c0_5 = arith.constant 0 : index
      %5 = vector.load %arg1[%4, %c0_4, %c0_5] : memref<2x192x128xf32, #tpu.memory_space<vmem>>, vector<1x192x128xf32>
      %6 = vector.shape_cast %5 : vector<1x192x128xf32> to vector<192x128xf32>
      %cst = arith.constant dense<0.000000e+00> : vector<16x128xf32>
      %7 = tpu.matmul %3, %6, %cst {dimension_numbers = #tpu.dot_dimension_numbers<[1], [0], [0], [1], [0, 0, 1, 1], [], []>} : vector<16x192xf32>, vector<192x128xf32>, vector<16x128xf32> -> vector<16x128xf32>
      %c0_6 = arith.constant 0 : index
      %c0_7 = arith.constant 0 : index
      %8 = vector.load %arg3[%c0_6, %c0_7] : memref<16x1xf32, #tpu.memory_space<vmem>>, vector<16x1xf32>
      %9 = vector.broadcast %8 : vector<16x1xf32> to vector<16x128xf32>
      %10 = arith.addf %7, %9 : vector<16x128xf32>
      %cst_8 = arith.constant 0.000000e+00 : f32
      %11 = vector.broadcast %cst_8 : f32 to vector<16x128xf32>
      %12 = arith.cmpf ogt, %10, %11 : vector<16x128xf32>
      %cst_9 = arith.constant 0.000000e+00 : f32
      %13 = vector.broadcast %cst_9 : f32 to vector<16x128xf32>
      %14 = arith.minimumf %10, %13 : vector<16x128xf32>
      %15 = math.exp %14 : vector<16x128xf32>
      %cst_10 = arith.constant 1.000000e+00 : f32
      %16 = vector.broadcast %cst_10 : f32 to vector<16x128xf32>
      %17 = arith.subf %15, %16 : vector<16x128xf32>
      %18 = arith.select %12, %10, %17 : vector<16x128xi1>, vector<16x128xf32>
      %c0_11 = arith.constant 0 : index
      %c0_12 = arith.constant 0 : index
      %19 = vector.load %arg4[%c0_11, %c0_12] : memref<128x32xf32, #tpu.memory_space<vmem>>, vector<128x32xf32>
      %cst_13 = arith.constant dense<0.000000e+00> : vector<16x32xf32>
      %20 = tpu.matmul %18, %19, %cst_13 {dimension_numbers = #tpu.dot_dimension_numbers<[1], [0], [0], [1], [0, 0, 1, 1], [], []>} : vector<16x128xf32>, vector<128x32xf32>, vector<16x32xf32> -> vector<16x32xf32>
      %21 = arith.index_cast %2 : i32 to index
      %c0_14 = arith.constant 0 : index
      %c0_15 = arith.constant 0 : index
      %22 = vector.load %arg5[%21, %c0_14, %c0_15] : memref<2x16x32xf32, #tpu.memory_space<vmem>>, vector<1x16x32xf32>
      %23 = vector.shape_cast %22 : vector<1x16x32xf32> to vector<16x32xf32>
      %24 = vector.shape_cast %20 : vector<16x32xf32> to vector<1x16x32xf32>
      tpu.vector_store %arg5[%21, %c0_14, %c0_15], %24 {strides = array<i32>} : memref<2x16x32xf32, #tpu.memory_space<vmem>>, vector<1x16x32xf32>,
    }
    %c2_i32_0 = arith.constant 2 : i32
    return
  }
  func.func @transform_0(%arg0: i32) -> (i32, i32, i32) {
    %c0_i32 = arith.constant 0 : i32
    %c0_i32_0 = arith.constant 0 : i32
    %c0_i32_1 = arith.constant 0 : i32
    return %arg0, %c0_i32, %c0_i32_0 : i32, i32, i32
  }
  func.func @transform_1(%arg0: i32) -> (i32, i32) {
    %c0_i32 = arith.constant 0 : i32
    %c0_i32_0 = arith.constant 0 : i32
    %c0_i32_1 = arith.constant 0 : i32
    return %c0_i32, %c0_i32_0 : i32, i32
  }
  func.func @transform_2(%arg0: i32) -> (i32, i32) {
    %c0_i32 = arith.constant 0 : i32
    %c0_i32_0 = arith.constant 0 : i32
    %c0_i32_1 = arith.constant 0 : i32
    return %c0_i32, %c0_i32_0 : i32, i32
  }
  func.func @transform_3(%arg0: i32) -> (i32, i32) {
    %c0_i32 = arith.constant 0 : i32
    %c0_i32_0 = arith.constant 0 : i32
    %c0_i32_1 = arith.constant 0 : i32
    return %c0_i32, %c0_i32_0 : i32, i32
  }
  func.func @transform_4(%arg0: i32) -> (i32, i32, i32) {
    %c0_i32 = arith.constant 0 : i32
    %c0_i32_0 = arith.constant 0 : i32
    %c0_i32_1 = arith.constant 0 : i32
    return %arg0, %c0_i32, %c0_i32_0 : i32, i32, i32
  }
}

module attributes {stable_mosaic.version = 11 : i64} {
  func.func @_matmul_bias_kernel(%arg0: i32, %arg1: memref<56x128xbf16, #tpu.memory_space<vmem>>, %arg2: memref<128x256xbf16, #tpu.memory_space<vmem>>, %arg3: memref<1x256xf32, #tpu.memory_space<vmem>>, %arg4: memref<56x256xf32, #tpu.memory_space<vmem>>) attributes {dimension_semantics = [#tpu.dimension_semantics<parallel>], iteration_bounds = array<i64: 1>, scalar_prefetch = 0 : i64, scratch_operands = 0 : i64, tpu.core_type = #tpu.core_type<tc>, window_params = [{transform_indices = @transform_0, window_bounds = array<i64: 56, 128>}, {pipeline_mode = #tpu.pipeline_mode<synchronous>, transform_indices = @transform_1, window_bounds = array<i64: 128, 256>}, {pipeline_mode = #tpu.pipeline_mode<synchronous>, transform_indices = @transform_2, window_bounds = array<i64: 1, 256>}, {transform_indices = @transform_3, window_bounds = array<i64: 56, 256>}]} {
    %c0 = arith.constant 0 : index
    %c0_0 = arith.constant 0 : index
    %0 = vector.load %arg1[%c0, %c0_0] : memref<56x128xbf16, #tpu.memory_space<vmem>>, vector<56x128xbf16>
    %c0_1 = arith.constant 0 : index
    %c0_2 = arith.constant 0 : index
    %1 = vector.load %arg2[%c0_1, %c0_2] : memref<128x256xbf16, #tpu.memory_space<vmem>>, vector<128x256xbf16>
    %cst = arith.constant dense<0.000000e+00> : vector<56x256xf32>
    %2 = tpu.matmul %0, %1, %cst {dimension_numbers = #tpu.dot_dimension_numbers<[1], [0], [0], [1], [0, 0, 1, 1], [], []>} : vector<56x128xbf16>, vector<128x256xbf16>, vector<56x256xf32> -> vector<56x256xf32>
    %c0_3 = arith.constant 0 : index
    %c0_4 = arith.constant 0 : index
    %3 = vector.load %arg3[%c0_3, %c0_4] : memref<1x256xf32, #tpu.memory_space<vmem>>, vector<1x256xf32>
    %4 = vector.broadcast %3 : vector<1x256xf32> to vector<56x256xf32>
    %5 = arith.addf %2, %4 : vector<56x256xf32>
    %c0_5 = arith.constant 0 : index
    %c0_6 = arith.constant 0 : index
    %6 = vector.load %arg4[%c0_5, %c0_6] : memref<56x256xf32, #tpu.memory_space<vmem>>, vector<56x256xf32>
    tpu.vector_store %arg4[%c0_5, %c0_6], %5 {strides = array<i32>} : memref<56x256xf32, #tpu.memory_space<vmem>>, vector<56x256xf32>,
    return
  }
  func.func @transform_0(%arg0: i32) -> (i32, i32) {
    %c0_i32 = arith.constant 0 : i32
    %c0_i32_0 = arith.constant 0 : i32
    return %arg0, %c0_i32 : i32, i32
  }
  func.func @transform_1(%arg0: i32) -> (i32, i32) {
    %c0_i32 = arith.constant 0 : i32
    %c0_i32_0 = arith.constant 0 : i32
    %c0_i32_1 = arith.constant 0 : i32
    return %c0_i32, %c0_i32_0 : i32, i32
  }
  func.func @transform_2(%arg0: i32) -> (i32, i32) {
    %c0_i32 = arith.constant 0 : i32
    %c0_i32_0 = arith.constant 0 : i32
    %c0_i32_1 = arith.constant 0 : i32
    return %c0_i32, %c0_i32_0 : i32, i32
  }
  func.func @transform_3(%arg0: i32) -> (i32, i32) {
    %c0_i32 = arith.constant 0 : i32
    %c0_i32_0 = arith.constant 0 : i32
    return %arg0, %c0_i32 : i32, i32
  }
}

module attributes {stable_mosaic.version = 11 : i64} {
  func.func @kernel(%arg0: i32, %arg1: memref<2x8x896xf32, #tpu.memory_space<vmem>>, %arg2: memref<384x896xf32, #tpu.memory_space<vmem>>, %arg3: memref<3x896xf32, #tpu.memory_space<vmem>>, %arg4: memref<48x3xf32, #tpu.memory_space<vmem>>, %arg5: memref<3x48xf32, #tpu.memory_space<vmem>>, %arg6: memref<3x48xf32, #tpu.memory_space<vmem>>, %arg7: memref<3x1xf32, #tpu.memory_space<vmem>>, %arg8: memref<2x3x1xf32, #tpu.memory_space<vmem>>, %arg9: memref<2x48x1xf32, #tpu.memory_space<vmem>>) attributes {dimension_semantics = [#tpu.dimension_semantics<parallel>], iteration_bounds = array<i64: 1>, scalar_prefetch = 0 : i64, scratch_operands = 0 : i64, tpu.core_type = #tpu.core_type<tc>, window_params = [{transform_indices = @transform_0, window_bounds = array<i64: 2, 8, 896>}, {pipeline_mode = #tpu.pipeline_mode<synchronous>, transform_indices = @transform_1, window_bounds = array<i64: 384, 896>}, {pipeline_mode = #tpu.pipeline_mode<synchronous>, transform_indices = @transform_2, window_bounds = array<i64: 3, 896>}, {pipeline_mode = #tpu.pipeline_mode<synchronous>, transform_indices = @transform_3, window_bounds = array<i64: 48, 3>}, {pipeline_mode = #tpu.pipeline_mode<synchronous>, transform_indices = @transform_4, window_bounds = array<i64: 3, 48>}, {pipeline_mode = #tpu.pipeline_mode<synchronous>, transform_indices = @transform_5, window_bounds = array<i64: 3, 48>}, {pipeline_mode = #tpu.pipeline_mode<synchronous>, transform_indices = @transform_6, window_bounds = array<i64: 3, 1>}, {transform_indices = @transform_7, window_bounds = array<i64: 2, 3, 1>}, {transform_indices = @transform_8, window_bounds = array<i64: 2, 48, 1>}]} {
    %c0_i32 = arith.constant 0 : i32
    %c2_i32 = arith.constant 2 : i32
    %0 = arith.addi %c0_i32, %c2_i32 : i32
    %c1_i32 = arith.constant 1 : i32
    scf.for %arg10 = %c0_i32 to %0 step %c1_i32  : i32 {
      %c1_i32_1 = arith.constant 1 : i32
      %1 = arith.muli %arg10, %c1_i32_1 : i32
      %c0_i32_2 = arith.constant 0 : i32
      %2 = arith.addi %c0_i32_2, %1 : i32
      %c0 = arith.constant 0 : index
      %c0_3 = arith.constant 0 : index
      %3 = vector.load %arg4[%c0, %c0_3] : memref<48x3xf32, #tpu.memory_space<vmem>>, vector<48x3xf32>
      %c0_4 = arith.constant 0 : index
      %c0_5 = arith.constant 0 : index
      %4 = vector.load %arg5[%c0_4, %c0_5] : memref<3x48xf32, #tpu.memory_space<vmem>>, vector<3x48xf32>
      %5 = arith.index_cast %2 : i32 to index
      %c0_6 = arith.constant 0 : index
      %c0_7 = arith.constant 0 : index
      %6 = vector.load %arg1[%5, %c0_6, %c0_7] : memref<2x8x896xf32, #tpu.memory_space<vmem>>, vector<1x8x896xf32>
      %7 = vector.shape_cast %6 : vector<1x8x896xf32> to vector<8x896xf32>
      %8 = arith.mulf %7, %7 : vector<8x896xf32>
      %cst = arith.constant dense<0.000000e+00> : vector<896xf32>
      %9 = vector.multi_reduction <add>, %8, %cst [0] : vector<8x896xf32> to vector<896xf32>
      %10 = vector.shape_cast %9 : vector<896xf32> to vector<1x896xf32>
      %cst_8 = arith.constant 1.000000e+00 : f32
      %11 = vector.broadcast %cst_8 : f32 to vector<1x896xf32>
      %12 = arith.addf %11, %10 : vector<1x896xf32>
      %13 = arith.divf %10, %12 : vector<1x896xf32>
      %cst_9 = arith.constant 9.99999993E-9 : f32
      %14 = vector.broadcast %cst_9 : f32 to vector<1x896xf32>
      %15 = arith.addf %10, %14 : vector<1x896xf32>
      %16 = math.rsqrt %15 : vector<1x896xf32>
      %17 = arith.mulf %13, %16 : vector<1x896xf32>
      %18 = vector.broadcast %17 : vector<1x896xf32> to vector<8x896xf32>
      %19 = arith.mulf %7, %18 : vector<8x896xf32>
      %20 = vector.extract_strided_slice %19 {offsets = [0, 0], sizes = [1, 896], strides = [1, 1]} : vector<8x896xf32> to vector<1x896xf32>
      %c0_10 = arith.constant 0 : index
      %c0_11 = arith.constant 0 : index
      %21 = vector.load %arg2[%c0_10, %c0_11] : memref<384x896xf32, #tpu.memory_space<vmem>>, vector<48x896xf32>
      %22 = vector.broadcast %20 : vector<1x896xf32> to vector<48x896xf32>
      %23 = arith.mulf %22, %21 : vector<48x896xf32>
      %24 = vector.extract_strided_slice %19 {offsets = [1, 0], sizes = [1, 896], strides = [1, 1]} : vector<8x896xf32> to vector<1x896xf32>
      %c48 = arith.constant 48 : index
      %c0_12 = arith.constant 0 : index
      %25 = vector.load %arg2[%c48, %c0_12] : memref<384x896xf32, #tpu.memory_space<vmem>>, vector<48x896xf32>
      %26 = vector.broadcast %24 : vector<1x896xf32> to vector<48x896xf32>
      %27 = arith.mulf %26, %25 : vector<48x896xf32>
      %28 = arith.addf %23, %27 : vector<48x896xf32>
      %29 = vector.extract_strided_slice %19 {offsets = [2, 0], sizes = [1, 896], strides = [1, 1]} : vector<8x896xf32> to vector<1x896xf32>
      %c96 = arith.constant 96 : index
      %c0_13 = arith.constant 0 : index
      %30 = vector.load %arg2[%c96, %c0_13] : memref<384x896xf32, #tpu.memory_space<vmem>>, vector<48x896xf32>
      %31 = vector.broadcast %29 : vector<1x896xf32> to vector<48x896xf32>
      %32 = arith.mulf %31, %30 : vector<48x896xf32>
      %33 = arith.addf %28, %32 : vector<48x896xf32>
      %34 = vector.extract_strided_slice %19 {offsets = [3, 0], sizes = [1, 896], strides = [1, 1]} : vector<8x896xf32> to vector<1x896xf32>
      %c144 = arith.constant 144 : index
      %c0_14 = arith.constant 0 : index
      %35 = vector.load %arg2[%c144, %c0_14] : memref<384x896xf32, #tpu.memory_space<vmem>>, vector<48x896xf32>
      %36 = vector.broadcast %34 : vector<1x896xf32> to vector<48x896xf32>
      %37 = arith.mulf %36, %35 : vector<48x896xf32>
      %38 = arith.addf %33, %37 : vector<48x896xf32>
      %39 = vector.extract_strided_slice %19 {offsets = [4, 0], sizes = [1, 896], strides = [1, 1]} : vector<8x896xf32> to vector<1x896xf32>
      %c192 = arith.constant 192 : index
      %c0_15 = arith.constant 0 : index
      %40 = vector.load %arg2[%c192, %c0_15] : memref<384x896xf32, #tpu.memory_space<vmem>>, vector<48x896xf32>
      %41 = vector.broadcast %39 : vector<1x896xf32> to vector<48x896xf32>
      %42 = arith.mulf %41, %40 : vector<48x896xf32>
      %43 = arith.addf %38, %42 : vector<48x896xf32>
      %44 = vector.extract_strided_slice %19 {offsets = [5, 0], sizes = [1, 896], strides = [1, 1]} : vector<8x896xf32> to vector<1x896xf32>
      %c240 = arith.constant 240 : index
      %c0_16 = arith.constant 0 : index
      %45 = vector.load %arg2[%c240, %c0_16] : memref<384x896xf32, #tpu.memory_space<vmem>>, vector<48x896xf32>
      %46 = vector.broadcast %44 : vector<1x896xf32> to vector<48x896xf32>
      %47 = arith.mulf %46, %45 : vector<48x896xf32>
      %48 = arith.addf %43, %47 : vector<48x896xf32>
      %49 = vector.extract_strided_slice %19 {offsets = [6, 0], sizes = [1, 896], strides = [1, 1]} : vector<8x896xf32> to vector<1x896xf32>
      %c288 = arith.constant 288 : index
      %c0_17 = arith.constant 0 : index
      %50 = vector.load %arg2[%c288, %c0_17] : memref<384x896xf32, #tpu.memory_space<vmem>>, vector<48x896xf32>
      %51 = vector.broadcast %49 : vector<1x896xf32> to vector<48x896xf32>
      %52 = arith.mulf %51, %50 : vector<48x896xf32>
      %53 = arith.addf %48, %52 : vector<48x896xf32>
      %54 = vector.extract_strided_slice %19 {offsets = [7, 0], sizes = [1, 896], strides = [1, 1]} : vector<8x896xf32> to vector<1x896xf32>
      %c336 = arith.constant 336 : index
      %c0_18 = arith.constant 0 : index
      %55 = vector.load %arg2[%c336, %c0_18] : memref<384x896xf32, #tpu.memory_space<vmem>>, vector<48x896xf32>
      %56 = vector.broadcast %54 : vector<1x896xf32> to vector<48x896xf32>
      %57 = arith.mulf %56, %55 : vector<48x896xf32>
      %58 = arith.addf %53, %57 : vector<48x896xf32>
      %c0_19 = arith.constant 0 : index
      %c0_20 = arith.constant 0 : index
      %59 = vector.load %arg3[%c0_19, %c0_20] : memref<3x896xf32, #tpu.memory_space<vmem>>, vector<3x896xf32>
      %cst_21 = arith.constant dense<0xFF800000> : vector<896xf32>
      %60 = vector.multi_reduction <maximumf>, %59, %cst_21 [0] : vector<3x896xf32> to vector<896xf32>
      %61 = vector.shape_cast %60 : vector<896xf32> to vector<1x896xf32>
      %62 = vector.broadcast %61 : vector<1x896xf32> to vector<3x896xf32>
      %63 = arith.subf %59, %62 : vector<3x896xf32>
      %64 = math.exp %63 : vector<3x896xf32>
      %cst_22 = arith.constant dense<0.000000e+00> : vector<896xf32>
      %65 = vector.multi_reduction <add>, %64, %cst_22 [0] : vector<3x896xf32> to vector<896xf32>
      %66 = vector.shape_cast %65 : vector<896xf32> to vector<1x896xf32>
      %67 = vector.broadcast %66 : vector<1x896xf32> to vector<3x896xf32>
      %68 = arith.divf %64, %67 : vector<3x896xf32>
      %cst_23 = arith.constant dense<0.000000e+00> : vector<48x3xf32>
      %69 = tpu.matmul %58, %68, %cst_23 {dimension_numbers = #tpu.dot_dimension_numbers<[1], [1], [0], [0], [0, 0, 1, 0], [], []>} : vector<48x896xf32>, vector<3x896xf32>, vector<48x3xf32> -> vector<48x3xf32>
      %70 = arith.mulf %69, %3 : vector<48x3xf32>
      %cst_24 = arith.constant dense<0.000000e+00> : vector<48xf32>
      %71 = vector.multi_reduction <add>, %70, %cst_24 [1] : vector<48x3xf32> to vector<48xf32>
      %72 = vector.shape_cast %71 : vector<48xf32> to vector<48x1xf32>
      %73 = arith.mulf %72, %72 : vector<48x1xf32>
      %cst_25 = arith.constant dense<0.000000e+00> : vector<3x1xf32>
      %74 = tpu.matmul %4, %73, %cst_25 {dimension_numbers = #tpu.dot_dimension_numbers<[1], [0], [0], [1], [0, 0, 1, 1], [], []>} : vector<3x48xf32>, vector<48x1xf32>, vector<3x1xf32> -> vector<3x1xf32>
      %cst_26 = arith.constant 1.000000e+00 : f32
      %75 = vector.broadcast %cst_26 : f32 to vector<3x1xf32>
      %76 = arith.addf %75, %74 : vector<3x1xf32>
      %77 = arith.divf %74, %76 : vector<3x1xf32>
      %cst_27 = arith.constant 9.99999993E-9 : f32
      %78 = vector.broadcast %cst_27 : f32 to vector<3x1xf32>
      %79 = arith.addf %74, %78 : vector<3x1xf32>
      %80 = math.rsqrt %79 : vector<3x1xf32>
      %81 = arith.mulf %77, %80 : vector<3x1xf32>
      %cst_28 = arith.constant dense<0.000000e+00> : vector<48x1xf32>
      %82 = tpu.matmul %3, %81, %cst_28 {dimension_numbers = #tpu.dot_dimension_numbers<[1], [0], [0], [1], [0, 0, 1, 1], [], []>} : vector<48x3xf32>, vector<3x1xf32>, vector<48x1xf32> -> vector<48x1xf32>
      %83 = arith.mulf %72, %82 : vector<48x1xf32>
      %84 = vector.broadcast %83 : vector<48x1xf32> to vector<48x3xf32>
      %85 = arith.mulf %3, %84 : vector<48x3xf32>
      %cst_29 = arith.constant dense<0.000000e+00> : vector<3x896xf32>
      %86 = tpu.matmul %85, %58, %cst_29 {dimension_numbers = #tpu.dot_dimension_numbers<[0], [0], [1], [1], [0, 1, 1, 1], [], []>} : vector<48x3xf32>, vector<48x896xf32>, vector<3x896xf32> -> vector<3x896xf32>
      %87 = arith.addf %59, %86 : vector<3x896xf32>
      %cst_30 = arith.constant dense<0xFF800000> : vector<896xf32>
      %88 = vector.multi_reduction <maximumf>, %87, %cst_30 [0] : vector<3x896xf32> to vector<896xf32>
      %89 = vector.shape_cast %88 : vector<896xf32> to vector<1x896xf32>
      %90 = vector.broadcast %89 : vector<1x896xf32> to vector<3x896xf32>
      %91 = arith.subf %87, %90 : vector<3x896xf32>
      %92 = math.exp %91 : vector<3x896xf32>
      %cst_31 = arith.constant dense<0.000000e+00> : vector<896xf32>
      %93 = vector.multi_reduction <add>, %92, %cst_31 [0] : vector<3x896xf32> to vector<896xf32>
      %94 = vector.shape_cast %93 : vector<896xf32> to vector<1x896xf32>
      %95 = vector.broadcast %94 : vector<1x896xf32> to vector<3x896xf32>
      %96 = arith.divf %92, %95 : vector<3x896xf32>
      %cst_32 = arith.constant dense<0.000000e+00> : vector<48x3xf32>
      %97 = tpu.matmul %58, %96, %cst_32 {dimension_numbers = #tpu.dot_dimension_numbers<[1], [1], [0], [0], [0, 0, 1, 0], [], []>} : vector<48x896xf32>, vector<3x896xf32>, vector<48x3xf32> -> vector<48x3xf32>
      %98 = arith.mulf %97, %3 : vector<48x3xf32>
      %cst_33 = arith.constant dense<0.000000e+00> : vector<48xf32>
      %99 = vector.multi_reduction <add>, %98, %cst_33 [1] : vector<48x3xf32> to vector<48xf32>
      %100 = vector.shape_cast %99 : vector<48xf32> to vector<48x1xf32>
      %101 = arith.mulf %100, %100 : vector<48x1xf32>
      %cst_34 = arith.constant dense<0.000000e+00> : vector<3x1xf32>
      %102 = tpu.matmul %4, %101, %cst_34 {dimension_numbers = #tpu.dot_dimension_numbers<[1], [0], [0], [1], [0, 0, 1, 1], [], []>} : vector<3x48xf32>, vector<48x1xf32>, vector<3x1xf32> -> vector<3x1xf32>
      %cst_35 = arith.constant 1.000000e+00 : f32
      %103 = vector.broadcast %cst_35 : f32 to vector<3x1xf32>
      %104 = arith.addf %103, %102 : vector<3x1xf32>
      %105 = arith.divf %102, %104 : vector<3x1xf32>
      %cst_36 = arith.constant 9.99999993E-9 : f32
      %106 = vector.broadcast %cst_36 : f32 to vector<3x1xf32>
      %107 = arith.addf %102, %106 : vector<3x1xf32>
      %108 = math.rsqrt %107 : vector<3x1xf32>
      %109 = arith.mulf %105, %108 : vector<3x1xf32>
      %cst_37 = arith.constant dense<0.000000e+00> : vector<48x1xf32>
      %110 = tpu.matmul %3, %109, %cst_37 {dimension_numbers = #tpu.dot_dimension_numbers<[1], [0], [0], [1], [0, 0, 1, 1], [], []>} : vector<48x3xf32>, vector<3x1xf32>, vector<48x1xf32> -> vector<48x1xf32>
      %111 = arith.mulf %100, %110 : vector<48x1xf32>
      %112 = vector.broadcast %111 : vector<48x1xf32> to vector<48x3xf32>
      %113 = arith.mulf %3, %112 : vector<48x3xf32>
      %cst_38 = arith.constant dense<0.000000e+00> : vector<3x896xf32>
      %114 = tpu.matmul %113, %58, %cst_38 {dimension_numbers = #tpu.dot_dimension_numbers<[0], [0], [1], [1], [0, 1, 1, 1], [], []>} : vector<48x3xf32>, vector<48x896xf32>, vector<3x896xf32> -> vector<3x896xf32>
      %115 = arith.addf %87, %114 : vector<3x896xf32>
      %cst_39 = arith.constant dense<0xFF800000> : vector<896xf32>
      %116 = vector.multi_reduction <maximumf>, %115, %cst_39 [0] : vector<3x896xf32> to vector<896xf32>
      %117 = vector.shape_cast %116 : vector<896xf32> to vector<1x896xf32>
      %118 = vector.broadcast %117 : vector<1x896xf32> to vector<3x896xf32>
      %119 = arith.subf %115, %118 : vector<3x896xf32>
      %120 = math.exp %119 : vector<3x896xf32>
      %cst_40 = arith.constant dense<0.000000e+00> : vector<896xf32>
      %121 = vector.multi_reduction <add>, %120, %cst_40 [0] : vector<3x896xf32> to vector<896xf32>
      %122 = vector.shape_cast %121 : vector<896xf32> to vector<1x896xf32>
      %123 = vector.broadcast %122 : vector<1x896xf32> to vector<3x896xf32>
      %124 = arith.divf %120, %123 : vector<3x896xf32>
      %cst_41 = arith.constant dense<0.000000e+00> : vector<48x3xf32>
      %125 = tpu.matmul %58, %124, %cst_41 {dimension_numbers = #tpu.dot_dimension_numbers<[1], [1], [0], [0], [0, 0, 1, 0], [], []>} : vector<48x896xf32>, vector<3x896xf32>, vector<48x3xf32> -> vector<48x3xf32>
      %126 = arith.mulf %125, %3 : vector<48x3xf32>
      %cst_42 = arith.constant dense<0.000000e+00> : vector<48xf32>
      %127 = vector.multi_reduction <add>, %126, %cst_42 [1] : vector<48x3xf32> to vector<48xf32>
      %128 = vector.shape_cast %127 : vector<48xf32> to vector<48x1xf32>
      %129 = arith.mulf %128, %128 : vector<48x1xf32>
      %cst_43 = arith.constant dense<0.000000e+00> : vector<3x1xf32>
      %130 = tpu.matmul %4, %129, %cst_43 {dimension_numbers = #tpu.dot_dimension_numbers<[1], [0], [0], [1], [0, 0, 1, 1], [], []>} : vector<3x48xf32>, vector<48x1xf32>, vector<3x1xf32> -> vector<3x1xf32>
      %cst_44 = arith.constant 1.000000e+00 : f32
      %131 = vector.broadcast %cst_44 : f32 to vector<3x1xf32>
      %132 = arith.addf %131, %130 : vector<3x1xf32>
      %133 = arith.divf %130, %132 : vector<3x1xf32>
      %cst_45 = arith.constant 9.99999993E-9 : f32
      %134 = vector.broadcast %cst_45 : f32 to vector<3x1xf32>
      %135 = arith.addf %130, %134 : vector<3x1xf32>
      %136 = math.rsqrt %135 : vector<3x1xf32>
      %137 = arith.mulf %133, %136 : vector<3x1xf32>
      %cst_46 = arith.constant dense<0.000000e+00> : vector<48x1xf32>
      %138 = tpu.matmul %3, %137, %cst_46 {dimension_numbers = #tpu.dot_dimension_numbers<[1], [0], [0], [1], [0, 0, 1, 1], [], []>} : vector<48x3xf32>, vector<3x1xf32>, vector<48x1xf32> -> vector<48x1xf32>
      %139 = arith.mulf %128, %138 : vector<48x1xf32>
      %140 = vector.broadcast %139 : vector<48x1xf32> to vector<48x3xf32>
      %141 = arith.mulf %3, %140 : vector<48x3xf32>
      %cst_47 = arith.constant dense<0.000000e+00> : vector<3x896xf32>
      %142 = tpu.matmul %141, %58, %cst_47 {dimension_numbers = #tpu.dot_dimension_numbers<[0], [0], [1], [1], [0, 1, 1, 1], [], []>} : vector<48x3xf32>, vector<48x896xf32>, vector<3x896xf32> -> vector<3x896xf32>
      %143 = arith.addf %115, %142 : vector<3x896xf32>
      %cst_48 = arith.constant dense<0xFF800000> : vector<896xf32>
      %144 = vector.multi_reduction <maximumf>, %143, %cst_48 [0] : vector<3x896xf32> to vector<896xf32>
      %145 = vector.shape_cast %144 : vector<896xf32> to vector<1x896xf32>
      %146 = vector.broadcast %145 : vector<1x896xf32> to vector<3x896xf32>
      %147 = arith.subf %143, %146 : vector<3x896xf32>
      %148 = math.exp %147 : vector<3x896xf32>
      %cst_49 = arith.constant dense<0.000000e+00> : vector<896xf32>
      %149 = vector.multi_reduction <add>, %148, %cst_49 [0] : vector<3x896xf32> to vector<896xf32>
      %150 = vector.shape_cast %149 : vector<896xf32> to vector<1x896xf32>
      %151 = vector.broadcast %150 : vector<1x896xf32> to vector<3x896xf32>
      %152 = arith.divf %148, %151 : vector<3x896xf32>
      %cst_50 = arith.constant dense<0.000000e+00> : vector<48x3xf32>
      %153 = tpu.matmul %58, %152, %cst_50 {dimension_numbers = #tpu.dot_dimension_numbers<[1], [1], [0], [0], [0, 0, 1, 0], [], []>} : vector<48x896xf32>, vector<3x896xf32>, vector<48x3xf32> -> vector<48x3xf32>
      %154 = arith.mulf %153, %3 : vector<48x3xf32>
      %cst_51 = arith.constant dense<0.000000e+00> : vector<48xf32>
      %155 = vector.multi_reduction <add>, %154, %cst_51 [1] : vector<48x3xf32> to vector<48xf32>
      %156 = vector.shape_cast %155 : vector<48xf32> to vector<48x1xf32>
      %157 = arith.mulf %156, %156 : vector<48x1xf32>
      %cst_52 = arith.constant dense<0.000000e+00> : vector<3x1xf32>
      %158 = tpu.matmul %4, %157, %cst_52 {dimension_numbers = #tpu.dot_dimension_numbers<[1], [0], [0], [1], [0, 0, 1, 1], [], []>} : vector<3x48xf32>, vector<48x1xf32>, vector<3x1xf32> -> vector<3x1xf32>
      %cst_53 = arith.constant 1.000000e+00 : f32
      %159 = vector.broadcast %cst_53 : f32 to vector<3x1xf32>
      %160 = arith.addf %159, %158 : vector<3x1xf32>
      %161 = arith.divf %158, %160 : vector<3x1xf32>
      %cst_54 = arith.constant 9.99999993E-9 : f32
      %162 = vector.broadcast %cst_54 : f32 to vector<3x1xf32>
      %163 = arith.addf %158, %162 : vector<3x1xf32>
      %164 = math.rsqrt %163 : vector<3x1xf32>
      %165 = arith.mulf %161, %164 : vector<3x1xf32>
      %cst_55 = arith.constant dense<0.000000e+00> : vector<48x1xf32>
      %166 = tpu.matmul %3, %165, %cst_55 {dimension_numbers = #tpu.dot_dimension_numbers<[1], [0], [0], [1], [0, 0, 1, 1], [], []>} : vector<48x3xf32>, vector<3x1xf32>, vector<48x1xf32> -> vector<48x1xf32>
      %167 = arith.mulf %156, %166 : vector<48x1xf32>
      %168 = arith.index_cast %2 : i32 to index
      %c0_56 = arith.constant 0 : index
      %c0_57 = arith.constant 0 : index
      %169 = vector.load %arg9[%168, %c0_56, %c0_57] : memref<2x48x1xf32, #tpu.memory_space<vmem>>, vector<1x48x1xf32>
      %170 = vector.shape_cast %169 : vector<1x48x1xf32> to vector<48x1xf32>
      %171 = vector.shape_cast %167 : vector<48x1xf32> to vector<1x48x1xf32>
      tpu.vector_store %arg9[%168, %c0_56, %c0_57], %171 {strides = array<i32>} : memref<2x48x1xf32, #tpu.memory_space<vmem>>, vector<1x48x1xf32>,
      %c0_58 = arith.constant 0 : index
      %c0_59 = arith.constant 0 : index
      %172 = vector.load %arg6[%c0_58, %c0_59] : memref<3x48xf32, #tpu.memory_space<vmem>>, vector<3x48xf32>
      %cst_60 = arith.constant dense<0.000000e+00> : vector<3x1xf32>
      %173 = tpu.matmul %172, %167, %cst_60 {dimension_numbers = #tpu.dot_dimension_numbers<[1], [0], [0], [1], [0, 0, 1, 1], [], []>} : vector<3x48xf32>, vector<48x1xf32>, vector<3x1xf32> -> vector<3x1xf32>
      %c0_61 = arith.constant 0 : index
      %c0_62 = arith.constant 0 : index
      %174 = vector.load %arg7[%c0_61, %c0_62] : memref<3x1xf32, #tpu.memory_space<vmem>>, vector<3x1xf32>
      %175 = arith.addf %173, %174 : vector<3x1xf32>
      %cst_63 = arith.constant dense<0xFF800000> : vector<1xf32>
      %176 = vector.multi_reduction <maximumf>, %175, %cst_63 [0] : vector<3x1xf32> to vector<1xf32>
      %177 = vector.shape_cast %176 : vector<1xf32> to vector<1x1xf32>
      %178 = vector.broadcast %177 : vector<1x1xf32> to vector<3x1xf32>
      %179 = arith.subf %175, %178 : vector<3x1xf32>
      %180 = math.exp %179 : vector<3x1xf32>
      %cst_64 = arith.constant dense<0.000000e+00> : vector<1xf32>
      %181 = vector.multi_reduction <add>, %180, %cst_64 [0] : vector<3x1xf32> to vector<1xf32>
      %182 = vector.shape_cast %181 : vector<1xf32> to vector<1x1xf32>
      %183 = vector.broadcast %182 : vector<1x1xf32> to vector<3x1xf32>
      %184 = arith.divf %180, %183 : vector<3x1xf32>
      %185 = arith.index_cast %2 : i32 to index
      %c0_65 = arith.constant 0 : index
      %c0_66 = arith.constant 0 : index
      %186 = vector.load %arg8[%185, %c0_65, %c0_66] : memref<2x3x1xf32, #tpu.memory_space<vmem>>, vector<1x3x1xf32>
      %187 = vector.shape_cast %186 : vector<1x3x1xf32> to vector<3x1xf32>
      %188 = vector.shape_cast %184 : vector<3x1xf32> to vector<1x3x1xf32>
      tpu.vector_store %arg8[%185, %c0_65, %c0_66], %188 {strides = array<i32>} : memref<2x3x1xf32, #tpu.memory_space<vmem>>, vector<1x3x1xf32>,
    }
    %c2_i32_0 = arith.constant 2 : i32
    return
  }
  func.func @transform_0(%arg0: i32) -> (i32, i32, i32) {
    %c0_i32 = arith.constant 0 : i32
    %c0_i32_0 = arith.constant 0 : i32
    %c0_i32_1 = arith.constant 0 : i32
    return %arg0, %c0_i32, %c0_i32_0 : i32, i32, i32
  }
  func.func @transform_1(%arg0: i32) -> (i32, i32) {
    %c0_i32 = arith.constant 0 : i32
    %c0_i32_0 = arith.constant 0 : i32
    %c0_i32_1 = arith.constant 0 : i32
    return %c0_i32, %c0_i32_0 : i32, i32
  }
  func.func @transform_2(%arg0: i32) -> (i32, i32) {
    %c0_i32 = arith.constant 0 : i32
    %c0_i32_0 = arith.constant 0 : i32
    %c0_i32_1 = arith.constant 0 : i32
    return %c0_i32, %c0_i32_0 : i32, i32
  }
  func.func @transform_3(%arg0: i32) -> (i32, i32) {
    %c0_i32 = arith.constant 0 : i32
    %c0_i32_0 = arith.constant 0 : i32
    %c0_i32_1 = arith.constant 0 : i32
    return %c0_i32, %c0_i32_0 : i32, i32
  }
  func.func @transform_4(%arg0: i32) -> (i32, i32) {
    %c0_i32 = arith.constant 0 : i32
    %c0_i32_0 = arith.constant 0 : i32
    %c0_i32_1 = arith.constant 0 : i32
    return %c0_i32, %c0_i32_0 : i32, i32
  }
  func.func @transform_5(%arg0: i32) -> (i32, i32) {
    %c0_i32 = arith.constant 0 : i32
    %c0_i32_0 = arith.constant 0 : i32
    %c0_i32_1 = arith.constant 0 : i32
    return %c0_i32, %c0_i32_0 : i32, i32
  }
  func.func @transform_6(%arg0: i32) -> (i32, i32) {
    %c0_i32 = arith.constant 0 : i32
    %c0_i32_0 = arith.constant 0 : i32
    %c0_i32_1 = arith.constant 0 : i32
    return %c0_i32, %c0_i32_0 : i32, i32
  }
  func.func @transform_7(%arg0: i32) -> (i32, i32, i32) {
    %c0_i32 = arith.constant 0 : i32
    %c0_i32_0 = arith.constant 0 : i32
    %c0_i32_1 = arith.constant 0 : i32
    return %arg0, %c0_i32, %c0_i32_0 : i32, i32, i32
  }
  func.func @transform_8(%arg0: i32) -> (i32, i32, i32) {
    %c0_i32 = arith.constant 0 : i32
    %c0_i32_0 = arith.constant 0 : i32
    %c0_i32_1 = arith.constant 0 : i32
    return %arg0, %c0_i32, %c0_i32_0 : i32, i32, i32
  }
}

</mosaic_0001>

<llo_original>
// kernel: selfnet_forward.4
$region0: #{selfnet_forward.4}
  #allocation0 [shape = 'u32[]', space=smem, size = 0x4, offset = 0x4, fixed_abs, tag = 'smem constant byte address 0x4 - core index']
  #allocation1 [shape = 'u32[144,128]{1,0:T(1,128)}', space=vmem, size = 0x12000, scoped, tag = 'internal scratch']
  %s0 = inlined_call_operand.vmem [shape: bf16[48,256], index: 0, kind: input, shape index: {}]
  %s1 = inlined_call_operand.vmem [shape: bf16[256,1024], index: 1, kind: input, shape index: {}]
  %s2 = inlined_call_operand.vmem [shape: f32[1,1024], index: 2, kind: input, shape index: {}]
  %s3 = inlined_call_operand.vmem [shape: f32[48,1024], index: 3, kind: output, shape index: {}]
  %s4 = sld [smem:[#allocation0]]
  $region22: #{selfnet_forward.4} parent=0
    _
  %s6 = ssub.s32 1, %s4
  %s7 = scalar_select 0, %s6, %s4
  // Predicated region
  $region2: #{selfnet_forward.4} parent=0 // pred_check
    _
  $region3: #{selfnet_forward.4} parent=0 // pred_check_branch
    %9 = sbr.rel (0) target = $region5
  $region4: #{selfnet_forward.4} parent=0 // pred_region
    _
  $region5: #{selfnet_forward.4} parent=0 // pred_fallthru
    _
  // Predicated region
  $region6: #{selfnet_forward.4} parent=0 // pred_check
    _
  $region7: #{selfnet_forward.4} parent=0 // pred_check_branch
    %11 = sbr.rel (0) target = $region9
  $region8: #{selfnet_forward.4} parent=0 // pred_region
    _
  $region9: #{selfnet_forward.4} parent=0 // pred_fallthru
    _
  // Predicated region
  $region10: #{selfnet_forward.4} parent=0 // pred_check
    _
  $region11: #{selfnet_forward.4} parent=0 // pred_check_branch
    %13 = sbr.rel (0) target = $region13
  $region12: #{selfnet_forward.4} parent=0 // pred_region
    _
  $region13: #{selfnet_forward.4} parent=0 // pred_fallthru
    _
  %v14 = vld [vmem:[%s0] sm:$0xff]
  %v15 = vld [vmem:[%s0 + $0x8] sm:$0xff]
  %v16 = vld [vmem:[%s0 + $0x10] sm:$0xff]
  %v17 = vld [vmem:[%s0 + $0x18] sm:$0xff]
  %v18 = vld [vmem:[%s0 + $0x20] sm:$0xff]
  %v19 = vld [vmem:[%s0 + $0x28] sm:$0xff]
  %v20 = vld [vmem:[%s1] sm:$0xff]
  %v21 = vld [vmem:[%s1 + $0x8] sm:$0xff]
  %v22 = vld [vmem:[%s1 + $0x10] sm:$0xff]
  %v23 = vld [vmem:[%s1 + $0x18] sm:$0xff]
  %v24 = vld [vmem:[%s1 + $0x20] sm:$0xff]
  %v25 = vld [vmem:[%s1 + $0x28] sm:$0xff]
  %v26 = vld [vmem:[%s1 + $0x30] sm:$0xff]
  %v27 = vld [vmem:[%s1 + $0x38] sm:$0xff]
  %v28 = vld [vmem:[%s1 + $0x40] sm:$0xff]
  %v29 = vld [vmem:[%s1 + $0x48] sm:$0xff]
  %v30 = vld [vmem:[%s1 + $0x50] sm:$0xff]
  %v31 = vld [vmem:[%s1 + $0x58] sm:$0xff]
  %v32 = vld [vmem:[%s1 + $0x60] sm:$0xff]
  %v33 = vld [vmem:[%s1 + $0x68] sm:$0xff]
  %v34 = vld [vmem:[%s1 + $0x70] sm:$0xff]
  %v35 = vld [vmem:[%s1 + $0x78] sm:$0xff]
  %v36 = vld [vmem:[%s1 + $0x80] sm:$0xff]
  %v37 = vld [vmem:[%s1 + $0x88] sm:$0xff]
  %v38 = vld [vmem:[%s1 + $0x90] sm:$0xff]
  %v39 = vld [vmem:[%s1 + $0x98] sm:$0xff]
  %v40 = vld [vmem:[%s1 + $0xa0] sm:$0xff]
  %v41 = vld [vmem:[%s1 + $0xa8] sm:$0xff]
  %v42 = vld [vmem:[%s1 + $0xb0] sm:$0xff]
  %v43 = vld [vmem:[%s1 + $0xb8] sm:$0xff]
  %v44 = vld [vmem:[%s1 + $0xc0] sm:$0xff]
  %v45 = vld [vmem:[%s1 + $0xc8] sm:$0xff]
  %v46 = vld [vmem:[%s1 + $0xd0] sm:$0xff]
  %v47 = vld [vmem:[%s1 + $0xd8] sm:$0xff]
  %v48 = vld [vmem:[%s1 + $0xe0] sm:$0xff]
  %v49 = vld [vmem:[%s1 + $0xe8] sm:$0xff]
  %v50 = vld [vmem:[%s1 + $0xf0] sm:$0xff]
  %v51 = vld [vmem:[%s1 + $0xf8] sm:$0xff]
  %v52 = vld [vmem:[%s1 + $0x100] sm:$0xff]
  %v53 = vld [vmem:[%s1 + $0x108] sm:$0xff]
  %v54 = vld [vmem:[%s1 + $0x110] sm:$0xff]
  %v55 = vld [vmem:[%s1 + $0x118] sm:$0xff]
  %v56 = vld [vmem:[%s1 + $0x120] sm:$0xff]
  %v57 = vld [vmem:[%s1 + $0x128] sm:$0xff]
  %v58 = vld [vmem:[%s1 + $0x130] sm:$0xff]
  %v59 = vld [vmem:[%s1 + $0x138] sm:$0xff]
  %v60 = vld [vmem:[%s1 + $0x140] sm:$0xff]
  %v61 = vld [vmem:[%s1 + $0x148] sm:$0xff]
  %v62 = vld [vmem:[%s1 + $0x150] sm:$0xff]
  %v63 = vld [vmem:[%s1 + $0x158] sm:$0xff]
  %v64 = vld [vmem:[%s1 + $0x160] sm:$0xff]
  %v65 = vld [vmem:[%s1 + $0x168] sm:$0xff]
  %v66 = vld [vmem:[%s1 + $0x170] sm:$0xff]
  %v67 = vld [vmem:[%s1 + $0x178] sm:$0xff]
  %v68 = vld [vmem:[%s1 + $0x180] sm:$0xff]
  %v69 = vld [vmem:[%s1 + $0x188] sm:$0xff]
  %v70 = vld [vmem:[%s1 + $0x190] sm:$0xff]
  %v71 = vld [vmem:[%s1 + $0x198] sm:$0xff]
  %v72 = vld [vmem:[%s1 + $0x1a0] sm:$0xff]
  %v73 = vld [vmem:[%s1 + $0x1a8] sm:$0xff]
  %v74 = vld [vmem:[%s1 + $0x1b0] sm:$0xff]
  %v75 = vld [vmem:[%s1 + $0x1b8] sm:$0xff]
  %v76 = vld [vmem:[%s1 + $0x1c0] sm:$0xff]
  %v77 = vld [vmem:[%s1 + $0x1c8] sm:$0xff]
  %v78 = vld [vmem:[%s1 + $0x1d0] sm:$0xff]
  %v79 = vld [vmem:[%s1 + $0x1d8] sm:$0xff]
  %v80 = vld [vmem:[%s1 + $0x1e0] sm:$0xff]
  %v81 = vld [vmem:[%s1 + $0x1e8] sm:$0xff]
  %v82 = vld [vmem:[%s1 + $0x1f0] sm:$0xff]
  %v83 = vld [vmem:[%s1 + $0x1f8] sm:$0xff]
  %v84 = vld [vmem:[%s1 + $0x200] sm:$0xff]
  %v85 = vld [vmem:[%s1 + $0x208] sm:$0xff]
  %v86 = vld [vmem:[%s1 + $0x210] sm:$0xff]
  %v87 = vld [vmem:[%s1 + $0x218] sm:$0xff]
  %v88 = vld [vmem:[%s1 + $0x220] sm:$0xff]
  %v89 = vld [vmem:[%s1 + $0x228] sm:$0xff]
  %v90 = vld [vmem:[%s1 + $0x230] sm:$0xff]
  %v91 = vld [vmem:[%s1 + $0x238] sm:$0xff]
  %v92 = vld [vmem:[%s1 + $0x240] sm:$0xff]
  %v93 = vld [vmem:[%s1 + $0x248] sm:$0xff]
  %v94 = vld [vmem:[%s1 + $0x250] sm:$0xff]
  %v95 = vld [vmem:[%s1 + $0x258] sm:$0xff]
  %v96 = vld [vmem:[%s1 + $0x260] sm:$0xff]
  %v97 = vld [vmem:[%s1 + $0x268] sm:$0xff]
  %v98 = vld [vmem:[%s1 + $0x270] sm:$0xff]
  %v99 = vld [vmem:[%s1 + $0x278] sm:$0xff]
  %v100 = vld [vmem:[%s1 + $0x280] sm:$0xff]
  %v101 = vld [vmem:[%s1 + $0x288] sm:$0xff]
  %v102 = vld [vmem:[%s1 + $0x290] sm:$0xff]
  %v103 = vld [vmem:[%s1 + $0x298] sm:$0xff]
  %v104 = vld [vmem:[%s1 + $0x2a0] sm:$0xff]
  %v105 = vld [vmem:[%s1 + $0x2a8] sm:$0xff]
  %v106 = vld [vmem:[%s1 + $0x2b0] sm:$0xff]
  %v107 = vld [vmem:[%s1 + $0x2b8] sm:$0xff]
  %v108 = vld [vmem:[%s1 + $0x2c0] sm:$0xff]
  %v109 = vld [vmem:[%s1 + $0x2c8] sm:$0xff]
  %v110 = vld [vmem:[%s1 + $0x2d0] sm:$0xff]
  %v111 = vld [vmem:[%s1 + $0x2d8] sm:$0xff]
  %v112 = vld [vmem:[%s1 + $0x2e0] sm:$0xff]
  %v113 = vld [vmem:[%s1 + $0x2e8] sm:$0xff]
  %v114 = vld [vmem:[%s1 + $0x2f0] sm:$0xff]
  %v115 = vld [vmem:[%s1 + $0x2f8] sm:$0xff]
  %v116 = vld [vmem:[%s1 + $0x300] sm:$0xff]
  %v117 = vld [vmem:[%s1 + $0x308] sm:$0xff]
  %v118 = vld [vmem:[%s1 + $0x310] sm:$0xff]
  %v119 = vld [vmem:[%s1 + $0x318] sm:$0xff]
  %v120 = vld [vmem:[%s1 + $0x320] sm:$0xff]
  %v121 = vld [vmem:[%s1 + $0x328] sm:$0xff]
  %v122 = vld [vmem:[%s1 + $0x330] sm:$0xff]
  %v123 = vld [vmem:[%s1 + $0x338] sm:$0xff]
  %v124 = vld [vmem:[%s1 + $0x340] sm:$0xff]
  %v125 = vld [vmem:[%s1 + $0x348] sm:$0xff]
  %v126 = vld [vmem:[%s1 + $0x350] sm:$0xff]
  %v127 = vld [vmem:[%s1 + $0x358] sm:$0xff]
  %v128 = vld [vmem:[%s1 + $0x360] sm:$0xff]
  %v129 = vld [vmem:[%s1 + $0x368] sm:$0xff]
  %v130 = vld [vmem:[%s1 + $0x370] sm:$0xff]
  %v131 = vld [vmem:[%s1 + $0x378] sm:$0xff]
  %v132 = vld [vmem:[%s1 + $0x380] sm:$0xff]
  %v133 = vld [vmem:[%s1 + $0x388] sm:$0xff]
  %v134 = vld [vmem:[%s1 + $0x390] sm:$0xff]
  %v135 = vld [vmem:[%s1 + $0x398] sm:$0xff]
  %v136 = vld [vmem:[%s1 + $0x3a0] sm:$0xff]
  %v137 = vld [vmem:[%s1 + $0x3a8] sm:$0xff]
  %v138 = vld [vmem:[%s1 + $0x3b0] sm:$0xff]
  %v139 = vld [vmem:[%s1 + $0x3b8] sm:$0xff]
  %v140 = vld [vmem:[%s1 + $0x3c0] sm:$0xff]
  %v141 = vld [vmem:[%s1 + $0x3c8] sm:$0xff]
  %v142 = vld [vmem:[%s1 + $0x3d0] sm:$0xff]
  %v143 = vld [vmem:[%s1 + $0x3d8] sm:$0xff]
  %v144 = vld [vmem:[%s1 + $0x3e0] sm:$0xff]
  %v145 = vld [vmem:[%s1 + $0x3e8] sm:$0xff]
  %v146 = vld [vmem:[%s1 + $0x3f0] sm:$0xff]
  %v147 = vld [vmem:[%s1 + $0x3f8] sm:$0xff]
  %v148 = vld [vmem:[%s2] sm:$0xff]
  %v150 = vlaneseq
  %v151 = vshrl.u32 %v150, 7
  %v152 = vsub.s32 0, %v151
  %v153 = vrot.slane %v148, %v152
  %v154 = vlaneseq
  %v155 = vshrl.u32 %v154, 7
  %v156 = vsub.s32 1, %v155
  %v157 = vrot.slane %v148, %v156
  %v158 = vlaneseq
  %v159 = vshrl.u32 %v158, 7
  %v160 = vsub.s32 2, %v159
  %v161 = vrot.slane %v148, %v160
  %v162 = vlaneseq
  %v163 = vshrl.u32 %v162, 7
  %v164 = vsub.s32 3, %v163
  %v165 = vrot.slane %v148, %v164
  %v166 = vlaneseq
  %v167 = vshrl.u32 %v166, 7
  %v168 = vsub.s32 4, %v167
  %v169 = vrot.slane %v148, %v168
  %v170 = vlaneseq
  %v171 = vshrl.u32 %v170, 7
  %v172 = vsub.s32 5, %v171
  %v173 = vrot.slane %v148, %v172
  %v174 = vlaneseq
  %v175 = vshrl.u32 %v174, 7
  %v176 = vsub.s32 6, %v175
  %v177 = vrot.slane %v148, %v176
  %v178 = vlaneseq
  %v179 = vshrl.u32 %v178, 7
  %v180 = vsub.s32 7, %v179
  %v181 = vrot.slane %v148, %v180
  %v196 = vunpack.c.l.b16 %v14
  %v197 = vunpack.c.h.b16 %v14
  %v198 = vunpack.c.l.b16 %v15
  %v199 = vunpack.c.h.b16 %v15
  %v200 = vunpack.c.l.b16 %v16
  %v201 = vunpack.c.h.b16 %v16
  %v202 = vunpack.c.l.b16 %v17
  %v203 = vunpack.c.h.b16 %v17
  %v204 = vunpack.c.l.b16 %v18
  %v205 = vunpack.c.h.b16 %v18
  %v206 = vunpack.c.l.b16 %v19
  %v207 = vunpack.c.h.b16 %v19
  %v208 = vpack.c.b16 %v198, %v196
  %v209 = vpack.c.b16 %v199, %v197
  %v210 = vpack.c.b16 %v202, %v200
  %v211 = vpack.c.b16 %v203, %v201
  %v212 = vpack.c.b16 %v206, %v204
  %v213 = vpack.c.b16 %v207, %v205
  %v348 = vunpack.c.l.b16 %v20
  %v349 = vunpack.c.h.b16 %v20
  %v350 = vunpack.c.l.b16 %v21
  %v351 = vunpack.c.h.b16 %v21
  %v352 = vunpack.c.l.b16 %v22
  %v353 = vunpack.c.h.b16 %v22
  %v354 = vunpack.c.l.b16 %v23
  %v355 = vunpack.c.h.b16 %v23
  %v356 = vunpack.c.l.b16 %v24
  %v357 = vunpack.c.h.b16 %v24
  %v358 = vunpack.c.l.b16 %v25
  %v359 = vunpack.c.h.b16 %v25
  %v360 = vunpack.c.l.b16 %v26
  %v361 = vunpack.c.h.b16 %v26
  %v362 = vunpack.c.l.b16 %v27
  %v363 = vunpack.c.h.b16 %v27
  %v364 = vunpack.c.l.b16 %v28
  %v365 = vunpack.c.h.b16 %v28
  %v366 = vunpack.c.l.b16 %v29
  %v367 = vunpack.c.h.b16 %v29
  %v368 = vunpack.c.l.b16 %v30
  %v369 = vunpack.c.h.b16 %v30
  %v370 = vunpack.c.l.b16 %v31
  %v371 = vunpack.c.h.b16 %v31
  %v372 = vunpack.c.l.b16 %v32
  %v373 = vunpack.c.h.b16 %v32
  %v374 = vunpack.c.l.b16 %v33
  %v375 = vunpack.c.h.b16 %v33
  %v376 = vunpack.c.l.b16 %v34
  %v377 = vunpack.c.h.b16 %v34
  %v378 = vunpack.c.l.b16 %v35
  %v379 = vunpack.c.h.b16 %v35
  %v380 = vunpack.c.l.b16 %v36
  %v381 = vunpack.c.h.b16 %v36
  %v382 = vunpack.c.l.b16 %v37
  %v383 = vunpack.c.h.b16 %v37
  %v384 = vunpack.c.l.b16 %v38
  %v385 = vunpack.c.h.b16 %v38
  %v386 = vunpack.c.l.b16 %v39
  %v387 = vunpack.c.h.b16 %v39
  %v388 = vunpack.c.l.b16 %v40
  %v389 = vunpack.c.h.b16 %v40
  %v390 = vunpack.c.l.b16 %v41
  %v391 = vunpack.c.h.b16 %v41
  %v392 = vunpack.c.l.b16 %v42
  %v393 = vunpack.c.h.b16 %v42
  %v394 = vunpack.c.l.b16 %v43
  %v395 = vunpack.c.h.b16 %v43
  %v396 = vunpack.c.l.b16 %v44
  %v397 = vunpack.c.h.b16 %v44
  %v398 = vunpack.c.l.b16 %v45
  %v399 = vunpack.c.h.b16 %v45
  %v400 = vunpack.c.l.b16 %v46
  %v401 = vunpack.c.h.b16 %v46
  %v402 = vunpack.c.l.b16 %v47
  %v403 = vunpack.c.h.b16 %v47
  %v404 = vunpack.c.l.b16 %v48
  %v405 = vunpack.c.h.b16 %v48
  %v406 = vunpack.c.l.b16 %v49
  %v407 = vunpack.c.h.b16 %v49
  %v408 = vunpack.c.l.b16 %v50
  %v409 = vunpack.c.h.b16 %v50
  %v410 = vunpack.c.l.b16 %v51
  %v411 = vunpack.c.h.b16 %v51
  %v412 = vunpack.c.l.b16 %v52
  %v413 = vunpack.c.h.b16 %v52
  %v414 = vunpack.c.l.b16 %v53
  %v415 = vunpack.c.h.b16 %v53
  %v416 = vunpack.c.l.b16 %v54
  %v417 = vunpack.c.h.b16 %v54
  %v418 = vunpack.c.l.b16 %v55
  %v419 = vunpack.c.h.b16 %v55
  %v420 = vunpack.c.l.b16 %v56
  %v421 = vunpack.c.h.b16 %v56
  %v422 = vunpack.c.l.b16 %v57
  %v423 = vunpack.c.h.b16 %v57
  %v424 = vunpack.c.l.b16 %v58
  %v425 = vunpack.c.h.b16 %v58
  %v426 = vunpack.c.l.b16 %v59
  %v427 = vunpack.c.h.b16 %v59
  %v428 = vunpack.c.l.b16 %v60
  %v429 = vunpack.c.h.b16 %v60
  %v430 = vunpack.c.l.b16 %v61
  %v431 = vunpack.c.h.b16 %v61
  %v432 = vunpack.c.l.b16 %v62
  %v433 = vunpack.c.h.b16 %v62
  %v434 = vunpack.c.l.b16 %v63
  %v435 = vunpack.c.h.b16 %v63
  %v436 = vunpack.c.l.b16 %v64
  %v437 = vunpack.c.h.b16 %v64
  %v438 = vunpack.c.l.b16 %v65
  %v439 = vunpack.c.h.b16 %v65
  %v440 = vunpack.c.l.b16 %v66
  %v441 = vunpack.c.h.b16 %v66
  %v442 = vunpack.c.l.b16 %v67
  %v443 = vunpack.c.h.b16 %v67
  %v444 = vunpack.c.l.b16 %v68
  %v445 = vunpack.c.h.b16 %v68
  %v446 = vunpack.c.l.b16 %v69
  %v447 = vunpack.c.h.b16 %v69
  %v448 = vunpack.c.l.b16 %v70
  %v449 = vunpack.c.h.b16 %v70
  %v450 = vunpack.c.l.b16 %v71
  %v451 = vunpack.c.h.b16 %v71
  %v452 = vunpack.c.l.b16 %v72
  %v453 = vunpack.c.h.b16 %v72
  %v454 = vunpack.c.l.b16 %v73
  %v455 = vunpack.c.h.b16 %v73
  %v456 = vunpack.c.l.b16 %v74
  %v457 = vunpack.c.h.b16 %v74
  %v458 = vunpack.c.l.b16 %v75
  %v459 = vunpack.c.h.b16 %v75
  %v460 = vunpack.c.l.b16 %v76
  %v461 = vunpack.c.h.b16 %v76
  %v462 = vunpack.c.l.b16 %v77
  %v463 = vunpack.c.h.b16 %v77
  %v464 = vunpack.c.l.b16 %v78
  %v465 = vunpack.c.h.b16 %v78
  %v466 = vunpack.c.l.b16 %v79
  %v467 = vunpack.c.h.b16 %v79
  %v468 = vunpack.c.l.b16 %v80
  %v469 = vunpack.c.h.b16 %v80
  %v470 = vunpack.c.l.b16 %v81
  %v471 = vunpack.c.h.b16 %v81
  %v472 = vunpack.c.l.b16 %v82
  %v473 = vunpack.c.h.b16 %v82
  %v474 = vunpack.c.l.b16 %v83
  %v475 = vunpack.c.h.b16 %v83
  %v476 = vunpack.c.l.b16 %v84
  %v477 = vunpack.c.h.b16 %v84
  %v478 = vunpack.c.l.b16 %v85
  %v479 = vunpack.c.h.b16 %v85
  %v480 = vunpack.c.l.b16 %v86
  %v481 = vunpack.c.h.b16 %v86
  %v482 = vunpack.c.l.b16 %v87
  %v483 = vunpack.c.h.b16 %v87
  %v484 = vunpack.c.l.b16 %v88
  %v485 = vunpack.c.h.b16 %v88
  %v486 = vunpack.c.l.b16 %v89
  %v487 = vunpack.c.h.b16 %v89
  %v488 = vunpack.c.l.b16 %v90
  %v489 = vunpack.c.h.b16 %v90
  %v490 = vunpack.c.l.b16 %v91
  %v491 = vunpack.c.h.b16 %v91
  %v492 = vunpack.c.l.b16 %v92
  %v493 = vunpack.c.h.b16 %v92
  %v494 = vunpack.c.l.b16 %v93
  %v495 = vunpack.c.h.b16 %v93
  %v496 = vunpack.c.l.b16 %v94
  %v497 = vunpack.c.h.b16 %v94
  %v498 = vunpack.c.l.b16 %v95
  %v499 = vunpack.c.h.b16 %v95
  %v500 = vunpack.c.l.b16 %v96
  %v501 = vunpack.c.h.b16 %v96
  %v502 = vunpack.c.l.b16 %v97
  %v503 = vunpack.c.h.b16 %v97
  %v504 = vunpack.c.l.b16 %v98
  %v505 = vunpack.c.h.b16 %v98
  %v506 = vunpack.c.l.b16 %v99
  %v507 = vunpack.c.h.b16 %v99
  %v508 = vunpack.c.l.b16 %v100
  %v509 = vunpack.c.h.b16 %v100
  %v510 = vunpack.c.l.b16 %v101
  %v511 = vunpack.c.h.b16 %v101
  %v512 = vunpack.c.l.b16 %v102
  %v513 = vunpack.c.h.b16 %v102
  %v514 = vunpack.c.l.b16 %v103
  %v515 = vunpack.c.h.b16 %v103
  %v516 = vunpack.c.l.b16 %v104
  %v517 = vunpack.c.h.b16 %v104
  %v518 = vunpack.c.l.b16 %v105
  %v519 = vunpack.c.h.b16 %v105
  %v520 = vunpack.c.l.b16 %v106
  %v521 = vunpack.c.h.b16 %v106
  %v522 = vunpack.c.l.b16 %v107
  %v523 = vunpack.c.h.b16 %v107
  %v524 = vunpack.c.l.b16 %v108
  %v525 = vunpack.c.h.b16 %v108
  %v526 = vunpack.c.l.b16 %v109
  %v527 = vunpack.c.h.b16 %v109
  %v528 = vunpack.c.l.b16 %v110
  %v529 = vunpack.c.h.b16 %v110
  %v530 = vunpack.c.l.b16 %v111
  %v531 = vunpack.c.h.b16 %v111
  %v532 = vunpack.c.l.b16 %v112
  %v533 = vunpack.c.h.b16 %v112
  %v534 = vunpack.c.l.b16 %v113
  %v535 = vunpack.c.h.b16 %v113
  %v536 = vunpack.c.l.b16 %v114
  %v537 = vunpack.c.h.b16 %v114
  %v538 = vunpack.c.l.b16 %v115
  %v539 = vunpack.c.h.b16 %v115
  %v540 = vunpack.c.l.b16 %v116
  %v541 = vunpack.c.h.b16 %v116
  %v542 = vunpack.c.l.b16 %v117
  %v543 = vunpack.c.h.b16 %v117
  %v544 = vunpack.c.l.b16 %v118
  %v545 = vunpack.c.h.b16 %v118
  %v546 = vunpack.c.l.b16 %v119
  %v547 = vunpack.c.h.b16 %v119
  %v548 = vunpack.c.l.b16 %v120
  %v549 = vunpack.c.h.b16 %v120
  %v550 = vunpack.c.l.b16 %v121
  %v551 = vunpack.c.h.b16 %v121
  %v552 = vunpack.c.l.b16 %v122
  %v553 = vunpack.c.h.b16 %v122
  %v554 = vunpack.c.l.b16 %v123
  %v555 = vunpack.c.h.b16 %v123
  %v556 = vunpack.c.l.b16 %v124
  %v557 = vunpack.c.h.b16 %v124
  %v558 = vunpack.c.l.b16 %v125
  %v559 = vunpack.c.h.b16 %v125
  %v560 = vunpack.c.l.b16 %v126
  %v561 = vunpack.c.h.b16 %v126
  %v562 = vunpack.c.l.b16 %v127
  %v563 = vunpack.c.h.b16 %v127
  %v564 = vunpack.c.l.b16 %v128
  %v565 = vunpack.c.h.b16 %v128
  %v566 = vunpack.c.l.b16 %v129
  %v567 = vunpack.c.h.b16 %v129
  %v568 = vunpack.c.l.b16 %v130
  %v569 = vunpack.c.h.b16 %v130
  %v570 = vunpack.c.l.b16 %v131
  %v571 = vunpack.c.h.b16 %v131
  %v572 = vunpack.c.l.b16 %v132
  %v573 = vunpack.c.h.b16 %v132
  %v574 = vunpack.c.l.b16 %v133
  %v575 = vunpack.c.h.b16 %v133
  %v576 = vunpack.c.l.b16 %v134
  %v577 = vunpack.c.h.b16 %v134
  %v578 = vunpack.c.l.b16 %v135
  %v579 = vunpack.c.h.b16 %v135
  %v580 = vunpack.c.l.b16 %v136
  %v581 = vunpack.c.h.b16 %v136
  %v582 = vunpack.c.l.b16 %v137
  %v583 = vunpack.c.h.b16 %v137
  %v584 = vunpack.c.l.b16 %v138
  %v585 = vunpack.c.h.b16 %v138
  %v586 = vunpack.c.l.b16 %v139
  %v587 = vunpack.c.h.b16 %v139
  %v588 = vunpack.c.l.b16 %v140
  %v589 = vunpack.c.h.b16 %v140
  %v590 = vunpack.c.l.b16 %v141
  %v591 = vunpack.c.h.b16 %v141
  %v592 = vunpack.c.l.b16 %v142
  %v593 = vunpack.c.h.b16 %v142
  %v594 = vunpack.c.l.b16 %v143
  %v595 = vunpack.c.h.b16 %v143
  %v596 = vunpack.c.l.b16 %v144
  %v597 = vunpack.c.h.b16 %v144
  %v598 = vunpack.c.l.b16 %v145
  %v599 = vunpack.c.h.b16 %v145
  %v600 = vunpack.c.l.b16 %v146
  %v601 = vunpack.c.h.b16 %v146
  %v602 = vunpack.c.l.b16 %v147
  %v603 = vunpack.c.h.b16 %v147
  %v604 = vpack.c.b16 %v356, %v348
  %v605 = vpack.c.b16 %v357, %v349
  %v606 = vpack.c.b16 %v358, %v350
  %v607 = vpack.c.b16 %v359, %v351
  %v608 = vpack.c.b16 %v360, %v352
  %v609 = vpack.c.b16 %v361, %v353
  %v610 = vpack.c.b16 %v362, %v354
  %v611 = vpack.c.b16 %v363, %v355
  %v612 = vpack.c.b16 %v372, %v364
  %v613 = vpack.c.b16 %v373, %v365
  %v614 = vpack.c.b16 %v374, %v366
  %v615 = vpack.c.b16 %v375, %v367
  %v616 = vpack.c.b16 %v376, %v368
  %v617 = vpack.c.b16 %v377, %v369
  %v618 = vpack.c.b16 %v378, %v370
  %v619 = vpack.c.b16 %v379, %v371
  %v620 = vpack.c.b16 %v388, %v380
  %v621 = vpack.c.b16 %v389, %v381
  %v622 = vpack.c.b16 %v390, %v382
  %v623 = vpack.c.b16 %v391, %v383
  %v624 = vpack.c.b16 %v392, %v384
  %v625 = vpack.c.b16 %v393, %v385
  %v626 = vpack.c.b16 %v394, %v386
  %v627 = vpack.c.b16 %v395, %v387
  %v628 = vpack.c.b16 %v404, %v396
  %v629 = vpack.c.b16 %v405, %v397
  %v630 = vpack.c.b16 %v406, %v398
  %v631 = vpack.c.b16 %v407, %v399
  %v632 = vpack.c.b16 %v408, %v400
  %v633 = vpack.c.b16 %v409, %v401
  %v634 = vpack.c.b16 %v410, %v402
  %v635 = vpack.c.b16 %v411, %v403
  %v636 = vpack.c.b16 %v420, %v412
  %v637 = vpack.c.b16 %v421, %v413
  %v638 = vpack.c.b16 %v422, %v414
  %v639 = vpack.c.b16 %v423, %v415
  %v640 = vpack.c.b16 %v424, %v416
  %v641 = vpack.c.b16 %v425, %v417
  %v642 = vpack.c.b16 %v426, %v418
  %v643 = vpack.c.b16 %v427, %v419
  %v644 = vpack.c.b16 %v436, %v428
  %v645 = vpack.c.b16 %v437, %v429
  %v646 = vpack.c.b16 %v438, %v430
  %v647 = vpack.c.b16 %v439, %v431
  %v648 = vpack.c.b16 %v440, %v432
  %v649 = vpack.c.b16 %v441, %v433
  %v650 = vpack.c.b16 %v442, %v434
  %v651 = vpack.c.b16 %v443, %v435
  %v652 = vpack.c.b16 %v452, %v444
  %v653 = vpack.c.b16 %v453, %v445
  %v654 = vpack.c.b16 %v454, %v446
  %v655 = vpack.c.b16 %v455, %v447
  %v656 = vpack.c.b16 %v456, %v448
  %v657 = vpack.c.b16 %v457, %v449
  %v658 = vpack.c.b16 %v458, %v450
  %v659 = vpack.c.b16 %v459, %v451
  %v660 = vpack.c.b16 %v468, %v460
  %v661 = vpack.c.b16 %v469, %v461
  %v662 = vpack.c.b16 %v470, %v462
  %v663 = vpack.c.b16 %v471, %v463
  %v664 = vpack.c.b16 %v472, %v464
  %v665 = vpack.c.b16 %v473, %v465
  %v666 = vpack.c.b16 %v474, %v466
  %v667 = vpack.c.b16 %v475, %v467
  %v668 = vpack.c.b16 %v484, %v476
  %v669 = vpack.c.b16 %v485, %v477
  %v670 = vpack.c.b16 %v486, %v478
  %v671 = vpack.c.b16 %v487, %v479
  %v672 = vpack.c.b16 %v488, %v480
  %v673 = vpack.c.b16 %v489, %v481
  %v674 = vpack.c.b16 %v490, %v482
  %v675 = vpack.c.b16 %v491, %v483
  %v676 = vpack.c.b16 %v500, %v492
  %v677 = vpack.c.b16 %v501, %v493
  %v678 = vpack.c.b16 %v502, %v494
  %v679 = vpack.c.b16 %v503, %v495
  %v680 = vpack.c.b16 %v504, %v496
  %v681 = vpack.c.b16 %v505, %v497
  %v682 = vpack.c.b16 %v506, %v498
  %v683 = vpack.c.b16 %v507, %v499
  %v684 = vpack.c.b16 %v516, %v508
  %v685 = vpack.c.b16 %v517, %v509
  %v686 = vpack.c.b16 %v518, %v510
  %v687 = vpack.c.b16 %v519, %v511
  %v688 = vpack.c.b16 %v520, %v512
  %v689 = vpack.c.b16 %v521, %v513
  %v690 = vpack.c.b16 %v522, %v514
  %v691 = vpack.c.b16 %v523, %v515
  %v692 = vpack.c.b16 %v532, %v524
  %v693 = vpack.c.b16 %v533, %v525
  %v694 = vpack.c.b16 %v534, %v526
  %v695 = vpack.c.b16 %v535, %v527
  %v696 = vpack.c.b16 %v536, %v528
  %v697 = vpack.c.b16 %v537, %v529
  %v698 = vpack.c.b16 %v538, %v530
  %v699 = vpack.c.b16 %v539, %v531
  %v700 = vpack.c.b16 %v548, %v540
  %v701 = vpack.c.b16 %v549, %v541
  %v702 = vpack.c.b16 %v550, %v542
  %v703 = vpack.c.b16 %v551, %v543
  %v704 = vpack.c.b16 %v552, %v544
  %v705 = vpack.c.b16 %v553, %v545
  %v706 = vpack.c.b16 %v554, %v546
  %v707 = vpack.c.b16 %v555, %v547
  %v708 = vpack.c.b16 %v564, %v556
  %v709 = vpack.c.b16 %v565, %v557
  %v710 = vpack.c.b16 %v566, %v558
  %v711 = vpack.c.b16 %v567, %v559
  %v712 = vpack.c.b16 %v568, %v560
  %v713 = vpack.c.b16 %v569, %v561
  %v714 = vpack.c.b16 %v570, %v562
  %v715 = vpack.c.b16 %v571, %v563
  %v716 = vpack.c.b16 %v580, %v572
  %v717 = vpack.c.b16 %v581, %v573
  %v718 = vpack.c.b16 %v582, %v574
  %v719 = vpack.c.b16 %v583, %v575
  %v720 = vpack.c.b16 %v584, %v576
  %v721 = vpack.c.b16 %v585, %v577
  %v722 = vpack.c.b16 %v586, %v578
  %v723 = vpack.c.b16 %v587, %v579
  %v724 = vpack.c.b16 %v596, %v588
  %v725 = vpack.c.b16 %v597, %v589
  %v726 = vpack.c.b16 %v598, %v590
  %v727 = vpack.c.b16 %v599, %v591
  %v728 = vpack.c.b16 %v600, %v592
  %v729 = vpack.c.b16 %v601, %v593
  %v730 = vpack.c.b16 %v602, %v594
  %v731 = vpack.c.b16 %v603, %v595
  %860 = vmatprep.subr.bf16.mxu0 %v605
  %861 = vmatpush1.bf16.msra.mxu0 %v604
  %862 = vmatprep.subr.bf16.mxu0 %v613
  %863 = vmatpush1.bf16.msra.mxu0 %v612
  %864 = vmatprep.subr.bf16.mxu0 %v621
  %865 = vmatpush1.bf16.msra.mxu0 %v620
  %866 = vmatprep.subr.bf16.mxu0 %v629
  %867 = vmatpush1.bf16.msra.mxu0 %v628
  %868 = vmatprep.subr.bf16.mxu0 %v637
  %869 = vmatpush1.bf16.msra.mxu0 %v636
  %870 = vmatprep.subr.bf16.mxu0 %v645
  %871 = vmatpush1.bf16.msra.mxu0 %v644
  %872 = vmatprep.subr.bf16.mxu0 %v653
  %873 = vmatpush1.bf16.msra.mxu0 %v652
  %874 = vmatprep.subr.bf16.mxu0 %v661
  %875 = vmatpush1.bf16.msra.mxu0 %v660
  %876 = vmatprep.subr.bf16.mxu0 %v669
  %877 = vmatpush1.bf16.msra.mxu0 %v668
  %878 = vmatprep.subr.bf16.mxu0 %v677
  %879 = vmatpush1.bf16.msra.mxu0 %v676
  %880 = vmatprep.subr.bf16.mxu0 %v685
  %881 = vmatpush1.bf16.msra.mxu0 %v684
  %882 = vmatprep.subr.bf16.mxu0 %v693
  %883 = vmatpush1.bf16.msra.mxu0 %v692
  %884 = vmatprep.subr.bf16.mxu0 %v701
  %885 = vmatpush1.bf16.msra.mxu0 %v700
  %886 = vmatprep.subr.bf16.mxu0 %v709
  %887 = vmatpush1.bf16.msra.mxu0 %v708
  %888 = vmatprep.subr.bf16.mxu0 %v717
  %889 = vmatpush1.bf16.msra.mxu0 %v716
  %890 = vmatprep.subr.bf16.mxu0 %v725
  %891 = vmatpush1.bf16.msra.mxu0 %v724
  %892 = vmatprep.mubr.bf16.mxu0 %v209
  %893 = vmatmul.mubr.bf16.gmra.mrb[0].mxu0 %v208
  %v894 = vpop.f32.mrb[0].mxu0
  %v895 = vadd.f32 %v153, %v894
  %v896 = vpop.f32.mrb[0].mxu0
  %v897 = vadd.f32 %v157, %v896
  %v898 = vpop.f32.mrb[0].mxu0
  %v899 = vadd.f32 %v153, %v898
  %v900 = vpop.f32.mrb[0].mxu0
  %v901 = vadd.f32 %v157, %v900
  %902 = vmatprep.mubr.bf16.mxu0 %v211
  %903 = vmatmul.mubr.bf16.gmra.mrb[0].mxu0 %v210
  %v904 = vpop.f32.mrb[0].mxu0
  %v905 = vadd.f32 %v153, %v904
  %v906 = vpop.f32.mrb[0].mxu0
  %v907 = vadd.f32 %v157, %v906
  %v908 = vpop.f32.mrb[0].mxu0
  %v909 = vadd.f32 %v153, %v908
  %v910 = vpop.f32.mrb[0].mxu0
  %v911 = vadd.f32 %v157, %v910
  %912 = vmatprep.mubr.bf16.mxu0 %v213
  %913 = vmatmul.mubr.bf16.gmra.mrb[0].mxu0 %v212
  %v914 = vpop.f32.mrb[0].mxu0
  %v915 = vadd.f32 %v153, %v914
  %v916 = vpop.f32.mrb[0].mxu0
  %v917 = vadd.f32 %v157, %v916
  %v918 = vpop.f32.mrb[0].mxu0
  %v919 = vadd.f32 %v153, %v918
  %v920 = vpop.f32.mrb[0].mxu0
  %v921 = vadd.f32 %v157, %v920
  %922 = vdwg.mxu0
  %923 = vmatprep.subr.bf16.mxu0 %v607
  %924 = vmatpush1.bf16.msra.mxu0 %v606
  %925 = vmatprep.subr.bf16.mxu0 %v615
  %926 = vmatpush1.bf16.msra.mxu0 %v614
  %927 = vmatprep.subr.bf16.mxu0 %v623
  %928 = vmatpush1.bf16.msra.mxu0 %v622
  %929 = vmatprep.subr.bf16.mxu0 %v631
  %930 = vmatpush1.bf16.msra.mxu0 %v630
  %931 = vmatprep.subr.bf16.mxu0 %v639
  %932 = vmatpush1.bf16.msra.mxu0 %v638
  %933 = vmatprep.subr.bf16.mxu0 %v647
  %934 = vmatpush1.bf16.msra.mxu0 %v646
  %935 = vmatprep.subr.bf16.mxu0 %v655
  %936 = vmatpush1.bf16.msra.mxu0 %v654
  %937 = vmatprep.subr.bf16.mxu0 %v663
  %938 = vmatpush1.bf16.msra.mxu0 %v662
  %939 = vmatprep.subr.bf16.mxu0 %v671
  %940 = vmatpush1.bf16.msra.mxu0 %v670
  %941 = vmatprep.subr.bf16.mxu0 %v679
  %942 = vmatpush1.bf16.msra.mxu0 %v678
  %943 = vmatprep.subr.bf16.mxu0 %v687
  %944 = vmatpush1.bf16.msra.mxu0 %v686
  %945 = vmatprep.subr.bf16.mxu0 %v695
  %946 = vmatpush1.bf16.msra.mxu0 %v694
  %947 = vmatprep.subr.bf16.mxu0 %v703
  %948 = vmatpush1.bf16.msra.mxu0 %v702
  %949 = vmatprep.subr.bf16.mxu0 %v711
  %950 = vmatpush1.bf16.msra.mxu0 %v710
  %951 = vmatprep.subr.bf16.mxu0 %v719
  %952 = vmatpush1.bf16.msra.mxu0 %v718
  %953 = vmatprep.subr.bf16.mxu0 %v727
  %954 = vmatpush1.bf16.msra.mxu0 %v726
  %955 = vmatprep.mubr.bf16.mxu0 %v209
  %956 = vmatmul.mubr.bf16.gmra.mrb[0].mxu0 %v208
  %v957 = vpop.f32.mrb[0].mxu0
  %v958 = vadd.f32 %v161, %v957
  %v959 = vpop.f32.mrb[0].mxu0
  %v960 = vadd.f32 %v165, %v959
  %v961 = vpop.f32.mrb[0].mxu0
  %v962 = vadd.f32 %v161, %v961
  %v963 = vpop.f32.mrb[0].mxu0
  %v964 = vadd.f32 %v165, %v963
  %965 = vmatprep.mubr.bf16.mxu0 %v211
  %966 = vmatmul.mubr.bf16.gmra.mrb[0].mxu0 %v210
  %v967 = vpop.f32.mrb[0].mxu0
  %v968 = vadd.f32 %v161, %v967
  %v969 = vpop.f32.mrb[0].mxu0
  %v970 = vadd.f32 %v165, %v969
  %v971 = vpop.f32.mrb[0].mxu0
  %v972 = vadd.f32 %v161, %v971
  %v973 = vpop.f32.mrb[0].mxu0
  %v974 = vadd.f32 %v165, %v973
  %975 = vmatprep.mubr.bf16.mxu0 %v213
  %976 = vmatmul.mubr.bf16.gmra.mrb[0].mxu0 %v212
  %v977 = vpop.f32.mrb[0].mxu0
  %v978 = vadd.f32 %v161, %v977
  %v979 = vpop.f32.mrb[0].mxu0
  %v980 = vadd.f32 %v165, %v979
  %v981 = vpop.f32.mrb[0].mxu0
  %v982 = vadd.f32 %v161, %v981
  %v983 = vpop.f32.mrb[0].mxu0
  %v984 = vadd.f32 %v165, %v983
  %985 = vdwg.mxu0
  %986 = vmatprep.subr.bf16.mxu0 %v609
  %987 = vmatpush1.bf16.msra.mxu0 %v608
  %988 = vmatprep.subr.bf16.mxu0 %v617
  %989 = vmatpush1.bf16.msra.mxu0 %v616
  %990 = vmatprep.subr.bf16.mxu0 %v625
  %991 = vmatpush1.bf16.msra.mxu0 %v624
  %992 = vmatprep.subr.bf16.mxu0 %v633
  %993 = vmatpush1.bf16.msra.mxu0 %v632
  %994 = vmatprep.subr.bf16.mxu0 %v641
  %995 = vmatpush1.bf16.msra.mxu0 %v640
  %996 = vmatprep.subr.bf16.mxu0 %v649
  %997 = vmatpush1.bf16.msra.mxu0 %v648
  %998 = vmatprep.subr.bf16.mxu0 %v657
  %999 = vmatpush1.bf16.msra.mxu0 %v656
  %1000 = vmatprep.subr.bf16.mxu0 %v665
  %1001 = vmatpush1.bf16.msra.mxu0 %v664
  %1002 = vmatprep.subr.bf16.mxu0 %v673
  %1003 = vmatpush1.bf16.msra.mxu0 %v672
  %1004 = vmatprep.subr.bf16.mxu0 %v681
  %1005 = vmatpush1.bf16.msra.mxu0 %v680
  %1006 = vmatprep.subr.bf16.mxu0 %v689
  %1007 = vmatpush1.bf16.msra.mxu0 %v688
  %1008 = vmatprep.subr.bf16.mxu0 %v697
  %1009 = vmatpush1.bf16.msra.mxu0 %v696
  %1010 = vmatprep.subr.bf16.mxu0 %v705
  %1011 = vmatpush1.bf16.msra.mxu0 %v704
  %1012 = vmatprep.subr.bf16.mxu0 %v713
  %1013 = vmatpush1.bf16.msra.mxu0 %v712
  %1014 = vmatprep.subr.bf16.mxu0 %v721
  %1015 = vmatpush1.bf16.msra.mxu0 %v720
  %1016 = vmatprep.subr.bf16.mxu0 %v729
  %1017 = vmatpush1.bf16.msra.mxu0 %v728
  %1018 = vmatprep.mubr.bf16.mxu0 %v209
  %1019 = vmatmul.mubr.bf16.gmra.mrb[0].mxu0 %v208
  %v1020 = vpop.f32.mrb[0].mxu0
  %v1021 = vadd.f32 %v169, %v1020
  %v1022 = vpop.f32.mrb[0].mxu0
  %v1023 = vadd.f32 %v173, %v1022
  %v1024 = vpop.f32.mrb[0].mxu0
  %v1025 = vadd.f32 %v169, %v1024
  %v1026 = vpop.f32.mrb[0].mxu0
  %v1027 = vadd.f32 %v173, %v1026
  %1028 = vmatprep.mubr.bf16.mxu0 %v211
  %1029 = vmatmul.mubr.bf16.gmra.mrb[0].mxu0 %v210
  %v1030 = vpop.f32.mrb[0].mxu0
  %v1031 = vadd.f32 %v169, %v1030
  %v1032 = vpop.f32.mrb[0].mxu0
  %v1033 = vadd.f32 %v173, %v1032
  %v1034 = vpop.f32.mrb[0].mxu0
  %v1035 = vadd.f32 %v169, %v1034
  %v1036 = vpop.f32.mrb[0].mxu0
  %v1037 = vadd.f32 %v173, %v1036
  %1038 = vmatprep.mubr.bf16.mxu0 %v213
  %1039 = vmatmul.mubr.bf16.gmra.mrb[0].mxu0 %v212
  %v1040 = vpop.f32.mrb[0].mxu0
  %v1041 = vadd.f32 %v169, %v1040
  %v1042 = vpop.f32.mrb[0].mxu0
  %v1043 = vadd.f32 %v173, %v1042
  %v1044 = vpop.f32.mrb[0].mxu0
  %v1045 = vadd.f32 %v169, %v1044
  %v1046 = vpop.f32.mrb[0].mxu0
  %v1047 = vadd.f32 %v173, %v1046
  %1048 = vdwg.mxu0
  %1049 = vmatprep.subr.bf16.mxu0 %v611
  %1050 = vmatpush1.bf16.msra.mxu0 %v610
  %1051 = vmatprep.subr.bf16.mxu0 %v619
  %1052 = vmatpush1.bf16.msra.mxu0 %v618
  %1053 = vmatprep.subr.bf16.mxu0 %v627
  %1054 = vmatpush1.bf16.msra.mxu0 %v626
  %1055 = vmatprep.subr.bf16.mxu0 %v635
  %1056 = vmatpush1.bf16.msra.mxu0 %v634
  %1057 = vmatprep.subr.bf16.mxu0 %v643
  %1058 = vmatpush1.bf16.msra.mxu0 %v642
  %1059 = vmatprep.subr.bf16.mxu0 %v651
  %1060 = vmatpush1.bf16.msra.mxu0 %v650
  %1061 = vmatprep.subr.bf16.mxu0 %v659
  %1062 = vmatpush1.bf16.msra.mxu0 %v658
  %1063 = vmatprep.subr.bf16.mxu0 %v667
  %1064 = vmatpush1.bf16.msra.mxu0 %v666
  %1065 = vmatprep.subr.bf16.mxu0 %v675
  %1066 = vmatpush1.bf16.msra.mxu0 %v674
  %1067 = vmatprep.subr.bf16.mxu0 %v683
  %1068 = vmatpush1.bf16.msra.mxu0 %v682
  %1069 = vmatprep.subr.bf16.mxu0 %v691
  %1070 = vmatpush1.bf16.msra.mxu0 %v690
  %1071 = vmatprep.subr.bf16.mxu0 %v699
  %1072 = vmatpush1.bf16.msra.mxu0 %v698
  %1073 = vmatprep.subr.bf16.mxu0 %v707
  %1074 = vmatpush1.bf16.msra.mxu0 %v706
  %1075 = vmatprep.subr.bf16.mxu0 %v715
  %1076 = vmatpush1.bf16.msra.mxu0 %v714
  %1077 = vmatprep.subr.bf16.mxu0 %v723
  %1078 = vmatpush1.bf16.msra.mxu0 %v722
  %1079 = vmatprep.subr.bf16.mxu0 %v731
  %1080 = vmatpush1.bf16.msra.mxu0 %v730
  %1081 = vmatprep.mubr.bf16.mxu0 %v209
  %1082 = vmatmul.mubr.bf16.gmra.mrb[0].mxu0 %v208
  %v1083 = vpop.f32.mrb[0].mxu0
  %v1084 = vadd.f32 %v177, %v1083
  %v1085 = vpop.f32.mrb[0].mxu0
  %v1086 = vadd.f32 %v181, %v1085
  %v1087 = vpop.f32.mrb[0].mxu0
  %v1088 = vadd.f32 %v177, %v1087
  %v1089 = vpop.f32.mrb[0].mxu0
  %v1090 = vadd.f32 %v181, %v1089
  %1091 = vmatprep.mubr.bf16.mxu0 %v211
  %1092 = vmatmul.mubr.bf16.gmra.mrb[0].mxu0 %v210
  %v1093 = vpop.f32.mrb[0].mxu0
  %v1094 = vadd.f32 %v177, %v1093
  %v1095 = vpop.f32.mrb[0].mxu0
  %v1096 = vadd.f32 %v181, %v1095
  %v1097 = vpop.f32.mrb[0].mxu0
  %v1098 = vadd.f32 %v177, %v1097
  %v1099 = vpop.f32.mrb[0].mxu0
  %v1100 = vadd.f32 %v181, %v1099
  %1101 = vmatprep.mubr.bf16.mxu0 %v213
  %1102 = vmatmul.mubr.bf16.gmra.mrb[0].mxu0 %v212
  %v1103 = vpop.f32.mrb[0].mxu0
  %v1104 = vadd.f32 %v177, %v1103
  %v1105 = vpop.f32.mrb[0].mxu0
  %v1106 = vadd.f32 %v181, %v1105
  %v1107 = vpop.f32.mrb[0].mxu0
  %v1108 = vadd.f32 %v177, %v1107
  %v1109 = vpop.f32.mrb[0].mxu0
  %v1110 = vadd.f32 %v181, %v1109
  %1111 = vdwg.mxu0
  %1112 = vst [vmem:[%s3] sm:$0xff] %v895
  %1113 = vst [vmem:[%s3 + $0x8] sm:$0xff] %v897
  %1114 = vst [vmem:[%s3 + $0x10] sm:$0xff] %v958
  %1115 = vst [vmem:[%s3 + $0x18] sm:$0xff] %v960
  %1116 = vst [vmem:[%s3 + $0x20] sm:$0xff] %v1021
  %1117 = vst [vmem:[%s3 + $0x28] sm:$0xff] %v1023
  %1118 = vst [vmem:[%s3 + $0x30] sm:$0xff] %v1084
  %1119 = vst [vmem:[%s3 + $0x38] sm:$0xff] %v1086
  %1120 = vst [vmem:[%s3 + $0x40] sm:$0xff] %v899
  %1121 = vst [vmem:[%s3 + $0x48] sm:$0xff] %v901
  %1122 = vst [vmem:[%s3 + $0x50] sm:$0xff] %v962
  %1123 = vst [vmem:[%s3 + $0x58] sm:$0xff] %v964
  %1124 = vst [vmem:[%s3 + $0x60] sm:$0xff] %v1025
  %1125 = vst [vmem:[%s3 + $0x68] sm:$0xff] %v1027
  %1126 = vst [vmem:[%s3 + $0x70] sm:$0xff] %v1088
  %1127 = vst [vmem:[%s3 + $0x78] sm:$0xff] %v1090
  %1128 = vst [vmem:[%s3 + $0x80] sm:$0xff] %v905
  %1129 = vst [vmem:[%s3 + $0x88] sm:$0xff] %v907
  %1130 = vst [vmem:[%s3 + $0x90] sm:$0xff] %v968
  %1131 = vst [vmem:[%s3 + $0x98] sm:$0xff] %v970
  %1132 = vst [vmem:[%s3 + $0xa0] sm:$0xff] %v1031
  %1133 = vst [vmem:[%s3 + $0xa8] sm:$0xff] %v1033
  %1134 = vst [vmem:[%s3 + $0xb0] sm:$0xff] %v1094
  %1135 = vst [vmem:[%s3 + $0xb8] sm:$0xff] %v1096
  %1136 = vst [vmem:[%s3 + $0xc0] sm:$0xff] %v909
  %1137 = vst [vmem:[%s3 + $0xc8] sm:$0xff] %v911
  %1138 = vst [vmem:[%s3 + $0xd0] sm:$0xff] %v972
  %1139 = vst [vmem:[%s3 + $0xd8] sm:$0xff] %v974
  %1140 = vst [vmem:[%s3 + $0xe0] sm:$0xff] %v1035
  %1141 = vst [vmem:[%s3 + $0xe8] sm:$0xff] %v1037
  %1142 = vst [vmem:[%s3 + $0xf0] sm:$0xff] %v1098
  %1143 = vst [vmem:[%s3 + $0xf8] sm:$0xff] %v1100
  %1144 = vst [vmem:[%s3 + $0x100] sm:$0xff] %v915
  %1145 = vst [vmem:[%s3 + $0x108] sm:$0xff] %v917
  %1146 = vst [vmem:[%s3 + $0x110] sm:$0xff] %v978
  %1147 = vst [vmem:[%s3 + $0x118] sm:$0xff] %v980
  %1148 = vst [vmem:[%s3 + $0x120] sm:$0xff] %v1041
  %1149 = vst [vmem:[%s3 + $0x128] sm:$0xff] %v1043
  %1150 = vst [vmem:[%s3 + $0x130] sm:$0xff] %v1104
  %1151 = vst [vmem:[%s3 + $0x138] sm:$0xff] %v1106
  %1152 = vst [vmem:[%s3 + $0x140] sm:$0xff] %v919
  %1153 = vst [vmem:[%s3 + $0x148] sm:$0xff] %v921
  %1154 = vst [vmem:[%s3 + $0x150] sm:$0xff] %v982
  %1155 = vst [vmem:[%s3 + $0x158] sm:$0xff] %v984
  %1156 = vst [vmem:[%s3 + $0x160] sm:$0xff] %v1045
  %1157 = vst [vmem:[%s3 + $0x168] sm:$0xff] %v1047
  %1158 = vst [vmem:[%s3 + $0x170] sm:$0xff] %v1108
  %1159 = vst [vmem:[%s3 + $0x178] sm:$0xff] %v1110
  // Predicated region
  $region14: #{selfnet_forward.4} parent=0 // pred_check
    _
  $region15: #{selfnet_forward.4} parent=0 // pred_check_branch
    %1161 = sbr.rel (0) target = $region17
  $region16: #{selfnet_forward.4} parent=0 // pred_region
    _
  $region17: #{selfnet_forward.4} parent=0 // pred_fallthru
    _
  // Predicated region
  $region18: #{selfnet_forward.4} parent=0 // pred_check
    _
  $region19: #{selfnet_forward.4} parent=0 // pred_check_branch
    %1163 = sbr.rel (0) target = $region21
  $region20: #{selfnet_forward.4} parent=0 // pred_region
    _
  $region21: #{selfnet_forward.4} parent=0 // pred_fallthru
    _

// kernel: selfnet_forward.5
$region0: #{selfnet_forward.5}
  #allocation0 [shape = 'u32[]', space=smem, size = 0x4, offset = 0x4, fixed_abs, tag = 'smem constant byte address 0x4 - core index']
  #allocation1 [shape = 'u32[144,128]{1,0:T(1,128)}', space=vmem, size = 0x12000, scoped, tag = 'internal scratch']
  %s0 = inlined_call_operand.vmem [shape: f32[2,192,128], index: 0, kind: input, shape index: {}]
  %s1 = inlined_call_operand.vmem [shape: f32[16,192], index: 1, kind: input, shape index: {}]
  %s2 = inlined_call_operand.vmem [shape: f32[16,1], index: 2, kind: input, shape index: {}]
  %s3 = inlined_call_operand.vmem [shape: f32[128,32], index: 3, kind: input, shape index: {}]
  %s4 = inlined_call_operand.vmem [shape: f32[2,16,32], index: 4, kind: output, shape index: {}]
  %s5 = sld [smem:[#allocation0]]
  $region33: #{selfnet_forward.5} parent=0
    _
  %s7 = ssub.s32 1, %s5
  %s8 = scalar_select 0, %s7, %s5
  // Predicated region
  $region2: #{selfnet_forward.5} parent=0 // pred_check
    _
  $region3: #{selfnet_forward.5} parent=0 // pred_check_branch
    %10 = sbr.rel (0) target = $region5
  $region4: #{selfnet_forward.5} parent=0 // pred_region
    _
  $region5: #{selfnet_forward.5} parent=0 // pred_fallthru
    _
  // Predicated region
  $region6: #{selfnet_forward.5} parent=0 // pred_check
    _
  $region7: #{selfnet_forward.5} parent=0 // pred_check_branch
    %12 = sbr.rel (0) target = $region9
  $region8: #{selfnet_forward.5} parent=0 // pred_region
    _
  $region9: #{selfnet_forward.5} parent=0 // pred_fallthru
    _
  // Predicated region
  $region10: #{selfnet_forward.5} parent=0 // pred_check
    _
  $region11: #{selfnet_forward.5} parent=0 // pred_check_branch
    %14 = sbr.rel (0) target = $region13
  $region12: #{selfnet_forward.5} parent=0 // pred_region
    _
  $region13: #{selfnet_forward.5} parent=0 // pred_fallthru
    _
  // Predicated region
  $region14: #{selfnet_forward.5} parent=0 // pred_check
    _
  $region15: #{selfnet_forward.5} parent=0 // pred_check_branch
    %16 = sbr.rel (0) target = $region17
  $region16: #{selfnet_forward.5} parent=0 // pred_region
    _
  $region17: #{selfnet_forward.5} parent=0 // pred_fallthru
    _
  loop: start=0, step=1, limit=2
  $region18: #{selfnet_forward.5} parent=0 // loop_pre_header
    _
  $region19: #{selfnet_forward.5} parent=0 // loop_header
    %s18 = sphi 0, %s22
    %p19 = scmp.ge.s32.totalorder %s18, 2
  $region20: #{selfnet_forward.5} parent=0 // loop_header_branch
    %21 = sbr.rel (%p19) target = $region24
  $region21: #{selfnet_forward.5} parent=0 // loop_body
    %v23 = vld [vmem:[%s1] sm:$0xff]
    %v24 = vld [vmem:[%s1 + $0x8] sm:$0xff]
    %v25 = vld [vmem:[%s1 + $0x10] sm:$0xff]
    %v26 = vld [vmem:[%s1 + $0x18] sm:$0xff]
    %s27 = smul.u32 %s18, 192
    %s28 = scalar_lea.vmem %s0, %s27
    %v29 = vld [vmem:[%s28] sm:$0xff]
    %v30 = vld [vmem:[%s28 + $0x8] sm:$0xff]
    %v31 = vld [vmem:[%s28 + $0x10] sm:$0xff]
    %v32 = vld [vmem:[%s28 + $0x18] sm:$0xff]
    %v33 = vld [vmem:[%s28 + $0x20] sm:$0xff]
    %v34 = vld [vmem:[%s28 + $0x28] sm:$0xff]
    %v35 = vld [vmem:[%s28 + $0x30] sm:$0xff]
    %v36 = vld [vmem:[%s28 + $0x38] sm:$0xff]
    %v37 = vld [vmem:[%s28 + $0x40] sm:$0xff]
    %v38 = vld [vmem:[%s28 + $0x48] sm:$0xff]
    %v39 = vld [vmem:[%s28 + $0x50] sm:$0xff]
    %v40 = vld [vmem:[%s28 + $0x58] sm:$0xff]
    %v41 = vld [vmem:[%s28 + $0x60] sm:$0xff]
    %v42 = vld [vmem:[%s28 + $0x68] sm:$0xff]
    %v43 = vld [vmem:[%s28 + $0x70] sm:$0xff]
    %v44 = vld [vmem:[%s28 + $0x78] sm:$0xff]
    %v45 = vld [vmem:[%s28 + $0x80] sm:$0xff]
    %v46 = vld [vmem:[%s28 + $0x88] sm:$0xff]
    %v47 = vld [vmem:[%s28 + $0x90] sm:$0xff]
    %v48 = vld [vmem:[%s28 + $0x98] sm:$0xff]
    %v49 = vld [vmem:[%s28 + $0xa0] sm:$0xff]
    %v50 = vld [vmem:[%s28 + $0xa8] sm:$0xff]
    %v51 = vld [vmem:[%s28 + $0xb0] sm:$0xff]
    %v52 = vld [vmem:[%s28 + $0xb8] sm:$0xff]
    %v53 = vld [vmem:[%s2] sm:$0xff]
    %v54 = vld [vmem:[%s2 + $0x8] sm:$0xff]
    %56 = vset.pattern.permute.xlu0 0
    %57 = vperm.xlu0 %56, %v53
    %v58 = vpop.permute.xlu0 %57
    %61 = vset.pattern.permute.xlu0 0
    %62 = vperm.xlu0 %61, %v54
    %v63 = vpop.permute.xlu0 %62
    %vm65 = vcmask 523264
    %v67 = vsel %vm65, %v24, 0
    %v70 = vsel %vm65, %v26, 0
    %72 = vmatprep.subr.mxu0 0.0
    %73 = vmatpush1.msra.mxu0 %v29
    %74 = vmatprep.subr.mxu0 0.0
    %75 = vmatpush1.msra.mxu0 %v30
    %76 = vmatprep.subr.mxu0 0.0
    %77 = vmatpush1.msra.mxu0 %v31
    %78 = vmatprep.subr.mxu0 0.0
    %79 = vmatpush1.msra.mxu0 %v32
    %80 = vmatprep.subr.mxu0 0.0
    %81 = vmatpush1.msra.mxu0 %v33
    %82 = vmatprep.subr.mxu0 0.0
    %83 = vmatpush1.msra.mxu0 %v34
    %84 = vmatprep.subr.mxu0 0.0
    %85 = vmatpush1.msra.mxu0 %v35
    %86 = vmatprep.subr.mxu0 0.0
    %87 = vmatpush1.msra.mxu0 %v36
    %88 = vmatprep.subr.mxu0 0.0
    %89 = vmatpush1.msra.mxu0 %v37
    %90 = vmatprep.subr.mxu0 0.0
    %91 = vmatpush1.msra.mxu0 %v38
    %92 = vmatprep.subr.mxu0 0.0
    %93 = vmatpush1.msra.mxu0 %v39
    %94 = vmatprep.subr.mxu0 0.0
    %95 = vmatpush1.msra.mxu0 %v40
    %96 = vmatprep.subr.mxu0 0.0
    %97 = vmatpush1.msra.mxu0 %v41
    %98 = vmatprep.subr.mxu0 0.0
    %99 = vmatpush1.msra.mxu0 %v42
    %100 = vmatprep.subr.mxu0 0.0
    %101 = vmatpush1.msra.mxu0 %v43
    %102 = vmatprep.subr.mxu0 0.0
    %103 = vmatpush1.msra.mxu0 %v44
    %104 = vmatprep.subr.mxu0 0.0
    %105 = vmatpush1.msra.mxu0 %v45
    %106 = vmatprep.subr.mxu0 0.0
    %107 = vmatpush1.msra.mxu0 %v46
    %108 = vmatprep.subr.mxu0 0.0
    %109 = vmatpush1.msra.mxu0 %v47
    %110 = vmatprep.subr.mxu0 0.0
    %111 = vmatpush1.msra.mxu0 %v48
    %112 = vmatprep.subr.mxu0 0.0
    %113 = vmatpush1.msra.mxu0 %v49
    %114 = vmatprep.subr.mxu0 0.0
    %115 = vmatpush1.msra.mxu0 %v50
    %116 = vmatprep.subr.mxu0 0.0
    %117 = vmatpush1.msra.mxu0 %v51
    %118 = vmatprep.subr.mxu0 0.0
    %119 = vmatpush1.msra.mxu0 %v52
    %120 = vmatprep.subr.mxu0 0.0
    %121 = vmatpush1.msra.mxu0 0.0
    %122 = vmatprep.subr.mxu0 0.0
    %123 = vmatpush1.msra.mxu0 0.0
    %124 = vmatprep.subr.mxu0 0.0
    %125 = vmatpush1.msra.mxu0 0.0
    %126 = vmatprep.subr.mxu0 0.0
    %127 = vmatpush1.msra.mxu0 0.0
    %128 = vmatprep.subr.mxu0 0.0
    %129 = vmatpush1.msra.mxu0 0.0
    %130 = vmatprep.subr.mxu0 0.0
    %131 = vmatpush1.msra.mxu0 0.0
    %132 = vmatprep.subr.mxu0 0.0
    %133 = vmatpush1.msra.mxu0 0.0
    %134 = vmatprep.subr.mxu0 0.0
    %135 = vmatpush1.msra.mxu0 0.0
    %136 = vmatprep.mubr.f32.mxu0 %v67
    %137 = vmatmul.mubr.f32.gmra.mrb[0].mxu0 %v23
    %v138 = vpop.f32.mrb[0].mxu0
    %v139 = vadd.f32 %v58, %v138
    %v140 = vpop.f32.mrb[0].mxu0
    %141 = vmatprep.mubr.f32.mxu0 %v70
    %142 = vmatmul.mubr.f32.gmra.mrb[0].mxu0 %v25
    %v143 = vpop.f32.mrb[0].mxu0
    %v144 = vadd.f32 %v63, %v143
    %v145 = vpop.f32.mrb[0].mxu0
    %146 = vdwg.mxu0
    %vm147 = vcmp.gt.f32.partialorder %v139, 0.0
    %vm148 = vcmp.gt.f32.partialorder %v144, 0.0
    %v149 = vmin.f32 %v139, 0.0
    %v150 = vmin.f32 %v144, 0.0
    %v151 = vmul.f32 %v149, 1.442695
    %v152 = vpow.pop %v151
    %v153 = vmul.f32 %v150, 1.442695
    %v154 = vpow.pop %v153
    %v155 = vsub.f32 %v152, 1.0
    %v156 = vsub.f32 %v154, 1.0
    %v157 = vsel %vm147, %v139, %v155
    %v158 = vsel %vm148, %v144, %v156
    %v159 = vld [vmem:[%s3] sm:$0xff]
    %v160 = vld [vmem:[%s3 + $0x8] sm:$0xff]
    %v161 = vld [vmem:[%s3 + $0x10] sm:$0xff]
    %v162 = vld [vmem:[%s3 + $0x18] sm:$0xff]
    %v163 = vld [vmem:[%s3 + $0x20] sm:$0xff]
    %v164 = vld [vmem:[%s3 + $0x28] sm:$0xff]
    %v165 = vld [vmem:[%s3 + $0x30] sm:$0xff]
    %v166 = vld [vmem:[%s3 + $0x38] sm:$0xff]
    %v167 = vld [vmem:[%s3 + $0x40] sm:$0xff]
    %v168 = vld [vmem:[%s3 + $0x48] sm:$0xff]
    %v169 = vld [vmem:[%s3 + $0x50] sm:$0xff]
    %v170 = vld [vmem:[%s3 + $0x58] sm:$0xff]
    %v171 = vld [vmem:[%s3 + $0x60] sm:$0xff]
    %v172 = vld [vmem:[%s3 + $0x68] sm:$0xff]
    %v173 = vld [vmem:[%s3 + $0x70] sm:$0xff]
    %v174 = vld [vmem:[%s3 + $0x78] sm:$0xff]
    %175 = vmatprep.subr.mxu0 0.0
    %176 = vmatpush1.msra.mxu0 %v159
    %177 = vmatprep.subr.mxu0 0.0
    %178 = vmatpush1.msra.mxu0 %v160
    %179 = vmatprep.subr.mxu0 0.0
    %180 = vmatpush1.msra.mxu0 %v161
    %181 = vmatprep.subr.mxu0 0.0
    %182 = vmatpush1.msra.mxu0 %v162
    %183 = vmatprep.subr.mxu0 0.0
    %184 = vmatpush1.msra.mxu0 %v163
    %185 = vmatprep.subr.mxu0 0.0
    %186 = vmatpush1.msra.mxu0 %v164
    %187 = vmatprep.subr.mxu0 0.0
    %188 = vmatpush1.msra.mxu0 %v165
    %189 = vmatprep.subr.mxu0 0.0
    %190 = vmatpush1.msra.mxu0 %v166
    %191 = vmatprep.subr.mxu0 0.0
    %192 = vmatpush1.msra.mxu0 %v167
    %193 = vmatprep.subr.mxu0 0.0
    %194 = vmatpush1.msra.mxu0 %v168
    %195 = vmatprep.subr.mxu0 0.0
    %196 = vmatpush1.msra.mxu0 %v169
    %197 = vmatprep.subr.mxu0 0.0
    %198 = vmatpush1.msra.mxu0 %v170
    %199 = vmatprep.subr.mxu0 0.0
    %200 = vmatpush1.msra.mxu0 %v171
    %201 = vmatprep.subr.mxu0 0.0
    %202 = vmatpush1.msra.mxu0 %v172
    %203 = vmatprep.subr.mxu0 0.0
    %204 = vmatpush1.msra.mxu0 %v173
    %205 = vmatprep.subr.mxu0 0.0
    %206 = vmatpush1.msra.mxu0 %v174
    %207 = vmatprep.subr.mxu0 0.0
    %208 = vmatpush1.msra.mxu0 0.0
    %209 = vmatprep.subr.mxu0 0.0
    %210 = vmatpush1.msra.mxu0 0.0
    %211 = vmatprep.subr.mxu0 0.0
    %212 = vmatpush1.msra.mxu0 0.0
    %213 = vmatprep.subr.mxu0 0.0
    %214 = vmatpush1.msra.mxu0 0.0
    %215 = vmatprep.subr.mxu0 0.0
    %216 = vmatpush1.msra.mxu0 0.0
    %217 = vmatprep.subr.mxu0 0.0
    %218 = vmatpush1.msra.mxu0 0.0
    %219 = vmatprep.subr.mxu0 0.0
    %220 = vmatpush1.msra.mxu0 0.0
    %221 = vmatprep.subr.mxu0 0.0
    %222 = vmatpush1.msra.mxu0 0.0
    %223 = vmatprep.subr.mxu0 0.0
    %224 = vmatpush1.msra.mxu0 0.0
    %225 = vmatprep.subr.mxu0 0.0
    %226 = vmatpush1.msra.mxu0 0.0
    %227 = vmatprep.subr.mxu0 0.0
    %228 = vmatpush1.msra.mxu0 0.0
    %229 = vmatprep.subr.mxu0 0.0
    %230 = vmatpush1.msra.mxu0 0.0
    %231 = vmatprep.subr.mxu0 0.0
    %232 = vmatpush1.msra.mxu0 0.0
    %233 = vmatprep.subr.mxu0 0.0
    %234 = vmatpush1.msra.mxu0 0.0
    %235 = vmatprep.subr.mxu0 0.0
    %236 = vmatpush1.msra.mxu0 0.0
    %237 = vmatprep.subr.mxu0 0.0
    %238 = vmatpush1.msra.mxu0 0.0
    %239 = vmatprep.mubr.f32.mxu0 0.0
    %240 = vmatmul.mubr.f32.gmra.mrb[0].mxu0 %v157
    %v241 = vpop.f32.mrb[0].mxu0
    %v242 = vadd.f32 0.0, %v241
    %v243 = vpop.f32.mrb[0].mxu0
    %244 = vmatprep.mubr.f32.mxu0 0.0
    %245 = vmatmul.mubr.f32.gmra.mrb[0].mxu0 %v158
    %v246 = vpop.f32.mrb[0].mxu0
    %v247 = vadd.f32 0.0, %v246
    %v248 = vpop.f32.mrb[0].mxu0
    %249 = vdwg.mxu0
    %s250 = smul.u32 %s18, 16
    %s251 = scalar_lea.vmem %s4, %s250
    %vm252 = vcmask 261120
    %253 = vst.msk [vmem:[%s251] sm:$0xff] %vm252, %v242
    %254 = vst.msk [vmem:[%s251 + $0x8] sm:$0xff] %vm252, %v247
  $region22: #{selfnet_forward.5} parent=0 // loop_footer
    %s22 = sadd.s32 1, %s18
  $region23: #{selfnet_forward.5} parent=0 // loop_footer_branch
    %17 = sbr.rel target = $region19
  $region24: #{selfnet_forward.5} parent=0 // loop_exit
    _
  // Predicated region
  $region25: #{selfnet_forward.5} parent=0 // pred_check
    _
  $region26: #{selfnet_forward.5} parent=0 // pred_check_branch
    %256 = sbr.rel (0) target = $region28
  $region27: #{selfnet_forward.5} parent=0 // pred_region
    _
  $region28: #{selfnet_forward.5} parent=0 // pred_fallthru
    _
  // Predicated region
  $region29: #{selfnet_forward.5} parent=0 // pred_check
    _
  $region30: #{selfnet_forward.5} parent=0 // pred_check_branch
    %258 = sbr.rel (0) target = $region32
  $region31: #{selfnet_forward.5} parent=0 // pred_region
    _
  $region32: #{selfnet_forward.5} parent=0 // pred_fallthru
    _

// kernel: selfnet_forward.6
$region0: #{selfnet_forward.6}
  #allocation0 [shape = 'u32[]', space=smem, size = 0x4, offset = 0x4, fixed_abs, tag = 'smem constant byte address 0x4 - core index']
  #allocation1 [shape = 'u32[144,128]{1,0:T(1,128)}', space=vmem, size = 0x12000, scoped, tag = 'internal scratch']
  %s0 = inlined_call_operand.vmem [shape: bf16[56,128], index: 0, kind: input, shape index: {}]
  %s1 = inlined_call_operand.vmem [shape: bf16[128,256], index: 1, kind: input, shape index: {}]
  %s2 = inlined_call_operand.vmem [shape: f32[1,256], index: 2, kind: input, shape index: {}]
  %s3 = inlined_call_operand.vmem [shape: f32[56,256], index: 3, kind: output, shape index: {}]
  %s4 = sld [smem:[#allocation0]]
  $region22: #{selfnet_forward.6} parent=0
    _
  %s6 = ssub.s32 1, %s4
  %s7 = scalar_select 0, %s6, %s4
  // Predicated region
  $region2: #{selfnet_forward.6} parent=0 // pred_check
    _
  $region3: #{selfnet_forward.6} parent=0 // pred_check_branch
    %9 = sbr.rel (0) target = $region5
  $region4: #{selfnet_forward.6} parent=0 // pred_region
    _
  $region5: #{selfnet_forward.6} parent=0 // pred_fallthru
    _
  // Predicated region
  $region6: #{selfnet_forward.6} parent=0 // pred_check
    _
  $region7: #{selfnet_forward.6} parent=0 // pred_check_branch
    %11 = sbr.rel (0) target = $region9
  $region8: #{selfnet_forward.6} parent=0 // pred_region
    _
  $region9: #{selfnet_forward.6} parent=0 // pred_fallthru
    _
  // Predicated region
  $region10: #{selfnet_forward.6} parent=0 // pred_check
    _
  $region11: #{selfnet_forward.6} parent=0 // pred_check_branch
    %13 = sbr.rel (0) target = $region13
  $region12: #{selfnet_forward.6} parent=0 // pred_region
    _
  $region13: #{selfnet_forward.6} parent=0 // pred_fallthru
    _
  %v15 = vld [vmem:[%s0] sm:$0xf]
  %v16 = vld [vmem:[%s0 + $0x4] sm:$0xf]
  %v17 = vld [vmem:[%s0 + $0x8] sm:$0xf]
  %v18 = vld [vmem:[%s0 + $0xc] sm:$0xf]
  %v19 = vld [vmem:[%s0 + $0x10] sm:$0xf]
  %v20 = vld [vmem:[%s0 + $0x14] sm:$0xf]
  %v21 = vld [vmem:[%s0 + $0x18] sm:$0xf]
  %v22 = vld [vmem:[%s1] sm:$0xff]
  %v23 = vld [vmem:[%s1 + $0x8] sm:$0xff]
  %v24 = vld [vmem:[%s1 + $0x10] sm:$0xff]
  %v25 = vld [vmem:[%s1 + $0x18] sm:$0xff]
  %v26 = vld [vmem:[%s1 + $0x20] sm:$0xff]
  %v27 = vld [vmem:[%s1 + $0x28] sm:$0xff]
  %v28 = vld [vmem:[%s1 + $0x30] sm:$0xff]
  %v29 = vld [vmem:[%s1 + $0x38] sm:$0xff]
  %v30 = vld [vmem:[%s1 + $0x40] sm:$0xff]
  %v31 = vld [vmem:[%s1 + $0x48] sm:$0xff]
  %v32 = vld [vmem:[%s1 + $0x50] sm:$0xff]
  %v33 = vld [vmem:[%s1 + $0x58] sm:$0xff]
  %v34 = vld [vmem:[%s1 + $0x60] sm:$0xff]
  %v35 = vld [vmem:[%s1 + $0x68] sm:$0xff]
  %v36 = vld [vmem:[%s1 + $0x70] sm:$0xff]
  %v37 = vld [vmem:[%s1 + $0x78] sm:$0xff]
  %v38 = vld [vmem:[%s2] sm:$0x3]
  %v40 = vlaneseq
  %v41 = vshrl.u32 %v40, 7
  %v42 = vsub.s32 0, %v41
  %v43 = vrot.slane %v38, %v42
  %v44 = vlaneseq
  %v45 = vshrl.u32 %v44, 7
  %v46 = vsub.s32 1, %v45
  %v47 = vrot.slane %v38, %v46
  %v57 = vunpack.c.l.b16 %v15
  %v58 = vunpack.c.l.b16 %v16
  %v59 = vunpack.c.l.b16 %v17
  %v60 = vunpack.c.l.b16 %v18
  %v61 = vunpack.c.l.b16 %v19
  %v62 = vunpack.c.l.b16 %v20
  %v63 = vunpack.c.l.b16 %v21
  %v64 = vpack.c.b16 %v58, %v57
  %v65 = vpack.c.b16 %v60, %v59
  %v66 = vpack.c.b16 %v62, %v61
  %v67 = vpack.c.b16 %v63, %v63
  %v88 = vunpack.c.l.b16 %v22
  %v89 = vunpack.c.h.b16 %v22
  %v90 = vunpack.c.l.b16 %v23
  %v91 = vunpack.c.h.b16 %v23
  %v92 = vunpack.c.l.b16 %v24
  %v93 = vunpack.c.h.b16 %v24
  %v94 = vunpack.c.l.b16 %v25
  %v95 = vunpack.c.h.b16 %v25
  %v96 = vunpack.c.l.b16 %v26
  %v97 = vunpack.c.h.b16 %v26
  %v98 = vunpack.c.l.b16 %v27
  %v99 = vunpack.c.h.b16 %v27
  %v100 = vunpack.c.l.b16 %v28
  %v101 = vunpack.c.h.b16 %v28
  %v102 = vunpack.c.l.b16 %v29
  %v103 = vunpack.c.h.b16 %v29
  %v104 = vunpack.c.l.b16 %v30
  %v105 = vunpack.c.h.b16 %v30
  %v106 = vunpack.c.l.b16 %v31
  %v107 = vunpack.c.h.b16 %v31
  %v108 = vunpack.c.l.b16 %v32
  %v109 = vunpack.c.h.b16 %v32
  %v110 = vunpack.c.l.b16 %v33
  %v111 = vunpack.c.h.b16 %v33
  %v112 = vunpack.c.l.b16 %v34
  %v113 = vunpack.c.h.b16 %v34
  %v114 = vunpack.c.l.b16 %v35
  %v115 = vunpack.c.h.b16 %v35
  %v116 = vunpack.c.l.b16 %v36
  %v117 = vunpack.c.h.b16 %v36
  %v118 = vunpack.c.l.b16 %v37
  %v119 = vunpack.c.h.b16 %v37
  %v120 = vpack.c.b16 %v90, %v88
  %v121 = vpack.c.b16 %v91, %v89
  %v122 = vpack.c.b16 %v94, %v92
  %v123 = vpack.c.b16 %v95, %v93
  %v124 = vpack.c.b16 %v98, %v96
  %v125 = vpack.c.b16 %v99, %v97
  %v126 = vpack.c.b16 %v102, %v100
  %v127 = vpack.c.b16 %v103, %v101
  %v128 = vpack.c.b16 %v106, %v104
  %v129 = vpack.c.b16 %v107, %v105
  %v130 = vpack.c.b16 %v110, %v108
  %v131 = vpack.c.b16 %v111, %v109
  %v132 = vpack.c.b16 %v114, %v112
  %v133 = vpack.c.b16 %v115, %v113
  %v134 = vpack.c.b16 %v118, %v116
  %v135 = vpack.c.b16 %v119, %v117
  %152 = vmatprep.subr.bf16.mxu0 %v121
  %153 = vmatpush1.bf16.msra.mxu0 %v120
  %154 = vmatprep.subr.bf16.mxu0 %v123
  %155 = vmatpush1.bf16.msra.mxu0 %v122
  %156 = vmatprep.subr.bf16.mxu0 %v125
  %157 = vmatpush1.bf16.msra.mxu0 %v124
  %158 = vmatprep.subr.bf16.mxu0 %v127
  %159 = vmatpush1.bf16.msra.mxu0 %v126
  %160 = vmatprep.subr.bf16.mxu0 %v129
  %161 = vmatpush1.bf16.msra.mxu0 %v128
  %162 = vmatprep.subr.bf16.mxu0 %v131
  %163 = vmatpush1.bf16.msra.mxu0 %v130
  %164 = vmatprep.subr.bf16.mxu0 %v133
  %165 = vmatpush1.bf16.msra.mxu0 %v132
  %166 = vmatprep.subr.bf16.mxu0 %v135
  %167 = vmatpush1.bf16.msra.mxu0 %v134
  %168 = vmatprep.subr.bf16.mxu0 0
  %169 = vmatpush1.bf16.msra.mxu0 0
  %170 = vmatprep.subr.bf16.mxu0 0
  %171 = vmatpush1.bf16.msra.mxu0 0
  %172 = vmatprep.subr.bf16.mxu0 0
  %173 = vmatpush1.bf16.msra.mxu0 0
  %174 = vmatprep.subr.bf16.mxu0 0
  %175 = vmatpush1.bf16.msra.mxu0 0
  %176 = vmatprep.subr.bf16.mxu0 0
  %177 = vmatpush1.bf16.msra.mxu0 0
  %178 = vmatprep.subr.bf16.mxu0 0
  %179 = vmatpush1.bf16.msra.mxu0 0
  %180 = vmatprep.subr.bf16.mxu0 0
  %181 = vmatpush1.bf16.msra.mxu0 0
  %182 = vmatprep.subr.bf16.mxu0 0
  %183 = vmatpush1.bf16.msra.mxu0 0
  %184 = vmatprep.mubr.bf16.mxu0 0
  %185 = vmatmul.mubr.bf16.gmra.mrb[0].mxu0 %v64
  %v186 = vpop.f32.mrb[0].mxu0
  %v187 = vadd.f32 %v43, %v186
  %v188 = vpop.f32.mrb[0].mxu0
  %v189 = vadd.f32 %v47, %v188
  %v190 = vpop.f32.mrb[0].mxu0
  %v191 = vadd.f32 %v43, %v190
  %v192 = vpop.f32.mrb[0].mxu0
  %v193 = vadd.f32 %v47, %v192
  %194 = vmatprep.mubr.bf16.mxu0 0
  %195 = vmatmul.mubr.bf16.gmra.mrb[0].mxu0 %v65
  %v196 = vpop.f32.mrb[0].mxu0
  %v197 = vadd.f32 %v43, %v196
  %v198 = vpop.f32.mrb[0].mxu0
  %v199 = vadd.f32 %v47, %v198
  %v200 = vpop.f32.mrb[0].mxu0
  %v201 = vadd.f32 %v43, %v200
  %v202 = vpop.f32.mrb[0].mxu0
  %v203 = vadd.f32 %v47, %v202
  %204 = vmatprep.mubr.bf16.mxu0 0
  %205 = vmatmul.mubr.bf16.gmra.mrb[0].mxu0 %v66
  %v206 = vpop.f32.mrb[0].mxu0
  %v207 = vadd.f32 %v43, %v206
  %v208 = vpop.f32.mrb[0].mxu0
  %v209 = vadd.f32 %v47, %v208
  %v210 = vpop.f32.mrb[0].mxu0
  %v211 = vadd.f32 %v43, %v210
  %v212 = vpop.f32.mrb[0].mxu0
  %v213 = vadd.f32 %v47, %v212
  %214 = vmatprep.mubr.bf16.mxu0 0
  %215 = vmatmul.mubr.bf16.gmra.mrb[0].mxu0 %v67
  %v216 = vpop.f32.mrb[0].mxu0
  %v217 = vadd.f32 %v43, %v216
  %v218 = vpop.f32.mrb[0].mxu0
  %v219 = vadd.f32 %v47, %v218
  %v220 = vpop.f32.mrb[0].mxu0
  %v221 = vpop.f32.mrb[0].mxu0
  %222 = vdwg.mxu0
  %223 = vst [vmem:[%s3] sm:$0xff] %v187
  %224 = vst [vmem:[%s3 + $0x8] sm:$0xff] %v189
  %225 = vst [vmem:[%s3 + $0x10] sm:$0xff] %v191
  %226 = vst [vmem:[%s3 + $0x18] sm:$0xff] %v193
  %227 = vst [vmem:[%s3 + $0x20] sm:$0xff] %v197
  %228 = vst [vmem:[%s3 + $0x28] sm:$0xff] %v199
  %229 = vst [vmem:[%s3 + $0x30] sm:$0xff] %v201
  %230 = vst [vmem:[%s3 + $0x38] sm:$0xff] %v203
  %231 = vst [vmem:[%s3 + $0x40] sm:$0xff] %v207
  %232 = vst [vmem:[%s3 + $0x48] sm:$0xff] %v209
  %233 = vst [vmem:[%s3 + $0x50] sm:$0xff] %v211
  %234 = vst [vmem:[%s3 + $0x58] sm:$0xff] %v213
  %235 = vst [vmem:[%s3 + $0x60] sm:$0xff] %v217
  %236 = vst [vmem:[%s3 + $0x68] sm:$0xff] %v219
  // Predicated region
  $region14: #{selfnet_forward.6} parent=0 // pred_check
    _
  $region15: #{selfnet_forward.6} parent=0 // pred_check_branch
    %238 = sbr.rel (0) target = $region17
  $region16: #{selfnet_forward.6} parent=0 // pred_region
    _
  $region17: #{selfnet_forward.6} parent=0 // pred_fallthru
    _
  // Predicated region
  $region18: #{selfnet_forward.6} parent=0 // pred_check
    _
  $region19: #{selfnet_forward.6} parent=0 // pred_check_branch
    %240 = sbr.rel (0) target = $region21
  $region20: #{selfnet_forward.6} parent=0 // pred_region
    _
  $region21: #{selfnet_forward.6} parent=0 // pred_fallthru
    _

// kernel: selfnet_forward.7
$region0: #{selfnet_forward.7}
  #allocation0 [shape = 'u32[]', space=smem, size = 0x4, offset = 0x4, fixed_abs, tag = 'smem constant byte address 0x4 - core index']
  #allocation1 [shape = 'u32[144,128]{1,0:T(1,128)}', space=vmem, size = 0x12000, scoped, tag = 'internal scratch']
  %s0 = inlined_call_operand.vmem [shape: f32[2,8,896], index: 0, kind: input, shape index: {}]
  %s1 = inlined_call_operand.vmem [shape: f32[384,896], index: 1, kind: input, shape index: {}]
  %s2 = inlined_call_operand.vmem [shape: f32[3,896], index: 2, kind: input, shape index: {}]
  %s3 = inlined_call_operand.vmem [shape: f32[48,3], index: 3, kind: input, shape index: {}]
  %s4 = inlined_call_operand.vmem [shape: f32[3,48], index: 4, kind: input, shape index: {}]
  %s5 = inlined_call_operand.vmem [shape: f32[3,48], index: 5, kind: input, shape index: {}]
  %s6 = inlined_call_operand.vmem [shape: f32[3,1], index: 6, kind: input, shape index: {}]
  %s7 = inlined_call_operand.vmem [shape: f32[2,3,1], index: 7, kind: output, shape index: {0}]
  %s8 = inlined_call_operand.vmem [shape: f32[2,48,1], index: 8, kind: output, shape index: {1}]
  %9 = xla_tuple %s7, %s8
  %s10 = sld [smem:[#allocation0]]
  $region53: #{selfnet_forward.7} parent=0
    _
  %s12 = ssub.s32 1, %s10
  %s13 = scalar_select 0, %s12, %s10
  // Predicated region
  $region2: #{selfnet_forward.7} parent=0 // pred_check
    _
  $region3: #{selfnet_forward.7} parent=0 // pred_check_branch
    %15 = sbr.rel (0) target = $region5
  $region4: #{selfnet_forward.7} parent=0 // pred_region
    _
  $region5: #{selfnet_forward.7} parent=0 // pred_fallthru
    _
  // Predicated region
  $region6: #{selfnet_forward.7} parent=0 // pred_check
    _
  $region7: #{selfnet_forward.7} parent=0 // pred_check_branch
    %17 = sbr.rel (0) target = $region9
  $region8: #{selfnet_forward.7} parent=0 // pred_region
    _
  $region9: #{selfnet_forward.7} parent=0 // pred_fallthru
    _
  // Predicated region
  $region10: #{selfnet_forward.7} parent=0 // pred_check
    _
  $region11: #{selfnet_forward.7} parent=0 // pred_check_branch
    %19 = sbr.rel (0) target = $region13
  $region12: #{selfnet_forward.7} parent=0 // pred_region
    _
  $region13: #{selfnet_forward.7} parent=0 // pred_fallthru
    _
  // Predicated region
  $region14: #{selfnet_forward.7} parent=0 // pred_check
    _
  $region15: #{selfnet_forward.7} parent=0 // pred_check_branch
    %21 = sbr.rel (0) target = $region17
  $region16: #{selfnet_forward.7} parent=0 // pred_region
    _
  $region17: #{selfnet_forward.7} parent=0 // pred_fallthru
    _
  // Predicated region
  $region18: #{selfnet_forward.7} parent=0 // pred_check
    _
  $region19: #{selfnet_forward.7} parent=0 // pred_check_branch
    %23 = sbr.rel (0) target = $region21
  $region20: #{selfnet_forward.7} parent=0 // pred_region
    _
  $region21: #{selfnet_forward.7} parent=0 // pred_fallthru
    _
  // Predicated region
  $region22: #{selfnet_forward.7} parent=0 // pred_check
    _
  $region23: #{selfnet_forward.7} parent=0 // pred_check_branch
    %25 = sbr.rel (0) target = $region25
  $region24: #{selfnet_forward.7} parent=0 // pred_region
    _
  $region25: #{selfnet_forward.7} parent=0 // pred_fallthru
    _
  // Predicated region
  $region26: #{selfnet_forward.7} parent=0 // pred_check
    _
  $region27: #{selfnet_forward.7} parent=0 // pred_check_branch
    %27 = sbr.rel (0) target = $region29
  $region28: #{selfnet_forward.7} parent=0 // pred_region
    _
  $region29: #{selfnet_forward.7} parent=0 // pred_fallthru
    _
  loop: start=0, step=1, limit=2
  $region30: #{selfnet_forward.7} parent=0 // loop_pre_header
    _
  $region31: #{selfnet_forward.7} parent=0 // loop_header
    %s29 = sphi 0, %s33
    %p30 = scmp.ge.s32.totalorder %s29, 2
  $region32: #{selfnet_forward.7} parent=0 // loop_header_branch
    %32 = sbr.rel (%p30) target = $region36
  $region33: #{selfnet_forward.7} parent=0 // loop_body
    %v34 = vld [vmem:[%s3] sm:$0xff]
    %v35 = vld [vmem:[%s3 + $0x8] sm:$0xff]
    %v36 = vld [vmem:[%s3 + $0x10] sm:$0xff]
    %v37 = vld [vmem:[%s3 + $0x18] sm:$0xff]
    %v38 = vld [vmem:[%s3 + $0x20] sm:$0xff]
    %v39 = vld [vmem:[%s3 + $0x28] sm:$0xff]
    %v40 = vld [vmem:[%s4] sm:$0x7]
    %s41 = smul.u32 %s29, 7
    %s42 = smul.addr %s41, 8
    %s43 = scalar_lea.vmem %s0, %s42
    %v44 = vld [vmem:[%s43] sm:$0xff]
    %v45 = vld [vmem:[%s43 + $0x8] sm:$0xff]
    %v46 = vld [vmem:[%s43 + $0x10] sm:$0xff]
    %v47 = vld [vmem:[%s43 + $0x18] sm:$0xff]
    %v48 = vld [vmem:[%s43 + $0x20] sm:$0xff]
    %v49 = vld [vmem:[%s43 + $0x28] sm:$0xff]
    %v50 = vld [vmem:[%s43 + $0x30] sm:$0xff]
    %v51 = vmul.f32 %v44, %v44
    %v52 = vmul.f32 %v45, %v45
    %v53 = vmul.f32 %v46, %v46
    %v54 = vmul.f32 %v47, %v47
    %v55 = vmul.f32 %v48, %v48
    %v56 = vmul.f32 %v49, %v49
    %v57 = vmul.f32 %v50, %v50
    %v58 = vrot.slane %v51, 4
    %v59 = vadd.f32 %v51, %v58
    %v60 = vrot.slane %v59, 2
    %v61 = vadd.f32 %v59, %v60
    %v62 = vrot.slane %v61, 1
    %v63 = vadd.f32 %v61, %v62
    %v64 = vrot.slane %v52, 4
    %v65 = vadd.f32 %v52, %v64
    %v66 = vrot.slane %v65, 2
    %v67 = vadd.f32 %v65, %v66
    %v68 = vrot.slane %v67, 1
    %v69 = vadd.f32 %v67, %v68
    %v70 = vrot.slane %v53, 4
    %v71 = vadd.f32 %v53, %v70
    %v72 = vrot.slane %v71, 2
    %v73 = vadd.f32 %v71, %v72
    %v74 = vrot.slane %v73, 1
    %v75 = vadd.f32 %v73, %v74
    %v76 = vrot.slane %v54, 4
    %v77 = vadd.f32 %v54, %v76
    %v78 = vrot.slane %v77, 2
    %v79 = vadd.f32 %v77, %v78
    %v80 = vrot.slane %v79, 1
    %v81 = vadd.f32 %v79, %v80
    %v82 = vrot.slane %v55, 4
    %v83 = vadd.f32 %v55, %v82
    %v84 = vrot.slane %v83, 2
    %v85 = vadd.f32 %v83, %v84
    %v86 = vrot.slane %v85, 1
    %v87 = vadd.f32 %v85, %v86
    %v88 = vrot.slane %v56, 4
    %v89 = vadd.f32 %v56, %v88
    %v90 = vrot.slane %v89, 2
    %v91 = vadd.f32 %v89, %v90
    %v92 = vrot.slane %v91, 1
    %v93 = vadd.f32 %v91, %v92
    %v94 = vrot.slane %v57, 4
    %v95 = vadd.f32 %v57, %v94
    %v96 = vrot.slane %v95, 2
    %v97 = vadd.f32 %v95, %v96
    %v98 = vrot.slane %v97, 1
    %v99 = vadd.f32 %v97, %v98
    %v100 = vadd.f32 %v63, 1.0
    %v101 = vadd.f32 %v69, 1.0
    %v102 = vadd.f32 %v75, 1.0
    %v103 = vadd.f32 %v81, 1.0
    %v104 = vadd.f32 %v87, 1.0
    %v105 = vadd.f32 %v93, 1.0
    %v106 = vadd.f32 %v99, 1.0
    %v107 = vrcp.pop %v100
    %v108 = vmul.f32 %v63, %v107
    %v109 = vrcp.pop %v101
    %v110 = vmul.f32 %v69, %v109
    %v111 = vrcp.pop %v102
    %v112 = vmul.f32 %v75, %v111
    %v113 = vrcp.pop %v103
    %v114 = vmul.f32 %v81, %v113
    %v115 = vrcp.pop %v104
    %v116 = vmul.f32 %v87, %v115
    %v117 = vrcp.pop %v105
    %v118 = vmul.f32 %v93, %v117
    %v119 = vrcp.pop %v106
    %v120 = vmul.f32 %v99, %v119
    %v121 = vadd.f32 %v63, 1e-08
    %v122 = vadd.f32 %v69, 1e-08
    %v123 = vadd.f32 %v75, 1e-08
    %v124 = vadd.f32 %v81, 1e-08
    %v125 = vadd.f32 %v87, 1e-08
    %v126 = vadd.f32 %v93, 1e-08
    %v127 = vadd.f32 %v99, 1e-08
    %v128 = vrsqrt.pop %v121
    %v129 = vrsqrt.pop %v122
    %v130 = vrsqrt.pop %v123
    %v131 = vrsqrt.pop %v124
    %v132 = vrsqrt.pop %v125
    %v133 = vrsqrt.pop %v126
    %v134 = vrsqrt.pop %v127
    %v135 = vmul.f32 %v108, %v128
    %v136 = vmul.f32 %v110, %v129
    %v137 = vmul.f32 %v112, %v130
    %v138 = vmul.f32 %v114, %v131
    %v139 = vmul.f32 %v116, %v132
    %v140 = vmul.f32 %v118, %v133
    %v141 = vmul.f32 %v120, %v134
    %v142 = vmul.f32 %v44, %v135
    %v143 = vmul.f32 %v45, %v136
    %v144 = vmul.f32 %v46, %v137
    %v145 = vmul.f32 %v47, %v138
    %v146 = vmul.f32 %v48, %v139
    %v147 = vmul.f32 %v49, %v140
    %v148 = vmul.f32 %v50, %v141
    %v149 = vld [vmem:[%s1] sm:$0xff]
    %v150 = vld [vmem:[%s1 + $0x8] sm:$0xff]
    %v151 = vld [vmem:[%s1 + $0x10] sm:$0xff]
    %v152 = vld [vmem:[%s1 + $0x18] sm:$0xff]
    %v153 = vld [vmem:[%s1 + $0x20] sm:$0xff]
    %v154 = vld [vmem:[%s1 + $0x28] sm:$0xff]
    %v155 = vld [vmem:[%s1 + $0x30] sm:$0xff]
    %v156 = vld [vmem:[%s1 + $0x38] sm:$0xff]
    %v157 = vld [vmem:[%s1 + $0x40] sm:$0xff]
    %v158 = vld [vmem:[%s1 + $0x48] sm:$0xff]
    %v159 = vld [vmem:[%s1 + $0x50] sm:$0xff]
    %v160 = vld [vmem:[%s1 + $0x58] sm:$0xff]
    %v161 = vld [vmem:[%s1 + $0x60] sm:$0xff]
    %v162 = vld [vmem:[%s1 + $0x68] sm:$0xff]
    %v163 = vld [vmem:[%s1 + $0x70] sm:$0xff]
    %v164 = vld [vmem:[%s1 + $0x78] sm:$0xff]
    %v165 = vld [vmem:[%s1 + $0x80] sm:$0xff]
    %v166 = vld [vmem:[%s1 + $0x88] sm:$0xff]
    %v167 = vld [vmem:[%s1 + $0x90] sm:$0xff]
    %v168 = vld [vmem:[%s1 + $0x98] sm:$0xff]
    %v169 = vld [vmem:[%s1 + $0xa0] sm:$0xff]
    %v170 = vld [vmem:[%s1 + $0xa8] sm:$0xff]
    %v171 = vld [vmem:[%s1 + $0xb0] sm:$0xff]
    %v172 = vld [vmem:[%s1 + $0xb8] sm:$0xff]
    %v173 = vld [vmem:[%s1 + $0xc0] sm:$0xff]
    %v174 = vld [vmem:[%s1 + $0xc8] sm:$0xff]
    %v175 = vld [vmem:[%s1 + $0xd0] sm:$0xff]
    %v176 = vld [vmem:[%s1 + $0xd8] sm:$0xff]
    %v177 = vld [vmem:[%s1 + $0xe0] sm:$0xff]
    %v178 = vld [vmem:[%s1 + $0xe8] sm:$0xff]
    %v179 = vld [vmem:[%s1 + $0xf0] sm:$0xff]
    %v180 = vld [vmem:[%s1 + $0xf8] sm:$0xff]
    %v181 = vld [vmem:[%s1 + $0x100] sm:$0xff]
    %v182 = vld [vmem:[%s1 + $0x108] sm:$0xff]
    %v183 = vld [vmem:[%s1 + $0x110] sm:$0xff]
    %v184 = vld [vmem:[%s1 + $0x118] sm:$0xff]
    %v185 = vld [vmem:[%s1 + $0x120] sm:$0xff]
    %v186 = vld [vmem:[%s1 + $0x128] sm:$0xff]
    %v187 = vld [vmem:[%s1 + $0x130] sm:$0xff]
    %v188 = vld [vmem:[%s1 + $0x138] sm:$0xff]
    %v189 = vld [vmem:[%s1 + $0x140] sm:$0xff]
    %v190 = vld [vmem:[%s1 + $0x148] sm:$0xff]
    %v191 = vlaneseq
    %v192 = vshrl.u32 %v191, 7
    %v193 = vsub.s32 0, %v192
    %v194 = vrot.slane %v142, %v193
    %v195 = vlaneseq
    %v196 = vshrl.u32 %v195, 7
    %v197 = vsub.s32 0, %v196
    %v198 = vrot.slane %v143, %v197
    %v199 = vlaneseq
    %v200 = vshrl.u32 %v199, 7
    %v201 = vsub.s32 0, %v200
    %v202 = vrot.slane %v144, %v201
    %v203 = vlaneseq
    %v204 = vshrl.u32 %v203, 7
    %v205 = vsub.s32 0, %v204
    %v206 = vrot.slane %v145, %v205
    %v207 = vlaneseq
    %v208 = vshrl.u32 %v207, 7
    %v209 = vsub.s32 0, %v208
    %v210 = vrot.slane %v146, %v209
    %v211 = vlaneseq
    %v212 = vshrl.u32 %v211, 7
    %v213 = vsub.s32 0, %v212
    %v214 = vrot.slane %v147, %v213
    %v215 = vlaneseq
    %v216 = vshrl.u32 %v215, 7
    %v217 = vsub.s32 0, %v216
    %v218 = vrot.slane %v148, %v217
    %v219 = vmul.f32 %v194, %v149
    %v220 = vmul.f32 %v198, %v150
    %v221 = vmul.f32 %v202, %v151
    %v222 = vmul.f32 %v206, %v152
    %v223 = vmul.f32 %v210, %v153
    %v224 = vmul.f32 %v214, %v154
    %v225 = vmul.f32 %v218, %v155
    %v226 = vmul.f32 %v194, %v156
    %v227 = vmul.f32 %v198, %v157
    %v228 = vmul.f32 %v202, %v158
    %v229 = vmul.f32 %v206, %v159
    %v230 = vmul.f32 %v210, %v160
    %v231 = vmul.f32 %v214, %v161
    %v232 = vmul.f32 %v218, %v162
    %v233 = vmul.f32 %v194, %v163
    %v234 = vmul.f32 %v198, %v164
    %v235 = vmul.f32 %v202, %v165
    %v236 = vmul.f32 %v206, %v166
    %v237 = vmul.f32 %v210, %v167
    %v238 = vmul.f32 %v214, %v168
    %v239 = vmul.f32 %v218, %v169
    %v240 = vmul.f32 %v194, %v170
    %v241 = vmul.f32 %v198, %v171
    %v242 = vmul.f32 %v202, %v172
    %v243 = vmul.f32 %v206, %v173
    %v244 = vmul.f32 %v210, %v174
    %v245 = vmul.f32 %v214, %v175
    %v246 = vmul.f32 %v218, %v176
    %v247 = vmul.f32 %v194, %v177
    %v248 = vmul.f32 %v198, %v178
    %v249 = vmul.f32 %v202, %v179
    %v250 = vmul.f32 %v206, %v180
    %v251 = vmul.f32 %v210, %v181
    %v252 = vmul.f32 %v214, %v182
    %v253 = vmul.f32 %v218, %v183
    %v254 = vmul.f32 %v194, %v184
    %v255 = vmul.f32 %v198, %v185
    %v256 = vmul.f32 %v202, %v186
    %v257 = vmul.f32 %v206, %v187
    %v258 = vmul.f32 %v210, %v188
    %v259 = vmul.f32 %v214, %v189
    %v260 = vmul.f32 %v218, %v190
    %v261 = vld [vmem:[%s1 + $0x150] sm:$0xff]
    %v262 = vld [vmem:[%s1 + $0x158] sm:$0xff]
    %v263 = vld [vmem:[%s1 + $0x160] sm:$0xff]
    %v264 = vld [vmem:[%s1 + $0x168] sm:$0xff]
    %v265 = vld [vmem:[%s1 + $0x170] sm:$0xff]
    %v266 = vld [vmem:[%s1 + $0x178] sm:$0xff]
    %v267 = vld [vmem:[%s1 + $0x180] sm:$0xff]
    %v268 = vld [vmem:[%s1 + $0x188] sm:$0xff]
    %v269 = vld [vmem:[%s1 + $0x190] sm:$0xff]
    %v270 = vld [vmem:[%s1 + $0x198] sm:$0xff]
    %v271 = vld [vmem:[%s1 + $0x1a0] sm:$0xff]
    %v272 = vld [vmem:[%s1 + $0x1a8] sm:$0xff]
    %v273 = vld [vmem:[%s1 + $0x1b0] sm:$0xff]
    %v274 = vld [vmem:[%s1 + $0x1b8] sm:$0xff]
    %v275 = vld [vmem:[%s1 + $0x1c0] sm:$0xff]
    %v276 = vld [vmem:[%s1 + $0x1c8] sm:$0xff]
    %v277 = vld [vmem:[%s1 + $0x1d0] sm:$0xff]
    %v278 = vld [vmem:[%s1 + $0x1d8] sm:$0xff]
    %v279 = vld [vmem:[%s1 + $0x1e0] sm:$0xff]
    %v280 = vld [vmem:[%s1 + $0x1e8] sm:$0xff]
    %v281 = vld [vmem:[%s1 + $0x1f0] sm:$0xff]
    %v282 = vld [vmem:[%s1 + $0x1f8] sm:$0xff]
    %v283 = vld [vmem:[%s1 + $0x200] sm:$0xff]
    %v284 = vld [vmem:[%s1 + $0x208] sm:$0xff]
    %v285 = vld [vmem:[%s1 + $0x210] sm:$0xff]
    %v286 = vld [vmem:[%s1 + $0x218] sm:$0xff]
    %v287 = vld [vmem:[%s1 + $0x220] sm:$0xff]
    %v288 = vld [vmem:[%s1 + $0x228] sm:$0xff]
    %v289 = vld [vmem:[%s1 + $0x230] sm:$0xff]
    %v290 = vld [vmem:[%s1 + $0x238] sm:$0xff]
    %v291 = vld [vmem:[%s1 + $0x240] sm:$0xff]
    %v292 = vld [vmem:[%s1 + $0x248] sm:$0xff]
    %v293 = vld [vmem:[%s1 + $0x250] sm:$0xff]
    %v294 = vld [vmem:[%s1 + $0x258] sm:$0xff]
    %v295 = vld [vmem:[%s1 + $0x260] sm:$0xff]
    %v296 = vld [vmem:[%s1 + $0x268] sm:$0xff]
    %v297 = vld [vmem:[%s1 + $0x270] sm:$0xff]
    %v298 = vld [vmem:[%s1 + $0x278] sm:$0xff]
    %v299 = vld [vmem:[%s1 + $0x280] sm:$0xff]
    %v300 = vld [vmem:[%s1 + $0x288] sm:$0xff]
    %v301 = vld [vmem:[%s1 + $0x290] sm:$0xff]
    %v302 = vld [vmem:[%s1 + $0x298] sm:$0xff]
    %v303 = vlaneseq
    %v304 = vshrl.u32 %v303, 7
    %v305 = vsub.s32 1, %v304
    %v306 = vrot.slane %v142, %v305
    %v307 = vlaneseq
    %v308 = vshrl.u32 %v307, 7
    %v309 = vsub.s32 1, %v308
    %v310 = vrot.slane %v143, %v309
    %v311 = vlaneseq
    %v312 = vshrl.u32 %v311, 7
    %v313 = vsub.s32 1, %v312
    %v314 = vrot.slane %v144, %v313
    %v315 = vlaneseq
    %v316 = vshrl.u32 %v315, 7
    %v317 = vsub.s32 1, %v316
    %v318 = vrot.slane %v145, %v317
    %v319 = vlaneseq
    %v320 = vshrl.u32 %v319, 7
    %v321 = vsub.s32 1, %v320
    %v322 = vrot.slane %v146, %v321
    %v323 = vlaneseq
    %v324 = vshrl.u32 %v323, 7
    %v325 = vsub.s32 1, %v324
    %v326 = vrot.slane %v147, %v325
    %v327 = vlaneseq
    %v328 = vshrl.u32 %v327, 7
    %v329 = vsub.s32 1, %v328
    %v330 = vrot.slane %v148, %v329
    %v331 = vmul.f32 %v306, %v261
    %v332 = vmul.f32 %v310, %v262
    %v333 = vmul.f32 %v314, %v263
    %v334 = vmul.f32 %v318, %v264
    %v335 = vmul.f32 %v322, %v265
    %v336 = vmul.f32 %v326, %v266
    %v337 = vmul.f32 %v330, %v267
    %v338 = vmul.f32 %v306, %v268
    %v339 = vmul.f32 %v310, %v269
    %v340 = vmul.f32 %v314, %v270
    %v341 = vmul.f32 %v318, %v271
    %v342 = vmul.f32 %v322, %v272
    %v343 = vmul.f32 %v326, %v273
    %v344 = vmul.f32 %v330, %v274
    %v345 = vmul.f32 %v306, %v275
    %v346 = vmul.f32 %v310, %v276
    %v347 = vmul.f32 %v314, %v277
    %v348 = vmul.f32 %v318, %v278
    %v349 = vmul.f32 %v322, %v279
    %v350 = vmul.f32 %v326, %v280
    %v351 = vmul.f32 %v330, %v281
    %v352 = vmul.f32 %v306, %v282
    %v353 = vmul.f32 %v310, %v283
    %v354 = vmul.f32 %v314, %v284
    %v355 = vmul.f32 %v318, %v285
    %v356 = vmul.f32 %v322, %v286
    %v357 = vmul.f32 %v326, %v287
    %v358 = vmul.f32 %v330, %v288
    %v359 = vmul.f32 %v306, %v289
    %v360 = vmul.f32 %v310, %v290
    %v361 = vmul.f32 %v314, %v291
    %v362 = vmul.f32 %v318, %v292
    %v363 = vmul.f32 %v322, %v293
    %v364 = vmul.f32 %v326, %v294
    %v365 = vmul.f32 %v330, %v295
    %v366 = vmul.f32 %v306, %v296
    %v367 = vmul.f32 %v310, %v297
    %v368 = vmul.f32 %v314, %v298
    %v369 = vmul.f32 %v318, %v299
    %v370 = vmul.f32 %v322, %v300
    %v371 = vmul.f32 %v326, %v301
    %v372 = vmul.f32 %v330, %v302
    %v373 = vadd.f32 %v219, %v331
    %v374 = vadd.f32 %v220, %v332
    %v375 = vadd.f32 %v221, %v333
    %v376 = vadd.f32 %v222, %v334
    %v377 = vadd.f32 %v223, %v335
    %v378 = vadd.f32 %v224, %v336
    %v379 = vadd.f32 %v225, %v337
    %v380 = vadd.f32 %v226, %v338
    %v381 = vadd.f32 %v227, %v339
    %v382 = vadd.f32 %v228, %v340
    %v383 = vadd.f32 %v229, %v341
    %v384 = vadd.f32 %v230, %v342
    %v385 = vadd.f32 %v231, %v343
    %v386 = vadd.f32 %v232, %v344
    %v387 = vadd.f32 %v233, %v345
    %v388 = vadd.f32 %v234, %v346
    %v389 = vadd.f32 %v235, %v347
    %v390 = vadd.f32 %v236, %v348
    %v391 = vadd.f32 %v237, %v349
    %v392 = vadd.f32 %v238, %v350
    %v393 = vadd.f32 %v239, %v351
    %v394 = vadd.f32 %v240, %v352
    %v395 = vadd.f32 %v241, %v353
    %v396 = vadd.f32 %v242, %v354
    %v397 = vadd.f32 %v243, %v355
    %v398 = vadd.f32 %v244, %v356
    %v399 = vadd.f32 %v245, %v357
    %v400 = vadd.f32 %v246, %v358
    %v401 = vadd.f32 %v247, %v359
    %v402 = vadd.f32 %v248, %v360
    %v403 = vadd.f32 %v249, %v361
    %v404 = vadd.f32 %v250, %v362
    %v405 = vadd.f32 %v251, %v363
    %v406 = vadd.f32 %v252, %v364
    %v407 = vadd.f32 %v253, %v365
    %v408 = vadd.f32 %v254, %v366
    %v409 = vadd.f32 %v255, %v367
    %v410 = vadd.f32 %v256, %v368
    %v411 = vadd.f32 %v257, %v369
    %v412 = vadd.f32 %v258, %v370
    %v413 = vadd.f32 %v259, %v371
    %v414 = vadd.f32 %v260, %v372
    %v415 = vld [vmem:[%s1 + $0x2a0] sm:$0xff]
    %v416 = vld [vmem:[%s1 + $0x2a8] sm:$0xff]
    %v417 = vld [vmem:[%s1 + $0x2b0] sm:$0xff]
    %v418 = vld [vmem:[%s1 + $0x2b8] sm:$0xff]
    %v419 = vld [vmem:[%s1 + $0x2c0] sm:$0xff]
    %v420 = vld [vmem:[%s1 + $0x2c8] sm:$0xff]
    %v421 = vld [vmem:[%s1 + $0x2d0] sm:$0xff]
    %v422 = vld [vmem:[%s1 + $0x2d8] sm:$0xff]
    %v423 = vld [vmem:[%s1 + $0x2e0] sm:$0xff]
    %v424 = vld [vmem:[%s1 + $0x2e8] sm:$0xff]
    %v425 = vld [vmem:[%s1 + $0x2f0] sm:$0xff]
    %v426 = vld [vmem:[%s1 + $0x2f8] sm:$0xff]
    %v427 = vld [vmem:[%s1 + $0x300] sm:$0xff]
    %v428 = vld [vmem:[%s1 + $0x308] sm:$0xff]
    %v429 = vld [vmem:[%s1 + $0x310] sm:$0xff]
    %v430 = vld [vmem:[%s1 + $0x318] sm:$0xff]
    %v431 = vld [vmem:[%s1 + $0x320] sm:$0xff]
    %v432 = vld [vmem:[%s1 + $0x328] sm:$0xff]
    %v433 = vld [vmem:[%s1 + $0x330] sm:$0xff]
    %v434 = vld [vmem:[%s1 + $0x338] sm:$0xff]
    %v435 = vld [vmem:[%s1 + $0x340] sm:$0xff]
    %v436 = vld [vmem:[%s1 + $0x348] sm:$0xff]
    %v437 = vld [vmem:[%s1 + $0x350] sm:$0xff]
    %v438 = vld [vmem:[%s1 + $0x358] sm:$0xff]
    %v439 = vld [vmem:[%s1 + $0x360] sm:$0xff]
    %v440 = vld [vmem:[%s1 + $0x368] sm:$0xff]
    %v441 = vld [vmem:[%s1 + $0x370] sm:$0xff]
    %v442 = vld [vmem:[%s1 + $0x378] sm:$0xff]
    %v443 = vld [vmem:[%s1 + $0x380] sm:$0xff]
    %v444 = vld [vmem:[%s1 + $0x388] sm:$0xff]
    %v445 = vld [vmem:[%s1 + $0x390] sm:$0xff]
    %v446 = vld [vmem:[%s1 + $0x398] sm:$0xff]
    %v447 = vld [vmem:[%s1 + $0x3a0] sm:$0xff]
    %v448 = vld [vmem:[%s1 + $0x3a8] sm:$0xff]
    %v449 = vld [vmem:[%s1 + $0x3b0] sm:$0xff]
    %v450 = vld [vmem:[%s1 + $0x3b8] sm:$0xff]
    %v451 = vld [vmem:[%s1 + $0x3c0] sm:$0xff]
    %v452 = vld [vmem:[%s1 + $0x3c8] sm:$0xff]
    %v453 = vld [vmem:[%s1 + $0x3d0] sm:$0xff]
    %v454 = vld [vmem:[%s1 + $0x3d8] sm:$0xff]
    %v455 = vld [vmem:[%s1 + $0x3e0] sm:$0xff]
    %v456 = vld [vmem:[%s1 + $0x3e8] sm:$0xff]
    %v457 = vlaneseq
    %v458 = vshrl.u32 %v457, 7
    %v459 = vsub.s32 2, %v458
    %v460 = vrot.slane %v142, %v459
    %v461 = vlaneseq
    %v462 = vshrl.u32 %v461, 7
    %v463 = vsub.s32 2, %v462
    %v464 = vrot.slane %v143, %v463
    %v465 = vlaneseq
    %v466 = vshrl.u32 %v465, 7
    %v467 = vsub.s32 2, %v466
    %v468 = vrot.slane %v144, %v467
    %v469 = vlaneseq
    %v470 = vshrl.u32 %v469, 7
    %v471 = vsub.s32 2, %v470
    %v472 = vrot.slane %v145, %v471
    %v473 = vlaneseq
    %v474 = vshrl.u32 %v473, 7
    %v475 = vsub.s32 2, %v474
    %v476 = vrot.slane %v146, %v475
    %v477 = vlaneseq
    %v478 = vshrl.u32 %v477, 7
    %v479 = vsub.s32 2, %v478
    %v480 = vrot.slane %v147, %v479
    %v481 = vlaneseq
    %v482 = vshrl.u32 %v481, 7
    %v483 = vsub.s32 2, %v482
    %v484 = vrot.slane %v148, %v483
    %v485 = vmul.f32 %v460, %v415
    %v486 = vmul.f32 %v464, %v416
    %v487 = vmul.f32 %v468, %v417
    %v488 = vmul.f32 %v472, %v418
    %v489 = vmul.f32 %v476, %v419
    %v490 = vmul.f32 %v480, %v420
    %v491 = vmul.f32 %v484, %v421
    %v492 = vmul.f32 %v460, %v422
    %v493 = vmul.f32 %v464, %v423
    %v494 = vmul.f32 %v468, %v424
    %v495 = vmul.f32 %v472, %v425
    %v496 = vmul.f32 %v476, %v426
    %v497 = vmul.f32 %v480, %v427
    %v498 = vmul.f32 %v484, %v428
    %v499 = vmul.f32 %v460, %v429
    %v500 = vmul.f32 %v464, %v430
    %v501 = vmul.f32 %v468, %v431
    %v502 = vmul.f32 %v472, %v432
    %v503 = vmul.f32 %v476, %v433
    %v504 = vmul.f32 %v480, %v434
    %v505 = vmul.f32 %v484, %v435
    %v506 = vmul.f32 %v460, %v436
    %v507 = vmul.f32 %v464, %v437
    %v508 = vmul.f32 %v468, %v438
    %v509 = vmul.f32 %v472, %v439
    %v510 = vmul.f32 %v476, %v440
    %v511 = vmul.f32 %v480, %v441
    %v512 = vmul.f32 %v484, %v442
    %v513 = vmul.f32 %v460, %v443
    %v514 = vmul.f32 %v464, %v444
    %v515 = vmul.f32 %v468, %v445
    %v516 = vmul.f32 %v472, %v446
    %v517 = vmul.f32 %v476, %v447
    %v518 = vmul.f32 %v480, %v448
    %v519 = vmul.f32 %v484, %v449
    %v520 = vmul.f32 %v460, %v450
    %v521 = vmul.f32 %v464, %v451
    %v522 = vmul.f32 %v468, %v452
    %v523 = vmul.f32 %v472, %v453
    %v524 = vmul.f32 %v476, %v454
    %v525 = vmul.f32 %v480, %v455
    %v526 = vmul.f32 %v484, %v456
    %v527 = vadd.f32 %v373, %v485
    %v528 = vadd.f32 %v374, %v486
    %v529 = vadd.f32 %v375, %v487
    %v530 = vadd.f32 %v376, %v488
    %v531 = vadd.f32 %v377, %v489
    %v532 = vadd.f32 %v378, %v490
    %v533 = vadd.f32 %v379, %v491
    %v534 = vadd.f32 %v380, %v492
    %v535 = vadd.f32 %v381, %v493
    %v536 = vadd.f32 %v382, %v494
    %v537 = vadd.f32 %v383, %v495
    %v538 = vadd.f32 %v384, %v496
    %v539 = vadd.f32 %v385, %v497
    %v540 = vadd.f32 %v386, %v498
    %v541 = vadd.f32 %v387, %v499
    %v542 = vadd.f32 %v388, %v500
    %v543 = vadd.f32 %v389, %v501
    %v544 = vadd.f32 %v390, %v502
    %v545 = vadd.f32 %v391, %v503
    %v546 = vadd.f32 %v392, %v504
    %v547 = vadd.f32 %v393, %v505
    %v548 = vadd.f32 %v394, %v506
    %v549 = vadd.f32 %v395, %v507
    %v550 = vadd.f32 %v396, %v508
    %v551 = vadd.f32 %v397, %v509
    %v552 = vadd.f32 %v398, %v510
    %v553 = vadd.f32 %v399, %v511
    %v554 = vadd.f32 %v400, %v512
    %v555 = vadd.f32 %v401, %v513
    %v556 = vadd.f32 %v402, %v514
    %v557 = vadd.f32 %v403, %v515
    %v558 = vadd.f32 %v404, %v516
    %v559 = vadd.f32 %v405, %v517
    %v560 = vadd.f32 %v406, %v518
    %v561 = vadd.f32 %v407, %v519
    %v562 = vadd.f32 %v408, %v520
    %v563 = vadd.f32 %v409, %v521
    %v564 = vadd.f32 %v410, %v522
    %v565 = vadd.f32 %v411, %v523
    %v566 = vadd.f32 %v412, %v524
    %v567 = vadd.f32 %v413, %v525
    %v568 = vadd.f32 %v414, %v526
    %v569 = vld [vmem:[%s1 + $0x3f0] sm:$0xff]
    %v570 = vld [vmem:[%s1 + $0x3f8] sm:$0xff]
    %v571 = vld [vmem:[%s1 + $0x400] sm:$0xff]
    %v572 = vld [vmem:[%s1 + $0x408] sm:$0xff]
    %v573 = vld [vmem:[%s1 + $0x410] sm:$0xff]
    %v574 = vld [vmem:[%s1 + $0x418] sm:$0xff]
    %v575 = vld [vmem:[%s1 + $0x420] sm:$0xff]
    %v576 = vld [vmem:[%s1 + $0x428] sm:$0xff]
    %v577 = vld [vmem:[%s1 + $0x430] sm:$0xff]
    %v578 = vld [vmem:[%s1 + $0x438] sm:$0xff]
    %v579 = vld [vmem:[%s1 + $0x440] sm:$0xff]
    %v580 = vld [vmem:[%s1 + $0x448] sm:$0xff]
    %v581 = vld [vmem:[%s1 + $0x450] sm:$0xff]
    %v582 = vld [vmem:[%s1 + $0x458] sm:$0xff]
    %v583 = vld [vmem:[%s1 + $0x460] sm:$0xff]
    %v584 = vld [vmem:[%s1 + $0x468] sm:$0xff]
    %v585 = vld [vmem:[%s1 + $0x470] sm:$0xff]
    %v586 = vld [vmem:[%s1 + $0x478] sm:$0xff]
    %v587 = vld [vmem:[%s1 + $0x480] sm:$0xff]
    %v588 = vld [vmem:[%s1 + $0x488] sm:$0xff]
    %v589 = vld [vmem:[%s1 + $0x490] sm:$0xff]
    %v590 = vld [vmem:[%s1 + $0x498] sm:$0xff]
    %v591 = vld [vmem:[%s1 + $0x4a0] sm:$0xff]
    %v592 = vld [vmem:[%s1 + $0x4a8] sm:$0xff]
    %v593 = vld [vmem:[%s1 + $0x4b0] sm:$0xff]
    %v594 = vld [vmem:[%s1 + $0x4b8] sm:$0xff]
    %v595 = vld [vmem:[%s1 + $0x4c0] sm:$0xff]
    %v596 = vld [vmem:[%s1 + $0x4c8] sm:$0xff]
    %v597 = vld [vmem:[%s1 + $0x4d0] sm:$0xff]
    %v598 = vld [vmem:[%s1 + $0x4d8] sm:$0xff]
    %v599 = vld [vmem:[%s1 + $0x4e0] sm:$0xff]
    %v600 = vld [vmem:[%s1 + $0x4e8] sm:$0xff]
    %v601 = vld [vmem:[%s1 + $0x4f0] sm:$0xff]
    %v602 = vld [vmem:[%s1 + $0x4f8] sm:$0xff]
    %v603 = vld [vmem:[%s1 + $0x500] sm:$0xff]
    %v604 = vld [vmem:[%s1 + $0x508] sm:$0xff]
    %v605 = vld [vmem:[%s1 + $0x510] sm:$0xff]
    %v606 = vld [vmem:[%s1 + $0x518] sm:$0xff]
    %v607 = vld [vmem:[%s1 + $0x520] sm:$0xff]
    %v608 = vld [vmem:[%s1 + $0x528] sm:$0xff]
    %v609 = vld [vmem:[%s1 + $0x530] sm:$0xff]
    %v610 = vld [vmem:[%s1 + $0x538] sm:$0xff]
    %v611 = vlaneseq
    %v612 = vshrl.u32 %v611, 7
    %v613 = vsub.s32 3, %v612
    %v614 = vrot.slane %v142, %v613
    %v615 = vlaneseq
    %v616 = vshrl.u32 %v615, 7
    %v617 = vsub.s32 3, %v616
    %v618 = vrot.slane %v143, %v617
    %v619 = vlaneseq
    %v620 = vshrl.u32 %v619, 7
    %v621 = vsub.s32 3, %v620
    %v622 = vrot.slane %v144, %v621
    %v623 = vlaneseq
    %v624 = vshrl.u32 %v623, 7
    %v625 = vsub.s32 3, %v624
    %v626 = vrot.slane %v145, %v625
    %v627 = vlaneseq
    %v628 = vshrl.u32 %v627, 7
    %v629 = vsub.s32 3, %v628
    %v630 = vrot.slane %v146, %v629
    %v631 = vlaneseq
    %v632 = vshrl.u32 %v631, 7
    %v633 = vsub.s32 3, %v632
    %v634 = vrot.slane %v147, %v633
    %v635 = vlaneseq
    %v636 = vshrl.u32 %v635, 7
    %v637 = vsub.s32 3, %v636
    %v638 = vrot.slane %v148, %v637
    %v639 = vmul.f32 %v614, %v569
    %v640 = vmul.f32 %v618, %v570
    %v641 = vmul.f32 %v622, %v571
    %v642 = vmul.f32 %v626, %v572
    %v643 = vmul.f32 %v630, %v573
    %v644 = vmul.f32 %v634, %v574
    %v645 = vmul.f32 %v638, %v575
    %v646 = vmul.f32 %v614, %v576
    %v647 = vmul.f32 %v618, %v577
    %v648 = vmul.f32 %v622, %v578
    %v649 = vmul.f32 %v626, %v579
    %v650 = vmul.f32 %v630, %v580
    %v651 = vmul.f32 %v634, %v581
    %v652 = vmul.f32 %v638, %v582
    %v653 = vmul.f32 %v614, %v583
    %v654 = vmul.f32 %v618, %v584
    %v655 = vmul.f32 %v622, %v585
    %v656 = vmul.f32 %v626, %v586
    %v657 = vmul.f32 %v630, %v587
    %v658 = vmul.f32 %v634, %v588
    %v659 = vmul.f32 %v638, %v589
    %v660 = vmul.f32 %v614, %v590
    %v661 = vmul.f32 %v618, %v591
    %v662 = vmul.f32 %v622, %v592
    %v663 = vmul.f32 %v626, %v593
    %v664 = vmul.f32 %v630, %v594
    %v665 = vmul.f32 %v634, %v595
    %v666 = vmul.f32 %v638, %v596
    %v667 = vmul.f32 %v614, %v597
    %v668 = vmul.f32 %v618, %v598
    %v669 = vmul.f32 %v622, %v599
    %v670 = vmul.f32 %v626, %v600
    %v671 = vmul.f32 %v630, %v601
    %v672 = vmul.f32 %v634, %v602
    %v673 = vmul.f32 %v638, %v603
    %v674 = vmul.f32 %v614, %v604
    %v675 = vmul.f32 %v618, %v605
    %v676 = vmul.f32 %v622, %v606
    %v677 = vmul.f32 %v626, %v607
    %v678 = vmul.f32 %v630, %v608
    %v679 = vmul.f32 %v634, %v609
    %v680 = vmul.f32 %v638, %v610
    %v681 = vadd.f32 %v527, %v639
    %v682 = vadd.f32 %v528, %v640
    %v683 = vadd.f32 %v529, %v641
    %v684 = vadd.f32 %v530, %v642
    %v685 = vadd.f32 %v531, %v643
    %v686 = vadd.f32 %v532, %v644
    %v687 = vadd.f32 %v533, %v645
    %v688 = vadd.f32 %v534, %v646
    %v689 = vadd.f32 %v535, %v647
    %v690 = vadd.f32 %v536, %v648
    %v691 = vadd.f32 %v537, %v649
    %v692 = vadd.f32 %v538, %v650
    %v693 = vadd.f32 %v539, %v651
    %v694 = vadd.f32 %v540, %v652
    %v695 = vadd.f32 %v541, %v653
    %v696 = vadd.f32 %v542, %v654
    %v697 = vadd.f32 %v543, %v655
    %v698 = vadd.f32 %v544, %v656
    %v699 = vadd.f32 %v545, %v657
    %v700 = vadd.f32 %v546, %v658
    %v701 = vadd.f32 %v547, %v659
    %v702 = vadd.f32 %v548, %v660
    %v703 = vadd.f32 %v549, %v661
    %v704 = vadd.f32 %v550, %v662
    %v705 = vadd.f32 %v551, %v663
    %v706 = vadd.f32 %v552, %v664
    %v707 = vadd.f32 %v553, %v665
    %v708 = vadd.f32 %v554, %v666
    %v709 = vadd.f32 %v555, %v667
    %v710 = vadd.f32 %v556, %v668
    %v711 = vadd.f32 %v557, %v669
    %v712 = vadd.f32 %v558, %v670
    %v713 = vadd.f32 %v559, %v671
    %v714 = vadd.f32 %v560, %v672
    %v715 = vadd.f32 %v561, %v673
    %v716 = vadd.f32 %v562, %v674
    %v717 = vadd.f32 %v563, %v675
    %v718 = vadd.f32 %v564, %v676
    %v719 = vadd.f32 %v565, %v677
    %v720 = vadd.f32 %v566, %v678
    %v721 = vadd.f32 %v567, %v679
    %v722 = vadd.f32 %v568, %v680
    %v723 = vld [vmem:[%s1 + $0x540] sm:$0xff]
    %v724 = vld [vmem:[%s1 + $0x548] sm:$0xff]
    %v725 = vld [vmem:[%s1 + $0x550] sm:$0xff]
    %v726 = vld [vmem:[%s1 + $0x558] sm:$0xff]
    %v727 = vld [vmem:[%s1 + $0x560] sm:$0xff]
    %v728 = vld [vmem:[%s1 + $0x568] sm:$0xff]
    %v729 = vld [vmem:[%s1 + $0x570] sm:$0xff]
    %v730 = vld [vmem:[%s1 + $0x578] sm:$0xff]
    %v731 = vld [vmem:[%s1 + $0x580] sm:$0xff]
    %v732 = vld [vmem:[%s1 + $0x588] sm:$0xff]
    %v733 = vld [vmem:[%s1 + $0x590] sm:$0xff]
    %v734 = vld [vmem:[%s1 + $0x598] sm:$0xff]
    %v735 = vld [vmem:[%s1 + $0x5a0] sm:$0xff]
    %v736 = vld [vmem:[%s1 + $0x5a8] sm:$0xff]
    %v737 = vld [vmem:[%s1 + $0x5b0] sm:$0xff]
    %v738 = vld [vmem:[%s1 + $0x5b8] sm:$0xff]
    %v739 = vld [vmem:[%s1 + $0x5c0] sm:$0xff]
    %v740 = vld [vmem:[%s1 + $0x5c8] sm:$0xff]
    %v741 = vld [vmem:[%s1 + $0x5d0] sm:$0xff]
    %v742 = vld [vmem:[%s1 + $0x5d8] sm:$0xff]
    %v743 = vld [vmem:[%s1 + $0x5e0] sm:$0xff]
    %v744 = vld [vmem:[%s1 + $0x5e8] sm:$0xff]
    %v745 = vld [vmem:[%s1 + $0x5f0] sm:$0xff]
    %v746 = vld [vmem:[%s1 + $0x5f8] sm:$0xff]
    %v747 = vld [vmem:[%s1 + $0x600] sm:$0xff]
    %v748 = vld [vmem:[%s1 + $0x608] sm:$0xff]
    %v749 = vld [vmem:[%s1 + $0x610] sm:$0xff]
    %v750 = vld [vmem:[%s1 + $0x618] sm:$0xff]
    %v751 = vld [vmem:[%s1 + $0x620] sm:$0xff]
    %v752 = vld [vmem:[%s1 + $0x628] sm:$0xff]
    %v753 = vld [vmem:[%s1 + $0x630] sm:$0xff]
    %v754 = vld [vmem:[%s1 + $0x638] sm:$0xff]
    %v755 = vld [vmem:[%s1 + $0x640] sm:$0xff]
    %v756 = vld [vmem:[%s1 + $0x648] sm:$0xff]
    %v757 = vld [vmem:[%s1 + $0x650] sm:$0xff]
    %v758 = vld [vmem:[%s1 + $0x658] sm:$0xff]
    %v759 = vld [vmem:[%s1 + $0x660] sm:$0xff]
    %v760 = vld [vmem:[%s1 + $0x668] sm:$0xff]
    %v761 = vld [vmem:[%s1 + $0x670] sm:$0xff]
    %v762 = vld [vmem:[%s1 + $0x678] sm:$0xff]
    %v763 = vld [vmem:[%s1 + $0x680] sm:$0xff]
    %v764 = vld [vmem:[%s1 + $0x688] sm:$0xff]
    %v765 = vlaneseq
    %v766 = vshrl.u32 %v765, 7
    %v767 = vsub.s32 4, %v766
    %v768 = vrot.slane %v142, %v767
    %v769 = vlaneseq
    %v770 = vshrl.u32 %v769, 7
    %v771 = vsub.s32 4, %v770
    %v772 = vrot.slane %v143, %v771
    %v773 = vlaneseq
    %v774 = vshrl.u32 %v773, 7
    %v775 = vsub.s32 4, %v774
    %v776 = vrot.slane %v144, %v775
    %v777 = vlaneseq
    %v778 = vshrl.u32 %v777, 7
    %v779 = vsub.s32 4, %v778
    %v780 = vrot.slane %v145, %v779
    %v781 = vlaneseq
    %v782 = vshrl.u32 %v781, 7
    %v783 = vsub.s32 4, %v782
    %v784 = vrot.slane %v146, %v783
    %v785 = vlaneseq
    %v786 = vshrl.u32 %v785, 7
    %v787 = vsub.s32 4, %v786
    %v788 = vrot.slane %v147, %v787
    %v789 = vlaneseq
    %v790 = vshrl.u32 %v789, 7
    %v791 = vsub.s32 4, %v790
    %v792 = vrot.slane %v148, %v791
    %v793 = vmul.f32 %v768, %v723
    %v794 = vmul.f32 %v772, %v724
    %v795 = vmul.f32 %v776, %v725
    %v796 = vmul.f32 %v780, %v726
    %v797 = vmul.f32 %v784, %v727
    %v798 = vmul.f32 %v788, %v728
    %v799 = vmul.f32 %v792, %v729
    %v800 = vmul.f32 %v768, %v730
    %v801 = vmul.f32 %v772, %v731
    %v802 = vmul.f32 %v776, %v732
    %v803 = vmul.f32 %v780, %v733
    %v804 = vmul.f32 %v784, %v734
    %v805 = vmul.f32 %v788, %v735
    %v806 = vmul.f32 %v792, %v736
    %v807 = vmul.f32 %v768, %v737
    %v808 = vmul.f32 %v772, %v738
    %v809 = vmul.f32 %v776, %v739
    %v810 = vmul.f32 %v780, %v740
    %v811 = vmul.f32 %v784, %v741
    %v812 = vmul.f32 %v788, %v742
    %v813 = vmul.f32 %v792, %v743
    %v814 = vmul.f32 %v768, %v744
    %v815 = vmul.f32 %v772, %v745
    %v816 = vmul.f32 %v776, %v746
    %v817 = vmul.f32 %v780, %v747
    %v818 = vmul.f32 %v784, %v748
    %v819 = vmul.f32 %v788, %v749
    %v820 = vmul.f32 %v792, %v750
    %v821 = vmul.f32 %v768, %v751
    %v822 = vmul.f32 %v772, %v752
    %v823 = vmul.f32 %v776, %v753
    %v824 = vmul.f32 %v780, %v754
    %v825 = vmul.f32 %v784, %v755
    %v826 = vmul.f32 %v788, %v756
    %v827 = vmul.f32 %v792, %v757
    %v828 = vmul.f32 %v768, %v758
    %v829 = vmul.f32 %v772, %v759
    %v830 = vmul.f32 %v776, %v760
    %v831 = vmul.f32 %v780, %v761
    %v832 = vmul.f32 %v784, %v762
    %v833 = vmul.f32 %v788, %v763
    %v834 = vmul.f32 %v792, %v764
    %v835 = vadd.f32 %v681, %v793
    %v836 = vadd.f32 %v682, %v794
    %v837 = vadd.f32 %v683, %v795
    %v838 = vadd.f32 %v684, %v796
    %v839 = vadd.f32 %v685, %v797
    %v840 = vadd.f32 %v686, %v798
    %v841 = vadd.f32 %v687, %v799
    %v842 = vadd.f32 %v688, %v800
    %v843 = vadd.f32 %v689, %v801
    %v844 = vadd.f32 %v690, %v802
    %v845 = vadd.f32 %v691, %v803
    %v846 = vadd.f32 %v692, %v804
    %v847 = vadd.f32 %v693, %v805
    %v848 = vadd.f32 %v694, %v806
    %v849 = vadd.f32 %v695, %v807
    %v850 = vadd.f32 %v696, %v808
    %v851 = vadd.f32 %v697, %v809
    %v852 = vadd.f32 %v698, %v810
    %v853 = vadd.f32 %v699, %v811
    %v854 = vadd.f32 %v700, %v812
    %v855 = vadd.f32 %v701, %v813
    %v856 = vadd.f32 %v702, %v814
    %v857 = vadd.f32 %v703, %v815
    %v858 = vadd.f32 %v704, %v816
    %v859 = vadd.f32 %v705, %v817
    %v860 = vadd.f32 %v706, %v818
    %v861 = vadd.f32 %v707, %v819
    %v862 = vadd.f32 %v708, %v820
    %v863 = vadd.f32 %v709, %v821
    %v864 = vadd.f32 %v710, %v822
    %v865 = vadd.f32 %v711, %v823
    %v866 = vadd.f32 %v712, %v824
    %v867 = vadd.f32 %v713, %v825
    %v868 = vadd.f32 %v714, %v826
    %v869 = vadd.f32 %v715, %v827
    %v870 = vadd.f32 %v716, %v828
    %v871 = vadd.f32 %v717, %v829
    %v872 = vadd.f32 %v718, %v830
    %v873 = vadd.f32 %v719, %v831
    %v874 = vadd.f32 %v720, %v832
    %v875 = vadd.f32 %v721, %v833
    %v876 = vadd.f32 %v722, %v834
    %v877 = vld [vmem:[%s1 + $0x690] sm:$0xff]
    %v878 = vld [vmem:[%s1 + $0x698] sm:$0xff]
    %v879 = vld [vmem:[%s1 + $0x6a0] sm:$0xff]
    %v880 = vld [vmem:[%s1 + $0x6a8] sm:$0xff]
    %v881 = vld [vmem:[%s1 + $0x6b0] sm:$0xff]
    %v882 = vld [vmem:[%s1 + $0x6b8] sm:$0xff]
    %v883 = vld [vmem:[%s1 + $0x6c0] sm:$0xff]
    %v884 = vld [vmem:[%s1 + $0x6c8] sm:$0xff]
    %v885 = vld [vmem:[%s1 + $0x6d0] sm:$0xff]
    %v886 = vld [vmem:[%s1 + $0x6d8] sm:$0xff]
    %v887 = vld [vmem:[%s1 + $0x6e0] sm:$0xff]
    %v888 = vld [vmem:[%s1 + $0x6e8] sm:$0xff]
    %v889 = vld [vmem:[%s1 + $0x6f0] sm:$0xff]
    %v890 = vld [vmem:[%s1 + $0x6f8] sm:$0xff]
    %v891 = vld [vmem:[%s1 + $0x700] sm:$0xff]
    %v892 = vld [vmem:[%s1 + $0x708] sm:$0xff]
    %v893 = vld [vmem:[%s1 + $0x710] sm:$0xff]
    %v894 = vld [vmem:[%s1 + $0x718] sm:$0xff]
    %v895 = vld [vmem:[%s1 + $0x720] sm:$0xff]
    %v896 = vld [vmem:[%s1 + $0x728] sm:$0xff]
    %v897 = vld [vmem:[%s1 + $0x730] sm:$0xff]
    %v898 = vld [vmem:[%s1 + $0x738] sm:$0xff]
    %v899 = vld [vmem:[%s1 + $0x740] sm:$0xff]
    %v900 = vld [vmem:[%s1 + $0x748] sm:$0xff]
    %v901 = vld [vmem:[%s1 + $0x750] sm:$0xff]
    %v902 = vld [vmem:[%s1 + $0x758] sm:$0xff]
    %v903 = vld [vmem:[%s1 + $0x760] sm:$0xff]
    %v904 = vld [vmem:[%s1 + $0x768] sm:$0xff]
    %v905 = vld [vmem:[%s1 + $0x770] sm:$0xff]
    %v906 = vld [vmem:[%s1 + $0x778] sm:$0xff]
    %v907 = vld [vmem:[%s1 + $0x780] sm:$0xff]
    %v908 = vld [vmem:[%s1 + $0x788] sm:$0xff]
    %v909 = vld [vmem:[%s1 + $0x790] sm:$0xff]
    %v910 = vld [vmem:[%s1 + $0x798] sm:$0xff]
    %v911 = vld [vmem:[%s1 + $0x7a0] sm:$0xff]
    %v912 = vld [vmem:[%s1 + $0x7a8] sm:$0xff]
    %v913 = vld [vmem:[%s1 + $0x7b0] sm:$0xff]
    %v914 = vld [vmem:[%s1 + $0x7b8] sm:$0xff]
    %v915 = vld [vmem:[%s1 + $0x7c0] sm:$0xff]
    %v916 = vld [vmem:[%s1 + $0x7c8] sm:$0xff]
    %v917 = vld [vmem:[%s1 + $0x7d0] sm:$0xff]
    %v918 = vld [vmem:[%s1 + $0x7d8] sm:$0xff]
    %v919 = vlaneseq
    %v920 = vshrl.u32 %v919, 7
    %v921 = vsub.s32 5, %v920
    %v922 = vrot.slane %v142, %v921
    %v923 = vlaneseq
    %v924 = vshrl.u32 %v923, 7
    %v925 = vsub.s32 5, %v924
    %v926 = vrot.slane %v143, %v925
    %v927 = vlaneseq
    %v928 = vshrl.u32 %v927, 7
    %v929 = vsub.s32 5, %v928
    %v930 = vrot.slane %v144, %v929
    %v931 = vlaneseq
    %v932 = vshrl.u32 %v931, 7
    %v933 = vsub.s32 5, %v932
    %v934 = vrot.slane %v145, %v933
    %v935 = vlaneseq
    %v936 = vshrl.u32 %v935, 7
    %v937 = vsub.s32 5, %v936
    %v938 = vrot.slane %v146, %v937
    %v939 = vlaneseq
    %v940 = vshrl.u32 %v939, 7
    %v941 = vsub.s32 5, %v940
    %v942 = vrot.slane %v147, %v941
    %v943 = vlaneseq
    %v944 = vshrl.u32 %v943, 7
    %v945 = vsub.s32 5, %v944
    %v946 = vrot.slane %v148, %v945
    %v947 = vmul.f32 %v922, %v877
    %v948 = vmul.f32 %v926, %v878
    %v949 = vmul.f32 %v930, %v879
    %v950 = vmul.f32 %v934, %v880
    %v951 = vmul.f32 %v938, %v881
    %v952 = vmul.f32 %v942, %v882
    %v953 = vmul.f32 %v946, %v883
    %v954 = vmul.f32 %v922, %v884
    %v955 = vmul.f32 %v926, %v885
    %v956 = vmul.f32 %v930, %v886
    %v957 = vmul.f32 %v934, %v887
    %v958 = vmul.f32 %v938, %v888
    %v959 = vmul.f32 %v942, %v889
    %v960 = vmul.f32 %v946, %v890
    %v961 = vmul.f32 %v922, %v891
    %v962 = vmul.f32 %v926, %v892
    %v963 = vmul.f32 %v930, %v893
    %v964 = vmul.f32 %v934, %v894
    %v965 = vmul.f32 %v938, %v895
    %v966 = vmul.f32 %v942, %v896
    %v967 = vmul.f32 %v946, %v897
    %v968 = vmul.f32 %v922, %v898
    %v969 = vmul.f32 %v926, %v899
    %v970 = vmul.f32 %v930, %v900
    %v971 = vmul.f32 %v934, %v901
    %v972 = vmul.f32 %v938, %v902
    %v973 = vmul.f32 %v942, %v903
    %v974 = vmul.f32 %v946, %v904
    %v975 = vmul.f32 %v922, %v905
    %v976 = vmul.f32 %v926, %v906
    %v977 = vmul.f32 %v930, %v907
    %v978 = vmul.f32 %v934, %v908
    %v979 = vmul.f32 %v938, %v909
    %v980 = vmul.f32 %v942, %v910
    %v981 = vmul.f32 %v946, %v911
    %v982 = vmul.f32 %v922, %v912
    %v983 = vmul.f32 %v926, %v913
    %v984 = vmul.f32 %v930, %v914
    %v985 = vmul.f32 %v934, %v915
    %v986 = vmul.f32 %v938, %v916
    %v987 = vmul.f32 %v942, %v917
    %v988 = vmul.f32 %v946, %v918
    %v989 = vadd.f32 %v835, %v947
    %v990 = vadd.f32 %v836, %v948
    %v991 = vadd.f32 %v837, %v949
    %v992 = vadd.f32 %v838, %v950
    %v993 = vadd.f32 %v839, %v951
    %v994 = vadd.f32 %v840, %v952
    %v995 = vadd.f32 %v841, %v953
    %v996 = vadd.f32 %v842, %v954
    %v997 = vadd.f32 %v843, %v955
    %v998 = vadd.f32 %v844, %v956
    %v999 = vadd.f32 %v845, %v957
    %v1000 = vadd.f32 %v846, %v958
    %v1001 = vadd.f32 %v847, %v959
    %v1002 = vadd.f32 %v848, %v960
    %v1003 = vadd.f32 %v849, %v961
    %v1004 = vadd.f32 %v850, %v962
    %v1005 = vadd.f32 %v851, %v963
    %v1006 = vadd.f32 %v852, %v964
    %v1007 = vadd.f32 %v853, %v965
    %v1008 = vadd.f32 %v854, %v966
    %v1009 = vadd.f32 %v855, %v967
    %v1010 = vadd.f32 %v856, %v968
    %v1011 = vadd.f32 %v857, %v969
    %v1012 = vadd.f32 %v858, %v970
    %v1013 = vadd.f32 %v859, %v971
    %v1014 = vadd.f32 %v860, %v972
    %v1015 = vadd.f32 %v861, %v973
    %v1016 = vadd.f32 %v862, %v974
    %v1017 = vadd.f32 %v863, %v975
    %v1018 = vadd.f32 %v864, %v976
    %v1019 = vadd.f32 %v865, %v977
    %v1020 = vadd.f32 %v866, %v978
    %v1021 = vadd.f32 %v867, %v979
    %v1022 = vadd.f32 %v868, %v980
    %v1023 = vadd.f32 %v869, %v981
    %v1024 = vadd.f32 %v870, %v982
    %v1025 = vadd.f32 %v871, %v983
    %v1026 = vadd.f32 %v872, %v984
    %v1027 = vadd.f32 %v873, %v985
    %v1028 = vadd.f32 %v874, %v986
    %v1029 = vadd.f32 %v875, %v987
    %v1030 = vadd.f32 %v876, %v988
    %v1031 = vld [vmem:[%s1 + $0x7e0] sm:$0xff]
    %v1032 = vld [vmem:[%s1 + $0x7e8] sm:$0xff]
    %v1033 = vld [vmem:[%s1 + $0x7f0] sm:$0xff]
    %v1034 = vld [vmem:[%s1 + $0x7f8] sm:$0xff]
    %v1035 = vld [vmem:[%s1 + $0x800] sm:$0xff]
    %v1036 = vld [vmem:[%s1 + $0x808] sm:$0xff]
    %v1037 = vld [vmem:[%s1 + $0x810] sm:$0xff]
    %v1038 = vld [vmem:[%s1 + $0x818] sm:$0xff]
    %v1039 = vld [vmem:[%s1 + $0x820] sm:$0xff]
    %v1040 = vld [vmem:[%s1 + $0x828] sm:$0xff]
    %v1041 = vld [vmem:[%s1 + $0x830] sm:$0xff]
    %v1042 = vld [vmem:[%s1 + $0x838] sm:$0xff]
    %v1043 = vld [vmem:[%s1 + $0x840] sm:$0xff]
    %v1044 = vld [vmem:[%s1 + $0x848] sm:$0xff]
    %v1045 = vld [vmem:[%s1 + $0x850] sm:$0xff]
    %v1046 = vld [vmem:[%s1 + $0x858] sm:$0xff]
    %v1047 = vld [vmem:[%s1 + $0x860] sm:$0xff]
    %v1048 = vld [vmem:[%s1 + $0x868] sm:$0xff]
    %v1049 = vld [vmem:[%s1 + $0x870] sm:$0xff]
    %v1050 = vld [vmem:[%s1 + $0x878] sm:$0xff]
    %v1051 = vld [vmem:[%s1 + $0x880] sm:$0xff]
    %v1052 = vld [vmem:[%s1 + $0x888] sm:$0xff]
    %v1053 = vld [vmem:[%s1 + $0x890] sm:$0xff]
    %v1054 = vld [vmem:[%s1 + $0x898] sm:$0xff]
    %v1055 = vld [vmem:[%s1 + $0x8a0] sm:$0xff]
    %v1056 = vld [vmem:[%s1 + $0x8a8] sm:$0xff]
    %v1057 = vld [vmem:[%s1 + $0x8b0] sm:$0xff]
    %v1058 = vld [vmem:[%s1 + $0x8b8] sm:$0xff]
    %v1059 = vld [vmem:[%s1 + $0x8c0] sm:$0xff]
    %v1060 = vld [vmem:[%s1 + $0x8c8] sm:$0xff]
    %v1061 = vld [vmem:[%s1 + $0x8d0] sm:$0xff]
    %v1062 = vld [vmem:[%s1 + $0x8d8] sm:$0xff]
    %v1063 = vld [vmem:[%s1 + $0x8e0] sm:$0xff]
    %v1064 = vld [vmem:[%s1 + $0x8e8] sm:$0xff]
    %v1065 = vld [vmem:[%s1 + $0x8f0] sm:$0xff]
    %v1066 = vld [vmem:[%s1 + $0x8f8] sm:$0xff]
    %v1067 = vld [vmem:[%s1 + $0x900] sm:$0xff]
    %v1068 = vld [vmem:[%s1 + $0x908] sm:$0xff]
    %v1069 = vld [vmem:[%s1 + $0x910] sm:$0xff]
    %v1070 = vld [vmem:[%s1 + $0x918] sm:$0xff]
    %v1071 = vld [vmem:[%s1 + $0x920] sm:$0xff]
    %v1072 = vld [vmem:[%s1 + $0x928] sm:$0xff]
    %v1073 = vlaneseq
    %v1074 = vshrl.u32 %v1073, 7
    %v1075 = vsub.s32 6, %v1074
    %v1076 = vrot.slane %v142, %v1075
    %v1077 = vlaneseq
    %v1078 = vshrl.u32 %v1077, 7
    %v1079 = vsub.s32 6, %v1078
    %v1080 = vrot.slane %v143, %v1079
    %v1081 = vlaneseq
    %v1082 = vshrl.u32 %v1081, 7
    %v1083 = vsub.s32 6, %v1082
    %v1084 = vrot.slane %v144, %v1083
    %v1085 = vlaneseq
    %v1086 = vshrl.u32 %v1085, 7
    %v1087 = vsub.s32 6, %v1086
    %v1088 = vrot.slane %v145, %v1087
    %v1089 = vlaneseq
    %v1090 = vshrl.u32 %v1089, 7
    %v1091 = vsub.s32 6, %v1090
    %v1092 = vrot.slane %v146, %v1091
    %v1093 = vlaneseq
    %v1094 = vshrl.u32 %v1093, 7
    %v1095 = vsub.s32 6, %v1094
    %v1096 = vrot.slane %v147, %v1095
    %v1097 = vlaneseq
    %v1098 = vshrl.u32 %v1097, 7
    %v1099 = vsub.s32 6, %v1098
    %v1100 = vrot.slane %v148, %v1099
    %v1101 = vmul.f32 %v1076, %v1031
    %v1102 = vmul.f32 %v1080, %v1032
    %v1103 = vmul.f32 %v1084, %v1033
    %v1104 = vmul.f32 %v1088, %v1034
    %v1105 = vmul.f32 %v1092, %v1035
    %v1106 = vmul.f32 %v1096, %v1036
    %v1107 = vmul.f32 %v1100, %v1037
    %v1108 = vmul.f32 %v1076, %v1038
    %v1109 = vmul.f32 %v1080, %v1039
    %v1110 = vmul.f32 %v1084, %v1040
    %v1111 = vmul.f32 %v1088, %v1041
    %v1112 = vmul.f32 %v1092, %v1042
    %v1113 = vmul.f32 %v1096, %v1043
    %v1114 = vmul.f32 %v1100, %v1044
    %v1115 = vmul.f32 %v1076, %v1045
    %v1116 = vmul.f32 %v1080, %v1046
    %v1117 = vmul.f32 %v1084, %v1047
    %v1118 = vmul.f32 %v1088, %v1048
    %v1119 = vmul.f32 %v1092, %v1049
    %v1120 = vmul.f32 %v1096, %v1050
    %v1121 = vmul.f32 %v1100, %v1051
    %v1122 = vmul.f32 %v1076, %v1052
    %v1123 = vmul.f32 %v1080, %v1053
    %v1124 = vmul.f32 %v1084, %v1054
    %v1125 = vmul.f32 %v1088, %v1055
    %v1126 = vmul.f32 %v1092, %v1056
    %v1127 = vmul.f32 %v1096, %v1057
    %v1128 = vmul.f32 %v1100, %v1058
    %v1129 = vmul.f32 %v1076, %v1059
    %v1130 = vmul.f32 %v1080, %v1060
    %v1131 = vmul.f32 %v1084, %v1061
    %v1132 = vmul.f32 %v1088, %v1062
    %v1133 = vmul.f32 %v1092, %v1063
    %v1134 = vmul.f32 %v1096, %v1064
    %v1135 = vmul.f32 %v1100, %v1065
    %v1136 = vmul.f32 %v1076, %v1066
    %v1137 = vmul.f32 %v1080, %v1067
    %v1138 = vmul.f32 %v1084, %v1068
    %v1139 = vmul.f32 %v1088, %v1069
    %v1140 = vmul.f32 %v1092, %v1070
    %v1141 = vmul.f32 %v1096, %v1071
    %v1142 = vmul.f32 %v1100, %v1072
    %v1143 = vadd.f32 %v989, %v1101
    %v1144 = vadd.f32 %v990, %v1102
    %v1145 = vadd.f32 %v991, %v1103
    %v1146 = vadd.f32 %v992, %v1104
    %v1147 = vadd.f32 %v993, %v1105
    %v1148 = vadd.f32 %v994, %v1106
    %v1149 = vadd.f32 %v995, %v1107
    %v1150 = vadd.f32 %v996, %v1108
    %v1151 = vadd.f32 %v997, %v1109
    %v1152 = vadd.f32 %v998, %v1110
    %v1153 = vadd.f32 %v999, %v1111
    %v1154 = vadd.f32 %v1000, %v1112
    %v1155 = vadd.f32 %v1001, %v1113
    %v1156 = vadd.f32 %v1002, %v1114
    %v1157 = vadd.f32 %v1003, %v1115
    %v1158 = vadd.f32 %v1004, %v1116
    %v1159 = vadd.f32 %v1005, %v1117
    %v1160 = vadd.f32 %v1006, %v1118
    %v1161 = vadd.f32 %v1007, %v1119
    %v1162 = vadd.f32 %v1008, %v1120
    %v1163 = vadd.f32 %v1009, %v1121
    %v1164 = vadd.f32 %v1010, %v1122
    %v1165 = vadd.f32 %v1011, %v1123
    %v1166 = vadd.f32 %v1012, %v1124
    %v1167 = vadd.f32 %v1013, %v1125
    %v1168 = vadd.f32 %v1014, %v1126
    %v1169 = vadd.f32 %v1015, %v1127
    %v1170 = vadd.f32 %v1016, %v1128
    %v1171 = vadd.f32 %v1017, %v1129
    %v1172 = vadd.f32 %v1018, %v1130
    %v1173 = vadd.f32 %v1019, %v1131
    %v1174 = vadd.f32 %v1020, %v1132
    %v1175 = vadd.f32 %v1021, %v1133
    %v1176 = vadd.f32 %v1022, %v1134
    %v1177 = vadd.f32 %v1023, %v1135
    %v1178 = vadd.f32 %v1024, %v1136
    %v1179 = vadd.f32 %v1025, %v1137
    %v1180 = vadd.f32 %v1026, %v1138
    %v1181 = vadd.f32 %v1027, %v1139
    %v1182 = vadd.f32 %v1028, %v1140
    %v1183 = vadd.f32 %v1029, %v1141
    %v1184 = vadd.f32 %v1030, %v1142
    %v1185 = vld [vmem:[%s1 + $0x930] sm:$0xff]
    %v1186 = vld [vmem:[%s1 + $0x938] sm:$0xff]
    %v1187 = vld [vmem:[%s1 + $0x940] sm:$0xff]
    %v1188 = vld [vmem:[%s1 + $0x948] sm:$0xff]
    %v1189 = vld [vmem:[%s1 + $0x950] sm:$0xff]
    %v1190 = vld [vmem:[%s1 + $0x958] sm:$0xff]
    %v1191 = vld [vmem:[%s1 + $0x960] sm:$0xff]
    %v1192 = vld [vmem:[%s1 + $0x968] sm:$0xff]
    %v1193 = vld [vmem:[%s1 + $0x970] sm:$0xff]
    %v1194 = vld [vmem:[%s1 + $0x978] sm:$0xff]
    %v1195 = vld [vmem:[%s1 + $0x980] sm:$0xff]
    %v1196 = vld [vmem:[%s1 + $0x988] sm:$0xff]
    %v1197 = vld [vmem:[%s1 + $0x990] sm:$0xff]
    %v1198 = vld [vmem:[%s1 + $0x998] sm:$0xff]
    %v1199 = vld [vmem:[%s1 + $0x9a0] sm:$0xff]
    %v1200 = vld [vmem:[%s1 + $0x9a8] sm:$0xff]
    %v1201 = vld [vmem:[%s1 + $0x9b0] sm:$0xff]
    %v1202 = vld [vmem:[%s1 + $0x9b8] sm:$0xff]
    %v1203 = vld [vmem:[%s1 + $0x9c0] sm:$0xff]
    %v1204 = vld [vmem:[%s1 + $0x9c8] sm:$0xff]
    %v1205 = vld [vmem:[%s1 + $0x9d0] sm:$0xff]
    %v1206 = vld [vmem:[%s1 + $0x9d8] sm:$0xff]
    %v1207 = vld [vmem:[%s1 + $0x9e0] sm:$0xff]
    %v1208 = vld [vmem:[%s1 + $0x9e8] sm:$0xff]
    %v1209 = vld [vmem:[%s1 + $0x9f0] sm:$0xff]
    %v1210 = vld [vmem:[%s1 + $0x9f8] sm:$0xff]
    %v1211 = vld [vmem:[%s1 + $0xa00] sm:$0xff]
    %v1212 = vld [vmem:[%s1 + $0xa08] sm:$0xff]
    %v1213 = vld [vmem:[%s1 + $0xa10] sm:$0xff]
    %v1214 = vld [vmem:[%s1 + $0xa18] sm:$0xff]
    %v1215 = vld [vmem:[%s1 + $0xa20] sm:$0xff]
    %v1216 = vld [vmem:[%s1 + $0xa28] sm:$0xff]
    %v1217 = vld [vmem:[%s1 + $0xa30] sm:$0xff]
    %v1218 = vld [vmem:[%s1 + $0xa38] sm:$0xff]
    %v1219 = vld [vmem:[%s1 + $0xa40] sm:$0xff]
    %v1220 = vld [vmem:[%s1 + $0xa48] sm:$0xff]
    %v1221 = vld [vmem:[%s1 + $0xa50] sm:$0xff]
    %v1222 = vld [vmem:[%s1 + $0xa58] sm:$0xff]
    %v1223 = vld [vmem:[%s1 + $0xa60] sm:$0xff]
    %v1224 = vld [vmem:[%s1 + $0xa68] sm:$0xff]
    %v1225 = vld [vmem:[%s1 + $0xa70] sm:$0xff]
    %v1226 = vld [vmem:[%s1 + $0xa78] sm:$0xff]
    %v1227 = vlaneseq
    %v1228 = vshrl.u32 %v1227, 7
    %v1229 = vsub.s32 7, %v1228
    %v1230 = vrot.slane %v142, %v1229
    %v1231 = vlaneseq
    %v1232 = vshrl.u32 %v1231, 7
    %v1233 = vsub.s32 7, %v1232
    %v1234 = vrot.slane %v143, %v1233
    %v1235 = vlaneseq
    %v1236 = vshrl.u32 %v1235, 7
    %v1237 = vsub.s32 7, %v1236
    %v1238 = vrot.slane %v144, %v1237
    %v1239 = vlaneseq
    %v1240 = vshrl.u32 %v1239, 7
    %v1241 = vsub.s32 7, %v1240
    %v1242 = vrot.slane %v145, %v1241
    %v1243 = vlaneseq
    %v1244 = vshrl.u32 %v1243, 7
    %v1245 = vsub.s32 7, %v1244
    %v1246 = vrot.slane %v146, %v1245
    %v1247 = vlaneseq
    %v1248 = vshrl.u32 %v1247, 7
    %v1249 = vsub.s32 7, %v1248
    %v1250 = vrot.slane %v147, %v1249
    %v1251 = vlaneseq
    %v1252 = vshrl.u32 %v1251, 7
    %v1253 = vsub.s32 7, %v1252
    %v1254 = vrot.slane %v148, %v1253
    %v1255 = vmul.f32 %v1230, %v1185
    %v1256 = vmul.f32 %v1234, %v1186
    %v1257 = vmul.f32 %v1238, %v1187
    %v1258 = vmul.f32 %v1242, %v1188
    %v1259 = vmul.f32 %v1246, %v1189
    %v1260 = vmul.f32 %v1250, %v1190
    %v1261 = vmul.f32 %v1254, %v1191
    %v1262 = vmul.f32 %v1230, %v1192
    %v1263 = vmul.f32 %v1234, %v1193
    %v1264 = vmul.f32 %v1238, %v1194
    %v1265 = vmul.f32 %v1242, %v1195
    %v1266 = vmul.f32 %v1246, %v1196
    %v1267 = vmul.f32 %v1250, %v1197
    %v1268 = vmul.f32 %v1254, %v1198
    %v1269 = vmul.f32 %v1230, %v1199
    %v1270 = vmul.f32 %v1234, %v1200
    %v1271 = vmul.f32 %v1238, %v1201
    %v1272 = vmul.f32 %v1242, %v1202
    %v1273 = vmul.f32 %v1246, %v1203
    %v1274 = vmul.f32 %v1250, %v1204
    %v1275 = vmul.f32 %v1254, %v1205
    %v1276 = vmul.f32 %v1230, %v1206
    %v1277 = vmul.f32 %v1234, %v1207
    %v1278 = vmul.f32 %v1238, %v1208
    %v1279 = vmul.f32 %v1242, %v1209
    %v1280 = vmul.f32 %v1246, %v1210
    %v1281 = vmul.f32 %v1250, %v1211
    %v1282 = vmul.f32 %v1254, %v1212
    %v1283 = vmul.f32 %v1230, %v1213
    %v1284 = vmul.f32 %v1234, %v1214
    %v1285 = vmul.f32 %v1238, %v1215
    %v1286 = vmul.f32 %v1242, %v1216
    %v1287 = vmul.f32 %v1246, %v1217
    %v1288 = vmul.f32 %v1250, %v1218
    %v1289 = vmul.f32 %v1254, %v1219
    %v1290 = vmul.f32 %v1230, %v1220
    %v1291 = vmul.f32 %v1234, %v1221
    %v1292 = vmul.f32 %v1238, %v1222
    %v1293 = vmul.f32 %v1242, %v1223
    %v1294 = vmul.f32 %v1246, %v1224
    %v1295 = vmul.f32 %v1250, %v1225
    %v1296 = vmul.f32 %v1254, %v1226
    %v1297 = vadd.f32 %v1143, %v1255
    %v1298 = vadd.f32 %v1144, %v1256
    %v1299 = vadd.f32 %v1145, %v1257
    %v1300 = vadd.f32 %v1146, %v1258
    %v1301 = vadd.f32 %v1147, %v1259
    %v1302 = vadd.f32 %v1148, %v1260
    %v1303 = vadd.f32 %v1149, %v1261
    %v1304 = vadd.f32 %v1150, %v1262
    %v1305 = vadd.f32 %v1151, %v1263
    %v1306 = vadd.f32 %v1152, %v1264
    %v1307 = vadd.f32 %v1153, %v1265
    %v1308 = vadd.f32 %v1154, %v1266
    %v1309 = vadd.f32 %v1155, %v1267
    %v1310 = vadd.f32 %v1156, %v1268
    %v1311 = vadd.f32 %v1157, %v1269
    %v1312 = vadd.f32 %v1158, %v1270
    %v1313 = vadd.f32 %v1159, %v1271
    %v1314 = vadd.f32 %v1160, %v1272
    %v1315 = vadd.f32 %v1161, %v1273
    %v1316 = vadd.f32 %v1162, %v1274
    %v1317 = vadd.f32 %v1163, %v1275
    %v1318 = vadd.f32 %v1164, %v1276
    %v1319 = vadd.f32 %v1165, %v1277
    %v1320 = vadd.f32 %v1166, %v1278
    %v1321 = vadd.f32 %v1167, %v1279
    %v1322 = vadd.f32 %v1168, %v1280
    %v1323 = vadd.f32 %v1169, %v1281
    %v1324 = vadd.f32 %v1170, %v1282
    %v1325 = vadd.f32 %v1171, %v1283
    %v1326 = vadd.f32 %v1172, %v1284
    %v1327 = vadd.f32 %v1173, %v1285
    %v1328 = vadd.f32 %v1174, %v1286
    %v1329 = vadd.f32 %v1175, %v1287
    %v1330 = vadd.f32 %v1176, %v1288
    %v1331 = vadd.f32 %v1177, %v1289
    %v1332 = vadd.f32 %v1178, %v1290
    %v1333 = vadd.f32 %v1179, %v1291
    %v1334 = vadd.f32 %v1180, %v1292
    %v1335 = vadd.f32 %v1181, %v1293
    %v1336 = vadd.f32 %v1182, %v1294
    %v1337 = vadd.f32 %v1183, %v1295
    %v1338 = vadd.f32 %v1184, %v1296
    %v1339 = vld [vmem:[%s2] sm:$0x77]
    %v1340 = vld [vmem:[%s2 + $0x8] sm:$0x77]
    %v1341 = vld [vmem:[%s2 + $0x10] sm:$0x77]
    %v1342 = vld [vmem:[%s2 + $0x18] sm:$0x7]
    %v1346 = vcombine.high %v1339, %v1339
    %v1347 = vcombine.high %v1340, %v1340
    %v1348 = vcombine.high %v1341, %v1341
    %vm1352 = vcmask 1042432
    %v1353 = vsel %vm1352, %v1339, -inf
    %v1354 = vrot.slane %v1353, 4
    %v1355 = vmax.f32 %v1353, %v1354
    %v1356 = vrot.slane %v1355, 2
    %v1357 = vmax.f32 %v1355, %v1356
    %v1358 = vrot.slane %v1357, 1
    %v1359 = vmax.f32 %v1357, %v1358
    %v1360 = vsel %vm1352, %v1346, -inf
    %v1361 = vrot.slane %v1360, 4
    %v1362 = vmax.f32 %v1360, %v1361
    %v1363 = vrot.slane %v1362, 2
    %v1364 = vmax.f32 %v1362, %v1363
    %v1365 = vrot.slane %v1364, 1
    %v1366 = vmax.f32 %v1364, %v1365
    %v1367 = vsel %vm1352, %v1340, -inf
    %v1368 = vrot.slane %v1367, 4
    %v1369 = vmax.f32 %v1367, %v1368
    %v1370 = vrot.slane %v1369, 2
    %v1371 = vmax.f32 %v1369, %v1370
    %v1372 = vrot.slane %v1371, 1
    %v1373 = vmax.f32 %v1371, %v1372
    %v1374 = vsel %vm1352, %v1347, -inf
    %v1375 = vrot.slane %v1374, 4
    %v1376 = vmax.f32 %v1374, %v1375
    %v1377 = vrot.slane %v1376, 2
    %v1378 = vmax.f32 %v1376, %v1377
    %v1379 = vrot.slane %v1378, 1
    %v1380 = vmax.f32 %v1378, %v1379
    %v1381 = vsel %vm1352, %v1341, -inf
    %v1382 = vrot.slane %v1381, 4
    %v1383 = vmax.f32 %v1381, %v1382
    %v1384 = vrot.slane %v1383, 2
    %v1385 = vmax.f32 %v1383, %v1384
    %v1386 = vrot.slane %v1385, 1
    %v1387 = vmax.f32 %v1385, %v1386
    %v1388 = vsel %vm1352, %v1348, -inf
    %v1389 = vrot.slane %v1388, 4
    %v1390 = vmax.f32 %v1388, %v1389
    %v1391 = vrot.slane %v1390, 2
    %v1392 = vmax.f32 %v1390, %v1391
    %v1393 = vrot.slane %v1392, 1
    %v1394 = vmax.f32 %v1392, %v1393
    %v1395 = vsel %vm1352, %v1342, -inf
    %v1396 = vrot.slane %v1395, 4
    %v1397 = vmax.f32 %v1395, %v1396
    %v1398 = vrot.slane %v1397, 2
    %v1399 = vmax.f32 %v1397, %v1398
    %v1400 = vrot.slane %v1399, 1
    %v1401 = vmax.f32 %v1399, %v1400
    %v1408 = vcombine.low %v1359, %v1366
    %v1409 = vcombine.low %v1373, %v1380
    %v1410 = vcombine.low %v1387, %v1394
    %v1414 = vsub.f32 %v1339, %v1408
    %v1415 = vsub.f32 %v1340, %v1409
    %v1416 = vsub.f32 %v1341, %v1410
    %v1417 = vsub.f32 %v1342, %v1401
    %v1418 = vmul.f32 %v1414, 1.442695
    %v1419 = vpow.pop %v1418
    %v1420 = vmul.f32 %v1415, 1.442695
    %v1421 = vpow.pop %v1420
    %v1422 = vmul.f32 %v1416, 1.442695
    %v1423 = vpow.pop %v1422
    %v1424 = vmul.f32 %v1417, 1.442695
    %v1425 = vpow.pop %v1424
    %v1429 = vcombine.high %v1419, %v1419
    %v1430 = vcombine.high %v1421, %v1421
    %v1431 = vcombine.high %v1423, %v1423
    %v1435 = vsel %vm1352, %v1419, 0.0
    %v1436 = vrot.slane %v1435, 4
    %v1437 = vadd.f32 %v1435, %v1436
    %v1438 = vrot.slane %v1437, 2
    %v1439 = vadd.f32 %v1437, %v1438
    %v1440 = vrot.slane %v1439, 1
    %v1441 = vadd.f32 %v1439, %v1440
    %v1442 = vsel %vm1352, %v1429, 0.0
    %v1443 = vrot.slane %v1442, 4
    %v1444 = vadd.f32 %v1442, %v1443
    %v1445 = vrot.slane %v1444, 2
    %v1446 = vadd.f32 %v1444, %v1445
    %v1447 = vrot.slane %v1446, 1
    %v1448 = vadd.f32 %v1446, %v1447
    %v1449 = vsel %vm1352, %v1421, 0.0
    %v1450 = vrot.slane %v1449, 4
    %v1451 = vadd.f32 %v1449, %v1450
    %v1452 = vrot.slane %v1451, 2
    %v1453 = vadd.f32 %v1451, %v1452
    %v1454 = vrot.slane %v1453, 1
    %v1455 = vadd.f32 %v1453, %v1454
    %v1456 = vsel %vm1352, %v1430, 0.0
    %v1457 = vrot.slane %v1456, 4
    %v1458 = vadd.f32 %v1456, %v1457
    %v1459 = vrot.slane %v1458, 2
    %v1460 = vadd.f32 %v1458, %v1459
    %v1461 = vrot.slane %v1460, 1
    %v1462 = vadd.f32 %v1460, %v1461
    %v1463 = vsel %vm1352, %v1423, 0.0
    %v1464 = vrot.slane %v1463, 4
    %v1465 = vadd.f32 %v1463, %v1464
    %v1466 = vrot.slane %v1465, 2
    %v1467 = vadd.f32 %v1465, %v1466
    %v1468 = vrot.slane %v1467, 1
    %v1469 = vadd.f32 %v1467, %v1468
    %v1470 = vsel %vm1352, %v1431, 0.0
    %v1471 = vrot.slane %v1470, 4
    %v1472 = vadd.f32 %v1470, %v1471
    %v1473 = vrot.slane %v1472, 2
    %v1474 = vadd.f32 %v1472, %v1473
    %v1475 = vrot.slane %v1474, 1
    %v1476 = vadd.f32 %v1474, %v1475
    %v1477 = vsel %vm1352, %v1425, 0.0
    %v1478 = vrot.slane %v1477, 4
    %v1479 = vadd.f32 %v1477, %v1478
    %v1480 = vrot.slane %v1479, 2
    %v1481 = vadd.f32 %v1479, %v1480
    %v1482 = vrot.slane %v1481, 1
    %v1483 = vadd.f32 %v1481, %v1482
    %v1490 = vcombine.low %v1441, %v1448
    %v1491 = vcombine.low %v1455, %v1462
    %v1492 = vcombine.low %v1469, %v1476
    %v1496 = vrcp.pop %v1490
    %v1497 = vmul.f32 %v1419, %v1496
    %v1498 = vrcp.pop %v1491
    %v1499 = vmul.f32 %v1421, %v1498
    %v1500 = vrcp.pop %v1492
    %v1501 = vmul.f32 %v1423, %v1500
    %v1502 = vrcp.pop %v1483
    %v1503 = vmul.f32 %v1425, %v1502
    %v1507 = vcombine.high %v1497, %v1497
    %v1508 = vcombine.high %v1499, %v1499
    %v1509 = vcombine.high %v1501, %v1501
    %1513 = vmatprep.subr.mxu0 %v1507
    %1514 = vmatpush1.xpose.msra.mxu0 %v1497
    %1515 = vmatprep.subr.mxu0 0.0
    %1516 = vmatpush1.xpose.msra.mxu0 0.0
    %1517 = vmatprep.subr.mxu0 0.0
    %1518 = vmatpush1.xpose.msra.mxu0 0.0
    %1519 = vmatprep.subr.mxu0 0.0
    %1520 = vmatpush1.xpose.msra.mxu0 0.0
    %1521 = vmatprep.subr.mxu0 0.0
    %1522 = vmatpush1.xpose.msra.mxu0 0.0
    %1523 = vmatprep.subr.mxu0 0.0
    %1524 = vmatpush1.xpose.msra.mxu0 0.0
    %1525 = vmatprep.subr.mxu0 0.0
    %1526 = vmatpush1.xpose.msra.mxu0 0.0
    %1527 = vmatprep.subr.mxu0 0.0
    %1528 = vmatpush1.xpose.msra.mxu0 0.0
    %1529 = vmatprep.subr.mxu0 0.0
    %1530 = vmatpush1.xpose.msra.mxu0 0.0
    %1531 = vmatprep.subr.mxu0 0.0
    %1532 = vmatpush1.xpose.msra.mxu0 0.0
    %1533 = vmatprep.subr.mxu0 0.0
    %1534 = vmatpush1.xpose.msra.mxu0 0.0
    %1535 = vmatprep.subr.mxu0 0.0
    %1536 = vmatpush1.xpose.msra.mxu0 0.0
    %1537 = vmatprep.subr.mxu0 0.0
    %1538 = vmatpush1.xpose.msra.mxu0 0.0
    %1539 = vmatprep.subr.mxu0 0.0
    %1540 = vmatpush1.xpose.msra.mxu0 0.0
    %1541 = vmatprep.subr.mxu0 0.0
    %1542 = vmatpush1.xpose.msra.mxu0 0.0
    %1543 = vmatprep.subr.mxu0 0.0
    %1544 = vmatpush1.xpose.msra.mxu0 0.0
    %1545 = vmatprep.subr.mxu0 0.0
    %1546 = vmatpush1.xpose.msra.mxu0 0.0
    %1547 = vmatprep.subr.mxu0 0.0
    %1548 = vmatpush1.xpose.msra.mxu0 0.0
    %1549 = vmatprep.subr.mxu0 0.0
    %1550 = vmatpush1.xpose.msra.mxu0 0.0
    %1551 = vmatprep.subr.mxu0 0.0
    %1552 = vmatpush1.xpose.msra.mxu0 0.0
    %1553 = vmatprep.subr.mxu0 0.0
    %1554 = vmatpush1.xpose.msra.mxu0 0.0
    %1555 = vmatprep.subr.mxu0 0.0
    %1556 = vmatpush1.xpose.msra.mxu0 0.0
    %1557 = vmatprep.subr.mxu0 0.0
    %1558 = vmatpush1.xpose.msra.mxu0 0.0
    %1559 = vmatprep.subr.mxu0 0.0
    %1560 = vmatpush1.xpose.msra.mxu0 0.0
    %1561 = vmatprep.subr.mxu0 0.0
    %1562 = vmatpush1.xpose.msra.mxu0 0.0
    %1563 = vmatprep.subr.mxu0 0.0
    %1564 = vmatpush1.xpose.msra.mxu0 0.0
    %1565 = vmatprep.subr.mxu0 0.0
    %1566 = vmatpush1.xpose.msra.mxu0 0.0
    %1567 = vmatprep.subr.mxu0 0.0
    %1568 = vmatpush1.xpose.msra.mxu0 0.0
    %1569 = vmatprep.subr.mxu0 0.0
    %1570 = vmatpush1.xpose.msra.mxu0 0.0
    %1571 = vmatprep.subr.mxu0 0.0
    %1572 = vmatpush1.xpose.msra.mxu0 0.0
    %1573 = vmatprep.subr.mxu0 0.0
    %1574 = vmatpush1.xpose.msra.mxu0 0.0
    %1575 = vmatprep.subr.mxu0 0.0
    %1576 = vmatpush1.xpose.msra.mxu0 0.0
    %1577 = vmatprep.mubr.f32.mxu0 %v1298
    %1578 = vmatmul.mubr.f32.gmra.mrb[0].mxu0 %v1297
    %v1579 = vpop.f32.mrb[0].mxu0
    %v1580 = vadd.f32 0.0, %v1579
    %v1581 = vpop.f32.mrb[0].mxu0
    %1582 = vmatprep.mubr.f32.mxu0 %v1305
    %1583 = vmatmul.mubr.f32.gmra.mrb[0].mxu0 %v1304
    %v1584 = vpop.f32.mrb[0].mxu0
    %v1585 = vadd.f32 0.0, %v1584
    %v1586 = vpop.f32.mrb[0].mxu0
    %1587 = vmatprep.mubr.f32.mxu0 %v1312
    %1588 = vmatmul.mubr.f32.gmra.mrb[0].mxu0 %v1311
    %v1589 = vpop.f32.mrb[0].mxu0
    %v1590 = vadd.f32 0.0, %v1589
    %v1591 = vpop.f32.mrb[0].mxu0
    %1592 = vmatprep.mubr.f32.mxu0 %v1319
    %1593 = vmatmul.mubr.f32.gmra.mrb[0].mxu0 %v1318
    %v1594 = vpop.f32.mrb[0].mxu0
    %v1595 = vadd.f32 0.0, %v1594
    %v1596 = vpop.f32.mrb[0].mxu0
    %1597 = vmatprep.mubr.f32.mxu0 %v1326
    %1598 = vmatmul.mubr.f32.gmra.mrb[0].mxu0 %v1325
    %v1599 = vpop.f32.mrb[0].mxu0
    %v1600 = vadd.f32 0.0, %v1599
    %v1601 = vpop.f32.mrb[0].mxu0
    %1602 = vmatprep.mubr.f32.mxu0 %v1333
    %1603 = vmatmul.mubr.f32.gmra.mrb[0].mxu0 %v1332
    %v1604 = vpop.f32.mrb[0].mxu0
    %v1605 = vadd.f32 0.0, %v1604
    %v1606 = vpop.f32.mrb[0].mxu0
    %1607 = vdwg.mxu0
    %1608 = vmatprep.subr.mxu0 %v1508
    %1609 = vmatpush1.xpose.msra.mxu0 %v1499
    %1610 = vmatprep.subr.mxu0 0.0
    %1611 = vmatpush1.xpose.msra.mxu0 0.0
    %1612 = vmatprep.subr.mxu0 0.0
    %1613 = vmatpush1.xpose.msra.mxu0 0.0
    %1614 = vmatprep.subr.mxu0 0.0
    %1615 = vmatpush1.xpose.msra.mxu0 0.0
    %1616 = vmatprep.subr.mxu0 0.0
    %1617 = vmatpush1.xpose.msra.mxu0 0.0
    %1618 = vmatprep.subr.mxu0 0.0
    %1619 = vmatpush1.xpose.msra.mxu0 0.0
    %1620 = vmatprep.subr.mxu0 0.0
    %1621 = vmatpush1.xpose.msra.mxu0 0.0
    %1622 = vmatprep.subr.mxu0 0.0
    %1623 = vmatpush1.xpose.msra.mxu0 0.0
    %1624 = vmatprep.subr.mxu0 0.0
    %1625 = vmatpush1.xpose.msra.mxu0 0.0
    %1626 = vmatprep.subr.mxu0 0.0
    %1627 = vmatpush1.xpose.msra.mxu0 0.0
    %1628 = vmatprep.subr.mxu0 0.0
    %1629 = vmatpush1.xpose.msra.mxu0 0.0
    %1630 = vmatprep.subr.mxu0 0.0
    %1631 = vmatpush1.xpose.msra.mxu0 0.0
    %1632 = vmatprep.subr.mxu0 0.0
    %1633 = vmatpush1.xpose.msra.mxu0 0.0
    %1634 = vmatprep.subr.mxu0 0.0
    %1635 = vmatpush1.xpose.msra.mxu0 0.0
    %1636 = vmatprep.subr.mxu0 0.0
    %1637 = vmatpush1.xpose.msra.mxu0 0.0
    %1638 = vmatprep.subr.mxu0 0.0
    %1639 = vmatpush1.xpose.msra.mxu0 0.0
    %1640 = vmatprep.subr.mxu0 0.0
    %1641 = vmatpush1.xpose.msra.mxu0 0.0
    %1642 = vmatprep.subr.mxu0 0.0
    %1643 = vmatpush1.xpose.msra.mxu0 0.0
    %1644 = vmatprep.subr.mxu0 0.0
    %1645 = vmatpush1.xpose.msra.mxu0 0.0
    %1646 = vmatprep.subr.mxu0 0.0
    %1647 = vmatpush1.xpose.msra.mxu0 0.0
    %1648 = vmatprep.subr.mxu0 0.0
    %1649 = vmatpush1.xpose.msra.mxu0 0.0
    %1650 = vmatprep.subr.mxu0 0.0
    %1651 = vmatpush1.xpose.msra.mxu0 0.0
    %1652 = vmatprep.subr.mxu0 0.0
    %1653 = vmatpush1.xpose.msra.mxu0 0.0
    %1654 = vmatprep.subr.mxu0 0.0
    %1655 = vmatpush1.xpose.msra.mxu0 0.0
    %1656 = vmatprep.subr.mxu0 0.0
    %1657 = vmatpush1.xpose.msra.mxu0 0.0
    %1658 = vmatprep.subr.mxu0 0.0
    %1659 = vmatpush1.xpose.msra.mxu0 0.0
    %1660 = vmatprep.subr.mxu0 0.0
    %1661 = vmatpush1.xpose.msra.mxu0 0.0
    %1662 = vmatprep.subr.mxu0 0.0
    %1663 = vmatpush1.xpose.msra.mxu0 0.0
    %1664 = vmatprep.subr.mxu0 0.0
    %1665 = vmatpush1.xpose.msra.mxu0 0.0
    %1666 = vmatprep.subr.mxu0 0.0
    %1667 = vmatpush1.xpose.msra.mxu0 0.0
    %1668 = vmatprep.subr.mxu0 0.0
    %1669 = vmatpush1.xpose.msra.mxu0 0.0
    %1670 = vmatprep.subr.mxu0 0.0
    %1671 = vmatpush1.xpose.msra.mxu0 0.0
    %1672 = vmatprep.mubr.f32.mxu0 %v1300
    %1673 = vmatmul.mubr.f32.gmra.mrb[0].mxu0 %v1299
    %v1674 = vpop.f32.mrb[0].mxu0
    %v1675 = vadd.f32 %v1580, %v1674
    %v1676 = vpop.f32.mrb[0].mxu0
    %1677 = vmatprep.mubr.f32.mxu0 %v1307
    %1678 = vmatmul.mubr.f32.gmra.mrb[0].mxu0 %v1306
    %v1679 = vpop.f32.mrb[0].mxu0
    %v1680 = vadd.f32 %v1585, %v1679
    %v1681 = vpop.f32.mrb[0].mxu0
    %1682 = vmatprep.mubr.f32.mxu0 %v1314
    %1683 = vmatmul.mubr.f32.gmra.mrb[0].mxu0 %v1313
    %v1684 = vpop.f32.mrb[0].mxu0
    %v1685 = vadd.f32 %v1590, %v1684
    %v1686 = vpop.f32.mrb[0].mxu0
    %1687 = vmatprep.mubr.f32.mxu0 %v1321
    %1688 = vmatmul.mubr.f32.gmra.mrb[0].mxu0 %v1320
    %v1689 = vpop.f32.mrb[0].mxu0
    %v1690 = vadd.f32 %v1595, %v1689
    %v1691 = vpop.f32.mrb[0].mxu0
    %1692 = vmatprep.mubr.f32.mxu0 %v1328
    %1693 = vmatmul.mubr.f32.gmra.mrb[0].mxu0 %v1327
    %v1694 = vpop.f32.mrb[0].mxu0
    %v1695 = vadd.f32 %v1600, %v1694
    %v1696 = vpop.f32.mrb[0].mxu0
    %1697 = vmatprep.mubr.f32.mxu0 %v1335
    %1698 = vmatmul.mubr.f32.gmra.mrb[0].mxu0 %v1334
    %v1699 = vpop.f32.mrb[0].mxu0
    %v1700 = vadd.f32 %v1605, %v1699
    %v1701 = vpop.f32.mrb[0].mxu0
    %1702 = vdwg.mxu0
    %1703 = vmatprep.subr.mxu0 %v1509
    %1704 = vmatpush1.xpose.msra.mxu0 %v1501
    %1705 = vmatprep.subr.mxu0 0.0
    %1706 = vmatpush1.xpose.msra.mxu0 0.0
    %1707 = vmatprep.subr.mxu0 0.0
    %1708 = vmatpush1.xpose.msra.mxu0 0.0
    %1709 = vmatprep.subr.mxu0 0.0
    %1710 = vmatpush1.xpose.msra.mxu0 0.0
    %1711 = vmatprep.subr.mxu0 0.0
    %1712 = vmatpush1.xpose.msra.mxu0 0.0
    %1713 = vmatprep.subr.mxu0 0.0
    %1714 = vmatpush1.xpose.msra.mxu0 0.0
    %1715 = vmatprep.subr.mxu0 0.0
    %1716 = vmatpush1.xpose.msra.mxu0 0.0
    %1717 = vmatprep.subr.mxu0 0.0
    %1718 = vmatpush1.xpose.msra.mxu0 0.0
    %1719 = vmatprep.subr.mxu0 0.0
    %1720 = vmatpush1.xpose.msra.mxu0 0.0
    %1721 = vmatprep.subr.mxu0 0.0
    %1722 = vmatpush1.xpose.msra.mxu0 0.0
    %1723 = vmatprep.subr.mxu0 0.0
    %1724 = vmatpush1.xpose.msra.mxu0 0.0
    %1725 = vmatprep.subr.mxu0 0.0
    %1726 = vmatpush1.xpose.msra.mxu0 0.0
    %1727 = vmatprep.subr.mxu0 0.0
    %1728 = vmatpush1.xpose.msra.mxu0 0.0
    %1729 = vmatprep.subr.mxu0 0.0
    %1730 = vmatpush1.xpose.msra.mxu0 0.0
    %1731 = vmatprep.subr.mxu0 0.0
    %1732 = vmatpush1.xpose.msra.mxu0 0.0
    %1733 = vmatprep.subr.mxu0 0.0
    %1734 = vmatpush1.xpose.msra.mxu0 0.0
    %1735 = vmatprep.subr.mxu0 0.0
    %1736 = vmatpush1.xpose.msra.mxu0 0.0
    %1737 = vmatprep.subr.mxu0 0.0
    %1738 = vmatpush1.xpose.msra.mxu0 0.0
    %1739 = vmatprep.subr.mxu0 0.0
    %1740 = vmatpush1.xpose.msra.mxu0 0.0
    %1741 = vmatprep.subr.mxu0 0.0
    %1742 = vmatpush1.xpose.msra.mxu0 0.0
    %1743 = vmatprep.subr.mxu0 0.0
    %1744 = vmatpush1.xpose.msra.mxu0 0.0
    %1745 = vmatprep.subr.mxu0 0.0
    %1746 = vmatpush1.xpose.msra.mxu0 0.0
    %1747 = vmatprep.subr.mxu0 0.0
    %1748 = vmatpush1.xpose.msra.mxu0 0.0
    %1749 = vmatprep.subr.mxu0 0.0
    %1750 = vmatpush1.xpose.msra.mxu0 0.0
    %1751 = vmatprep.subr.mxu0 0.0
    %1752 = vmatpush1.xpose.msra.mxu0 0.0
    %1753 = vmatprep.subr.mxu0 0.0
    %1754 = vmatpush1.xpose.msra.mxu0 0.0
    %1755 = vmatprep.subr.mxu0 0.0
    %1756 = vmatpush1.xpose.msra.mxu0 0.0
    %1757 = vmatprep.subr.mxu0 0.0
    %1758 = vmatpush1.xpose.msra.mxu0 0.0
    %1759 = vmatprep.subr.mxu0 0.0
    %1760 = vmatpush1.xpose.msra.mxu0 0.0
    %1761 = vmatprep.subr.mxu0 0.0
    %1762 = vmatpush1.xpose.msra.mxu0 0.0
    %1763 = vmatprep.subr.mxu0 0.0
    %1764 = vmatpush1.xpose.msra.mxu0 0.0
    %1765 = vmatprep.subr.mxu0 0.0
    %1766 = vmatpush1.xpose.msra.mxu0 0.0
    %1767 = vmatprep.mubr.f32.mxu0 %v1302
    %1768 = vmatmul.mubr.f32.gmra.mrb[0].mxu0 %v1301
    %v1769 = vpop.f32.mrb[0].mxu0
    %v1770 = vadd.f32 %v1675, %v1769
    %v1771 = vpop.f32.mrb[0].mxu0
    %1772 = vmatprep.mubr.f32.mxu0 %v1309
    %1773 = vmatmul.mubr.f32.gmra.mrb[0].mxu0 %v1308
    %v1774 = vpop.f32.mrb[0].mxu0
    %v1775 = vadd.f32 %v1680, %v1774
    %v1776 = vpop.f32.mrb[0].mxu0
    %1777 = vmatprep.mubr.f32.mxu0 %v1316
    %1778 = vmatmul.mubr.f32.gmra.mrb[0].mxu0 %v1315
    %v1779 = vpop.f32.mrb[0].mxu0
    %v1780 = vadd.f32 %v1685, %v1779
    %v1781 = vpop.f32.mrb[0].mxu0
    %1782 = vmatprep.mubr.f32.mxu0 %v1323
    %1783 = vmatmul.mubr.f32.gmra.mrb[0].mxu0 %v1322
    %v1784 = vpop.f32.mrb[0].mxu0
    %v1785 = vadd.f32 %v1690, %v1784
    %v1786 = vpop.f32.mrb[0].mxu0
    %1787 = vmatprep.mubr.f32.mxu0 %v1330
    %1788 = vmatmul.mubr.f32.gmra.mrb[0].mxu0 %v1329
    %v1789 = vpop.f32.mrb[0].mxu0
    %v1790 = vadd.f32 %v1695, %v1789
    %v1791 = vpop.f32.mrb[0].mxu0
    %1792 = vmatprep.mubr.f32.mxu0 %v1337
    %1793 = vmatmul.mubr.f32.gmra.mrb[0].mxu0 %v1336
    %v1794 = vpop.f32.mrb[0].mxu0
    %v1795 = vadd.f32 %v1700, %v1794
    %v1796 = vpop.f32.mrb[0].mxu0
    %1797 = vdwg.mxu0
    %1798 = vmatprep.subr.mxu0 0.0
    %1799 = vmatpush1.xpose.msra.mxu0 %v1503
    %1800 = vmatprep.subr.mxu0 0.0
    %1801 = vmatpush1.xpose.msra.mxu0 0.0
    %1802 = vmatprep.subr.mxu0 0.0
    %1803 = vmatpush1.xpose.msra.mxu0 0.0
    %1804 = vmatprep.subr.mxu0 0.0
    %1805 = vmatpush1.xpose.msra.mxu0 0.0
    %1806 = vmatprep.subr.mxu0 0.0
    %1807 = vmatpush1.xpose.msra.mxu0 0.0
    %1808 = vmatprep.subr.mxu0 0.0
    %1809 = vmatpush1.xpose.msra.mxu0 0.0
    %1810 = vmatprep.subr.mxu0 0.0
    %1811 = vmatpush1.xpose.msra.mxu0 0.0
    %1812 = vmatprep.subr.mxu0 0.0
    %1813 = vmatpush1.xpose.msra.mxu0 0.0
    %1814 = vmatprep.subr.mxu0 0.0
    %1815 = vmatpush1.xpose.msra.mxu0 0.0
    %1816 = vmatprep.subr.mxu0 0.0
    %1817 = vmatpush1.xpose.msra.mxu0 0.0
    %1818 = vmatprep.subr.mxu0 0.0
    %1819 = vmatpush1.xpose.msra.mxu0 0.0
    %1820 = vmatprep.subr.mxu0 0.0
    %1821 = vmatpush1.xpose.msra.mxu0 0.0
    %1822 = vmatprep.subr.mxu0 0.0
    %1823 = vmatpush1.xpose.msra.mxu0 0.0
    %1824 = vmatprep.subr.mxu0 0.0
    %1825 = vmatpush1.xpose.msra.mxu0 0.0
    %1826 = vmatprep.subr.mxu0 0.0
    %1827 = vmatpush1.xpose.msra.mxu0 0.0
    %1828 = vmatprep.subr.mxu0 0.0
    %1829 = vmatpush1.xpose.msra.mxu0 0.0
    %1830 = vmatprep.subr.mxu0 0.0
    %1831 = vmatpush1.xpose.msra.mxu0 0.0
    %1832 = vmatprep.subr.mxu0 0.0
    %1833 = vmatpush1.xpose.msra.mxu0 0.0
    %1834 = vmatprep.subr.mxu0 0.0
    %1835 = vmatpush1.xpose.msra.mxu0 0.0
    %1836 = vmatprep.subr.mxu0 0.0
    %1837 = vmatpush1.xpose.msra.mxu0 0.0
    %1838 = vmatprep.subr.mxu0 0.0
    %1839 = vmatpush1.xpose.msra.mxu0 0.0
    %1840 = vmatprep.subr.mxu0 0.0
    %1841 = vmatpush1.xpose.msra.mxu0 0.0
    %1842 = vmatprep.subr.mxu0 0.0
    %1843 = vmatpush1.xpose.msra.mxu0 0.0
    %1844 = vmatprep.subr.mxu0 0.0
    %1845 = vmatpush1.xpose.msra.mxu0 0.0
    %1846 = vmatprep.subr.mxu0 0.0
    %1847 = vmatpush1.xpose.msra.mxu0 0.0
    %1848 = vmatprep.subr.mxu0 0.0
    %1849 = vmatpush1.xpose.msra.mxu0 0.0
    %1850 = vmatprep.subr.mxu0 0.0
    %1851 = vmatpush1.xpose.msra.mxu0 0.0
    %1852 = vmatprep.subr.mxu0 0.0
    %1853 = vmatpush1.xpose.msra.mxu0 0.0
    %1854 = vmatprep.subr.mxu0 0.0
    %1855 = vmatpush1.xpose.msra.mxu0 0.0
    %1856 = vmatprep.subr.mxu0 0.0
    %1857 = vmatpush1.xpose.msra.mxu0 0.0
    %1858 = vmatprep.subr.mxu0 0.0
    %1859 = vmatpush1.xpose.msra.mxu0 0.0
    %1860 = vmatprep.subr.mxu0 0.0
    %1861 = vmatpush1.xpose.msra.mxu0 0.0
    %1862 = vmatprep.mubr.f32.mxu0 0.0
    %1863 = vmatmul.mubr.f32.gmra.mrb[0].mxu0 %v1303
    %v1864 = vpop.f32.mrb[0].mxu0
    %v1865 = vadd.f32 %v1770, %v1864
    %v1866 = vpop.f32.mrb[0].mxu0
    %1867 = vmatprep.mubr.f32.mxu0 0.0
    %1868 = vmatmul.mubr.f32.gmra.mrb[0].mxu0 %v1310
    %v1869 = vpop.f32.mrb[0].mxu0
    %v1870 = vadd.f32 %v1775, %v1869
    %v1871 = vpop.f32.mrb[0].mxu0
    %1872 = vmatprep.mubr.f32.mxu0 0.0
    %1873 = vmatmul.mubr.f32.gmra.mrb[0].mxu0 %v1317
    %v1874 = vpop.f32.mrb[0].mxu0
    %v1875 = vadd.f32 %v1780, %v1874
    %v1876 = vpop.f32.mrb[0].mxu0
    %1877 = vmatprep.mubr.f32.mxu0 0.0
    %1878 = vmatmul.mubr.f32.gmra.mrb[0].mxu0 %v1324
    %v1879 = vpop.f32.mrb[0].mxu0
    %v1880 = vadd.f32 %v1785, %v1879
    %v1881 = vpop.f32.mrb[0].mxu0
    %1882 = vmatprep.mubr.f32.mxu0 0.0
    %1883 = vmatmul.mubr.f32.gmra.mrb[0].mxu0 %v1331
    %v1884 = vpop.f32.mrb[0].mxu0
    %v1885 = vadd.f32 %v1790, %v1884
    %v1886 = vpop.f32.mrb[0].mxu0
    %1887 = vmatprep.mubr.f32.mxu0 0.0
    %1888 = vmatmul.mubr.f32.gmra.mrb[0].mxu0 %v1338
    %v1889 = vpop.f32.mrb[0].mxu0
    %v1890 = vadd.f32 %v1795, %v1889
    %v1891 = vpop.f32.mrb[0].mxu0
    %1892 = vdwg.mxu0
    %v1893 = vmul.f32 %v1865, %v34
    %v1894 = vmul.f32 %v1870, %v35
    %v1895 = vmul.f32 %v1875, %v36
    %v1896 = vmul.f32 %v1880, %v37
    %v1897 = vmul.f32 %v1885, %v38
    %v1898 = vmul.f32 %v1890, %v39
    %vm1899 = vcmask 23552
    %v1900 = vsel %vm1899, %v1893, 0.0
    %1901 = vadd.xlane.f32.xlu0 %v1900
    %v1902 = vpop.xlane.xlu0 %1901
    %v1903 = vsel %vm1899, %v1894, 0.0
    %1904 = vadd.xlane.f32.xlu0 %v1903
    %v1905 = vpop.xlane.xlu0 %1904
    %v1906 = vsel %vm1899, %v1895, 0.0
    %1907 = vadd.xlane.f32.xlu0 %v1906
    %v1908 = vpop.xlane.xlu0 %1907
    %v1909 = vsel %vm1899, %v1896, 0.0
    %1910 = vadd.xlane.f32.xlu0 %v1909
    %v1911 = vpop.xlane.xlu0 %1910
    %v1912 = vsel %vm1899, %v1897, 0.0
    %1913 = vadd.xlane.f32.xlu0 %v1912
    %v1914 = vpop.xlane.xlu0 %1913
    %v1915 = vsel %vm1899, %v1898, 0.0
    %1916 = vadd.xlane.f32.xlu0 %v1915
    %v1917 = vpop.xlane.xlu0 %1916
    %v1918 = vmul.f32 %v1902, %v1902
    %v1919 = vmul.f32 %v1905, %v1905
    %v1920 = vmul.f32 %v1908, %v1908
    %v1921 = vmul.f32 %v1911, %v1911
    %v1922 = vmul.f32 %v1914, %v1914
    %v1923 = vmul.f32 %v1917, %v1917
    %vm1924 = vcmask 392192
    %v1926 = vsel %vm1924, %v40, 0
    %1928 = vmatprep.subr.mxu0 0.0
    %1929 = vmatpush1.msra.mxu0 %v1918
    %1930 = vmatprep.subr.mxu0 0.0
    %1931 = vmatpush1.msra.mxu0 %v1919
    %1932 = vmatprep.subr.mxu0 0.0
    %1933 = vmatpush1.msra.mxu0 %v1920
    %1934 = vmatprep.subr.mxu0 0.0
    %1935 = vmatpush1.msra.mxu0 %v1921
    %1936 = vmatprep.subr.mxu0 0.0
    %1937 = vmatpush1.msra.mxu0 %v1922
    %1938 = vmatprep.subr.mxu0 0.0
    %1939 = vmatpush1.msra.mxu0 %v1923
    %1940 = vmatprep.subr.mxu0 0.0
    %1941 = vmatpush1.msra.mxu0 0.0
    %1942 = vmatprep.subr.mxu0 0.0
    %1943 = vmatpush1.msra.mxu0 0.0
    %1944 = vmatprep.subr.mxu0 0.0
    %1945 = vmatpush1.msra.mxu0 0.0
    %1946 = vmatprep.subr.mxu0 0.0
    %1947 = vmatpush1.msra.mxu0 0.0
    %1948 = vmatprep.subr.mxu0 0.0
    %1949 = vmatpush1.msra.mxu0 0.0
    %1950 = vmatprep.subr.mxu0 0.0
    %1951 = vmatpush1.msra.mxu0 0.0
    %1952 = vmatprep.subr.mxu0 0.0
    %1953 = vmatpush1.msra.mxu0 0.0
    %1954 = vmatprep.subr.mxu0 0.0
    %1955 = vmatpush1.msra.mxu0 0.0
    %1956 = vmatprep.subr.mxu0 0.0
    %1957 = vmatpush1.msra.mxu0 0.0
    %1958 = vmatprep.subr.mxu0 0.0
    %1959 = vmatpush1.msra.mxu0 0.0
    %1960 = vmatprep.subr.mxu0 0.0
    %1961 = vmatpush1.msra.mxu0 0.0
    %1962 = vmatprep.subr.mxu0 0.0
    %1963 = vmatpush1.msra.mxu0 0.0
    %1964 = vmatprep.subr.mxu0 0.0
    %1965 = vmatpush1.msra.mxu0 0.0
    %1966 = vmatprep.subr.mxu0 0.0
    %1967 = vmatpush1.msra.mxu0 0.0
    %1968 = vmatprep.subr.mxu0 0.0
    %1969 = vmatpush1.msra.mxu0 0.0
    %1970 = vmatprep.subr.mxu0 0.0
    %1971 = vmatpush1.msra.mxu0 0.0
    %1972 = vmatprep.subr.mxu0 0.0
    %1973 = vmatpush1.msra.mxu0 0.0
    %1974 = vmatprep.subr.mxu0 0.0
    %1975 = vmatpush1.msra.mxu0 0.0
    %1976 = vmatprep.subr.mxu0 0.0
    %1977 = vmatpush1.msra.mxu0 0.0
    %1978 = vmatprep.subr.mxu0 0.0
    %1979 = vmatpush1.msra.mxu0 0.0
    %1980 = vmatprep.subr.mxu0 0.0
    %1981 = vmatpush1.msra.mxu0 0.0
    %1982 = vmatprep.subr.mxu0 0.0
    %1983 = vmatpush1.msra.mxu0 0.0
    %1984 = vmatprep.subr.mxu0 0.0
    %1985 = vmatpush1.msra.mxu0 0.0
    %1986 = vmatprep.subr.mxu0 0.0
    %1987 = vmatpush1.msra.mxu0 0.0
    %1988 = vmatprep.subr.mxu0 0.0
    %1989 = vmatpush1.msra.mxu0 0.0
    %1990 = vmatprep.subr.mxu0 0.0
    %1991 = vmatpush1.msra.mxu0 0.0
    %1992 = vmatprep.mubr.f32.mxu0 0.0
    %1993 = vmatmul.mubr.f32.gmra.mrb[0].mxu0 %v1926
    %v1994 = vpop.f32.mrb[0].mxu0
    %v1995 = vadd.f32 0.0, %v1994
    %v1996 = vpop.f32.mrb[0].mxu0
    %1997 = vdwg.mxu0
    %v1998 = vadd.f32 %v1995, 1.0
    %v1999 = vrcp.pop %v1998
    %v2000 = vmul.f32 %v1995, %v1999
    %v2001 = vadd.f32 %v1995, 1e-08
    %v2002 = vrsqrt.pop %v2001
    %v2003 = vmul.f32 %v2000, %v2002
    %v2005 = vsel %vm1899, %v34, 0
    %v2008 = vsel %vm1899, %v35, 0
    %v2011 = vsel %vm1899, %v36, 0
    %v2014 = vsel %vm1899, %v37, 0
    %v2017 = vsel %vm1899, %v38, 0
    %v2020 = vsel %vm1899, %v39, 0
    %v2023 = vsel %vm1352, %v2003, 0
    %2025 = vmatprep.subr.mxu0 0.0
    %2026 = vmatpush1.msra.mxu0 %v2023
    %2027 = vmatprep.subr.mxu0 0.0
    %2028 = vmatpush1.msra.mxu0 0.0
    %2029 = vmatprep.subr.mxu0 0.0
    %2030 = vmatpush1.msra.mxu0 0.0
    %2031 = vmatprep.subr.mxu0 0.0
    %2032 = vmatpush1.msra.mxu0 0.0
    %2033 = vmatprep.subr.mxu0 0.0
    %2034 = vmatpush1.msra.mxu0 0.0
    %2035 = vmatprep.subr.mxu0 0.0
    %2036 = vmatpush1.msra.mxu0 0.0
    %2037 = vmatprep.subr.mxu0 0.0
    %2038 = vmatpush1.msra.mxu0 0.0
    %2039 = vmatprep.subr.mxu0 0.0
    %2040 = vmatpush1.msra.mxu0 0.0
    %2041 = vmatprep.subr.mxu0 0.0
    %2042 = vmatpush1.msra.mxu0 0.0
    %2043 = vmatprep.subr.mxu0 0.0
    %2044 = vmatpush1.msra.mxu0 0.0
    %2045 = vmatprep.subr.mxu0 0.0
    %2046 = vmatpush1.msra.mxu0 0.0
    %2047 = vmatprep.subr.mxu0 0.0
    %2048 = vmatpush1.msra.mxu0 0.0
    %2049 = vmatprep.subr.mxu0 0.0
    %2050 = vmatpush1.msra.mxu0 0.0
    %2051 = vmatprep.subr.mxu0 0.0
    %2052 = vmatpush1.msra.mxu0 0.0
    %2053 = vmatprep.subr.mxu0 0.0
    %2054 = vmatpush1.msra.mxu0 0.0
    %2055 = vmatprep.subr.mxu0 0.0
    %2056 = vmatpush1.msra.mxu0 0.0
    %2057 = vmatprep.subr.mxu0 0.0
    %2058 = vmatpush1.msra.mxu0 0.0
    %2059 = vmatprep.subr.mxu0 0.0
    %2060 = vmatpush1.msra.mxu0 0.0
    %2061 = vmatprep.subr.mxu0 0.0
    %2062 = vmatpush1.msra.mxu0 0.0
    %2063 = vmatprep.subr.mxu0 0.0
    %2064 = vmatpush1.msra.mxu0 0.0
    %2065 = vmatprep.subr.mxu0 0.0
    %2066 = vmatpush1.msra.mxu0 0.0
    %2067 = vmatprep.subr.mxu0 0.0
    %2068 = vmatpush1.msra.mxu0 0.0
    %2069 = vmatprep.subr.mxu0 0.0
    %2070 = vmatpush1.msra.mxu0 0.0
    %2071 = vmatprep.subr.mxu0 0.0
    %2072 = vmatpush1.msra.mxu0 0.0
    %2073 = vmatprep.subr.mxu0 0.0
    %2074 = vmatpush1.msra.mxu0 0.0
    %2075 = vmatprep.subr.mxu0 0.0
    %2076 = vmatpush1.msra.mxu0 0.0
    %2077 = vmatprep.subr.mxu0 0.0
    %2078 = vmatpush1.msra.mxu0 0.0
    %2079 = vmatprep.subr.mxu0 0.0
    %2080 = vmatpush1.msra.mxu0 0.0
    %2081 = vmatprep.subr.mxu0 0.0
    %2082 = vmatpush1.msra.mxu0 0.0
    %2083 = vmatprep.subr.mxu0 0.0
    %2084 = vmatpush1.msra.mxu0 0.0
    %2085 = vmatprep.subr.mxu0 0.0
    %2086 = vmatpush1.msra.mxu0 0.0
    %2087 = vmatprep.subr.mxu0 0.0
    %2088 = vmatpush1.msra.mxu0 0.0
    %2089 = vmatprep.mubr.f32.mxu0 0.0
    %2090 = vmatmul.mubr.f32.gmra.mrb[0].mxu0 %v2005
    %v2091 = vpop.f32.mrb[0].mxu0
    %v2092 = vadd.f32 0.0, %v2091
    %v2093 = vpop.f32.mrb[0].mxu0
    %2094 = vmatprep.mubr.f32.mxu0 0.0
    %2095 = vmatmul.mubr.f32.gmra.mrb[0].mxu0 %v2008
    %v2096 = vpop.f32.mrb[0].mxu0
    %v2097 = vadd.f32 0.0, %v2096
    %v2098 = vpop.f32.mrb[0].mxu0
    %2099 = vmatprep.mubr.f32.mxu0 0.0
    %2100 = vmatmul.mubr.f32.gmra.mrb[0].mxu0 %v2011
    %v2101 = vpop.f32.mrb[0].mxu0
    %v2102 = vadd.f32 0.0, %v2101
    %v2103 = vpop.f32.mrb[0].mxu0
    %2104 = vmatprep.mubr.f32.mxu0 0.0
    %2105 = vmatmul.mubr.f32.gmra.mrb[0].mxu0 %v2014
    %v2106 = vpop.f32.mrb[0].mxu0
    %v2107 = vadd.f32 0.0, %v2106
    %v2108 = vpop.f32.mrb[0].mxu0
    %2109 = vmatprep.mubr.f32.mxu0 0.0
    %2110 = vmatmul.mubr.f32.gmra.mrb[0].mxu0 %v2017
    %v2111 = vpop.f32.mrb[0].mxu0
    %v2112 = vadd.f32 0.0, %v2111
    %v2113 = vpop.f32.mrb[0].mxu0
    %2114 = vmatprep.mubr.f32.mxu0 0.0
    %2115 = vmatmul.mubr.f32.gmra.mrb[0].mxu0 %v2020
    %v2116 = vpop.f32.mrb[0].mxu0
    %v2117 = vadd.f32 0.0, %v2116
    %v2118 = vpop.f32.mrb[0].mxu0
    %2119 = vdwg.mxu0
    %v2120 = vmul.f32 %v1902, %v2092
    %v2121 = vmul.f32 %v1905, %v2097
    %v2122 = vmul.f32 %v1908, %v2102
    %v2123 = vmul.f32 %v1911, %v2107
    %v2124 = vmul.f32 %v1914, %v2112
    %v2125 = vmul.f32 %v1917, %v2117
    %2127 = vset.pattern.permute.xlu0 0
    %2128 = vperm.xlu0 %2127, %v2120
    %v2129 = vpop.permute.xlu0 %2128
    %2132 = vset.pattern.permute.xlu0 0
    %2133 = vperm.xlu0 %2132, %v2121
    %v2134 = vpop.permute.xlu0 %2133
    %2137 = vset.pattern.permute.xlu0 0
    %2138 = vperm.xlu0 %2137, %v2122
    %v2139 = vpop.permute.xlu0 %2138
    %2142 = vset.pattern.permute.xlu0 0
    %2143 = vperm.xlu0 %2142, %v2123
    %v2144 = vpop.permute.xlu0 %2143
    %2147 = vset.pattern.permute.xlu0 0
    %2148 = vperm.xlu0 %2147, %v2124
    %v2149 = vpop.permute.xlu0 %2148
    %2152 = vset.pattern.permute.xlu0 0
    %2153 = vperm.xlu0 %2152, %v2125
    %v2154 = vpop.permute.xlu0 %2153
    %v2156 = vmul.f32 %v34, %v2129
    %v2157 = vmul.f32 %v35, %v2134
    %v2158 = vmul.f32 %v36, %v2139
    %v2159 = vmul.f32 %v37, %v2144
    %v2160 = vmul.f32 %v38, %v2149
    %v2161 = vmul.f32 %v39, %v2154
    %2162 = vxpose.xlu0.b32.start [1/16] %v2156, 128
    %2163 = vxpose.xlu0.b32.cont [2/16] %v2157, 128
    %2164 = vxpose.xlu0.b32.cont [3/16] %v2158, 128
    %2165 = vxpose.xlu0.b32.cont [4/16] %v2159, 128
    %2166 = vxpose.xlu0.b32.cont [5/16] %v2160, 128
    %2167 = vxpose.xlu0.b32.cont [6/16] %v2161, 128
    %2168 = vxpose.xlu0.b32.cont [7/16] 0.0, 128
    %2169 = vxpose.xlu0.b32.cont [8/16] 0.0, 128
    %2170 = vxpose.xlu0.b32.cont [9/16] 0.0, 128
    %2171 = vxpose.xlu0.b32.cont [10/16] 0.0, 128
    %2172 = vxpose.xlu0.b32.cont [11/16] 0.0, 128
    %2173 = vxpose.xlu0.b32.cont [12/16] 0.0, 128
    %2174 = vxpose.xlu0.b32.cont [13/16] 0.0, 128
    %2175 = vxpose.xlu0.b32.cont [14/16] 0.0, 128
    %2176 = vxpose.xlu0.b32.cont [15/16] 0.0, 128
    %2177 = vxpose.xlu0.b32.end [16/16] 0.0, 128
    %v2178 = vpop.trf.xlu0
    %v2179 = vpop.trf.xlu0
    %v2180 = vpop.trf.xlu0
    %v2181 = vpop.trf.xlu0
    %v2182 = vpop.trf.xlu0
    %v2183 = vpop.trf.xlu0
    %v2184 = vpop.trf.xlu0
    %v2185 = vpop.trf.xlu0
    %v2186 = vpop.trf.xlu0
    %v2187 = vpop.trf.xlu0
    %v2188 = vpop.trf.xlu0
    %v2189 = vpop.trf.xlu0
    %v2190 = vpop.trf.xlu0
    %v2191 = vpop.trf.xlu0
    %v2192 = vpop.trf.xlu0
    %v2193 = vpop.trf.xlu0
    %v2195 = vsel %vm1924, %v2178, 0
    %2197 = vmatprep.subr.mxu0 %v1298
    %2198 = vmatpush1.msra.mxu0 %v1297
    %2199 = vmatprep.subr.mxu0 %v1305
    %2200 = vmatpush1.msra.mxu0 %v1304
    %2201 = vmatprep.subr.mxu0 %v1312
    %2202 = vmatpush1.msra.mxu0 %v1311
    %2203 = vmatprep.subr.mxu0 %v1319
    %2204 = vmatpush1.msra.mxu0 %v1318
    %2205 = vmatprep.subr.mxu0 %v1326
    %2206 = vmatpush1.msra.mxu0 %v1325
    %2207 = vmatprep.subr.mxu0 %v1333
    %2208 = vmatpush1.msra.mxu0 %v1332
    %2209 = vmatprep.subr.mxu0 0.0
    %2210 = vmatpush1.msra.mxu0 0.0
    %2211 = vmatprep.subr.mxu0 0.0
    %2212 = vmatpush1.msra.mxu0 0.0
    %2213 = vmatprep.subr.mxu0 0.0
    %2214 = vmatpush1.msra.mxu0 0.0
    %2215 = vmatprep.subr.mxu0 0.0
    %2216 = vmatpush1.msra.mxu0 0.0
    %2217 = vmatprep.subr.mxu0 0.0
    %2218 = vmatpush1.msra.mxu0 0.0
    %2219 = vmatprep.subr.mxu0 0.0
    %2220 = vmatpush1.msra.mxu0 0.0
    %2221 = vmatprep.subr.mxu0 0.0
    %2222 = vmatpush1.msra.mxu0 0.0
    %2223 = vmatprep.subr.mxu0 0.0
    %2224 = vmatpush1.msra.mxu0 0.0
    %2225 = vmatprep.subr.mxu0 0.0
    %2226 = vmatpush1.msra.mxu0 0.0
    %2227 = vmatprep.subr.mxu0 0.0
    %2228 = vmatpush1.msra.mxu0 0.0
    %2229 = vmatprep.subr.mxu0 0.0
    %2230 = vmatpush1.msra.mxu0 0.0
    %2231 = vmatprep.subr.mxu0 0.0
    %2232 = vmatpush1.msra.mxu0 0.0
    %2233 = vmatprep.subr.mxu0 0.0
    %2234 = vmatpush1.msra.mxu0 0.0
    %2235 = vmatprep.subr.mxu0 0.0
    %2236 = vmatpush1.msra.mxu0 0.0
    %2237 = vmatprep.subr.mxu0 0.0
    %2238 = vmatpush1.msra.mxu0 0.0
    %2239 = vmatprep.subr.mxu0 0.0
    %2240 = vmatpush1.msra.mxu0 0.0
    %2241 = vmatprep.subr.mxu0 0.0
    %2242 = vmatpush1.msra.mxu0 0.0
    %2243 = vmatprep.subr.mxu0 0.0
    %2244 = vmatpush1.msra.mxu0 0.0
    %2245 = vmatprep.subr.mxu0 0.0
    %2246 = vmatpush1.msra.mxu0 0.0
    %2247 = vmatprep.subr.mxu0 0.0
    %2248 = vmatpush1.msra.mxu0 0.0
    %2249 = vmatprep.subr.mxu0 0.0
    %2250 = vmatpush1.msra.mxu0 0.0
    %2251 = vmatprep.subr.mxu0 0.0
    %2252 = vmatpush1.msra.mxu0 0.0
    %2253 = vmatprep.subr.mxu0 0.0
    %2254 = vmatpush1.msra.mxu0 0.0
    %2255 = vmatprep.subr.mxu0 0.0
    %2256 = vmatpush1.msra.mxu0 0.0
    %2257 = vmatprep.subr.mxu0 0.0
    %2258 = vmatpush1.msra.mxu0 0.0
    %2259 = vmatprep.subr.mxu0 0.0
    %2260 = vmatpush1.msra.mxu0 0.0
    %2261 = vmatprep.mubr.f32.mxu0 0.0
    %2262 = vmatmul.mubr.f32.gmra.mrb[0].mxu0 %v2195
    %v2263 = vpop.f32.mrb[0].mxu0
    %v2264 = vadd.f32 0.0, %v2263
    %v2265 = vpop.f32.mrb[0].mxu0
    %v2266 = vadd.f32 0.0, %v2265
    %2267 = vdwg.mxu0
    %2268 = vmatprep.subr.mxu0 %v1300
    %2269 = vmatpush1.msra.mxu0 %v1299
    %2270 = vmatprep.subr.mxu0 %v1307
    %2271 = vmatpush1.msra.mxu0 %v1306
    %2272 = vmatprep.subr.mxu0 %v1314
    %2273 = vmatpush1.msra.mxu0 %v1313
    %2274 = vmatprep.subr.mxu0 %v1321
    %2275 = vmatpush1.msra.mxu0 %v1320
    %2276 = vmatprep.subr.mxu0 %v1328
    %2277 = vmatpush1.msra.mxu0 %v1327
    %2278 = vmatprep.subr.mxu0 %v1335
    %2279 = vmatpush1.msra.mxu0 %v1334
    %2280 = vmatprep.subr.mxu0 0.0
    %2281 = vmatpush1.msra.mxu0 0.0
    %2282 = vmatprep.subr.mxu0 0.0
    %2283 = vmatpush1.msra.mxu0 0.0
    %2284 = vmatprep.subr.mxu0 0.0
    %2285 = vmatpush1.msra.mxu0 0.0
    %2286 = vmatprep.subr.mxu0 0.0
    %2287 = vmatpush1.msra.mxu0 0.0
    %2288 = vmatprep.subr.mxu0 0.0
    %2289 = vmatpush1.msra.mxu0 0.0
    %2290 = vmatprep.subr.mxu0 0.0
    %2291 = vmatpush1.msra.mxu0 0.0
    %2292 = vmatprep.subr.mxu0 0.0
    %2293 = vmatpush1.msra.mxu0 0.0
    %2294 = vmatprep.subr.mxu0 0.0
    %2295 = vmatpush1.msra.mxu0 0.0
    %2296 = vmatprep.subr.mxu0 0.0
    %2297 = vmatpush1.msra.mxu0 0.0
    %2298 = vmatprep.subr.mxu0 0.0
    %2299 = vmatpush1.msra.mxu0 0.0
    %2300 = vmatprep.subr.mxu0 0.0
    %2301 = vmatpush1.msra.mxu0 0.0
    %2302 = vmatprep.subr.mxu0 0.0
    %2303 = vmatpush1.msra.mxu0 0.0
    %2304 = vmatprep.subr.mxu0 0.0
    %2305 = vmatpush1.msra.mxu0 0.0
    %2306 = vmatprep.subr.mxu0 0.0
    %2307 = vmatpush1.msra.mxu0 0.0
    %2308 = vmatprep.subr.mxu0 0.0
    %2309 = vmatpush1.msra.mxu0 0.0
    %2310 = vmatprep.subr.mxu0 0.0
    %2311 = vmatpush1.msra.mxu0 0.0
    %2312 = vmatprep.subr.mxu0 0.0
    %2313 = vmatpush1.msra.mxu0 0.0
    %2314 = vmatprep.subr.mxu0 0.0
    %2315 = vmatpush1.msra.mxu0 0.0
    %2316 = vmatprep.subr.mxu0 0.0
    %2317 = vmatpush1.msra.mxu0 0.0
    %2318 = vmatprep.subr.mxu0 0.0
    %2319 = vmatpush1.msra.mxu0 0.0
    %2320 = vmatprep.subr.mxu0 0.0
    %2321 = vmatpush1.msra.mxu0 0.0
    %2322 = vmatprep.subr.mxu0 0.0
    %2323 = vmatpush1.msra.mxu0 0.0
    %2324 = vmatprep.subr.mxu0 0.0
    %2325 = vmatpush1.msra.mxu0 0.0
    %2326 = vmatprep.subr.mxu0 0.0
    %2327 = vmatpush1.msra.mxu0 0.0
    %2328 = vmatprep.subr.mxu0 0.0
    %2329 = vmatpush1.msra.mxu0 0.0
    %2330 = vmatprep.subr.mxu0 0.0
    %2331 = vmatpush1.msra.mxu0 0.0
    %2332 = vmatprep.mubr.f32.mxu0 0.0
    %2333 = vmatmul.mubr.f32.gmra.mrb[0].mxu0 %v2195
    %v2334 = vpop.f32.mrb[0].mxu0
    %v2335 = vadd.f32 0.0, %v2334
    %v2336 = vpop.f32.mrb[0].mxu0
    %v2337 = vadd.f32 0.0, %v2336
    %2338 = vdwg.mxu0
    %2339 = vmatprep.subr.mxu0 %v1302
    %2340 = vmatpush1.msra.mxu0 %v1301
    %2341 = vmatprep.subr.mxu0 %v1309
    %2342 = vmatpush1.msra.mxu0 %v1308
    %2343 = vmatprep.subr.mxu0 %v1316
    %2344 = vmatpush1.msra.mxu0 %v1315
    %2345 = vmatprep.subr.mxu0 %v1323
    %2346 = vmatpush1.msra.mxu0 %v1322
    %2347 = vmatprep.subr.mxu0 %v1330
    %2348 = vmatpush1.msra.mxu0 %v1329
    %2349 = vmatprep.subr.mxu0 %v1337
    %2350 = vmatpush1.msra.mxu0 %v1336
    %2351 = vmatprep.subr.mxu0 0.0
    %2352 = vmatpush1.msra.mxu0 0.0
    %2353 = vmatprep.subr.mxu0 0.0
    %2354 = vmatpush1.msra.mxu0 0.0
    %2355 = vmatprep.subr.mxu0 0.0
    %2356 = vmatpush1.msra.mxu0 0.0
    %2357 = vmatprep.subr.mxu0 0.0
    %2358 = vmatpush1.msra.mxu0 0.0
    %2359 = vmatprep.subr.mxu0 0.0
    %2360 = vmatpush1.msra.mxu0 0.0
    %2361 = vmatprep.subr.mxu0 0.0
    %2362 = vmatpush1.msra.mxu0 0.0
    %2363 = vmatprep.subr.mxu0 0.0
    %2364 = vmatpush1.msra.mxu0 0.0
    %2365 = vmatprep.subr.mxu0 0.0
    %2366 = vmatpush1.msra.mxu0 0.0
    %2367 = vmatprep.subr.mxu0 0.0
    %2368 = vmatpush1.msra.mxu0 0.0
    %2369 = vmatprep.subr.mxu0 0.0
    %2370 = vmatpush1.msra.mxu0 0.0
    %2371 = vmatprep.subr.mxu0 0.0
    %2372 = vmatpush1.msra.mxu0 0.0
    %2373 = vmatprep.subr.mxu0 0.0
    %2374 = vmatpush1.msra.mxu0 0.0
    %2375 = vmatprep.subr.mxu0 0.0
    %2376 = vmatpush1.msra.mxu0 0.0
    %2377 = vmatprep.subr.mxu0 0.0
    %2378 = vmatpush1.msra.mxu0 0.0
    %2379 = vmatprep.subr.mxu0 0.0
    %2380 = vmatpush1.msra.mxu0 0.0
    %2381 = vmatprep.subr.mxu0 0.0
    %2382 = vmatpush1.msra.mxu0 0.0
    %2383 = vmatprep.subr.mxu0 0.0
    %2384 = vmatpush1.msra.mxu0 0.0
    %2385 = vmatprep.subr.mxu0 0.0
    %2386 = vmatpush1.msra.mxu0 0.0
    %2387 = vmatprep.subr.mxu0 0.0
    %2388 = vmatpush1.msra.mxu0 0.0
    %2389 = vmatprep.subr.mxu0 0.0
    %2390 = vmatpush1.msra.mxu0 0.0
    %2391 = vmatprep.subr.mxu0 0.0
    %2392 = vmatpush1.msra.mxu0 0.0
    %2393 = vmatprep.subr.mxu0 0.0
    %2394 = vmatpush1.msra.mxu0 0.0
    %2395 = vmatprep.subr.mxu0 0.0
    %2396 = vmatpush1.msra.mxu0 0.0
    %2397 = vmatprep.subr.mxu0 0.0
    %2398 = vmatpush1.msra.mxu0 0.0
    %2399 = vmatprep.subr.mxu0 0.0
    %2400 = vmatpush1.msra.mxu0 0.0
    %2401 = vmatprep.subr.mxu0 0.0
    %2402 = vmatpush1.msra.mxu0 0.0
    %2403 = vmatprep.mubr.f32.mxu0 0.0
    %2404 = vmatmul.mubr.f32.gmra.mrb[0].mxu0 %v2195
    %v2405 = vpop.f32.mrb[0].mxu0
    %v2406 = vadd.f32 0.0, %v2405
    %v2407 = vpop.f32.mrb[0].mxu0
    %v2408 = vadd.f32 0.0, %v2407
    %2409 = vdwg.mxu0
    %2410 = vmatprep.subr.mxu0 0.0
    %2411 = vmatpush1.msra.mxu0 %v1303
    %2412 = vmatprep.subr.mxu0 0.0
    %2413 = vmatpush1.msra.mxu0 %v1310
    %2414 = vmatprep.subr.mxu0 0.0
    %2415 = vmatpush1.msra.mxu0 %v1317
    %2416 = vmatprep.subr.mxu0 0.0
    %2417 = vmatpush1.msra.mxu0 %v1324
    %2418 = vmatprep.subr.mxu0 0.0
    %2419 = vmatpush1.msra.mxu0 %v1331
    %2420 = vmatprep.subr.mxu0 0.0
    %2421 = vmatpush1.msra.mxu0 %v1338
    %2422 = vmatprep.subr.mxu0 0.0
    %2423 = vmatpush1.msra.mxu0 0.0
    %2424 = vmatprep.subr.mxu0 0.0
    %2425 = vmatpush1.msra.mxu0 0.0
    %2426 = vmatprep.subr.mxu0 0.0
    %2427 = vmatpush1.msra.mxu0 0.0
    %2428 = vmatprep.subr.mxu0 0.0
    %2429 = vmatpush1.msra.mxu0 0.0
    %2430 = vmatprep.subr.mxu0 0.0
    %2431 = vmatpush1.msra.mxu0 0.0
    %2432 = vmatprep.subr.mxu0 0.0
    %2433 = vmatpush1.msra.mxu0 0.0
    %2434 = vmatprep.subr.mxu0 0.0
    %2435 = vmatpush1.msra.mxu0 0.0
    %2436 = vmatprep.subr.mxu0 0.0
    %2437 = vmatpush1.msra.mxu0 0.0
    %2438 = vmatprep.subr.mxu0 0.0
    %2439 = vmatpush1.msra.mxu0 0.0
    %2440 = vmatprep.subr.mxu0 0.0
    %2441 = vmatpush1.msra.mxu0 0.0
    %2442 = vmatprep.subr.mxu0 0.0
    %2443 = vmatpush1.msra.mxu0 0.0
    %2444 = vmatprep.subr.mxu0 0.0
    %2445 = vmatpush1.msra.mxu0 0.0
    %2446 = vmatprep.subr.mxu0 0.0
    %2447 = vmatpush1.msra.mxu0 0.0
    %2448 = vmatprep.subr.mxu0 0.0
    %2449 = vmatpush1.msra.mxu0 0.0
    %2450 = vmatprep.subr.mxu0 0.0
    %2451 = vmatpush1.msra.mxu0 0.0
    %2452 = vmatprep.subr.mxu0 0.0
    %2453 = vmatpush1.msra.mxu0 0.0
    %2454 = vmatprep.subr.mxu0 0.0
    %2455 = vmatpush1.msra.mxu0 0.0
    %2456 = vmatprep.subr.mxu0 0.0
    %2457 = vmatpush1.msra.mxu0 0.0
    %2458 = vmatprep.subr.mxu0 0.0
    %2459 = vmatpush1.msra.mxu0 0.0
    %2460 = vmatprep.subr.mxu0 0.0
    %2461 = vmatpush1.msra.mxu0 0.0
    %2462 = vmatprep.subr.mxu0 0.0
    %2463 = vmatpush1.msra.mxu0 0.0
    %2464 = vmatprep.subr.mxu0 0.0
    %2465 = vmatpush1.msra.mxu0 0.0
    %2466 = vmatprep.subr.mxu0 0.0
    %2467 = vmatpush1.msra.mxu0 0.0
    %2468 = vmatprep.subr.mxu0 0.0
    %2469 = vmatpush1.msra.mxu0 0.0
    %2470 = vmatprep.subr.mxu0 0.0
    %2471 = vmatpush1.msra.mxu0 0.0
    %2472 = vmatprep.subr.mxu0 0.0
    %2473 = vmatpush1.msra.mxu0 0.0
    %2474 = vmatprep.mubr.f32.mxu0 0.0
    %2475 = vmatmul.mubr.f32.gmra.mrb[0].mxu0 %v2195
    %v2476 = vpop.f32.mrb[0].mxu0
    %v2477 = vadd.f32 0.0, %v2476
    %v2478 = vpop.f32.mrb[0].mxu0
    %2479 = vdwg.mxu0
    %v2486 = vcombine.low %v2264, %v2266
    %v2487 = vcombine.low %v2335, %v2337
    %v2488 = vcombine.low %v2406, %v2408
    %v2492 = vadd.f32 %v1339, %v2486
    %v2493 = vadd.f32 %v1340, %v2487
    %v2494 = vadd.f32 %v1341, %v2488
    %v2495 = vadd.f32 %v1342, %v2477
    %v2499 = vcombine.high %v2492, %v2492
    %v2500 = vcombine.high %v2493, %v2493
    %v2501 = vcombine.high %v2494, %v2494
    %v2505 = vsel %vm1352, %v2492, -inf
    %v2506 = vrot.slane %v2505, 4
    %v2507 = vmax.f32 %v2505, %v2506
    %v2508 = vrot.slane %v2507, 2
    %v2509 = vmax.f32 %v2507, %v2508
    %v2510 = vrot.slane %v2509, 1
    %v2511 = vmax.f32 %v2509, %v2510
    %v2512 = vsel %vm1352, %v2499, -inf
    %v2513 = vrot.slane %v2512, 4
    %v2514 = vmax.f32 %v2512, %v2513
    %v2515 = vrot.slane %v2514, 2
    %v2516 = vmax.f32 %v2514, %v2515
    %v2517 = vrot.slane %v2516, 1
    %v2518 = vmax.f32 %v2516, %v2517
    %v2519 = vsel %vm1352, %v2493, -inf
    %v2520 = vrot.slane %v2519, 4
    %v2521 = vmax.f32 %v2519, %v2520
    %v2522 = vrot.slane %v2521, 2
    %v2523 = vmax.f32 %v2521, %v2522
    %v2524 = vrot.slane %v2523, 1
    %v2525 = vmax.f32 %v2523, %v2524
    %v2526 = vsel %vm1352, %v2500, -inf
    %v2527 = vrot.slane %v2526, 4
    %v2528 = vmax.f32 %v2526, %v2527
    %v2529 = vrot.slane %v2528, 2
    %v2530 = vmax.f32 %v2528, %v2529
    %v2531 = vrot.slane %v2530, 1
    %v2532 = vmax.f32 %v2530, %v2531
    %v2533 = vsel %vm1352, %v2494, -inf
    %v2534 = vrot.slane %v2533, 4
    %v2535 = vmax.f32 %v2533, %v2534
    %v2536 = vrot.slane %v2535, 2
    %v2537 = vmax.f32 %v2535, %v2536
    %v2538 = vrot.slane %v2537, 1
    %v2539 = vmax.f32 %v2537, %v2538
    %v2540 = vsel %vm1352, %v2501, -inf
    %v2541 = vrot.slane %v2540, 4
    %v2542 = vmax.f32 %v2540, %v2541
    %v2543 = vrot.slane %v2542, 2
    %v2544 = vmax.f32 %v2542, %v2543
    %v2545 = vrot.slane %v2544, 1
    %v2546 = vmax.f32 %v2544, %v2545
    %v2547 = vsel %vm1352, %v2495, -inf
    %v2548 = vrot.slane %v2547, 4
    %v2549 = vmax.f32 %v2547, %v2548
    %v2550 = vrot.slane %v2549, 2
    %v2551 = vmax.f32 %v2549, %v2550
    %v2552 = vrot.slane %v2551, 1
    %v2553 = vmax.f32 %v2551, %v2552
    %v2560 = vcombine.low %v2511, %v2518
    %v2561 = vcombine.low %v2525, %v2532
    %v2562 = vcombine.low %v2539, %v2546
    %v2566 = vsub.f32 %v2492, %v2560
    %v2567 = vsub.f32 %v2493, %v2561
    %v2568 = vsub.f32 %v2494, %v2562
    %v2569 = vsub.f32 %v2495, %v2553
    %v2570 = vmul.f32 %v2566, 1.442695
    %v2571 = vpow.pop %v2570
    %v2572 = vmul.f32 %v2567, 1.442695
    %v2573 = vpow.pop %v2572
    %v2574 = vmul.f32 %v2568, 1.442695
    %v2575 = vpow.pop %v2574
    %v2576 = vmul.f32 %v2569, 1.442695
    %v2577 = vpow.pop %v2576
    %v2581 = vcombine.high %v2571, %v2571
    %v2582 = vcombine.high %v2573, %v2573
    %v2583 = vcombine.high %v2575, %v2575
    %v2587 = vsel %vm1352, %v2571, 0.0
    %v2588 = vrot.slane %v2587, 4
    %v2589 = vadd.f32 %v2587, %v2588
    %v2590 = vrot.slane %v2589, 2
    %v2591 = vadd.f32 %v2589, %v2590
    %v2592 = vrot.slane %v2591, 1
    %v2593 = vadd.f32 %v2591, %v2592
    %v2594 = vsel %vm1352, %v2581, 0.0
    %v2595 = vrot.slane %v2594, 4
    %v2596 = vadd.f32 %v2594, %v2595
    %v2597 = vrot.slane %v2596, 2
    %v2598 = vadd.f32 %v2596, %v2597
    %v2599 = vrot.slane %v2598, 1
    %v2600 = vadd.f32 %v2598, %v2599
    %v2601 = vsel %vm1352, %v2573, 0.0
    %v2602 = vrot.slane %v2601, 4
    %v2603 = vadd.f32 %v2601, %v2602
    %v2604 = vrot.slane %v2603, 2
    %v2605 = vadd.f32 %v2603, %v2604
    %v2606 = vrot.slane %v2605, 1
    %v2607 = vadd.f32 %v2605, %v2606
    %v2608 = vsel %vm1352, %v2582, 0.0
    %v2609 = vrot.slane %v2608, 4
    %v2610 = vadd.f32 %v2608, %v2609
    %v2611 = vrot.slane %v2610, 2
    %v2612 = vadd.f32 %v2610, %v2611
    %v2613 = vrot.slane %v2612, 1
    %v2614 = vadd.f32 %v2612, %v2613
    %v2615 = vsel %vm1352, %v2575, 0.0
    %v2616 = vrot.slane %v2615, 4
    %v2617 = vadd.f32 %v2615, %v2616
    %v2618 = vrot.slane %v2617, 2
    %v2619 = vadd.f32 %v2617, %v2618
    %v2620 = vrot.slane %v2619, 1
    %v2621 = vadd.f32 %v2619, %v2620
    %v2622 = vsel %vm1352, %v2583, 0.0
    %v2623 = vrot.slane %v2622, 4
    %v2624 = vadd.f32 %v2622, %v2623
    %v2625 = vrot.slane %v2624, 2
    %v2626 = vadd.f32 %v2624, %v2625
    %v2627 = vrot.slane %v2626, 1
    %v2628 = vadd.f32 %v2626, %v2627
    %v2629 = vsel %vm1352, %v2577, 0.0
    %v2630 = vrot.slane %v2629, 4
    %v2631 = vadd.f32 %v2629, %v2630
    %v2632 = vrot.slane %v2631, 2
    %v2633 = vadd.f32 %v2631, %v2632
    %v2634 = vrot.slane %v2633, 1
    %v2635 = vadd.f32 %v2633, %v2634
    %v2642 = vcombine.low %v2593, %v2600
    %v2643 = vcombine.low %v2607, %v2614
    %v2644 = vcombine.low %v2621, %v2628
    %v2648 = vrcp.pop %v2642
    %v2649 = vmul.f32 %v2571, %v2648
    %v2650 = vrcp.pop %v2643
    %v2651 = vmul.f32 %v2573, %v2650
    %v2652 = vrcp.pop %v2644
    %v2653 = vmul.f32 %v2575, %v2652
    %v2654 = vrcp.pop %v2635
    %v2655 = vmul.f32 %v2577, %v2654
    %v2659 = vcombine.high %v2649, %v2649
    %v2660 = vcombine.high %v2651, %v2651
    %v2661 = vcombine.high %v2653, %v2653
    %2665 = vmatprep.subr.mxu0 %v2659
    %2666 = vmatpush1.xpose.msra.mxu0 %v2649
    %2667 = vmatprep.subr.mxu0 0.0
    %2668 = vmatpush1.xpose.msra.mxu0 0.0
    %2669 = vmatprep.subr.mxu0 0.0
    %2670 = vmatpush1.xpose.msra.mxu0 0.0
    %2671 = vmatprep.subr.mxu0 0.0
    %2672 = vmatpush1.xpose.msra.mxu0 0.0
    %2673 = vmatprep.subr.mxu0 0.0
    %2674 = vmatpush1.xpose.msra.mxu0 0.0
    %2675 = vmatprep.subr.mxu0 0.0
    %2676 = vmatpush1.xpose.msra.mxu0 0.0
    %2677 = vmatprep.subr.mxu0 0.0
    %2678 = vmatpush1.xpose.msra.mxu0 0.0
    %2679 = vmatprep.subr.mxu0 0.0
    %2680 = vmatpush1.xpose.msra.mxu0 0.0
    %2681 = vmatprep.subr.mxu0 0.0
    %2682 = vmatpush1.xpose.msra.mxu0 0.0
    %2683 = vmatprep.subr.mxu0 0.0
    %2684 = vmatpush1.xpose.msra.mxu0 0.0
    %2685 = vmatprep.subr.mxu0 0.0
    %2686 = vmatpush1.xpose.msra.mxu0 0.0
    %2687 = vmatprep.subr.mxu0 0.0
    %2688 = vmatpush1.xpose.msra.mxu0 0.0
    %2689 = vmatprep.subr.mxu0 0.0
    %2690 = vmatpush1.xpose.msra.mxu0 0.0
    %2691 = vmatprep.subr.mxu0 0.0
    %2692 = vmatpush1.xpose.msra.mxu0 0.0
    %2693 = vmatprep.subr.mxu0 0.0
    %2694 = vmatpush1.xpose.msra.mxu0 0.0
    %2695 = vmatprep.subr.mxu0 0.0
    %2696 = vmatpush1.xpose.msra.mxu0 0.0
    %2697 = vmatprep.subr.mxu0 0.0
    %2698 = vmatpush1.xpose.msra.mxu0 0.0
    %2699 = vmatprep.subr.mxu0 0.0
    %2700 = vmatpush1.xpose.msra.mxu0 0.0
    %2701 = vmatprep.subr.mxu0 0.0
    %2702 = vmatpush1.xpose.msra.mxu0 0.0
    %2703 = vmatprep.subr.mxu0 0.0
    %2704 = vmatpush1.xpose.msra.mxu0 0.0
    %2705 = vmatprep.subr.mxu0 0.0
    %2706 = vmatpush1.xpose.msra.mxu0 0.0
    %2707 = vmatprep.subr.mxu0 0.0
    %2708 = vmatpush1.xpose.msra.mxu0 0.0
    %2709 = vmatprep.subr.mxu0 0.0
    %2710 = vmatpush1.xpose.msra.mxu0 0.0
    %2711 = vmatprep.subr.mxu0 0.0
    %2712 = vmatpush1.xpose.msra.mxu0 0.0
    %2713 = vmatprep.subr.mxu0 0.0
    %2714 = vmatpush1.xpose.msra.mxu0 0.0
    %2715 = vmatprep.subr.mxu0 0.0
    %2716 = vmatpush1.xpose.msra.mxu0 0.0
    %2717 = vmatprep.subr.mxu0 0.0
    %2718 = vmatpush1.xpose.msra.mxu0 0.0
    %2719 = vmatprep.subr.mxu0 0.0
    %2720 = vmatpush1.xpose.msra.mxu0 0.0
    %2721 = vmatprep.subr.mxu0 0.0
    %2722 = vmatpush1.xpose.msra.mxu0 0.0
    %2723 = vmatprep.subr.mxu0 0.0
    %2724 = vmatpush1.xpose.msra.mxu0 0.0
    %2725 = vmatprep.subr.mxu0 0.0
    %2726 = vmatpush1.xpose.msra.mxu0 0.0
    %2727 = vmatprep.subr.mxu0 0.0
    %2728 = vmatpush1.xpose.msra.mxu0 0.0
    %2729 = vmatprep.mubr.f32.mxu0 %v1298
    %2730 = vmatmul.mubr.f32.gmra.mrb[0].mxu0 %v1297
    %v2731 = vpop.f32.mrb[0].mxu0
    %v2732 = vadd.f32 0.0, %v2731
    %v2733 = vpop.f32.mrb[0].mxu0
    %2734 = vmatprep.mubr.f32.mxu0 %v1305
    %2735 = vmatmul.mubr.f32.gmra.mrb[0].mxu0 %v1304
    %v2736 = vpop.f32.mrb[0].mxu0
    %v2737 = vadd.f32 0.0, %v2736
    %v2738 = vpop.f32.mrb[0].mxu0
    %2739 = vmatprep.mubr.f32.mxu0 %v1312
    %2740 = vmatmul.mubr.f32.gmra.mrb[0].mxu0 %v1311
    %v2741 = vpop.f32.mrb[0].mxu0
    %v2742 = vadd.f32 0.0, %v2741
    %v2743 = vpop.f32.mrb[0].mxu0
    %2744 = vmatprep.mubr.f32.mxu0 %v1319
    %2745 = vmatmul.mubr.f32.gmra.mrb[0].mxu0 %v1318
    %v2746 = vpop.f32.mrb[0].mxu0
    %v2747 = vadd.f32 0.0, %v2746
    %v2748 = vpop.f32.mrb[0].mxu0
    %2749 = vmatprep.mubr.f32.mxu0 %v1326
    %2750 = vmatmul.mubr.f32.gmra.mrb[0].mxu0 %v1325
    %v2751 = vpop.f32.mrb[0].mxu0
    %v2752 = vadd.f32 0.0, %v2751
    %v2753 = vpop.f32.mrb[0].mxu0
    %2754 = vmatprep.mubr.f32.mxu0 %v1333
    %2755 = vmatmul.mubr.f32.gmra.mrb[0].mxu0 %v1332
    %v2756 = vpop.f32.mrb[0].mxu0
    %v2757 = vadd.f32 0.0, %v2756
    %v2758 = vpop.f32.mrb[0].mxu0
    %2759 = vdwg.mxu0
    %2760 = vmatprep.subr.mxu0 %v2660
    %2761 = vmatpush1.xpose.msra.mxu0 %v2651
    %2762 = vmatprep.subr.mxu0 0.0
    %2763 = vmatpush1.xpose.msra.mxu0 0.0
    %2764 = vmatprep.subr.mxu0 0.0
    %2765 = vmatpush1.xpose.msra.mxu0 0.0
    %2766 = vmatprep.subr.mxu0 0.0
    %2767 = vmatpush1.xpose.msra.mxu0 0.0
    %2768 = vmatprep.subr.mxu0 0.0
    %2769 = vmatpush1.xpose.msra.mxu0 0.0
    %2770 = vmatprep.subr.mxu0 0.0
    %2771 = vmatpush1.xpose.msra.mxu0 0.0
    %2772 = vmatprep.subr.mxu0 0.0
    %2773 = vmatpush1.xpose.msra.mxu0 0.0
    %2774 = vmatprep.subr.mxu0 0.0
    %2775 = vmatpush1.xpose.msra.mxu0 0.0
    %2776 = vmatprep.subr.mxu0 0.0
    %2777 = vmatpush1.xpose.msra.mxu0 0.0
    %2778 = vmatprep.subr.mxu0 0.0
    %2779 = vmatpush1.xpose.msra.mxu0 0.0
    %2780 = vmatprep.subr.mxu0 0.0
    %2781 = vmatpush1.xpose.msra.mxu0 0.0
    %2782 = vmatprep.subr.mxu0 0.0
    %2783 = vmatpush1.xpose.msra.mxu0 0.0
    %2784 = vmatprep.subr.mxu0 0.0
    %2785 = vmatpush1.xpose.msra.mxu0 0.0
    %2786 = vmatprep.subr.mxu0 0.0
    %2787 = vmatpush1.xpose.msra.mxu0 0.0
    %2788 = vmatprep.subr.mxu0 0.0
    %2789 = vmatpush1.xpose.msra.mxu0 0.0
    %2790 = vmatprep.subr.mxu0 0.0
    %2791 = vmatpush1.xpose.msra.mxu0 0.0
    %2792 = vmatprep.subr.mxu0 0.0
    %2793 = vmatpush1.xpose.msra.mxu0 0.0
    %2794 = vmatprep.subr.mxu0 0.0
    %2795 = vmatpush1.xpose.msra.mxu0 0.0
    %2796 = vmatprep.subr.mxu0 0.0
    %2797 = vmatpush1.xpose.msra.mxu0 0.0
    %2798 = vmatprep.subr.mxu0 0.0
    %2799 = vmatpush1.xpose.msra.mxu0 0.0
    %2800 = vmatprep.subr.mxu0 0.0
    %2801 = vmatpush1.xpose.msra.mxu0 0.0
    %2802 = vmatprep.subr.mxu0 0.0
    %2803 = vmatpush1.xpose.msra.mxu0 0.0
    %2804 = vmatprep.subr.mxu0 0.0
    %2805 = vmatpush1.xpose.msra.mxu0 0.0
    %2806 = vmatprep.subr.mxu0 0.0
    %2807 = vmatpush1.xpose.msra.mxu0 0.0
    %2808 = vmatprep.subr.mxu0 0.0
    %2809 = vmatpush1.xpose.msra.mxu0 0.0
    %2810 = vmatprep.subr.mxu0 0.0
    %2811 = vmatpush1.xpose.msra.mxu0 0.0
    %2812 = vmatprep.subr.mxu0 0.0
    %2813 = vmatpush1.xpose.msra.mxu0 0.0
    %2814 = vmatprep.subr.mxu0 0.0
    %2815 = vmatpush1.xpose.msra.mxu0 0.0
    %2816 = vmatprep.subr.mxu0 0.0
    %2817 = vmatpush1.xpose.msra.mxu0 0.0
    %2818 = vmatprep.subr.mxu0 0.0
    %2819 = vmatpush1.xpose.msra.mxu0 0.0
    %2820 = vmatprep.subr.mxu0 0.0
    %2821 = vmatpush1.xpose.msra.mxu0 0.0
    %2822 = vmatprep.subr.mxu0 0.0
    %2823 = vmatpush1.xpose.msra.mxu0 0.0
    %2824 = vmatprep.mubr.f32.mxu0 %v1300
    %2825 = vmatmul.mubr.f32.gmra.mrb[0].mxu0 %v1299
    %v2826 = vpop.f32.mrb[0].mxu0
    %v2827 = vadd.f32 %v2732, %v2826
    %v2828 = vpop.f32.mrb[0].mxu0
    %2829 = vmatprep.mubr.f32.mxu0 %v1307
    %2830 = vmatmul.mubr.f32.gmra.mrb[0].mxu0 %v1306
    %v2831 = vpop.f32.mrb[0].mxu0
    %v2832 = vadd.f32 %v2737, %v2831
    %v2833 = vpop.f32.mrb[0].mxu0
    %2834 = vmatprep.mubr.f32.mxu0 %v1314
    %2835 = vmatmul.mubr.f32.gmra.mrb[0].mxu0 %v1313
    %v2836 = vpop.f32.mrb[0].mxu0
    %v2837 = vadd.f32 %v2742, %v2836
    %v2838 = vpop.f32.mrb[0].mxu0
    %2839 = vmatprep.mubr.f32.mxu0 %v1321
    %2840 = vmatmul.mubr.f32.gmra.mrb[0].mxu0 %v1320
    %v2841 = vpop.f32.mrb[0].mxu0
    %v2842 = vadd.f32 %v2747, %v2841
    %v2843 = vpop.f32.mrb[0].mxu0
    %2844 = vmatprep.mubr.f32.mxu0 %v1328
    %2845 = vmatmul.mubr.f32.gmra.mrb[0].mxu0 %v1327
    %v2846 = vpop.f32.mrb[0].mxu0
    %v2847 = vadd.f32 %v2752, %v2846
    %v2848 = vpop.f32.mrb[0].mxu0
    %2849 = vmatprep.mubr.f32.mxu0 %v1335
    %2850 = vmatmul.mubr.f32.gmra.mrb[0].mxu0 %v1334
    %v2851 = vpop.f32.mrb[0].mxu0
    %v2852 = vadd.f32 %v2757, %v2851
    %v2853 = vpop.f32.mrb[0].mxu0
    %2854 = vdwg.mxu0
    %2855 = vmatprep.subr.mxu0 %v2661
    %2856 = vmatpush1.xpose.msra.mxu0 %v2653
    %2857 = vmatprep.subr.mxu0 0.0
    %2858 = vmatpush1.xpose.msra.mxu0 0.0
    %2859 = vmatprep.subr.mxu0 0.0
    %2860 = vmatpush1.xpose.msra.mxu0 0.0
    %2861 = vmatprep.subr.mxu0 0.0
    %2862 = vmatpush1.xpose.msra.mxu0 0.0
    %2863 = vmatprep.subr.mxu0 0.0
    %2864 = vmatpush1.xpose.msra.mxu0 0.0
    %2865 = vmatprep.subr.mxu0 0.0
    %2866 = vmatpush1.xpose.msra.mxu0 0.0
    %2867 = vmatprep.subr.mxu0 0.0
    %2868 = vmatpush1.xpose.msra.mxu0 0.0
    %2869 = vmatprep.subr.mxu0 0.0
    %2870 = vmatpush1.xpose.msra.mxu0 0.0
    %2871 = vmatprep.subr.mxu0 0.0
    %2872 = vmatpush1.xpose.msra.mxu0 0.0
    %2873 = vmatprep.subr.mxu0 0.0
    %2874 = vmatpush1.xpose.msra.mxu0 0.0
    %2875 = vmatprep.subr.mxu0 0.0
    %2876 = vmatpush1.xpose.msra.mxu0 0.0
    %2877 = vmatprep.subr.mxu0 0.0
    %2878 = vmatpush1.xpose.msra.mxu0 0.0
    %2879 = vmatprep.subr.mxu0 0.0
    %2880 = vmatpush1.xpose.msra.mxu0 0.0
    %2881 = vmatprep.subr.mxu0 0.0
    %2882 = vmatpush1.xpose.msra.mxu0 0.0
    %2883 = vmatprep.subr.mxu0 0.0
    %2884 = vmatpush1.xpose.msra.mxu0 0.0
    %2885 = vmatprep.subr.mxu0 0.0
    %2886 = vmatpush1.xpose.msra.mxu0 0.0
    %2887 = vmatprep.subr.mxu0 0.0
    %2888 = vmatpush1.xpose.msra.mxu0 0.0
    %2889 = vmatprep.subr.mxu0 0.0
    %2890 = vmatpush1.xpose.msra.mxu0 0.0
    %2891 = vmatprep.subr.mxu0 0.0
    %2892 = vmatpush1.xpose.msra.mxu0 0.0
    %2893 = vmatprep.subr.mxu0 0.0
    %2894 = vmatpush1.xpose.msra.mxu0 0.0
    %2895 = vmatprep.subr.mxu0 0.0
    %2896 = vmatpush1.xpose.msra.mxu0 0.0
    %2897 = vmatprep.subr.mxu0 0.0
    %2898 = vmatpush1.xpose.msra.mxu0 0.0
    %2899 = vmatprep.subr.mxu0 0.0
    %2900 = vmatpush1.xpose.msra.mxu0 0.0
    %2901 = vmatprep.subr.mxu0 0.0
    %2902 = vmatpush1.xpose.msra.mxu0 0.0
    %2903 = vmatprep.subr.mxu0 0.0
    %2904 = vmatpush1.xpose.msra.mxu0 0.0
    %2905 = vmatprep.subr.mxu0 0.0
    %2906 = vmatpush1.xpose.msra.mxu0 0.0
    %2907 = vmatprep.subr.mxu0 0.0
    %2908 = vmatpush1.xpose.msra.mxu0 0.0
    %2909 = vmatprep.subr.mxu0 0.0
    %2910 = vmatpush1.xpose.msra.mxu0 0.0
    %2911 = vmatprep.subr.mxu0 0.0
    %2912 = vmatpush1.xpose.msra.mxu0 0.0
    %2913 = vmatprep.subr.mxu0 0.0
    %2914 = vmatpush1.xpose.msra.mxu0 0.0
    %2915 = vmatprep.subr.mxu0 0.0
    %2916 = vmatpush1.xpose.msra.mxu0 0.0
    %2917 = vmatprep.subr.mxu0 0.0
    %2918 = vmatpush1.xpose.msra.mxu0 0.0
    %2919 = vmatprep.mubr.f32.mxu0 %v1302
    %2920 = vmatmul.mubr.f32.gmra.mrb[0].mxu0 %v1301
    %v2921 = vpop.f32.mrb[0].mxu0
    %v2922 = vadd.f32 %v2827, %v2921
    %v2923 = vpop.f32.mrb[0].mxu0
    %2924 = vmatprep.mubr.f32.mxu0 %v1309
    %2925 = vmatmul.mubr.f32.gmra.mrb[0].mxu0 %v1308
    %v2926 = vpop.f32.mrb[0].mxu0
    %v2927 = vadd.f32 %v2832, %v2926
    %v2928 = vpop.f32.mrb[0].mxu0
    %2929 = vmatprep.mubr.f32.mxu0 %v1316
    %2930 = vmatmul.mubr.f32.gmra.mrb[0].mxu0 %v1315
    %v2931 = vpop.f32.mrb[0].mxu0
    %v2932 = vadd.f32 %v2837, %v2931
    %v2933 = vpop.f32.mrb[0].mxu0
    %2934 = vmatprep.mubr.f32.mxu0 %v1323
    %2935 = vmatmul.mubr.f32.gmra.mrb[0].mxu0 %v1322
    %v2936 = vpop.f32.mrb[0].mxu0
    %v2937 = vadd.f32 %v2842, %v2936
    %v2938 = vpop.f32.mrb[0].mxu0
    %2939 = vmatprep.mubr.f32.mxu0 %v1330
    %2940 = vmatmul.mubr.f32.gmra.mrb[0].mxu0 %v1329
    %v2941 = vpop.f32.mrb[0].mxu0
    %v2942 = vadd.f32 %v2847, %v2941
    %v2943 = vpop.f32.mrb[0].mxu0
    %2944 = vmatprep.mubr.f32.mxu0 %v1337
    %2945 = vmatmul.mubr.f32.gmra.mrb[0].mxu0 %v1336
    %v2946 = vpop.f32.mrb[0].mxu0
    %v2947 = vadd.f32 %v2852, %v2946
    %v2948 = vpop.f32.mrb[0].mxu0
    %2949 = vdwg.mxu0
    %2950 = vmatprep.subr.mxu0 0.0
    %2951 = vmatpush1.xpose.msra.mxu0 %v2655
    %2952 = vmatprep.subr.mxu0 0.0
    %2953 = vmatpush1.xpose.msra.mxu0 0.0
    %2954 = vmatprep.subr.mxu0 0.0
    %2955 = vmatpush1.xpose.msra.mxu0 0.0
    %2956 = vmatprep.subr.mxu0 0.0
    %2957 = vmatpush1.xpose.msra.mxu0 0.0
    %2958 = vmatprep.subr.mxu0 0.0
    %2959 = vmatpush1.xpose.msra.mxu0 0.0
    %2960 = vmatprep.subr.mxu0 0.0
    %2961 = vmatpush1.xpose.msra.mxu0 0.0
    %2962 = vmatprep.subr.mxu0 0.0
    %2963 = vmatpush1.xpose.msra.mxu0 0.0
    %2964 = vmatprep.subr.mxu0 0.0
    %2965 = vmatpush1.xpose.msra.mxu0 0.0
    %2966 = vmatprep.subr.mxu0 0.0
    %2967 = vmatpush1.xpose.msra.mxu0 0.0
    %2968 = vmatprep.subr.mxu0 0.0
    %2969 = vmatpush1.xpose.msra.mxu0 0.0
    %2970 = vmatprep.subr.mxu0 0.0
    %2971 = vmatpush1.xpose.msra.mxu0 0.0
    %2972 = vmatprep.subr.mxu0 0.0
    %2973 = vmatpush1.xpose.msra.mxu0 0.0
    %2974 = vmatprep.subr.mxu0 0.0
    %2975 = vmatpush1.xpose.msra.mxu0 0.0
    %2976 = vmatprep.subr.mxu0 0.0
    %2977 = vmatpush1.xpose.msra.mxu0 0.0
    %2978 = vmatprep.subr.mxu0 0.0
    %2979 = vmatpush1.xpose.msra.mxu0 0.0
    %2980 = vmatprep.subr.mxu0 0.0
    %2981 = vmatpush1.xpose.msra.mxu0 0.0
    %2982 = vmatprep.subr.mxu0 0.0
    %2983 = vmatpush1.xpose.msra.mxu0 0.0
    %2984 = vmatprep.subr.mxu0 0.0
    %2985 = vmatpush1.xpose.msra.mxu0 0.0
    %2986 = vmatprep.subr.mxu0 0.0
    %2987 = vmatpush1.xpose.msra.mxu0 0.0
    %2988 = vmatprep.subr.mxu0 0.0
    %2989 = vmatpush1.xpose.msra.mxu0 0.0
    %2990 = vmatprep.subr.mxu0 0.0
    %2991 = vmatpush1.xpose.msra.mxu0 0.0
    %2992 = vmatprep.subr.mxu0 0.0
    %2993 = vmatpush1.xpose.msra.mxu0 0.0
    %2994 = vmatprep.subr.mxu0 0.0
    %2995 = vmatpush1.xpose.msra.mxu0 0.0
    %2996 = vmatprep.subr.mxu0 0.0
    %2997 = vmatpush1.xpose.msra.mxu0 0.0
    %2998 = vmatprep.subr.mxu0 0.0
    %2999 = vmatpush1.xpose.msra.mxu0 0.0
    %3000 = vmatprep.subr.mxu0 0.0
    %3001 = vmatpush1.xpose.msra.mxu0 0.0
    %3002 = vmatprep.subr.mxu0 0.0
    %3003 = vmatpush1.xpose.msra.mxu0 0.0
    %3004 = vmatprep.subr.mxu0 0.0
    %3005 = vmatpush1.xpose.msra.mxu0 0.0
    %3006 = vmatprep.subr.mxu0 0.0
    %3007 = vmatpush1.xpose.msra.mxu0 0.0
    %3008 = vmatprep.subr.mxu0 0.0
    %3009 = vmatpush1.xpose.msra.mxu0 0.0
    %3010 = vmatprep.subr.mxu0 0.0
    %3011 = vmatpush1.xpose.msra.mxu0 0.0
    %3012 = vmatprep.subr.mxu0 0.0
    %3013 = vmatpush1.xpose.msra.mxu0 0.0
    %3014 = vmatprep.mubr.f32.mxu0 0.0
    %3015 = vmatmul.mubr.f32.gmra.mrb[0].mxu0 %v1303
    %v3016 = vpop.f32.mrb[0].mxu0
    %v3017 = vadd.f32 %v2922, %v3016
    %v3018 = vpop.f32.mrb[0].mxu0
    %3019 = vmatprep.mubr.f32.mxu0 0.0
    %3020 = vmatmul.mubr.f32.gmra.mrb[0].mxu0 %v1310
    %v3021 = vpop.f32.mrb[0].mxu0
    %v3022 = vadd.f32 %v2927, %v3021
    %v3023 = vpop.f32.mrb[0].mxu0
    %3024 = vmatprep.mubr.f32.mxu0 0.0
    %3025 = vmatmul.mubr.f32.gmra.mrb[0].mxu0 %v1317
    %v3026 = vpop.f32.mrb[0].mxu0
    %v3027 = vadd.f32 %v2932, %v3026
    %v3028 = vpop.f32.mrb[0].mxu0
    %3029 = vmatprep.mubr.f32.mxu0 0.0
    %3030 = vmatmul.mubr.f32.gmra.mrb[0].mxu0 %v1324
    %v3031 = vpop.f32.mrb[0].mxu0
    %v3032 = vadd.f32 %v2937, %v3031
    %v3033 = vpop.f32.mrb[0].mxu0
    %3034 = vmatprep.mubr.f32.mxu0 0.0
    %3035 = vmatmul.mubr.f32.gmra.mrb[0].mxu0 %v1331
    %v3036 = vpop.f32.mrb[0].mxu0
    %v3037 = vadd.f32 %v2942, %v3036
    %v3038 = vpop.f32.mrb[0].mxu0
    %3039 = vmatprep.mubr.f32.mxu0 0.0
    %3040 = vmatmul.mubr.f32.gmra.mrb[0].mxu0 %v1338
    %v3041 = vpop.f32.mrb[0].mxu0
    %v3042 = vadd.f32 %v2947, %v3041
    %v3043 = vpop.f32.mrb[0].mxu0
    %3044 = vdwg.mxu0
    %v3045 = vmul.f32 %v3017, %v34
    %v3046 = vmul.f32 %v3022, %v35
    %v3047 = vmul.f32 %v3027, %v36
    %v3048 = vmul.f32 %v3032, %v37
    %v3049 = vmul.f32 %v3037, %v38
    %v3050 = vmul.f32 %v3042, %v39
    %v3051 = vsel %vm1899, %v3045, 0.0
    %3052 = vadd.xlane.f32.xlu0 %v3051
    %v3053 = vpop.xlane.xlu0 %3052
    %v3054 = vsel %vm1899, %v3046, 0.0
    %3055 = vadd.xlane.f32.xlu0 %v3054
    %v3056 = vpop.xlane.xlu0 %3055
    %v3057 = vsel %vm1899, %v3047, 0.0
    %3058 = vadd.xlane.f32.xlu0 %v3057
    %v3059 = vpop.xlane.xlu0 %3058
    %v3060 = vsel %vm1899, %v3048, 0.0
    %3061 = vadd.xlane.f32.xlu0 %v3060
    %v3062 = vpop.xlane.xlu0 %3061
    %v3063 = vsel %vm1899, %v3049, 0.0
    %3064 = vadd.xlane.f32.xlu0 %v3063
    %v3065 = vpop.xlane.xlu0 %3064
    %v3066 = vsel %vm1899, %v3050, 0.0
    %3067 = vadd.xlane.f32.xlu0 %v3066
    %v3068 = vpop.xlane.xlu0 %3067
    %v3069 = vmul.f32 %v3053, %v3053
    %v3070 = vmul.f32 %v3056, %v3056
    %v3071 = vmul.f32 %v3059, %v3059
    %v3072 = vmul.f32 %v3062, %v3062
    %v3073 = vmul.f32 %v3065, %v3065
    %v3074 = vmul.f32 %v3068, %v3068
    %3075 = vmatprep.subr.mxu0 0.0
    %3076 = vmatpush1.msra.mxu0 %v3069
    %3077 = vmatprep.subr.mxu0 0.0
    %3078 = vmatpush1.msra.mxu0 %v3070
    %3079 = vmatprep.subr.mxu0 0.0
    %3080 = vmatpush1.msra.mxu0 %v3071
    %3081 = vmatprep.subr.mxu0 0.0
    %3082 = vmatpush1.msra.mxu0 %v3072
    %3083 = vmatprep.subr.mxu0 0.0
    %3084 = vmatpush1.msra.mxu0 %v3073
    %3085 = vmatprep.subr.mxu0 0.0
    %3086 = vmatpush1.msra.mxu0 %v3074
    %3087 = vmatprep.subr.mxu0 0.0
    %3088 = vmatpush1.msra.mxu0 0.0
    %3089 = vmatprep.subr.mxu0 0.0
    %3090 = vmatpush1.msra.mxu0 0.0
    %3091 = vmatprep.subr.mxu0 0.0
    %3092 = vmatpush1.msra.mxu0 0.0
    %3093 = vmatprep.subr.mxu0 0.0
    %3094 = vmatpush1.msra.mxu0 0.0
    %3095 = vmatprep.subr.mxu0 0.0
    %3096 = vmatpush1.msra.mxu0 0.0
    %3097 = vmatprep.subr.mxu0 0.0
    %3098 = vmatpush1.msra.mxu0 0.0
    %3099 = vmatprep.subr.mxu0 0.0
    %3100 = vmatpush1.msra.mxu0 0.0
    %3101 = vmatprep.subr.mxu0 0.0
    %3102 = vmatpush1.msra.mxu0 0.0
    %3103 = vmatprep.subr.mxu0 0.0
    %3104 = vmatpush1.msra.mxu0 0.0
    %3105 = vmatprep.subr.mxu0 0.0
    %3106 = vmatpush1.msra.mxu0 0.0
    %3107 = vmatprep.subr.mxu0 0.0
    %3108 = vmatpush1.msra.mxu0 0.0
    %3109 = vmatprep.subr.mxu0 0.0
    %3110 = vmatpush1.msra.mxu0 0.0
    %3111 = vmatprep.subr.mxu0 0.0
    %3112 = vmatpush1.msra.mxu0 0.0
    %3113 = vmatprep.subr.mxu0 0.0
    %3114 = vmatpush1.msra.mxu0 0.0
    %3115 = vmatprep.subr.mxu0 0.0
    %3116 = vmatpush1.msra.mxu0 0.0
    %3117 = vmatprep.subr.mxu0 0.0
    %3118 = vmatpush1.msra.mxu0 0.0
    %3119 = vmatprep.subr.mxu0 0.0
    %3120 = vmatpush1.msra.mxu0 0.0
    %3121 = vmatprep.subr.mxu0 0.0
    %3122 = vmatpush1.msra.mxu0 0.0
    %3123 = vmatprep.subr.mxu0 0.0
    %3124 = vmatpush1.msra.mxu0 0.0
    %3125 = vmatprep.subr.mxu0 0.0
    %3126 = vmatpush1.msra.mxu0 0.0
    %3127 = vmatprep.subr.mxu0 0.0
    %3128 = vmatpush1.msra.mxu0 0.0
    %3129 = vmatprep.subr.mxu0 0.0
    %3130 = vmatpush1.msra.mxu0 0.0
    %3131 = vmatprep.subr.mxu0 0.0
    %3132 = vmatpush1.msra.mxu0 0.0
    %3133 = vmatprep.subr.mxu0 0.0
    %3134 = vmatpush1.msra.mxu0 0.0
    %3135 = vmatprep.subr.mxu0 0.0
    %3136 = vmatpush1.msra.mxu0 0.0
    %3137 = vmatprep.subr.mxu0 0.0
    %3138 = vmatpush1.msra.mxu0 0.0
    %3139 = vmatprep.mubr.f32.mxu0 0.0
    %3140 = vmatmul.mubr.f32.gmra.mrb[0].mxu0 %v1926
    %v3141 = vpop.f32.mrb[0].mxu0
    %v3142 = vadd.f32 0.0, %v3141
    %v3143 = vpop.f32.mrb[0].mxu0
    %3144 = vdwg.mxu0
    %v3145 = vadd.f32 %v3142, 1.0
    %v3146 = vrcp.pop %v3145
    %v3147 = vmul.f32 %v3142, %v3146
    %v3148 = vadd.f32 %v3142, 1e-08
    %v3149 = vrsqrt.pop %v3148
    %v3150 = vmul.f32 %v3147, %v3149
    %v3152 = vsel %vm1352, %v3150, 0
    %3154 = vmatprep.subr.mxu0 0.0
    %3155 = vmatpush1.msra.mxu0 %v3152
    %3156 = vmatprep.subr.mxu0 0.0
    %3157 = vmatpush1.msra.mxu0 0.0
    %3158 = vmatprep.subr.mxu0 0.0
    %3159 = vmatpush1.msra.mxu0 0.0
    %3160 = vmatprep.subr.mxu0 0.0
    %3161 = vmatpush1.msra.mxu0 0.0
    %3162 = vmatprep.subr.mxu0 0.0
    %3163 = vmatpush1.msra.mxu0 0.0
    %3164 = vmatprep.subr.mxu0 0.0
    %3165 = vmatpush1.msra.mxu0 0.0
    %3166 = vmatprep.subr.mxu0 0.0
    %3167 = vmatpush1.msra.mxu0 0.0
    %3168 = vmatprep.subr.mxu0 0.0
    %3169 = vmatpush1.msra.mxu0 0.0
    %3170 = vmatprep.subr.mxu0 0.0
    %3171 = vmatpush1.msra.mxu0 0.0
    %3172 = vmatprep.subr.mxu0 0.0
    %3173 = vmatpush1.msra.mxu0 0.0
    %3174 = vmatprep.subr.mxu0 0.0
    %3175 = vmatpush1.msra.mxu0 0.0
    %3176 = vmatprep.subr.mxu0 0.0
    %3177 = vmatpush1.msra.mxu0 0.0
    %3178 = vmatprep.subr.mxu0 0.0
    %3179 = vmatpush1.msra.mxu0 0.0
    %3180 = vmatprep.subr.mxu0 0.0
    %3181 = vmatpush1.msra.mxu0 0.0
    %3182 = vmatprep.subr.mxu0 0.0
    %3183 = vmatpush1.msra.mxu0 0.0
    %3184 = vmatprep.subr.mxu0 0.0
    %3185 = vmatpush1.msra.mxu0 0.0
    %3186 = vmatprep.subr.mxu0 0.0
    %3187 = vmatpush1.msra.mxu0 0.0
    %3188 = vmatprep.subr.mxu0 0.0
    %3189 = vmatpush1.msra.mxu0 0.0
    %3190 = vmatprep.subr.mxu0 0.0
    %3191 = vmatpush1.msra.mxu0 0.0
    %3192 = vmatprep.subr.mxu0 0.0
    %3193 = vmatpush1.msra.mxu0 0.0
    %3194 = vmatprep.subr.mxu0 0.0
    %3195 = vmatpush1.msra.mxu0 0.0
    %3196 = vmatprep.subr.mxu0 0.0
    %3197 = vmatpush1.msra.mxu0 0.0
    %3198 = vmatprep.subr.mxu0 0.0
    %3199 = vmatpush1.msra.mxu0 0.0
    %3200 = vmatprep.subr.mxu0 0.0
    %3201 = vmatpush1.msra.mxu0 0.0
    %3202 = vmatprep.subr.mxu0 0.0
    %3203 = vmatpush1.msra.mxu0 0.0
    %3204 = vmatprep.subr.mxu0 0.0
    %3205 = vmatpush1.msra.mxu0 0.0
    %3206 = vmatprep.subr.mxu0 0.0
    %3207 = vmatpush1.msra.mxu0 0.0
    %3208 = vmatprep.subr.mxu0 0.0
    %3209 = vmatpush1.msra.mxu0 0.0
    %3210 = vmatprep.subr.mxu0 0.0
    %3211 = vmatpush1.msra.mxu0 0.0
    %3212 = vmatprep.subr.mxu0 0.0
    %3213 = vmatpush1.msra.mxu0 0.0
    %3214 = vmatprep.subr.mxu0 0.0
    %3215 = vmatpush1.msra.mxu0 0.0
    %3216 = vmatprep.subr.mxu0 0.0
    %3217 = vmatpush1.msra.mxu0 0.0
    %3218 = vmatprep.mubr.f32.mxu0 0.0
    %3219 = vmatmul.mubr.f32.gmra.mrb[0].mxu0 %v2005
    %v3220 = vpop.f32.mrb[0].mxu0
    %v3221 = vadd.f32 0.0, %v3220
    %v3222 = vpop.f32.mrb[0].mxu0
    %3223 = vmatprep.mubr.f32.mxu0 0.0
    %3224 = vmatmul.mubr.f32.gmra.mrb[0].mxu0 %v2008
    %v3225 = vpop.f32.mrb[0].mxu0
    %v3226 = vadd.f32 0.0, %v3225
    %v3227 = vpop.f32.mrb[0].mxu0
    %3228 = vmatprep.mubr.f32.mxu0 0.0
    %3229 = vmatmul.mubr.f32.gmra.mrb[0].mxu0 %v2011
    %v3230 = vpop.f32.mrb[0].mxu0
    %v3231 = vadd.f32 0.0, %v3230
    %v3232 = vpop.f32.mrb[0].mxu0
    %3233 = vmatprep.mubr.f32.mxu0 0.0
    %3234 = vmatmul.mubr.f32.gmra.mrb[0].mxu0 %v2014
    %v3235 = vpop.f32.mrb[0].mxu0
    %v3236 = vadd.f32 0.0, %v3235
    %v3237 = vpop.f32.mrb[0].mxu0
    %3238 = vmatprep.mubr.f32.mxu0 0.0
    %3239 = vmatmul.mubr.f32.gmra.mrb[0].mxu0 %v2017
    %v3240 = vpop.f32.mrb[0].mxu0
    %v3241 = vadd.f32 0.0, %v3240
    %v3242 = vpop.f32.mrb[0].mxu0
    %3243 = vmatprep.mubr.f32.mxu0 0.0
    %3244 = vmatmul.mubr.f32.gmra.mrb[0].mxu0 %v2020
    %v3245 = vpop.f32.mrb[0].mxu0
    %v3246 = vadd.f32 0.0, %v3245
    %v3247 = vpop.f32.mrb[0].mxu0
    %3248 = vdwg.mxu0
    %v3249 = vmul.f32 %v3053, %v3221
    %v3250 = vmul.f32 %v3056, %v3226
    %v3251 = vmul.f32 %v3059, %v3231
    %v3252 = vmul.f32 %v3062, %v3236
    %v3253 = vmul.f32 %v3065, %v3241
    %v3254 = vmul.f32 %v3068, %v3246
    %3256 = vset.pattern.permute.xlu0 0
    %3257 = vperm.xlu0 %3256, %v3249
    %v3258 = vpop.permute.xlu0 %3257
    %3261 = vset.pattern.permute.xlu0 0
    %3262 = vperm.xlu0 %3261, %v3250
    %v3263 = vpop.permute.xlu0 %3262
    %3266 = vset.pattern.permute.xlu0 0
    %3267 = vperm.xlu0 %3266, %v3251
    %v3268 = vpop.permute.xlu0 %3267
    %3271 = vset.pattern.permute.xlu0 0
    %3272 = vperm.xlu0 %3271, %v3252
    %v3273 = vpop.permute.xlu0 %3272
    %3276 = vset.pattern.permute.xlu0 0
    %3277 = vperm.xlu0 %3276, %v3253
    %v3278 = vpop.permute.xlu0 %3277
    %3281 = vset.pattern.permute.xlu0 0
    %3282 = vperm.xlu0 %3281, %v3254
    %v3283 = vpop.permute.xlu0 %3282
    %v3285 = vmul.f32 %v34, %v3258
    %v3286 = vmul.f32 %v35, %v3263
    %v3287 = vmul.f32 %v36, %v3268
    %v3288 = vmul.f32 %v37, %v3273
    %v3289 = vmul.f32 %v38, %v3278
    %v3290 = vmul.f32 %v39, %v3283
    %3291 = vxpose.xlu0.b32.start [1/16] %v3285, 128
    %3292 = vxpose.xlu0.b32.cont [2/16] %v3286, 128
    %3293 = vxpose.xlu0.b32.cont [3/16] %v3287, 128
    %3294 = vxpose.xlu0.b32.cont [4/16] %v3288, 128
    %3295 = vxpose.xlu0.b32.cont [5/16] %v3289, 128
    %3296 = vxpose.xlu0.b32.cont [6/16] %v3290, 128
    %3297 = vxpose.xlu0.b32.cont [7/16] 0.0, 128
    %3298 = vxpose.xlu0.b32.cont [8/16] 0.0, 128
    %3299 = vxpose.xlu0.b32.cont [9/16] 0.0, 128
    %3300 = vxpose.xlu0.b32.cont [10/16] 0.0, 128
    %3301 = vxpose.xlu0.b32.cont [11/16] 0.0, 128
    %3302 = vxpose.xlu0.b32.cont [12/16] 0.0, 128
    %3303 = vxpose.xlu0.b32.cont [13/16] 0.0, 128
    %3304 = vxpose.xlu0.b32.cont [14/16] 0.0, 128
    %3305 = vxpose.xlu0.b32.cont [15/16] 0.0, 128
    %3306 = vxpose.xlu0.b32.end [16/16] 0.0, 128
    %v3307 = vpop.trf.xlu0
    %v3308 = vpop.trf.xlu0
    %v3309 = vpop.trf.xlu0
    %v3310 = vpop.trf.xlu0
    %v3311 = vpop.trf.xlu0
    %v3312 = vpop.trf.xlu0
    %v3313 = vpop.trf.xlu0
    %v3314 = vpop.trf.xlu0
    %v3315 = vpop.trf.xlu0
    %v3316 = vpop.trf.xlu0
    %v3317 = vpop.trf.xlu0
    %v3318 = vpop.trf.xlu0
    %v3319 = vpop.trf.xlu0
    %v3320 = vpop.trf.xlu0
    %v3321 = vpop.trf.xlu0
    %v3322 = vpop.trf.xlu0
    %v3324 = vsel %vm1924, %v3307, 0
    %3326 = vmatprep.subr.mxu0 %v1298
    %3327 = vmatpush1.msra.mxu0 %v1297
    %3328 = vmatprep.subr.mxu0 %v1305
    %3329 = vmatpush1.msra.mxu0 %v1304
    %3330 = vmatprep.subr.mxu0 %v1312
    %3331 = vmatpush1.msra.mxu0 %v1311
    %3332 = vmatprep.subr.mxu0 %v1319
    %3333 = vmatpush1.msra.mxu0 %v1318
    %3334 = vmatprep.subr.mxu0 %v1326
    %3335 = vmatpush1.msra.mxu0 %v1325
    %3336 = vmatprep.subr.mxu0 %v1333
    %3337 = vmatpush1.msra.mxu0 %v1332
    %3338 = vmatprep.subr.mxu0 0.0
    %3339 = vmatpush1.msra.mxu0 0.0
    %3340 = vmatprep.subr.mxu0 0.0
    %3341 = vmatpush1.msra.mxu0 0.0
    %3342 = vmatprep.subr.mxu0 0.0
    %3343 = vmatpush1.msra.mxu0 0.0
    %3344 = vmatprep.subr.mxu0 0.0
    %3345 = vmatpush1.msra.mxu0 0.0
    %3346 = vmatprep.subr.mxu0 0.0
    %3347 = vmatpush1.msra.mxu0 0.0
    %3348 = vmatprep.subr.mxu0 0.0
    %3349 = vmatpush1.msra.mxu0 0.0
    %3350 = vmatprep.subr.mxu0 0.0
    %3351 = vmatpush1.msra.mxu0 0.0
    %3352 = vmatprep.subr.mxu0 0.0
    %3353 = vmatpush1.msra.mxu0 0.0
    %3354 = vmatprep.subr.mxu0 0.0
    %3355 = vmatpush1.msra.mxu0 0.0
    %3356 = vmatprep.subr.mxu0 0.0
    %3357 = vmatpush1.msra.mxu0 0.0
    %3358 = vmatprep.subr.mxu0 0.0
    %3359 = vmatpush1.msra.mxu0 0.0
    %3360 = vmatprep.subr.mxu0 0.0
    %3361 = vmatpush1.msra.mxu0 0.0
    %3362 = vmatprep.subr.mxu0 0.0
    %3363 = vmatpush1.msra.mxu0 0.0
    %3364 = vmatprep.subr.mxu0 0.0
    %3365 = vmatpush1.msra.mxu0 0.0
    %3366 = vmatprep.subr.mxu0 0.0
    %3367 = vmatpush1.msra.mxu0 0.0
    %3368 = vmatprep.subr.mxu0 0.0
    %3369 = vmatpush1.msra.mxu0 0.0
    %3370 = vmatprep.subr.mxu0 0.0
    %3371 = vmatpush1.msra.mxu0 0.0
    %3372 = vmatprep.subr.mxu0 0.0
    %3373 = vmatpush1.msra.mxu0 0.0
    %3374 = vmatprep.subr.mxu0 0.0
    %3375 = vmatpush1.msra.mxu0 0.0
    %3376 = vmatprep.subr.mxu0 0.0
    %3377 = vmatpush1.msra.mxu0 0.0
    %3378 = vmatprep.subr.mxu0 0.0
    %3379 = vmatpush1.msra.mxu0 0.0
    %3380 = vmatprep.subr.mxu0 0.0
    %3381 = vmatpush1.msra.mxu0 0.0
    %3382 = vmatprep.subr.mxu0 0.0
    %3383 = vmatpush1.msra.mxu0 0.0
    %3384 = vmatprep.subr.mxu0 0.0
    %3385 = vmatpush1.msra.mxu0 0.0
    %3386 = vmatprep.subr.mxu0 0.0
    %3387 = vmatpush1.msra.mxu0 0.0
    %3388 = vmatprep.subr.mxu0 0.0
    %3389 = vmatpush1.msra.mxu0 0.0
    %3390 = vmatprep.mubr.f32.mxu0 0.0
    %3391 = vmatmul.mubr.f32.gmra.mrb[0].mxu0 %v3324
    %v3392 = vpop.f32.mrb[0].mxu0
    %v3393 = vadd.f32 0.0, %v3392
    %v3394 = vpop.f32.mrb[0].mxu0
    %v3395 = vadd.f32 0.0, %v3394
    %3396 = vdwg.mxu0
    %3397 = vmatprep.subr.mxu0 %v1300
    %3398 = vmatpush1.msra.mxu0 %v1299
    %3399 = vmatprep.subr.mxu0 %v1307
    %3400 = vmatpush1.msra.mxu0 %v1306
    %3401 = vmatprep.subr.mxu0 %v1314
    %3402 = vmatpush1.msra.mxu0 %v1313
    %3403 = vmatprep.subr.mxu0 %v1321
    %3404 = vmatpush1.msra.mxu0 %v1320
    %3405 = vmatprep.subr.mxu0 %v1328
    %3406 = vmatpush1.msra.mxu0 %v1327
    %3407 = vmatprep.subr.mxu0 %v1335
    %3408 = vmatpush1.msra.mxu0 %v1334
    %3409 = vmatprep.subr.mxu0 0.0
    %3410 = vmatpush1.msra.mxu0 0.0
    %3411 = vmatprep.subr.mxu0 0.0
    %3412 = vmatpush1.msra.mxu0 0.0
    %3413 = vmatprep.subr.mxu0 0.0
    %3414 = vmatpush1.msra.mxu0 0.0
    %3415 = vmatprep.subr.mxu0 0.0
    %3416 = vmatpush1.msra.mxu0 0.0
    %3417 = vmatprep.subr.mxu0 0.0
    %3418 = vmatpush1.msra.mxu0 0.0
    %3419 = vmatprep.subr.mxu0 0.0
    %3420 = vmatpush1.msra.mxu0 0.0
    %3421 = vmatprep.subr.mxu0 0.0
    %3422 = vmatpush1.msra.mxu0 0.0
    %3423 = vmatprep.subr.mxu0 0.0
    %3424 = vmatpush1.msra.mxu0 0.0
    %3425 = vmatprep.subr.mxu0 0.0
    %3426 = vmatpush1.msra.mxu0 0.0
    %3427 = vmatprep.subr.mxu0 0.0
    %3428 = vmatpush1.msra.mxu0 0.0
    %3429 = vmatprep.subr.mxu0 0.0
    %3430 = vmatpush1.msra.mxu0 0.0
    %3431 = vmatprep.subr.mxu0 0.0
    %3432 = vmatpush1.msra.mxu0 0.0
    %3433 = vmatprep.subr.mxu0 0.0
    %3434 = vmatpush1.msra.mxu0 0.0
    %3435 = vmatprep.subr.mxu0 0.0
    %3436 = vmatpush1.msra.mxu0 0.0
    %3437 = vmatprep.subr.mxu0 0.0
    %3438 = vmatpush1.msra.mxu0 0.0
    %3439 = vmatprep.subr.mxu0 0.0
    %3440 = vmatpush1.msra.mxu0 0.0
    %3441 = vmatprep.subr.mxu0 0.0
    %3442 = vmatpush1.msra.mxu0 0.0
    %3443 = vmatprep.subr.mxu0 0.0
    %3444 = vmatpush1.msra.mxu0 0.0
    %3445 = vmatprep.subr.mxu0 0.0
    %3446 = vmatpush1.msra.mxu0 0.0
    %3447 = vmatprep.subr.mxu0 0.0
    %3448 = vmatpush1.msra.mxu0 0.0
    %3449 = vmatprep.subr.mxu0 0.0
    %3450 = vmatpush1.msra.mxu0 0.0
    %3451 = vmatprep.subr.mxu0 0.0
    %3452 = vmatpush1.msra.mxu0 0.0
    %3453 = vmatprep.subr.mxu0 0.0
    %3454 = vmatpush1.msra.mxu0 0.0
    %3455 = vmatprep.subr.mxu0 0.0
    %3456 = vmatpush1.msra.mxu0 0.0
    %3457 = vmatprep.subr.mxu0 0.0
    %3458 = vmatpush1.msra.mxu0 0.0
    %3459 = vmatprep.subr.mxu0 0.0
    %3460 = vmatpush1.msra.mxu0 0.0
    %3461 = vmatprep.mubr.f32.mxu0 0.0
    %3462 = vmatmul.mubr.f32.gmra.mrb[0].mxu0 %v3324
    %v3463 = vpop.f32.mrb[0].mxu0
    %v3464 = vadd.f32 0.0, %v3463
    %v3465 = vpop.f32.mrb[0].mxu0
    %v3466 = vadd.f32 0.0, %v3465
    %3467 = vdwg.mxu0
    %3468 = vmatprep.subr.mxu0 %v1302
    %3469 = vmatpush1.msra.mxu0 %v1301
    %3470 = vmatprep.subr.mxu0 %v1309
    %3471 = vmatpush1.msra.mxu0 %v1308
    %3472 = vmatprep.subr.mxu0 %v1316
    %3473 = vmatpush1.msra.mxu0 %v1315
    %3474 = vmatprep.subr.mxu0 %v1323
    %3475 = vmatpush1.msra.mxu0 %v1322
    %3476 = vmatprep.subr.mxu0 %v1330
    %3477 = vmatpush1.msra.mxu0 %v1329
    %3478 = vmatprep.subr.mxu0 %v1337
    %3479 = vmatpush1.msra.mxu0 %v1336
    %3480 = vmatprep.subr.mxu0 0.0
    %3481 = vmatpush1.msra.mxu0 0.0
    %3482 = vmatprep.subr.mxu0 0.0
    %3483 = vmatpush1.msra.mxu0 0.0
    %3484 = vmatprep.subr.mxu0 0.0
    %3485 = vmatpush1.msra.mxu0 0.0
    %3486 = vmatprep.subr.mxu0 0.0
    %3487 = vmatpush1.msra.mxu0 0.0
    %3488 = vmatprep.subr.mxu0 0.0
    %3489 = vmatpush1.msra.mxu0 0.0
    %3490 = vmatprep.subr.mxu0 0.0
    %3491 = vmatpush1.msra.mxu0 0.0
    %3492 = vmatprep.subr.mxu0 0.0
    %3493 = vmatpush1.msra.mxu0 0.0
    %3494 = vmatprep.subr.mxu0 0.0
    %3495 = vmatpush1.msra.mxu0 0.0
    %3496 = vmatprep.subr.mxu0 0.0
    %3497 = vmatpush1.msra.mxu0 0.0
    %3498 = vmatprep.subr.mxu0 0.0
    %3499 = vmatpush1.msra.mxu0 0.0
    %3500 = vmatprep.subr.mxu0 0.0
    %3501 = vmatpush1.msra.mxu0 0.0
    %3502 = vmatprep.subr.mxu0 0.0
    %3503 = vmatpush1.msra.mxu0 0.0
    %3504 = vmatprep.subr.mxu0 0.0
    %3505 = vmatpush1.msra.mxu0 0.0
    %3506 = vmatprep.subr.mxu0 0.0
    %3507 = vmatpush1.msra.mxu0 0.0
    %3508 = vmatprep.subr.mxu0 0.0
    %3509 = vmatpush1.msra.mxu0 0.0
    %3510 = vmatprep.subr.mxu0 0.0
    %3511 = vmatpush1.msra.mxu0 0.0
    %3512 = vmatprep.subr.mxu0 0.0
    %3513 = vmatpush1.msra.mxu0 0.0
    %3514 = vmatprep.subr.mxu0 0.0
    %3515 = vmatpush1.msra.mxu0 0.0
    %3516 = vmatprep.subr.mxu0 0.0
    %3517 = vmatpush1.msra.mxu0 0.0
    %3518 = vmatprep.subr.mxu0 0.0
    %3519 = vmatpush1.msra.mxu0 0.0
    %3520 = vmatprep.subr.mxu0 0.0
    %3521 = vmatpush1.msra.mxu0 0.0
    %3522 = vmatprep.subr.mxu0 0.0
    %3523 = vmatpush1.msra.mxu0 0.0
    %3524 = vmatprep.subr.mxu0 0.0
    %3525 = vmatpush1.msra.mxu0 0.0
    %3526 = vmatprep.subr.mxu0 0.0
    %3527 = vmatpush1.msra.mxu0 0.0
    %3528 = vmatprep.subr.mxu0 0.0
    %3529 = vmatpush1.msra.mxu0 0.0
    %3530 = vmatprep.subr.mxu0 0.0
    %3531 = vmatpush1.msra.mxu0 0.0
    %3532 = vmatprep.mubr.f32.mxu0 0.0
    %3533 = vmatmul.mubr.f32.gmra.mrb[0].mxu0 %v3324
    %v3534 = vpop.f32.mrb[0].mxu0
    %v3535 = vadd.f32 0.0, %v3534
    %v3536 = vpop.f32.mrb[0].mxu0
    %v3537 = vadd.f32 0.0, %v3536
    %3538 = vdwg.mxu0
    %3539 = vmatprep.subr.mxu0 0.0
    %3540 = vmatpush1.msra.mxu0 %v1303
    %3541 = vmatprep.subr.mxu0 0.0
    %3542 = vmatpush1.msra.mxu0 %v1310
    %3543 = vmatprep.subr.mxu0 0.0
    %3544 = vmatpush1.msra.mxu0 %v1317
    %3545 = vmatprep.subr.mxu0 0.0
    %3546 = vmatpush1.msra.mxu0 %v1324
    %3547 = vmatprep.subr.mxu0 0.0
    %3548 = vmatpush1.msra.mxu0 %v1331
    %3549 = vmatprep.subr.mxu0 0.0
    %3550 = vmatpush1.msra.mxu0 %v1338
    %3551 = vmatprep.subr.mxu0 0.0
    %3552 = vmatpush1.msra.mxu0 0.0
    %3553 = vmatprep.subr.mxu0 0.0
    %3554 = vmatpush1.msra.mxu0 0.0
    %3555 = vmatprep.subr.mxu0 0.0
    %3556 = vmatpush1.msra.mxu0 0.0
    %3557 = vmatprep.subr.mxu0 0.0
    %3558 = vmatpush1.msra.mxu0 0.0
    %3559 = vmatprep.subr.mxu0 0.0
    %3560 = vmatpush1.msra.mxu0 0.0
    %3561 = vmatprep.subr.mxu0 0.0
    %3562 = vmatpush1.msra.mxu0 0.0
    %3563 = vmatprep.subr.mxu0 0.0
    %3564 = vmatpush1.msra.mxu0 0.0
    %3565 = vmatprep.subr.mxu0 0.0
    %3566 = vmatpush1.msra.mxu0 0.0
    %3567 = vmatprep.subr.mxu0 0.0
    %3568 = vmatpush1.msra.mxu0 0.0
    %3569 = vmatprep.subr.mxu0 0.0
    %3570 = vmatpush1.msra.mxu0 0.0
    %3571 = vmatprep.subr.mxu0 0.0
    %3572 = vmatpush1.msra.mxu0 0.0
    %3573 = vmatprep.subr.mxu0 0.0
    %3574 = vmatpush1.msra.mxu0 0.0
    %3575 = vmatprep.subr.mxu0 0.0
    %3576 = vmatpush1.msra.mxu0 0.0
    %3577 = vmatprep.subr.mxu0 0.0
    %3578 = vmatpush1.msra.mxu0 0.0
    %3579 = vmatprep.subr.mxu0 0.0
    %3580 = vmatpush1.msra.mxu0 0.0
    %3581 = vmatprep.subr.mxu0 0.0
    %3582 = vmatpush1.msra.mxu0 0.0
    %3583 = vmatprep.subr.mxu0 0.0
    %3584 = vmatpush1.msra.mxu0 0.0
    %3585 = vmatprep.subr.mxu0 0.0
    %3586 = vmatpush1.msra.mxu0 0.0
    %3587 = vmatprep.subr.mxu0 0.0
    %3588 = vmatpush1.msra.mxu0 0.0
    %3589 = vmatprep.subr.mxu0 0.0
    %3590 = vmatpush1.msra.mxu0 0.0
    %3591 = vmatprep.subr.mxu0 0.0
    %3592 = vmatpush1.msra.mxu0 0.0
    %3593 = vmatprep.subr.mxu0 0.0
    %3594 = vmatpush1.msra.mxu0 0.0
    %3595 = vmatprep.subr.mxu0 0.0
    %3596 = vmatpush1.msra.mxu0 0.0
    %3597 = vmatprep.subr.mxu0 0.0
    %3598 = vmatpush1.msra.mxu0 0.0
    %3599 = vmatprep.subr.mxu0 0.0
    %3600 = vmatpush1.msra.mxu0 0.0
    %3601 = vmatprep.subr.mxu0 0.0
    %3602 = vmatpush1.msra.mxu0 0.0
    %3603 = vmatprep.mubr.f32.mxu0 0.0
    %3604 = vmatmul.mubr.f32.gmra.mrb[0].mxu0 %v3324
    %v3605 = vpop.f32.mrb[0].mxu0
    %v3606 = vadd.f32 0.0, %v3605
    %v3607 = vpop.f32.mrb[0].mxu0
    %3608 = vdwg.mxu0
    %v3615 = vcombine.low %v3393, %v3395
    %v3616 = vcombine.low %v3464, %v3466
    %v3617 = vcombine.low %v3535, %v3537
    %v3621 = vadd.f32 %v2492, %v3615
    %v3622 = vadd.f32 %v2493, %v3616
    %v3623 = vadd.f32 %v2494, %v3617
    %v3624 = vadd.f32 %v2495, %v3606
    %v3628 = vcombine.high %v3621, %v3621
    %v3629 = vcombine.high %v3622, %v3622
    %v3630 = vcombine.high %v3623, %v3623
    %v3634 = vsel %vm1352, %v3621, -inf
    %v3635 = vrot.slane %v3634, 4
    %v3636 = vmax.f32 %v3634, %v3635
    %v3637 = vrot.slane %v3636, 2
    %v3638 = vmax.f32 %v3636, %v3637
    %v3639 = vrot.slane %v3638, 1
    %v3640 = vmax.f32 %v3638, %v3639
    %v3641 = vsel %vm1352, %v3628, -inf
    %v3642 = vrot.slane %v3641, 4
    %v3643 = vmax.f32 %v3641, %v3642
    %v3644 = vrot.slane %v3643, 2
    %v3645 = vmax.f32 %v3643, %v3644
    %v3646 = vrot.slane %v3645, 1
    %v3647 = vmax.f32 %v3645, %v3646
    %v3648 = vsel %vm1352, %v3622, -inf
    %v3649 = vrot.slane %v3648, 4
    %v3650 = vmax.f32 %v3648, %v3649
    %v3651 = vrot.slane %v3650, 2
    %v3652 = vmax.f32 %v3650, %v3651
    %v3653 = vrot.slane %v3652, 1
    %v3654 = vmax.f32 %v3652, %v3653
    %v3655 = vsel %vm1352, %v3629, -inf
    %v3656 = vrot.slane %v3655, 4
    %v3657 = vmax.f32 %v3655, %v3656
    %v3658 = vrot.slane %v3657, 2
    %v3659 = vmax.f32 %v3657, %v3658
    %v3660 = vrot.slane %v3659, 1
    %v3661 = vmax.f32 %v3659, %v3660
    %v3662 = vsel %vm1352, %v3623, -inf
    %v3663 = vrot.slane %v3662, 4
    %v3664 = vmax.f32 %v3662, %v3663
    %v3665 = vrot.slane %v3664, 2
    %v3666 = vmax.f32 %v3664, %v3665
    %v3667 = vrot.slane %v3666, 1
    %v3668 = vmax.f32 %v3666, %v3667
    %v3669 = vsel %vm1352, %v3630, -inf
    %v3670 = vrot.slane %v3669, 4
    %v3671 = vmax.f32 %v3669, %v3670
    %v3672 = vrot.slane %v3671, 2
    %v3673 = vmax.f32 %v3671, %v3672
    %v3674 = vrot.slane %v3673, 1
    %v3675 = vmax.f32 %v3673, %v3674
    %v3676 = vsel %vm1352, %v3624, -inf
    %v3677 = vrot.slane %v3676, 4
    %v3678 = vmax.f32 %v3676, %v3677
    %v3679 = vrot.slane %v3678, 2
    %v3680 = vmax.f32 %v3678, %v3679
    %v3681 = vrot.slane %v3680, 1
    %v3682 = vmax.f32 %v3680, %v3681
    %v3689 = vcombine.low %v3640, %v3647
    %v3690 = vcombine.low %v3654, %v3661
    %v3691 = vcombine.low %v3668, %v3675
    %v3695 = vsub.f32 %v3621, %v3689
    %v3696 = vsub.f32 %v3622, %v3690
    %v3697 = vsub.f32 %v3623, %v3691
    %v3698 = vsub.f32 %v3624, %v3682
    %v3699 = vmul.f32 %v3695, 1.442695
    %v3700 = vpow.pop %v3699
    %v3701 = vmul.f32 %v3696, 1.442695
    %v3702 = vpow.pop %v3701
    %v3703 = vmul.f32 %v3697, 1.442695
    %v3704 = vpow.pop %v3703
    %v3705 = vmul.f32 %v3698, 1.442695
    %v3706 = vpow.pop %v3705
    %v3710 = vcombine.high %v3700, %v3700
    %v3711 = vcombine.high %v3702, %v3702
    %v3712 = vcombine.high %v3704, %v3704
    %v3716 = vsel %vm1352, %v3700, 0.0
    %v3717 = vrot.slane %v3716, 4
    %v3718 = vadd.f32 %v3716, %v3717
    %v3719 = vrot.slane %v3718, 2
    %v3720 = vadd.f32 %v3718, %v3719
    %v3721 = vrot.slane %v3720, 1
    %v3722 = vadd.f32 %v3720, %v3721
    %v3723 = vsel %vm1352, %v3710, 0.0
    %v3724 = vrot.slane %v3723, 4
    %v3725 = vadd.f32 %v3723, %v3724
    %v3726 = vrot.slane %v3725, 2
    %v3727 = vadd.f32 %v3725, %v3726
    %v3728 = vrot.slane %v3727, 1
    %v3729 = vadd.f32 %v3727, %v3728
    %v3730 = vsel %vm1352, %v3702, 0.0
    %v3731 = vrot.slane %v3730, 4
    %v3732 = vadd.f32 %v3730, %v3731
    %v3733 = vrot.slane %v3732, 2
    %v3734 = vadd.f32 %v3732, %v3733
    %v3735 = vrot.slane %v3734, 1
    %v3736 = vadd.f32 %v3734, %v3735
    %v3737 = vsel %vm1352, %v3711, 0.0
    %v3738 = vrot.slane %v3737, 4
    %v3739 = vadd.f32 %v3737, %v3738
    %v3740 = vrot.slane %v3739, 2
    %v3741 = vadd.f32 %v3739, %v3740
    %v3742 = vrot.slane %v3741, 1
    %v3743 = vadd.f32 %v3741, %v3742
    %v3744 = vsel %vm1352, %v3704, 0.0
    %v3745 = vrot.slane %v3744, 4
    %v3746 = vadd.f32 %v3744, %v3745
    %v3747 = vrot.slane %v3746, 2
    %v3748 = vadd.f32 %v3746, %v3747
    %v3749 = vrot.slane %v3748, 1
    %v3750 = vadd.f32 %v3748, %v3749
    %v3751 = vsel %vm1352, %v3712, 0.0
    %v3752 = vrot.slane %v3751, 4
    %v3753 = vadd.f32 %v3751, %v3752
    %v3754 = vrot.slane %v3753, 2
    %v3755 = vadd.f32 %v3753, %v3754
    %v3756 = vrot.slane %v3755, 1
    %v3757 = vadd.f32 %v3755, %v3756
    %v3758 = vsel %vm1352, %v3706, 0.0
    %v3759 = vrot.slane %v3758, 4
    %v3760 = vadd.f32 %v3758, %v3759
    %v3761 = vrot.slane %v3760, 2
    %v3762 = vadd.f32 %v3760, %v3761
    %v3763 = vrot.slane %v3762, 1
    %v3764 = vadd.f32 %v3762, %v3763
    %v3771 = vcombine.low %v3722, %v3729
    %v3772 = vcombine.low %v3736, %v3743
    %v3773 = vcombine.low %v3750, %v3757
    %v3777 = vrcp.pop %v3771
    %v3778 = vmul.f32 %v3700, %v3777
    %v3779 = vrcp.pop %v3772
    %v3780 = vmul.f32 %v3702, %v3779
    %v3781 = vrcp.pop %v3773
    %v3782 = vmul.f32 %v3704, %v3781
    %v3783 = vrcp.pop %v3764
    %v3784 = vmul.f32 %v3706, %v3783
    %v3788 = vcombine.high %v3778, %v3778
    %v3789 = vcombine.high %v3780, %v3780
    %v3790 = vcombine.high %v3782, %v3782
    %3794 = vmatprep.subr.mxu0 %v3788
    %3795 = vmatpush1.xpose.msra.mxu0 %v3778
    %3796 = vmatprep.subr.mxu0 0.0
    %3797 = vmatpush1.xpose.msra.mxu0 0.0
    %3798 = vmatprep.subr.mxu0 0.0
    %3799 = vmatpush1.xpose.msra.mxu0 0.0
    %3800 = vmatprep.subr.mxu0 0.0
    %3801 = vmatpush1.xpose.msra.mxu0 0.0
    %3802 = vmatprep.subr.mxu0 0.0
    %3803 = vmatpush1.xpose.msra.mxu0 0.0
    %3804 = vmatprep.subr.mxu0 0.0
    %3805 = vmatpush1.xpose.msra.mxu0 0.0
    %3806 = vmatprep.subr.mxu0 0.0
    %3807 = vmatpush1.xpose.msra.mxu0 0.0
    %3808 = vmatprep.subr.mxu0 0.0
    %3809 = vmatpush1.xpose.msra.mxu0 0.0
    %3810 = vmatprep.subr.mxu0 0.0
    %3811 = vmatpush1.xpose.msra.mxu0 0.0
    %3812 = vmatprep.subr.mxu0 0.0
    %3813 = vmatpush1.xpose.msra.mxu0 0.0
    %3814 = vmatprep.subr.mxu0 0.0
    %3815 = vmatpush1.xpose.msra.mxu0 0.0
    %3816 = vmatprep.subr.mxu0 0.0
    %3817 = vmatpush1.xpose.msra.mxu0 0.0
    %3818 = vmatprep.subr.mxu0 0.0
    %3819 = vmatpush1.xpose.msra.mxu0 0.0
    %3820 = vmatprep.subr.mxu0 0.0
    %3821 = vmatpush1.xpose.msra.mxu0 0.0
    %3822 = vmatprep.subr.mxu0 0.0
    %3823 = vmatpush1.xpose.msra.mxu0 0.0
    %3824 = vmatprep.subr.mxu0 0.0
    %3825 = vmatpush1.xpose.msra.mxu0 0.0
    %3826 = vmatprep.subr.mxu0 0.0
    %3827 = vmatpush1.xpose.msra.mxu0 0.0
    %3828 = vmatprep.subr.mxu0 0.0
    %3829 = vmatpush1.xpose.msra.mxu0 0.0
    %3830 = vmatprep.subr.mxu0 0.0
    %3831 = vmatpush1.xpose.msra.mxu0 0.0
    %3832 = vmatprep.subr.mxu0 0.0
    %3833 = vmatpush1.xpose.msra.mxu0 0.0
    %3834 = vmatprep.subr.mxu0 0.0
    %3835 = vmatpush1.xpose.msra.mxu0 0.0
    %3836 = vmatprep.subr.mxu0 0.0
    %3837 = vmatpush1.xpose.msra.mxu0 0.0
    %3838 = vmatprep.subr.mxu0 0.0
    %3839 = vmatpush1.xpose.msra.mxu0 0.0
    %3840 = vmatprep.subr.mxu0 0.0
    %3841 = vmatpush1.xpose.msra.mxu0 0.0
    %3842 = vmatprep.subr.mxu0 0.0
    %3843 = vmatpush1.xpose.msra.mxu0 0.0
    %3844 = vmatprep.subr.mxu0 0.0
    %3845 = vmatpush1.xpose.msra.mxu0 0.0
    %3846 = vmatprep.subr.mxu0 0.0
    %3847 = vmatpush1.xpose.msra.mxu0 0.0
    %3848 = vmatprep.subr.mxu0 0.0
    %3849 = vmatpush1.xpose.msra.mxu0 0.0
    %3850 = vmatprep.subr.mxu0 0.0
    %3851 = vmatpush1.xpose.msra.mxu0 0.0
    %3852 = vmatprep.subr.mxu0 0.0
    %3853 = vmatpush1.xpose.msra.mxu0 0.0
    %3854 = vmatprep.subr.mxu0 0.0
    %3855 = vmatpush1.xpose.msra.mxu0 0.0
    %3856 = vmatprep.subr.mxu0 0.0
    %3857 = vmatpush1.xpose.msra.mxu0 0.0
    %3858 = vmatprep.mubr.f32.mxu0 %v1298
    %3859 = vmatmul.mubr.f32.gmra.mrb[0].mxu0 %v1297
    %v3860 = vpop.f32.mrb[0].mxu0
    %v3861 = vadd.f32 0.0, %v3860
    %v3862 = vpop.f32.mrb[0].mxu0
    %3863 = vmatprep.mubr.f32.mxu0 %v1305
    %3864 = vmatmul.mubr.f32.gmra.mrb[0].mxu0 %v1304
    %v3865 = vpop.f32.mrb[0].mxu0
    %v3866 = vadd.f32 0.0, %v3865
    %v3867 = vpop.f32.mrb[0].mxu0
    %3868 = vmatprep.mubr.f32.mxu0 %v1312
    %3869 = vmatmul.mubr.f32.gmra.mrb[0].mxu0 %v1311
    %v3870 = vpop.f32.mrb[0].mxu0
    %v3871 = vadd.f32 0.0, %v3870
    %v3872 = vpop.f32.mrb[0].mxu0
    %3873 = vmatprep.mubr.f32.mxu0 %v1319
    %3874 = vmatmul.mubr.f32.gmra.mrb[0].mxu0 %v1318
    %v3875 = vpop.f32.mrb[0].mxu0
    %v3876 = vadd.f32 0.0, %v3875
    %v3877 = vpop.f32.mrb[0].mxu0
    %3878 = vmatprep.mubr.f32.mxu0 %v1326
    %3879 = vmatmul.mubr.f32.gmra.mrb[0].mxu0 %v1325
    %v3880 = vpop.f32.mrb[0].mxu0
    %v3881 = vadd.f32 0.0, %v3880
    %v3882 = vpop.f32.mrb[0].mxu0
    %3883 = vmatprep.mubr.f32.mxu0 %v1333
    %3884 = vmatmul.mubr.f32.gmra.mrb[0].mxu0 %v1332
    %v3885 = vpop.f32.mrb[0].mxu0
    %v3886 = vadd.f32 0.0, %v3885
    %v3887 = vpop.f32.mrb[0].mxu0
    %3888 = vdwg.mxu0
    %3889 = vmatprep.subr.mxu0 %v3789
    %3890 = vmatpush1.xpose.msra.mxu0 %v3780
    %3891 = vmatprep.subr.mxu0 0.0
    %3892 = vmatpush1.xpose.msra.mxu0 0.0
    %3893 = vmatprep.subr.mxu0 0.0
    %3894 = vmatpush1.xpose.msra.mxu0 0.0
    %3895 = vmatprep.subr.mxu0 0.0
    %3896 = vmatpush1.xpose.msra.mxu0 0.0
    %3897 = vmatprep.subr.mxu0 0.0
    %3898 = vmatpush1.xpose.msra.mxu0 0.0
    %3899 = vmatprep.subr.mxu0 0.0
    %3900 = vmatpush1.xpose.msra.mxu0 0.0
    %3901 = vmatprep.subr.mxu0 0.0
    %3902 = vmatpush1.xpose.msra.mxu0 0.0
    %3903 = vmatprep.subr.mxu0 0.0
    %3904 = vmatpush1.xpose.msra.mxu0 0.0
    %3905 = vmatprep.subr.mxu0 0.0
    %3906 = vmatpush1.xpose.msra.mxu0 0.0
    %3907 = vmatprep.subr.mxu0 0.0
    %3908 = vmatpush1.xpose.msra.mxu0 0.0
    %3909 = vmatprep.subr.mxu0 0.0
    %3910 = vmatpush1.xpose.msra.mxu0 0.0
    %3911 = vmatprep.subr.mxu0 0.0
    %3912 = vmatpush1.xpose.msra.mxu0 0.0
    %3913 = vmatprep.subr.mxu0 0.0
    %3914 = vmatpush1.xpose.msra.mxu0 0.0
    %3915 = vmatprep.subr.mxu0 0.0
    %3916 = vmatpush1.xpose.msra.mxu0 0.0
    %3917 = vmatprep.subr.mxu0 0.0
    %3918 = vmatpush1.xpose.msra.mxu0 0.0
    %3919 = vmatprep.subr.mxu0 0.0
    %3920 = vmatpush1.xpose.msra.mxu0 0.0
    %3921 = vmatprep.subr.mxu0 0.0
    %3922 = vmatpush1.xpose.msra.mxu0 0.0
    %3923 = vmatprep.subr.mxu0 0.0
    %3924 = vmatpush1.xpose.msra.mxu0 0.0
    %3925 = vmatprep.subr.mxu0 0.0
    %3926 = vmatpush1.xpose.msra.mxu0 0.0
    %3927 = vmatprep.subr.mxu0 0.0
    %3928 = vmatpush1.xpose.msra.mxu0 0.0
    %3929 = vmatprep.subr.mxu0 0.0
    %3930 = vmatpush1.xpose.msra.mxu0 0.0
    %3931 = vmatprep.subr.mxu0 0.0
    %3932 = vmatpush1.xpose.msra.mxu0 0.0
    %3933 = vmatprep.subr.mxu0 0.0
    %3934 = vmatpush1.xpose.msra.mxu0 0.0
    %3935 = vmatprep.subr.mxu0 0.0
    %3936 = vmatpush1.xpose.msra.mxu0 0.0
    %3937 = vmatprep.subr.mxu0 0.0
    %3938 = vmatpush1.xpose.msra.mxu0 0.0
    %3939 = vmatprep.subr.mxu0 0.0
    %3940 = vmatpush1.xpose.msra.mxu0 0.0
    %3941 = vmatprep.subr.mxu0 0.0
    %3942 = vmatpush1.xpose.msra.mxu0 0.0
    %3943 = vmatprep.subr.mxu0 0.0
    %3944 = vmatpush1.xpose.msra.mxu0 0.0
    %3945 = vmatprep.subr.mxu0 0.0
    %3946 = vmatpush1.xpose.msra.mxu0 0.0
    %3947 = vmatprep.subr.mxu0 0.0
    %3948 = vmatpush1.xpose.msra.mxu0 0.0
    %3949 = vmatprep.subr.mxu0 0.0
    %3950 = vmatpush1.xpose.msra.mxu0 0.0
    %3951 = vmatprep.subr.mxu0 0.0
    %3952 = vmatpush1.xpose.msra.mxu0 0.0
    %3953 = vmatprep.mubr.f32.mxu0 %v1300
    %3954 = vmatmul.mubr.f32.gmra.mrb[0].mxu0 %v1299
    %v3955 = vpop.f32.mrb[0].mxu0
    %v3956 = vadd.f32 %v3861, %v3955
    %v3957 = vpop.f32.mrb[0].mxu0
    %3958 = vmatprep.mubr.f32.mxu0 %v1307
    %3959 = vmatmul.mubr.f32.gmra.mrb[0].mxu0 %v1306
    %v3960 = vpop.f32.mrb[0].mxu0
    %v3961 = vadd.f32 %v3866, %v3960
    %v3962 = vpop.f32.mrb[0].mxu0
    %3963 = vmatprep.mubr.f32.mxu0 %v1314
    %3964 = vmatmul.mubr.f32.gmra.mrb[0].mxu0 %v1313
    %v3965 = vpop.f32.mrb[0].mxu0
    %v3966 = vadd.f32 %v3871, %v3965
    %v3967 = vpop.f32.mrb[0].mxu0
    %3968 = vmatprep.mubr.f32.mxu0 %v1321
    %3969 = vmatmul.mubr.f32.gmra.mrb[0].mxu0 %v1320
    %v3970 = vpop.f32.mrb[0].mxu0
    %v3971 = vadd.f32 %v3876, %v3970
    %v3972 = vpop.f32.mrb[0].mxu0
    %3973 = vmatprep.mubr.f32.mxu0 %v1328
    %3974 = vmatmul.mubr.f32.gmra.mrb[0].mxu0 %v1327
    %v3975 = vpop.f32.mrb[0].mxu0
    %v3976 = vadd.f32 %v3881, %v3975
    %v3977 = vpop.f32.mrb[0].mxu0
    %3978 = vmatprep.mubr.f32.mxu0 %v1335
    %3979 = vmatmul.mubr.f32.gmra.mrb[0].mxu0 %v1334
    %v3980 = vpop.f32.mrb[0].mxu0
    %v3981 = vadd.f32 %v3886, %v3980
    %v3982 = vpop.f32.mrb[0].mxu0
    %3983 = vdwg.mxu0
    %3984 = vmatprep.subr.mxu0 %v3790
    %3985 = vmatpush1.xpose.msra.mxu0 %v3782
    %3986 = vmatprep.subr.mxu0 0.0
    %3987 = vmatpush1.xpose.msra.mxu0 0.0
    %3988 = vmatprep.subr.mxu0 0.0
    %3989 = vmatpush1.xpose.msra.mxu0 0.0
    %3990 = vmatprep.subr.mxu0 0.0
    %3991 = vmatpush1.xpose.msra.mxu0 0.0
    %3992 = vmatprep.subr.mxu0 0.0
    %3993 = vmatpush1.xpose.msra.mxu0 0.0
    %3994 = vmatprep.subr.mxu0 0.0
    %3995 = vmatpush1.xpose.msra.mxu0 0.0
    %3996 = vmatprep.subr.mxu0 0.0
    %3997 = vmatpush1.xpose.msra.mxu0 0.0
    %3998 = vmatprep.subr.mxu0 0.0
    %3999 = vmatpush1.xpose.msra.mxu0 0.0
    %4000 = vmatprep.subr.mxu0 0.0
    %4001 = vmatpush1.xpose.msra.mxu0 0.0
    %4002 = vmatprep.subr.mxu0 0.0
    %4003 = vmatpush1.xpose.msra.mxu0 0.0
    %4004 = vmatprep.subr.mxu0 0.0
    %4005 = vmatpush1.xpose.msra.mxu0 0.0
    %4006 = vmatprep.subr.mxu0 0.0
    %4007 = vmatpush1.xpose.msra.mxu0 0.0
    %4008 = vmatprep.subr.mxu0 0.0
    %4009 = vmatpush1.xpose.msra.mxu0 0.0
    %4010 = vmatprep.subr.mxu0 0.0
    %4011 = vmatpush1.xpose.msra.mxu0 0.0
    %4012 = vmatprep.subr.mxu0 0.0
    %4013 = vmatpush1.xpose.msra.mxu0 0.0
    %4014 = vmatprep.subr.mxu0 0.0
    %4015 = vmatpush1.xpose.msra.mxu0 0.0
    %4016 = vmatprep.subr.mxu0 0.0
    %4017 = vmatpush1.xpose.msra.mxu0 0.0
    %4018 = vmatprep.subr.mxu0 0.0
    %4019 = vmatpush1.xpose.msra.mxu0 0.0
    %4020 = vmatprep.subr.mxu0 0.0
    %4021 = vmatpush1.xpose.msra.mxu0 0.0
    %4022 = vmatprep.subr.mxu0 0.0
    %4023 = vmatpush1.xpose.msra.mxu0 0.0
    %4024 = vmatprep.subr.mxu0 0.0
    %4025 = vmatpush1.xpose.msra.mxu0 0.0
    %4026 = vmatprep.subr.mxu0 0.0
    %4027 = vmatpush1.xpose.msra.mxu0 0.0
    %4028 = vmatprep.subr.mxu0 0.0
    %4029 = vmatpush1.xpose.msra.mxu0 0.0
    %4030 = vmatprep.subr.mxu0 0.0
    %4031 = vmatpush1.xpose.msra.mxu0 0.0
    %4032 = vmatprep.subr.mxu0 0.0
    %4033 = vmatpush1.xpose.msra.mxu0 0.0
    %4034 = vmatprep.subr.mxu0 0.0
    %4035 = vmatpush1.xpose.msra.mxu0 0.0
    %4036 = vmatprep.subr.mxu0 0.0
    %4037 = vmatpush1.xpose.msra.mxu0 0.0
    %4038 = vmatprep.subr.mxu0 0.0
    %4039 = vmatpush1.xpose.msra.mxu0 0.0
    %4040 = vmatprep.subr.mxu0 0.0
    %4041 = vmatpush1.xpose.msra.mxu0 0.0
    %4042 = vmatprep.subr.mxu0 0.0
    %4043 = vmatpush1.xpose.msra.mxu0 0.0
    %4044 = vmatprep.subr.mxu0 0.0
    %4045 = vmatpush1.xpose.msra.mxu0 0.0
    %4046 = vmatprep.subr.mxu0 0.0
    %4047 = vmatpush1.xpose.msra.mxu0 0.0
    %4048 = vmatprep.mubr.f32.mxu0 %v1302
    %4049 = vmatmul.mubr.f32.gmra.mrb[0].mxu0 %v1301
    %v4050 = vpop.f32.mrb[0].mxu0
    %v4051 = vadd.f32 %v3956, %v4050
    %v4052 = vpop.f32.mrb[0].mxu0
    %4053 = vmatprep.mubr.f32.mxu0 %v1309
    %4054 = vmatmul.mubr.f32.gmra.mrb[0].mxu0 %v1308
    %v4055 = vpop.f32.mrb[0].mxu0
    %v4056 = vadd.f32 %v3961, %v4055
    %v4057 = vpop.f32.mrb[0].mxu0
    %4058 = vmatprep.mubr.f32.mxu0 %v1316
    %4059 = vmatmul.mubr.f32.gmra.mrb[0].mxu0 %v1315
    %v4060 = vpop.f32.mrb[0].mxu0
    %v4061 = vadd.f32 %v3966, %v4060
    %v4062 = vpop.f32.mrb[0].mxu0
    %4063 = vmatprep.mubr.f32.mxu0 %v1323
    %4064 = vmatmul.mubr.f32.gmra.mrb[0].mxu0 %v1322
    %v4065 = vpop.f32.mrb[0].mxu0
    %v4066 = vadd.f32 %v3971, %v4065
    %v4067 = vpop.f32.mrb[0].mxu0
    %4068 = vmatprep.mubr.f32.mxu0 %v1330
    %4069 = vmatmul.mubr.f32.gmra.mrb[0].mxu0 %v1329
    %v4070 = vpop.f32.mrb[0].mxu0
    %v4071 = vadd.f32 %v3976, %v4070
    %v4072 = vpop.f32.mrb[0].mxu0
    %4073 = vmatprep.mubr.f32.mxu0 %v1337
    %4074 = vmatmul.mubr.f32.gmra.mrb[0].mxu0 %v1336
    %v4075 = vpop.f32.mrb[0].mxu0
    %v4076 = vadd.f32 %v3981, %v4075
    %v4077 = vpop.f32.mrb[0].mxu0
    %4078 = vdwg.mxu0
    %4079 = vmatprep.subr.mxu0 0.0
    %4080 = vmatpush1.xpose.msra.mxu0 %v3784
    %4081 = vmatprep.subr.mxu0 0.0
    %4082 = vmatpush1.xpose.msra.mxu0 0.0
    %4083 = vmatprep.subr.mxu0 0.0
    %4084 = vmatpush1.xpose.msra.mxu0 0.0
    %4085 = vmatprep.subr.mxu0 0.0
    %4086 = vmatpush1.xpose.msra.mxu0 0.0
    %4087 = vmatprep.subr.mxu0 0.0
    %4088 = vmatpush1.xpose.msra.mxu0 0.0
    %4089 = vmatprep.subr.mxu0 0.0
    %4090 = vmatpush1.xpose.msra.mxu0 0.0
    %4091 = vmatprep.subr.mxu0 0.0
    %4092 = vmatpush1.xpose.msra.mxu0 0.0
    %4093 = vmatprep.subr.mxu0 0.0
    %4094 = vmatpush1.xpose.msra.mxu0 0.0
    %4095 = vmatprep.subr.mxu0 0.0
    %4096 = vmatpush1.xpose.msra.mxu0 0.0
    %4097 = vmatprep.subr.mxu0 0.0
    %4098 = vmatpush1.xpose.msra.mxu0 0.0
    %4099 = vmatprep.subr.mxu0 0.0
    %4100 = vmatpush1.xpose.msra.mxu0 0.0
    %4101 = vmatprep.subr.mxu0 0.0
    %4102 = vmatpush1.xpose.msra.mxu0 0.0
    %4103 = vmatprep.subr.mxu0 0.0
    %4104 = vmatpush1.xpose.msra.mxu0 0.0
    %4105 = vmatprep.subr.mxu0 0.0
    %4106 = vmatpush1.xpose.msra.mxu0 0.0
    %4107 = vmatprep.subr.mxu0 0.0
    %4108 = vmatpush1.xpose.msra.mxu0 0.0
    %4109 = vmatprep.subr.mxu0 0.0
    %4110 = vmatpush1.xpose.msra.mxu0 0.0
    %4111 = vmatprep.subr.mxu0 0.0
    %4112 = vmatpush1.xpose.msra.mxu0 0.0
    %4113 = vmatprep.subr.mxu0 0.0
    %4114 = vmatpush1.xpose.msra.mxu0 0.0
    %4115 = vmatprep.subr.mxu0 0.0
    %4116 = vmatpush1.xpose.msra.mxu0 0.0
    %4117 = vmatprep.subr.mxu0 0.0
    %4118 = vmatpush1.xpose.msra.mxu0 0.0
    %4119 = vmatprep.subr.mxu0 0.0
    %4120 = vmatpush1.xpose.msra.mxu0 0.0
    %4121 = vmatprep.subr.mxu0 0.0
    %4122 = vmatpush1.xpose.msra.mxu0 0.0
    %4123 = vmatprep.subr.mxu0 0.0
    %4124 = vmatpush1.xpose.msra.mxu0 0.0
    %4125 = vmatprep.subr.mxu0 0.0
    %4126 = vmatpush1.xpose.msra.mxu0 0.0
    %4127 = vmatprep.subr.mxu0 0.0
    %4128 = vmatpush1.xpose.msra.mxu0 0.0
    %4129 = vmatprep.subr.mxu0 0.0
    %4130 = vmatpush1.xpose.msra.mxu0 0.0
    %4131 = vmatprep.subr.mxu0 0.0
    %4132 = vmatpush1.xpose.msra.mxu0 0.0
    %4133 = vmatprep.subr.mxu0 0.0
    %4134 = vmatpush1.xpose.msra.mxu0 0.0
    %4135 = vmatprep.subr.mxu0 0.0
    %4136 = vmatpush1.xpose.msra.mxu0 0.0
    %4137 = vmatprep.subr.mxu0 0.0
    %4138 = vmatpush1.xpose.msra.mxu0 0.0
    %4139 = vmatprep.subr.mxu0 0.0
    %4140 = vmatpush1.xpose.msra.mxu0 0.0
    %4141 = vmatprep.subr.mxu0 0.0
    %4142 = vmatpush1.xpose.msra.mxu0 0.0
    %4143 = vmatprep.mubr.f32.mxu0 0.0
    %4144 = vmatmul.mubr.f32.gmra.mrb[0].mxu0 %v1303
    %v4145 = vpop.f32.mrb[0].mxu0
    %v4146 = vadd.f32 %v4051, %v4145
    %v4147 = vpop.f32.mrb[0].mxu0
    %4148 = vmatprep.mubr.f32.mxu0 0.0
    %4149 = vmatmul.mubr.f32.gmra.mrb[0].mxu0 %v1310
    %v4150 = vpop.f32.mrb[0].mxu0
    %v4151 = vadd.f32 %v4056, %v4150
    %v4152 = vpop.f32.mrb[0].mxu0
    %4153 = vmatprep.mubr.f32.mxu0 0.0
    %4154 = vmatmul.mubr.f32.gmra.mrb[0].mxu0 %v1317
    %v4155 = vpop.f32.mrb[0].mxu0
    %v4156 = vadd.f32 %v4061, %v4155
    %v4157 = vpop.f32.mrb[0].mxu0
    %4158 = vmatprep.mubr.f32.mxu0 0.0
    %4159 = vmatmul.mubr.f32.gmra.mrb[0].mxu0 %v1324
    %v4160 = vpop.f32.mrb[0].mxu0
    %v4161 = vadd.f32 %v4066, %v4160
    %v4162 = vpop.f32.mrb[0].mxu0
    %4163 = vmatprep.mubr.f32.mxu0 0.0
    %4164 = vmatmul.mubr.f32.gmra.mrb[0].mxu0 %v1331
    %v4165 = vpop.f32.mrb[0].mxu0
    %v4166 = vadd.f32 %v4071, %v4165
    %v4167 = vpop.f32.mrb[0].mxu0
    %4168 = vmatprep.mubr.f32.mxu0 0.0
    %4169 = vmatmul.mubr.f32.gmra.mrb[0].mxu0 %v1338
    %v4170 = vpop.f32.mrb[0].mxu0
    %v4171 = vadd.f32 %v4076, %v4170
    %v4172 = vpop.f32.mrb[0].mxu0
    %4173 = vdwg.mxu0
    %v4174 = vmul.f32 %v4146, %v34
    %v4175 = vmul.f32 %v4151, %v35
    %v4176 = vmul.f32 %v4156, %v36
    %v4177 = vmul.f32 %v4161, %v37
    %v4178 = vmul.f32 %v4166, %v38
    %v4179 = vmul.f32 %v4171, %v39
    %v4180 = vsel %vm1899, %v4174, 0.0
    %4181 = vadd.xlane.f32.xlu0 %v4180
    %v4182 = vpop.xlane.xlu0 %4181
    %v4183 = vsel %vm1899, %v4175, 0.0
    %4184 = vadd.xlane.f32.xlu0 %v4183
    %v4185 = vpop.xlane.xlu0 %4184
    %v4186 = vsel %vm1899, %v4176, 0.0
    %4187 = vadd.xlane.f32.xlu0 %v4186
    %v4188 = vpop.xlane.xlu0 %4187
    %v4189 = vsel %vm1899, %v4177, 0.0
    %4190 = vadd.xlane.f32.xlu0 %v4189
    %v4191 = vpop.xlane.xlu0 %4190
    %v4192 = vsel %vm1899, %v4178, 0.0
    %4193 = vadd.xlane.f32.xlu0 %v4192
    %v4194 = vpop.xlane.xlu0 %4193
    %v4195 = vsel %vm1899, %v4179, 0.0
    %4196 = vadd.xlane.f32.xlu0 %v4195
    %v4197 = vpop.xlane.xlu0 %4196
    %v4198 = vmul.f32 %v4182, %v4182
    %v4199 = vmul.f32 %v4185, %v4185
    %v4200 = vmul.f32 %v4188, %v4188
    %v4201 = vmul.f32 %v4191, %v4191
    %v4202 = vmul.f32 %v4194, %v4194
    %v4203 = vmul.f32 %v4197, %v4197
    %4204 = vmatprep.subr.mxu0 0.0
    %4205 = vmatpush1.msra.mxu0 %v4198
    %4206 = vmatprep.subr.mxu0 0.0
    %4207 = vmatpush1.msra.mxu0 %v4199
    %4208 = vmatprep.subr.mxu0 0.0
    %4209 = vmatpush1.msra.mxu0 %v4200
    %4210 = vmatprep.subr.mxu0 0.0
    %4211 = vmatpush1.msra.mxu0 %v4201
    %4212 = vmatprep.subr.mxu0 0.0
    %4213 = vmatpush1.msra.mxu0 %v4202
    %4214 = vmatprep.subr.mxu0 0.0
    %4215 = vmatpush1.msra.mxu0 %v4203
    %4216 = vmatprep.subr.mxu0 0.0
    %4217 = vmatpush1.msra.mxu0 0.0
    %4218 = vmatprep.subr.mxu0 0.0
    %4219 = vmatpush1.msra.mxu0 0.0
    %4220 = vmatprep.subr.mxu0 0.0
    %4221 = vmatpush1.msra.mxu0 0.0
    %4222 = vmatprep.subr.mxu0 0.0
    %4223 = vmatpush1.msra.mxu0 0.0
    %4224 = vmatprep.subr.mxu0 0.0
    %4225 = vmatpush1.msra.mxu0 0.0
    %4226 = vmatprep.subr.mxu0 0.0
    %4227 = vmatpush1.msra.mxu0 0.0
    %4228 = vmatprep.subr.mxu0 0.0
    %4229 = vmatpush1.msra.mxu0 0.0
    %4230 = vmatprep.subr.mxu0 0.0
    %4231 = vmatpush1.msra.mxu0 0.0
    %4232 = vmatprep.subr.mxu0 0.0
    %4233 = vmatpush1.msra.mxu0 0.0
    %4234 = vmatprep.subr.mxu0 0.0
    %4235 = vmatpush1.msra.mxu0 0.0
    %4236 = vmatprep.subr.mxu0 0.0
    %4237 = vmatpush1.msra.mxu0 0.0
    %4238 = vmatprep.subr.mxu0 0.0
    %4239 = vmatpush1.msra.mxu0 0.0
    %4240 = vmatprep.subr.mxu0 0.0
    %4241 = vmatpush1.msra.mxu0 0.0
    %4242 = vmatprep.subr.mxu0 0.0
    %4243 = vmatpush1.msra.mxu0 0.0
    %4244 = vmatprep.subr.mxu0 0.0
    %4245 = vmatpush1.msra.mxu0 0.0
    %4246 = vmatprep.subr.mxu0 0.0
    %4247 = vmatpush1.msra.mxu0 0.0
    %4248 = vmatprep.subr.mxu0 0.0
    %4249 = vmatpush1.msra.mxu0 0.0
    %4250 = vmatprep.subr.mxu0 0.0
    %4251 = vmatpush1.msra.mxu0 0.0
    %4252 = vmatprep.subr.mxu0 0.0
    %4253 = vmatpush1.msra.mxu0 0.0
    %4254 = vmatprep.subr.mxu0 0.0
    %4255 = vmatpush1.msra.mxu0 0.0
    %4256 = vmatprep.subr.mxu0 0.0
    %4257 = vmatpush1.msra.mxu0 0.0
    %4258 = vmatprep.subr.mxu0 0.0
    %4259 = vmatpush1.msra.mxu0 0.0
    %4260 = vmatprep.subr.mxu0 0.0
    %4261 = vmatpush1.msra.mxu0 0.0
    %4262 = vmatprep.subr.mxu0 0.0
    %4263 = vmatpush1.msra.mxu0 0.0
    %4264 = vmatprep.subr.mxu0 0.0
    %4265 = vmatpush1.msra.mxu0 0.0
    %4266 = vmatprep.subr.mxu0 0.0
    %4267 = vmatpush1.msra.mxu0 0.0
    %4268 = vmatprep.mubr.f32.mxu0 0.0
    %4269 = vmatmul.mubr.f32.gmra.mrb[0].mxu0 %v1926
    %v4270 = vpop.f32.mrb[0].mxu0
    %v4271 = vadd.f32 0.0, %v4270
    %v4272 = vpop.f32.mrb[0].mxu0
    %4273 = vdwg.mxu0
    %v4274 = vadd.f32 %v4271, 1.0
    %v4275 = vrcp.pop %v4274
    %v4276 = vmul.f32 %v4271, %v4275
    %v4277 = vadd.f32 %v4271, 1e-08
    %v4278 = vrsqrt.pop %v4277
    %v4279 = vmul.f32 %v4276, %v4278
    %v4281 = vsel %vm1352, %v4279, 0
    %4283 = vmatprep.subr.mxu0 0.0
    %4284 = vmatpush1.msra.mxu0 %v4281
    %4285 = vmatprep.subr.mxu0 0.0
    %4286 = vmatpush1.msra.mxu0 0.0
    %4287 = vmatprep.subr.mxu0 0.0
    %4288 = vmatpush1.msra.mxu0 0.0
    %4289 = vmatprep.subr.mxu0 0.0
    %4290 = vmatpush1.msra.mxu0 0.0
    %4291 = vmatprep.subr.mxu0 0.0
    %4292 = vmatpush1.msra.mxu0 0.0
    %4293 = vmatprep.subr.mxu0 0.0
    %4294 = vmatpush1.msra.mxu0 0.0
    %4295 = vmatprep.subr.mxu0 0.0
    %4296 = vmatpush1.msra.mxu0 0.0
    %4297 = vmatprep.subr.mxu0 0.0
    %4298 = vmatpush1.msra.mxu0 0.0
    %4299 = vmatprep.subr.mxu0 0.0
    %4300 = vmatpush1.msra.mxu0 0.0
    %4301 = vmatprep.subr.mxu0 0.0
    %4302 = vmatpush1.msra.mxu0 0.0
    %4303 = vmatprep.subr.mxu0 0.0
    %4304 = vmatpush1.msra.mxu0 0.0
    %4305 = vmatprep.subr.mxu0 0.0
    %4306 = vmatpush1.msra.mxu0 0.0
    %4307 = vmatprep.subr.mxu0 0.0
    %4308 = vmatpush1.msra.mxu0 0.0
    %4309 = vmatprep.subr.mxu0 0.0
    %4310 = vmatpush1.msra.mxu0 0.0
    %4311 = vmatprep.subr.mxu0 0.0
    %4312 = vmatpush1.msra.mxu0 0.0
    %4313 = vmatprep.subr.mxu0 0.0
    %4314 = vmatpush1.msra.mxu0 0.0
    %4315 = vmatprep.subr.mxu0 0.0
    %4316 = vmatpush1.msra.mxu0 0.0
    %4317 = vmatprep.subr.mxu0 0.0
    %4318 = vmatpush1.msra.mxu0 0.0
    %4319 = vmatprep.subr.mxu0 0.0
    %4320 = vmatpush1.msra.mxu0 0.0
    %4321 = vmatprep.subr.mxu0 0.0
    %4322 = vmatpush1.msra.mxu0 0.0
    %4323 = vmatprep.subr.mxu0 0.0
    %4324 = vmatpush1.msra.mxu0 0.0
    %4325 = vmatprep.subr.mxu0 0.0
    %4326 = vmatpush1.msra.mxu0 0.0
    %4327 = vmatprep.subr.mxu0 0.0
    %4328 = vmatpush1.msra.mxu0 0.0
    %4329 = vmatprep.subr.mxu0 0.0
    %4330 = vmatpush1.msra.mxu0 0.0
    %4331 = vmatprep.subr.mxu0 0.0
    %4332 = vmatpush1.msra.mxu0 0.0
    %4333 = vmatprep.subr.mxu0 0.0
    %4334 = vmatpush1.msra.mxu0 0.0
    %4335 = vmatprep.subr.mxu0 0.0
    %4336 = vmatpush1.msra.mxu0 0.0
    %4337 = vmatprep.subr.mxu0 0.0
    %4338 = vmatpush1.msra.mxu0 0.0
    %4339 = vmatprep.subr.mxu0 0.0
    %4340 = vmatpush1.msra.mxu0 0.0
    %4341 = vmatprep.subr.mxu0 0.0
    %4342 = vmatpush1.msra.mxu0 0.0
    %4343 = vmatprep.subr.mxu0 0.0
    %4344 = vmatpush1.msra.mxu0 0.0
    %4345 = vmatprep.subr.mxu0 0.0
    %4346 = vmatpush1.msra.mxu0 0.0
    %4347 = vmatprep.mubr.f32.mxu0 0.0
    %4348 = vmatmul.mubr.f32.gmra.mrb[0].mxu0 %v2005
    %v4349 = vpop.f32.mrb[0].mxu0
    %v4350 = vadd.f32 0.0, %v4349
    %v4351 = vpop.f32.mrb[0].mxu0
    %4352 = vmatprep.mubr.f32.mxu0 0.0
    %4353 = vmatmul.mubr.f32.gmra.mrb[0].mxu0 %v2008
    %v4354 = vpop.f32.mrb[0].mxu0
    %v4355 = vadd.f32 0.0, %v4354
    %v4356 = vpop.f32.mrb[0].mxu0
    %4357 = vmatprep.mubr.f32.mxu0 0.0
    %4358 = vmatmul.mubr.f32.gmra.mrb[0].mxu0 %v2011
    %v4359 = vpop.f32.mrb[0].mxu0
    %v4360 = vadd.f32 0.0, %v4359
    %v4361 = vpop.f32.mrb[0].mxu0
    %4362 = vmatprep.mubr.f32.mxu0 0.0
    %4363 = vmatmul.mubr.f32.gmra.mrb[0].mxu0 %v2014
    %v4364 = vpop.f32.mrb[0].mxu0
    %v4365 = vadd.f32 0.0, %v4364
    %v4366 = vpop.f32.mrb[0].mxu0
    %4367 = vmatprep.mubr.f32.mxu0 0.0
    %4368 = vmatmul.mubr.f32.gmra.mrb[0].mxu0 %v2017
    %v4369 = vpop.f32.mrb[0].mxu0
    %v4370 = vadd.f32 0.0, %v4369
    %v4371 = vpop.f32.mrb[0].mxu0
    %4372 = vmatprep.mubr.f32.mxu0 0.0
    %4373 = vmatmul.mubr.f32.gmra.mrb[0].mxu0 %v2020
    %v4374 = vpop.f32.mrb[0].mxu0
    %v4375 = vadd.f32 0.0, %v4374
    %v4376 = vpop.f32.mrb[0].mxu0
    %4377 = vdwg.mxu0
    %v4378 = vmul.f32 %v4182, %v4350
    %v4379 = vmul.f32 %v4185, %v4355
    %v4380 = vmul.f32 %v4188, %v4360
    %v4381 = vmul.f32 %v4191, %v4365
    %v4382 = vmul.f32 %v4194, %v4370
    %v4383 = vmul.f32 %v4197, %v4375
    %4385 = vset.pattern.permute.xlu0 0
    %4386 = vperm.xlu0 %4385, %v4378
    %v4387 = vpop.permute.xlu0 %4386
    %4390 = vset.pattern.permute.xlu0 0
    %4391 = vperm.xlu0 %4390, %v4379
    %v4392 = vpop.permute.xlu0 %4391
    %4395 = vset.pattern.permute.xlu0 0
    %4396 = vperm.xlu0 %4395, %v4380
    %v4397 = vpop.permute.xlu0 %4396
    %4400 = vset.pattern.permute.xlu0 0
    %4401 = vperm.xlu0 %4400, %v4381
    %v4402 = vpop.permute.xlu0 %4401
    %4405 = vset.pattern.permute.xlu0 0
    %4406 = vperm.xlu0 %4405, %v4382
    %v4407 = vpop.permute.xlu0 %4406
    %4410 = vset.pattern.permute.xlu0 0
    %4411 = vperm.xlu0 %4410, %v4383
    %v4412 = vpop.permute.xlu0 %4411
    %v4414 = vmul.f32 %v34, %v4387
    %v4415 = vmul.f32 %v35, %v4392
    %v4416 = vmul.f32 %v36, %v4397
    %v4417 = vmul.f32 %v37, %v4402
    %v4418 = vmul.f32 %v38, %v4407
    %v4419 = vmul.f32 %v39, %v4412
    %4420 = vxpose.xlu0.b32.start [1/16] %v4414, 128
    %4421 = vxpose.xlu0.b32.cont [2/16] %v4415, 128
    %4422 = vxpose.xlu0.b32.cont [3/16] %v4416, 128
    %4423 = vxpose.xlu0.b32.cont [4/16] %v4417, 128
    %4424 = vxpose.xlu0.b32.cont [5/16] %v4418, 128
    %4425 = vxpose.xlu0.b32.cont [6/16] %v4419, 128
    %4426 = vxpose.xlu0.b32.cont [7/16] 0.0, 128
    %4427 = vxpose.xlu0.b32.cont [8/16] 0.0, 128
    %4428 = vxpose.xlu0.b32.cont [9/16] 0.0, 128
    %4429 = vxpose.xlu0.b32.cont [10/16] 0.0, 128
    %4430 = vxpose.xlu0.b32.cont [11/16] 0.0, 128
    %4431 = vxpose.xlu0.b32.cont [12/16] 0.0, 128
    %4432 = vxpose.xlu0.b32.cont [13/16] 0.0, 128
    %4433 = vxpose.xlu0.b32.cont [14/16] 0.0, 128
    %4434 = vxpose.xlu0.b32.cont [15/16] 0.0, 128
    %4435 = vxpose.xlu0.b32.end [16/16] 0.0, 128
    %v4436 = vpop.trf.xlu0
    %v4437 = vpop.trf.xlu0
    %v4438 = vpop.trf.xlu0
    %v4439 = vpop.trf.xlu0
    %v4440 = vpop.trf.xlu0
    %v4441 = vpop.trf.xlu0
    %v4442 = vpop.trf.xlu0
    %v4443 = vpop.trf.xlu0
    %v4444 = vpop.trf.xlu0
    %v4445 = vpop.trf.xlu0
    %v4446 = vpop.trf.xlu0
    %v4447 = vpop.trf.xlu0
    %v4448 = vpop.trf.xlu0
    %v4449 = vpop.trf.xlu0
    %v4450 = vpop.trf.xlu0
    %v4451 = vpop.trf.xlu0
    %v4453 = vsel %vm1924, %v4436, 0
    %4455 = vmatprep.subr.mxu0 %v1298
    %4456 = vmatpush1.msra.mxu0 %v1297
    %4457 = vmatprep.subr.mxu0 %v1305
    %4458 = vmatpush1.msra.mxu0 %v1304
    %4459 = vmatprep.subr.mxu0 %v1312
    %4460 = vmatpush1.msra.mxu0 %v1311
    %4461 = vmatprep.subr.mxu0 %v1319
    %4462 = vmatpush1.msra.mxu0 %v1318
    %4463 = vmatprep.subr.mxu0 %v1326
    %4464 = vmatpush1.msra.mxu0 %v1325
    %4465 = vmatprep.subr.mxu0 %v1333
    %4466 = vmatpush1.msra.mxu0 %v1332
    %4467 = vmatprep.subr.mxu0 0.0
    %4468 = vmatpush1.msra.mxu0 0.0
    %4469 = vmatprep.subr.mxu0 0.0
    %4470 = vmatpush1.msra.mxu0 0.0
    %4471 = vmatprep.subr.mxu0 0.0
    %4472 = vmatpush1.msra.mxu0 0.0
    %4473 = vmatprep.subr.mxu0 0.0
    %4474 = vmatpush1.msra.mxu0 0.0
    %4475 = vmatprep.subr.mxu0 0.0
    %4476 = vmatpush1.msra.mxu0 0.0
    %4477 = vmatprep.subr.mxu0 0.0
    %4478 = vmatpush1.msra.mxu0 0.0
    %4479 = vmatprep.subr.mxu0 0.0
    %4480 = vmatpush1.msra.mxu0 0.0
    %4481 = vmatprep.subr.mxu0 0.0
    %4482 = vmatpush1.msra.mxu0 0.0
    %4483 = vmatprep.subr.mxu0 0.0
    %4484 = vmatpush1.msra.mxu0 0.0
    %4485 = vmatprep.subr.mxu0 0.0
    %4486 = vmatpush1.msra.mxu0 0.0
    %4487 = vmatprep.subr.mxu0 0.0
    %4488 = vmatpush1.msra.mxu0 0.0
    %4489 = vmatprep.subr.mxu0 0.0
    %4490 = vmatpush1.msra.mxu0 0.0
    %4491 = vmatprep.subr.mxu0 0.0
    %4492 = vmatpush1.msra.mxu0 0.0
    %4493 = vmatprep.subr.mxu0 0.0
    %4494 = vmatpush1.msra.mxu0 0.0
    %4495 = vmatprep.subr.mxu0 0.0
    %4496 = vmatpush1.msra.mxu0 0.0
    %4497 = vmatprep.subr.mxu0 0.0
    %4498 = vmatpush1.msra.mxu0 0.0
    %4499 = vmatprep.subr.mxu0 0.0
    %4500 = vmatpush1.msra.mxu0 0.0
    %4501 = vmatprep.subr.mxu0 0.0
    %4502 = vmatpush1.msra.mxu0 0.0
    %4503 = vmatprep.subr.mxu0 0.0
    %4504 = vmatpush1.msra.mxu0 0.0
    %4505 = vmatprep.subr.mxu0 0.0
    %4506 = vmatpush1.msra.mxu0 0.0
    %4507 = vmatprep.subr.mxu0 0.0
    %4508 = vmatpush1.msra.mxu0 0.0
    %4509 = vmatprep.subr.mxu0 0.0
    %4510 = vmatpush1.msra.mxu0 0.0
    %4511 = vmatprep.subr.mxu0 0.0
    %4512 = vmatpush1.msra.mxu0 0.0
    %4513 = vmatprep.subr.mxu0 0.0
    %4514 = vmatpush1.msra.mxu0 0.0
    %4515 = vmatprep.subr.mxu0 0.0
    %4516 = vmatpush1.msra.mxu0 0.0
    %4517 = vmatprep.subr.mxu0 0.0
    %4518 = vmatpush1.msra.mxu0 0.0
    %4519 = vmatprep.mubr.f32.mxu0 0.0
    %4520 = vmatmul.mubr.f32.gmra.mrb[0].mxu0 %v4453
    %v4521 = vpop.f32.mrb[0].mxu0
    %v4522 = vadd.f32 0.0, %v4521
    %v4523 = vpop.f32.mrb[0].mxu0
    %v4524 = vadd.f32 0.0, %v4523
    %4525 = vdwg.mxu0
    %4526 = vmatprep.subr.mxu0 %v1300
    %4527 = vmatpush1.msra.mxu0 %v1299
    %4528 = vmatprep.subr.mxu0 %v1307
    %4529 = vmatpush1.msra.mxu0 %v1306
    %4530 = vmatprep.subr.mxu0 %v1314
    %4531 = vmatpush1.msra.mxu0 %v1313
    %4532 = vmatprep.subr.mxu0 %v1321
    %4533 = vmatpush1.msra.mxu0 %v1320
    %4534 = vmatprep.subr.mxu0 %v1328
    %4535 = vmatpush1.msra.mxu0 %v1327
    %4536 = vmatprep.subr.mxu0 %v1335
    %4537 = vmatpush1.msra.mxu0 %v1334
    %4538 = vmatprep.subr.mxu0 0.0
    %4539 = vmatpush1.msra.mxu0 0.0
    %4540 = vmatprep.subr.mxu0 0.0
    %4541 = vmatpush1.msra.mxu0 0.0
    %4542 = vmatprep.subr.mxu0 0.0
    %4543 = vmatpush1.msra.mxu0 0.0
    %4544 = vmatprep.subr.mxu0 0.0
    %4545 = vmatpush1.msra.mxu0 0.0
    %4546 = vmatprep.subr.mxu0 0.0
    %4547 = vmatpush1.msra.mxu0 0.0
    %4548 = vmatprep.subr.mxu0 0.0
    %4549 = vmatpush1.msra.mxu0 0.0
    %4550 = vmatprep.subr.mxu0 0.0
    %4551 = vmatpush1.msra.mxu0 0.0
    %4552 = vmatprep.subr.mxu0 0.0
    %4553 = vmatpush1.msra.mxu0 0.0
    %4554 = vmatprep.subr.mxu0 0.0
    %4555 = vmatpush1.msra.mxu0 0.0
    %4556 = vmatprep.subr.mxu0 0.0
    %4557 = vmatpush1.msra.mxu0 0.0
    %4558 = vmatprep.subr.mxu0 0.0
    %4559 = vmatpush1.msra.mxu0 0.0
    %4560 = vmatprep.subr.mxu0 0.0
    %4561 = vmatpush1.msra.mxu0 0.0
    %4562 = vmatprep.subr.mxu0 0.0
    %4563 = vmatpush1.msra.mxu0 0.0
    %4564 = vmatprep.subr.mxu0 0.0
    %4565 = vmatpush1.msra.mxu0 0.0
    %4566 = vmatprep.subr.mxu0 0.0
    %4567 = vmatpush1.msra.mxu0 0.0
    %4568 = vmatprep.subr.mxu0 0.0
    %4569 = vmatpush1.msra.mxu0 0.0
    %4570 = vmatprep.subr.mxu0 0.0
    %4571 = vmatpush1.msra.mxu0 0.0
    %4572 = vmatprep.subr.mxu0 0.0
    %4573 = vmatpush1.msra.mxu0 0.0
    %4574 = vmatprep.subr.mxu0 0.0
    %4575 = vmatpush1.msra.mxu0 0.0
    %4576 = vmatprep.subr.mxu0 0.0
    %4577 = vmatpush1.msra.mxu0 0.0
    %4578 = vmatprep.subr.mxu0 0.0
    %4579 = vmatpush1.msra.mxu0 0.0
    %4580 = vmatprep.subr.mxu0 0.0
    %4581 = vmatpush1.msra.mxu0 0.0
    %4582 = vmatprep.subr.mxu0 0.0
    %4583 = vmatpush1.msra.mxu0 0.0
    %4584 = vmatprep.subr.mxu0 0.0
    %4585 = vmatpush1.msra.mxu0 0.0
    %4586 = vmatprep.subr.mxu0 0.0
    %4587 = vmatpush1.msra.mxu0 0.0
    %4588 = vmatprep.subr.mxu0 0.0
    %4589 = vmatpush1.msra.mxu0 0.0
    %4590 = vmatprep.mubr.f32.mxu0 0.0
    %4591 = vmatmul.mubr.f32.gmra.mrb[0].mxu0 %v4453
    %v4592 = vpop.f32.mrb[0].mxu0
    %v4593 = vadd.f32 0.0, %v4592
    %v4594 = vpop.f32.mrb[0].mxu0
    %v4595 = vadd.f32 0.0, %v4594
    %4596 = vdwg.mxu0
    %4597 = vmatprep.subr.mxu0 %v1302
    %4598 = vmatpush1.msra.mxu0 %v1301
    %4599 = vmatprep.subr.mxu0 %v1309
    %4600 = vmatpush1.msra.mxu0 %v1308
    %4601 = vmatprep.subr.mxu0 %v1316
    %4602 = vmatpush1.msra.mxu0 %v1315
    %4603 = vmatprep.subr.mxu0 %v1323
    %4604 = vmatpush1.msra.mxu0 %v1322
    %4605 = vmatprep.subr.mxu0 %v1330
    %4606 = vmatpush1.msra.mxu0 %v1329
    %4607 = vmatprep.subr.mxu0 %v1337
    %4608 = vmatpush1.msra.mxu0 %v1336
    %4609 = vmatprep.subr.mxu0 0.0
    %4610 = vmatpush1.msra.mxu0 0.0
    %4611 = vmatprep.subr.mxu0 0.0
    %4612 = vmatpush1.msra.mxu0 0.0
    %4613 = vmatprep.subr.mxu0 0.0
    %4614 = vmatpush1.msra.mxu0 0.0
    %4615 = vmatprep.subr.mxu0 0.0
    %4616 = vmatpush1.msra.mxu0 0.0
    %4617 = vmatprep.subr.mxu0 0.0
    %4618 = vmatpush1.msra.mxu0 0.0
    %4619 = vmatprep.subr.mxu0 0.0
    %4620 = vmatpush1.msra.mxu0 0.0
    %4621 = vmatprep.subr.mxu0 0.0
    %4622 = vmatpush1.msra.mxu0 0.0
    %4623 = vmatprep.subr.mxu0 0.0
    %4624 = vmatpush1.msra.mxu0 0.0
    %4625 = vmatprep.subr.mxu0 0.0
    %4626 = vmatpush1.msra.mxu0 0.0
    %4627 = vmatprep.subr.mxu0 0.0
    %4628 = vmatpush1.msra.mxu0 0.0
    %4629 = vmatprep.subr.mxu0 0.0
    %4630 = vmatpush1.msra.mxu0 0.0
    %4631 = vmatprep.subr.mxu0 0.0
    %4632 = vmatpush1.msra.mxu0 0.0
    %4633 = vmatprep.subr.mxu0 0.0
    %4634 = vmatpush1.msra.mxu0 0.0
    %4635 = vmatprep.subr.mxu0 0.0
    %4636 = vmatpush1.msra.mxu0 0.0
    %4637 = vmatprep.subr.mxu0 0.0
    %4638 = vmatpush1.msra.mxu0 0.0
    %4639 = vmatprep.subr.mxu0 0.0
    %4640 = vmatpush1.msra.mxu0 0.0
    %4641 = vmatprep.subr.mxu0 0.0
    %4642 = vmatpush1.msra.mxu0 0.0
    %4643 = vmatprep.subr.mxu0 0.0
    %4644 = vmatpush1.msra.mxu0 0.0
    %4645 = vmatprep.subr.mxu0 0.0
    %4646 = vmatpush1.msra.mxu0 0.0
    %4647 = vmatprep.subr.mxu0 0.0
    %4648 = vmatpush1.msra.mxu0 0.0
    %4649 = vmatprep.subr.mxu0 0.0
    %4650 = vmatpush1.msra.mxu0 0.0
    %4651 = vmatprep.subr.mxu0 0.0
    %4652 = vmatpush1.msra.mxu0 0.0
    %4653 = vmatprep.subr.mxu0 0.0
    %4654 = vmatpush1.msra.mxu0 0.0
    %4655 = vmatprep.subr.mxu0 0.0
    %4656 = vmatpush1.msra.mxu0 0.0
    %4657 = vmatprep.subr.mxu0 0.0
    %4658 = vmatpush1.msra.mxu0 0.0
    %4659 = vmatprep.subr.mxu0 0.0
    %4660 = vmatpush1.msra.mxu0 0.0
    %4661 = vmatprep.mubr.f32.mxu0 0.0
    %4662 = vmatmul.mubr.f32.gmra.mrb[0].mxu0 %v4453
    %v4663 = vpop.f32.mrb[0].mxu0
    %v4664 = vadd.f32 0.0, %v4663
    %v4665 = vpop.f32.mrb[0].mxu0
    %v4666 = vadd.f32 0.0, %v4665
    %4667 = vdwg.mxu0
    %4668 = vmatprep.subr.mxu0 0.0
    %4669 = vmatpush1.msra.mxu0 %v1303
    %4670 = vmatprep.subr.mxu0 0.0
    %4671 = vmatpush1.msra.mxu0 %v1310
    %4672 = vmatprep.subr.mxu0 0.0
    %4673 = vmatpush1.msra.mxu0 %v1317
    %4674 = vmatprep.subr.mxu0 0.0
    %4675 = vmatpush1.msra.mxu0 %v1324
    %4676 = vmatprep.subr.mxu0 0.0
    %4677 = vmatpush1.msra.mxu0 %v1331
    %4678 = vmatprep.subr.mxu0 0.0
    %4679 = vmatpush1.msra.mxu0 %v1338
    %4680 = vmatprep.subr.mxu0 0.0
    %4681 = vmatpush1.msra.mxu0 0.0
    %4682 = vmatprep.subr.mxu0 0.0
    %4683 = vmatpush1.msra.mxu0 0.0
    %4684 = vmatprep.subr.mxu0 0.0
    %4685 = vmatpush1.msra.mxu0 0.0
    %4686 = vmatprep.subr.mxu0 0.0
    %4687 = vmatpush1.msra.mxu0 0.0
    %4688 = vmatprep.subr.mxu0 0.0
    %4689 = vmatpush1.msra.mxu0 0.0
    %4690 = vmatprep.subr.mxu0 0.0
    %4691 = vmatpush1.msra.mxu0 0.0
    %4692 = vmatprep.subr.mxu0 0.0
    %4693 = vmatpush1.msra.mxu0 0.0
    %4694 = vmatprep.subr.mxu0 0.0
    %4695 = vmatpush1.msra.mxu0 0.0
    %4696 = vmatprep.subr.mxu0 0.0
    %4697 = vmatpush1.msra.mxu0 0.0
    %4698 = vmatprep.subr.mxu0 0.0
    %4699 = vmatpush1.msra.mxu0 0.0
    %4700 = vmatprep.subr.mxu0 0.0
    %4701 = vmatpush1.msra.mxu0 0.0
    %4702 = vmatprep.subr.mxu0 0.0
    %4703 = vmatpush1.msra.mxu0 0.0
    %4704 = vmatprep.subr.mxu0 0.0
    %4705 = vmatpush1.msra.mxu0 0.0
    %4706 = vmatprep.subr.mxu0 0.0
    %4707 = vmatpush1.msra.mxu0 0.0
    %4708 = vmatprep.subr.mxu0 0.0
    %4709 = vmatpush1.msra.mxu0 0.0
    %4710 = vmatprep.subr.mxu0 0.0
    %4711 = vmatpush1.msra.mxu0 0.0
    %4712 = vmatprep.subr.mxu0 0.0
    %4713 = vmatpush1.msra.mxu0 0.0
    %4714 = vmatprep.subr.mxu0 0.0
    %4715 = vmatpush1.msra.mxu0 0.0
    %4716 = vmatprep.subr.mxu0 0.0
    %4717 = vmatpush1.msra.mxu0 0.0
    %4718 = vmatprep.subr.mxu0 0.0
    %4719 = vmatpush1.msra.mxu0 0.0
    %4720 = vmatprep.subr.mxu0 0.0
    %4721 = vmatpush1.msra.mxu0 0.0
    %4722 = vmatprep.subr.mxu0 0.0
    %4723 = vmatpush1.msra.mxu0 0.0
    %4724 = vmatprep.subr.mxu0 0.0
    %4725 = vmatpush1.msra.mxu0 0.0
    %4726 = vmatprep.subr.mxu0 0.0
    %4727 = vmatpush1.msra.mxu0 0.0
    %4728 = vmatprep.subr.mxu0 0.0
    %4729 = vmatpush1.msra.mxu0 0.0
    %4730 = vmatprep.subr.mxu0 0.0
    %4731 = vmatpush1.msra.mxu0 0.0
    %4732 = vmatprep.mubr.f32.mxu0 0.0
    %4733 = vmatmul.mubr.f32.gmra.mrb[0].mxu0 %v4453
    %v4734 = vpop.f32.mrb[0].mxu0
    %v4735 = vadd.f32 0.0, %v4734
    %v4736 = vpop.f32.mrb[0].mxu0
    %4737 = vdwg.mxu0
    %v4744 = vcombine.low %v4522, %v4524
    %v4745 = vcombine.low %v4593, %v4595
    %v4746 = vcombine.low %v4664, %v4666
    %v4750 = vadd.f32 %v3621, %v4744
    %v4751 = vadd.f32 %v3622, %v4745
    %v4752 = vadd.f32 %v3623, %v4746
    %v4753 = vadd.f32 %v3624, %v4735
    %v4757 = vcombine.high %v4750, %v4750
    %v4758 = vcombine.high %v4751, %v4751
    %v4759 = vcombine.high %v4752, %v4752
    %v4763 = vsel %vm1352, %v4750, -inf
    %v4764 = vrot.slane %v4763, 4
    %v4765 = vmax.f32 %v4763, %v4764
    %v4766 = vrot.slane %v4765, 2
    %v4767 = vmax.f32 %v4765, %v4766
    %v4768 = vrot.slane %v4767, 1
    %v4769 = vmax.f32 %v4767, %v4768
    %v4770 = vsel %vm1352, %v4757, -inf
    %v4771 = vrot.slane %v4770, 4
    %v4772 = vmax.f32 %v4770, %v4771
    %v4773 = vrot.slane %v4772, 2
    %v4774 = vmax.f32 %v4772, %v4773
    %v4775 = vrot.slane %v4774, 1
    %v4776 = vmax.f32 %v4774, %v4775
    %v4777 = vsel %vm1352, %v4751, -inf
    %v4778 = vrot.slane %v4777, 4
    %v4779 = vmax.f32 %v4777, %v4778
    %v4780 = vrot.slane %v4779, 2
    %v4781 = vmax.f32 %v4779, %v4780
    %v4782 = vrot.slane %v4781, 1
    %v4783 = vmax.f32 %v4781, %v4782
    %v4784 = vsel %vm1352, %v4758, -inf
    %v4785 = vrot.slane %v4784, 4
    %v4786 = vmax.f32 %v4784, %v4785
    %v4787 = vrot.slane %v4786, 2
    %v4788 = vmax.f32 %v4786, %v4787
    %v4789 = vrot.slane %v4788, 1
    %v4790 = vmax.f32 %v4788, %v4789
    %v4791 = vsel %vm1352, %v4752, -inf
    %v4792 = vrot.slane %v4791, 4
    %v4793 = vmax.f32 %v4791, %v4792
    %v4794 = vrot.slane %v4793, 2
    %v4795 = vmax.f32 %v4793, %v4794
    %v4796 = vrot.slane %v4795, 1
    %v4797 = vmax.f32 %v4795, %v4796
    %v4798 = vsel %vm1352, %v4759, -inf
    %v4799 = vrot.slane %v4798, 4
    %v4800 = vmax.f32 %v4798, %v4799
    %v4801 = vrot.slane %v4800, 2
    %v4802 = vmax.f32 %v4800, %v4801
    %v4803 = vrot.slane %v4802, 1
    %v4804 = vmax.f32 %v4802, %v4803
    %v4805 = vsel %vm1352, %v4753, -inf
    %v4806 = vrot.slane %v4805, 4
    %v4807 = vmax.f32 %v4805, %v4806
    %v4808 = vrot.slane %v4807, 2
    %v4809 = vmax.f32 %v4807, %v4808
    %v4810 = vrot.slane %v4809, 1
    %v4811 = vmax.f32 %v4809, %v4810
    %v4818 = vcombine.low %v4769, %v4776
    %v4819 = vcombine.low %v4783, %v4790
    %v4820 = vcombine.low %v4797, %v4804
    %v4824 = vsub.f32 %v4750, %v4818
    %v4825 = vsub.f32 %v4751, %v4819
    %v4826 = vsub.f32 %v4752, %v4820
    %v4827 = vsub.f32 %v4753, %v4811
    %v4828 = vmul.f32 %v4824, 1.442695
    %v4829 = vpow.pop %v4828
    %v4830 = vmul.f32 %v4825, 1.442695
    %v4831 = vpow.pop %v4830
    %v4832 = vmul.f32 %v4826, 1.442695
    %v4833 = vpow.pop %v4832
    %v4834 = vmul.f32 %v4827, 1.442695
    %v4835 = vpow.pop %v4834
    %v4839 = vcombine.high %v4829, %v4829
    %v4840 = vcombine.high %v4831, %v4831
    %v4841 = vcombine.high %v4833, %v4833
    %v4845 = vsel %vm1352, %v4829, 0.0
    %v4846 = vrot.slane %v4845, 4
    %v4847 = vadd.f32 %v4845, %v4846
    %v4848 = vrot.slane %v4847, 2
    %v4849 = vadd.f32 %v4847, %v4848
    %v4850 = vrot.slane %v4849, 1
    %v4851 = vadd.f32 %v4849, %v4850
    %v4852 = vsel %vm1352, %v4839, 0.0
    %v4853 = vrot.slane %v4852, 4
    %v4854 = vadd.f32 %v4852, %v4853
    %v4855 = vrot.slane %v4854, 2
    %v4856 = vadd.f32 %v4854, %v4855
    %v4857 = vrot.slane %v4856, 1
    %v4858 = vadd.f32 %v4856, %v4857
    %v4859 = vsel %vm1352, %v4831, 0.0
    %v4860 = vrot.slane %v4859, 4
    %v4861 = vadd.f32 %v4859, %v4860
    %v4862 = vrot.slane %v4861, 2
    %v4863 = vadd.f32 %v4861, %v4862
    %v4864 = vrot.slane %v4863, 1
    %v4865 = vadd.f32 %v4863, %v4864
    %v4866 = vsel %vm1352, %v4840, 0.0
    %v4867 = vrot.slane %v4866, 4
    %v4868 = vadd.f32 %v4866, %v4867
    %v4869 = vrot.slane %v4868, 2
    %v4870 = vadd.f32 %v4868, %v4869
    %v4871 = vrot.slane %v4870, 1
    %v4872 = vadd.f32 %v4870, %v4871
    %v4873 = vsel %vm1352, %v4833, 0.0
    %v4874 = vrot.slane %v4873, 4
    %v4875 = vadd.f32 %v4873, %v4874
    %v4876 = vrot.slane %v4875, 2
    %v4877 = vadd.f32 %v4875, %v4876
    %v4878 = vrot.slane %v4877, 1
    %v4879 = vadd.f32 %v4877, %v4878
    %v4880 = vsel %vm1352, %v4841, 0.0
    %v4881 = vrot.slane %v4880, 4
    %v4882 = vadd.f32 %v4880, %v4881
    %v4883 = vrot.slane %v4882, 2
    %v4884 = vadd.f32 %v4882, %v4883
    %v4885 = vrot.slane %v4884, 1
    %v4886 = vadd.f32 %v4884, %v4885
    %v4887 = vsel %vm1352, %v4835, 0.0
    %v4888 = vrot.slane %v4887, 4
    %v4889 = vadd.f32 %v4887, %v4888
    %v4890 = vrot.slane %v4889, 2
    %v4891 = vadd.f32 %v4889, %v4890
    %v4892 = vrot.slane %v4891, 1
    %v4893 = vadd.f32 %v4891, %v4892
    %v4900 = vcombine.low %v4851, %v4858
    %v4901 = vcombine.low %v4865, %v4872
    %v4902 = vcombine.low %v4879, %v4886
    %v4906 = vrcp.pop %v4900
    %v4907 = vmul.f32 %v4829, %v4906
    %v4908 = vrcp.pop %v4901
    %v4909 = vmul.f32 %v4831, %v4908
    %v4910 = vrcp.pop %v4902
    %v4911 = vmul.f32 %v4833, %v4910
    %v4912 = vrcp.pop %v4893
    %v4913 = vmul.f32 %v4835, %v4912
    %v4917 = vcombine.high %v4907, %v4907
    %v4918 = vcombine.high %v4909, %v4909
    %v4919 = vcombine.high %v4911, %v4911
    %4923 = vmatprep.subr.mxu0 %v4917
    %4924 = vmatpush1.xpose.msra.mxu0 %v4907
    %4925 = vmatprep.subr.mxu0 0.0
    %4926 = vmatpush1.xpose.msra.mxu0 0.0
    %4927 = vmatprep.subr.mxu0 0.0
    %4928 = vmatpush1.xpose.msra.mxu0 0.0
    %4929 = vmatprep.subr.mxu0 0.0
    %4930 = vmatpush1.xpose.msra.mxu0 0.0
    %4931 = vmatprep.subr.mxu0 0.0
    %4932 = vmatpush1.xpose.msra.mxu0 0.0
    %4933 = vmatprep.subr.mxu0 0.0
    %4934 = vmatpush1.xpose.msra.mxu0 0.0
    %4935 = vmatprep.subr.mxu0 0.0
    %4936 = vmatpush1.xpose.msra.mxu0 0.0
    %4937 = vmatprep.subr.mxu0 0.0
    %4938 = vmatpush1.xpose.msra.mxu0 0.0
    %4939 = vmatprep.subr.mxu0 0.0
    %4940 = vmatpush1.xpose.msra.mxu0 0.0
    %4941 = vmatprep.subr.mxu0 0.0
    %4942 = vmatpush1.xpose.msra.mxu0 0.0
    %4943 = vmatprep.subr.mxu0 0.0
    %4944 = vmatpush1.xpose.msra.mxu0 0.0
    %4945 = vmatprep.subr.mxu0 0.0
    %4946 = vmatpush1.xpose.msra.mxu0 0.0
    %4947 = vmatprep.subr.mxu0 0.0
    %4948 = vmatpush1.xpose.msra.mxu0 0.0
    %4949 = vmatprep.subr.mxu0 0.0
    %4950 = vmatpush1.xpose.msra.mxu0 0.0
    %4951 = vmatprep.subr.mxu0 0.0
    %4952 = vmatpush1.xpose.msra.mxu0 0.0
    %4953 = vmatprep.subr.mxu0 0.0
    %4954 = vmatpush1.xpose.msra.mxu0 0.0
    %4955 = vmatprep.subr.mxu0 0.0
    %4956 = vmatpush1.xpose.msra.mxu0 0.0
    %4957 = vmatprep.subr.mxu0 0.0
    %4958 = vmatpush1.xpose.msra.mxu0 0.0
    %4959 = vmatprep.subr.mxu0 0.0
    %4960 = vmatpush1.xpose.msra.mxu0 0.0
    %4961 = vmatprep.subr.mxu0 0.0
    %4962 = vmatpush1.xpose.msra.mxu0 0.0
    %4963 = vmatprep.subr.mxu0 0.0
    %4964 = vmatpush1.xpose.msra.mxu0 0.0
    %4965 = vmatprep.subr.mxu0 0.0
    %4966 = vmatpush1.xpose.msra.mxu0 0.0
    %4967 = vmatprep.subr.mxu0 0.0
    %4968 = vmatpush1.xpose.msra.mxu0 0.0
    %4969 = vmatprep.subr.mxu0 0.0
    %4970 = vmatpush1.xpose.msra.mxu0 0.0
    %4971 = vmatprep.subr.mxu0 0.0
    %4972 = vmatpush1.xpose.msra.mxu0 0.0
    %4973 = vmatprep.subr.mxu0 0.0
    %4974 = vmatpush1.xpose.msra.mxu0 0.0
    %4975 = vmatprep.subr.mxu0 0.0
    %4976 = vmatpush1.xpose.msra.mxu0 0.0
    %4977 = vmatprep.subr.mxu0 0.0
    %4978 = vmatpush1.xpose.msra.mxu0 0.0
    %4979 = vmatprep.subr.mxu0 0.0
    %4980 = vmatpush1.xpose.msra.mxu0 0.0
    %4981 = vmatprep.subr.mxu0 0.0
    %4982 = vmatpush1.xpose.msra.mxu0 0.0
    %4983 = vmatprep.subr.mxu0 0.0
    %4984 = vmatpush1.xpose.msra.mxu0 0.0
    %4985 = vmatprep.subr.mxu0 0.0
    %4986 = vmatpush1.xpose.msra.mxu0 0.0
    %4987 = vmatprep.mubr.f32.mxu0 %v1298
    %4988 = vmatmul.mubr.f32.gmra.mrb[0].mxu0 %v1297
    %v4989 = vpop.f32.mrb[0].mxu0
    %v4990 = vadd.f32 0.0, %v4989
    %v4991 = vpop.f32.mrb[0].mxu0
    %4992 = vmatprep.mubr.f32.mxu0 %v1305
    %4993 = vmatmul.mubr.f32.gmra.mrb[0].mxu0 %v1304
    %v4994 = vpop.f32.mrb[0].mxu0
    %v4995 = vadd.f32 0.0, %v4994
    %v4996 = vpop.f32.mrb[0].mxu0
    %4997 = vmatprep.mubr.f32.mxu0 %v1312
    %4998 = vmatmul.mubr.f32.gmra.mrb[0].mxu0 %v1311
    %v4999 = vpop.f32.mrb[0].mxu0
    %v5000 = vadd.f32 0.0, %v4999
    %v5001 = vpop.f32.mrb[0].mxu0
    %5002 = vmatprep.mubr.f32.mxu0 %v1319
    %5003 = vmatmul.mubr.f32.gmra.mrb[0].mxu0 %v1318
    %v5004 = vpop.f32.mrb[0].mxu0
    %v5005 = vadd.f32 0.0, %v5004
    %v5006 = vpop.f32.mrb[0].mxu0
    %5007 = vmatprep.mubr.f32.mxu0 %v1326
    %5008 = vmatmul.mubr.f32.gmra.mrb[0].mxu0 %v1325
    %v5009 = vpop.f32.mrb[0].mxu0
    %v5010 = vadd.f32 0.0, %v5009
    %v5011 = vpop.f32.mrb[0].mxu0
    %5012 = vmatprep.mubr.f32.mxu0 %v1333
    %5013 = vmatmul.mubr.f32.gmra.mrb[0].mxu0 %v1332
    %v5014 = vpop.f32.mrb[0].mxu0
    %v5015 = vadd.f32 0.0, %v5014
    %v5016 = vpop.f32.mrb[0].mxu0
    %5017 = vdwg.mxu0
    %5018 = vmatprep.subr.mxu0 %v4918
    %5019 = vmatpush1.xpose.msra.mxu0 %v4909
    %5020 = vmatprep.subr.mxu0 0.0
    %5021 = vmatpush1.xpose.msra.mxu0 0.0
    %5022 = vmatprep.subr.mxu0 0.0
    %5023 = vmatpush1.xpose.msra.mxu0 0.0
    %5024 = vmatprep.subr.mxu0 0.0
    %5025 = vmatpush1.xpose.msra.mxu0 0.0
    %5026 = vmatprep.subr.mxu0 0.0
    %5027 = vmatpush1.xpose.msra.mxu0 0.0
    %5028 = vmatprep.subr.mxu0 0.0
    %5029 = vmatpush1.xpose.msra.mxu0 0.0
    %5030 = vmatprep.subr.mxu0 0.0
    %5031 = vmatpush1.xpose.msra.mxu0 0.0
    %5032 = vmatprep.subr.mxu0 0.0
    %5033 = vmatpush1.xpose.msra.mxu0 0.0
    %5034 = vmatprep.subr.mxu0 0.0
    %5035 = vmatpush1.xpose.msra.mxu0 0.0
    %5036 = vmatprep.subr.mxu0 0.0
    %5037 = vmatpush1.xpose.msra.mxu0 0.0
    %5038 = vmatprep.subr.mxu0 0.0
    %5039 = vmatpush1.xpose.msra.mxu0 0.0
    %5040 = vmatprep.subr.mxu0 0.0
    %5041 = vmatpush1.xpose.msra.mxu0 0.0
    %5042 = vmatprep.subr.mxu0 0.0
    %5043 = vmatpush1.xpose.msra.mxu0 0.0
    %5044 = vmatprep.subr.mxu0 0.0
    %5045 = vmatpush1.xpose.msra.mxu0 0.0
    %5046 = vmatprep.subr.mxu0 0.0
    %5047 = vmatpush1.xpose.msra.mxu0 0.0
    %5048 = vmatprep.subr.mxu0 0.0
    %5049 = vmatpush1.xpose.msra.mxu0 0.0
    %5050 = vmatprep.subr.mxu0 0.0
    %5051 = vmatpush1.xpose.msra.mxu0 0.0
    %5052 = vmatprep.subr.mxu0 0.0
    %5053 = vmatpush1.xpose.msra.mxu0 0.0
    %5054 = vmatprep.subr.mxu0 0.0
    %5055 = vmatpush1.xpose.msra.mxu0 0.0
    %5056 = vmatprep.subr.mxu0 0.0
    %5057 = vmatpush1.xpose.msra.mxu0 0.0
    %5058 = vmatprep.subr.mxu0 0.0
    %5059 = vmatpush1.xpose.msra.mxu0 0.0
    %5060 = vmatprep.subr.mxu0 0.0
    %5061 = vmatpush1.xpose.msra.mxu0 0.0
    %5062 = vmatprep.subr.mxu0 0.0
    %5063 = vmatpush1.xpose.msra.mxu0 0.0
    %5064 = vmatprep.subr.mxu0 0.0
    %5065 = vmatpush1.xpose.msra.mxu0 0.0
    %5066 = vmatprep.subr.mxu0 0.0
    %5067 = vmatpush1.xpose.msra.mxu0 0.0
    %5068 = vmatprep.subr.mxu0 0.0
    %5069 = vmatpush1.xpose.msra.mxu0 0.0
    %5070 = vmatprep.subr.mxu0 0.0
    %5071 = vmatpush1.xpose.msra.mxu0 0.0
    %5072 = vmatprep.subr.mxu0 0.0
    %5073 = vmatpush1.xpose.msra.mxu0 0.0
    %5074 = vmatprep.subr.mxu0 0.0
    %5075 = vmatpush1.xpose.msra.mxu0 0.0
    %5076 = vmatprep.subr.mxu0 0.0
    %5077 = vmatpush1.xpose.msra.mxu0 0.0
    %5078 = vmatprep.subr.mxu0 0.0
    %5079 = vmatpush1.xpose.msra.mxu0 0.0
    %5080 = vmatprep.subr.mxu0 0.0
    %5081 = vmatpush1.xpose.msra.mxu0 0.0
    %5082 = vmatprep.mubr.f32.mxu0 %v1300
    %5083 = vmatmul.mubr.f32.gmra.mrb[0].mxu0 %v1299
    %v5084 = vpop.f32.mrb[0].mxu0
    %v5085 = vadd.f32 %v4990, %v5084
    %v5086 = vpop.f32.mrb[0].mxu0
    %5087 = vmatprep.mubr.f32.mxu0 %v1307
    %5088 = vmatmul.mubr.f32.gmra.mrb[0].mxu0 %v1306
    %v5089 = vpop.f32.mrb[0].mxu0
    %v5090 = vadd.f32 %v4995, %v5089
    %v5091 = vpop.f32.mrb[0].mxu0
    %5092 = vmatprep.mubr.f32.mxu0 %v1314
    %5093 = vmatmul.mubr.f32.gmra.mrb[0].mxu0 %v1313
    %v5094 = vpop.f32.mrb[0].mxu0
    %v5095 = vadd.f32 %v5000, %v5094
    %v5096 = vpop.f32.mrb[0].mxu0
    %5097 = vmatprep.mubr.f32.mxu0 %v1321
    %5098 = vmatmul.mubr.f32.gmra.mrb[0].mxu0 %v1320
    %v5099 = vpop.f32.mrb[0].mxu0
    %v5100 = vadd.f32 %v5005, %v5099
    %v5101 = vpop.f32.mrb[0].mxu0
    %5102 = vmatprep.mubr.f32.mxu0 %v1328
    %5103 = vmatmul.mubr.f32.gmra.mrb[0].mxu0 %v1327
    %v5104 = vpop.f32.mrb[0].mxu0
    %v5105 = vadd.f32 %v5010, %v5104
    %v5106 = vpop.f32.mrb[0].mxu0
    %5107 = vmatprep.mubr.f32.mxu0 %v1335
    %5108 = vmatmul.mubr.f32.gmra.mrb[0].mxu0 %v1334
    %v5109 = vpop.f32.mrb[0].mxu0
    %v5110 = vadd.f32 %v5015, %v5109
    %v5111 = vpop.f32.mrb[0].mxu0
    %5112 = vdwg.mxu0
    %5113 = vmatprep.subr.mxu0 %v4919
    %5114 = vmatpush1.xpose.msra.mxu0 %v4911
    %5115 = vmatprep.subr.mxu0 0.0
    %5116 = vmatpush1.xpose.msra.mxu0 0.0
    %5117 = vmatprep.subr.mxu0 0.0
    %5118 = vmatpush1.xpose.msra.mxu0 0.0
    %5119 = vmatprep.subr.mxu0 0.0
    %5120 = vmatpush1.xpose.msra.mxu0 0.0
    %5121 = vmatprep.subr.mxu0 0.0
    %5122 = vmatpush1.xpose.msra.mxu0 0.0
    %5123 = vmatprep.subr.mxu0 0.0
    %5124 = vmatpush1.xpose.msra.mxu0 0.0
    %5125 = vmatprep.subr.mxu0 0.0
    %5126 = vmatpush1.xpose.msra.mxu0 0.0
    %5127 = vmatprep.subr.mxu0 0.0
    %5128 = vmatpush1.xpose.msra.mxu0 0.0
    %5129 = vmatprep.subr.mxu0 0.0
    %5130 = vmatpush1.xpose.msra.mxu0 0.0
    %5131 = vmatprep.subr.mxu0 0.0
    %5132 = vmatpush1.xpose.msra.mxu0 0.0
    %5133 = vmatprep.subr.mxu0 0.0
    %5134 = vmatpush1.xpose.msra.mxu0 0.0
    %5135 = vmatprep.subr.mxu0 0.0
    %5136 = vmatpush1.xpose.msra.mxu0 0.0
    %5137 = vmatprep.subr.mxu0 0.0
    %5138 = vmatpush1.xpose.msra.mxu0 0.0
    %5139 = vmatprep.subr.mxu0 0.0
    %5140 = vmatpush1.xpose.msra.mxu0 0.0
    %5141 = vmatprep.subr.mxu0 0.0
    %5142 = vmatpush1.xpose.msra.mxu0 0.0
    %5143 = vmatprep.subr.mxu0 0.0
    %5144 = vmatpush1.xpose.msra.mxu0 0.0
    %5145 = vmatprep.subr.mxu0 0.0
    %5146 = vmatpush1.xpose.msra.mxu0 0.0
    %5147 = vmatprep.subr.mxu0 0.0
    %5148 = vmatpush1.xpose.msra.mxu0 0.0
    %5149 = vmatprep.subr.mxu0 0.0
    %5150 = vmatpush1.xpose.msra.mxu0 0.0
    %5151 = vmatprep.subr.mxu0 0.0
    %5152 = vmatpush1.xpose.msra.mxu0 0.0
    %5153 = vmatprep.subr.mxu0 0.0
    %5154 = vmatpush1.xpose.msra.mxu0 0.0
    %5155 = vmatprep.subr.mxu0 0.0
    %5156 = vmatpush1.xpose.msra.mxu0 0.0
    %5157 = vmatprep.subr.mxu0 0.0
    %5158 = vmatpush1.xpose.msra.mxu0 0.0
    %5159 = vmatprep.subr.mxu0 0.0
    %5160 = vmatpush1.xpose.msra.mxu0 0.0
    %5161 = vmatprep.subr.mxu0 0.0
    %5162 = vmatpush1.xpose.msra.mxu0 0.0
    %5163 = vmatprep.subr.mxu0 0.0
    %5164 = vmatpush1.xpose.msra.mxu0 0.0
    %5165 = vmatprep.subr.mxu0 0.0
    %5166 = vmatpush1.xpose.msra.mxu0 0.0
    %5167 = vmatprep.subr.mxu0 0.0
    %5168 = vmatpush1.xpose.msra.mxu0 0.0
    %5169 = vmatprep.subr.mxu0 0.0
    %5170 = vmatpush1.xpose.msra.mxu0 0.0
    %5171 = vmatprep.subr.mxu0 0.0
    %5172 = vmatpush1.xpose.msra.mxu0 0.0
    %5173 = vmatprep.subr.mxu0 0.0
    %5174 = vmatpush1.xpose.msra.mxu0 0.0
    %5175 = vmatprep.subr.mxu0 0.0
    %5176 = vmatpush1.xpose.msra.mxu0 0.0
    %5177 = vmatprep.mubr.f32.mxu0 %v1302
    %5178 = vmatmul.mubr.f32.gmra.mrb[0].mxu0 %v1301
    %v5179 = vpop.f32.mrb[0].mxu0
    %v5180 = vadd.f32 %v5085, %v5179
    %v5181 = vpop.f32.mrb[0].mxu0
    %5182 = vmatprep.mubr.f32.mxu0 %v1309
    %5183 = vmatmul.mubr.f32.gmra.mrb[0].mxu0 %v1308
    %v5184 = vpop.f32.mrb[0].mxu0
    %v5185 = vadd.f32 %v5090, %v5184
    %v5186 = vpop.f32.mrb[0].mxu0
    %5187 = vmatprep.mubr.f32.mxu0 %v1316
    %5188 = vmatmul.mubr.f32.gmra.mrb[0].mxu0 %v1315
    %v5189 = vpop.f32.mrb[0].mxu0
    %v5190 = vadd.f32 %v5095, %v5189
    %v5191 = vpop.f32.mrb[0].mxu0
    %5192 = vmatprep.mubr.f32.mxu0 %v1323
    %5193 = vmatmul.mubr.f32.gmra.mrb[0].mxu0 %v1322
    %v5194 = vpop.f32.mrb[0].mxu0
    %v5195 = vadd.f32 %v5100, %v5194
    %v5196 = vpop.f32.mrb[0].mxu0
    %5197 = vmatprep.mubr.f32.mxu0 %v1330
    %5198 = vmatmul.mubr.f32.gmra.mrb[0].mxu0 %v1329
    %v5199 = vpop.f32.mrb[0].mxu0
    %v5200 = vadd.f32 %v5105, %v5199
    %v5201 = vpop.f32.mrb[0].mxu0
    %5202 = vmatprep.mubr.f32.mxu0 %v1337
    %5203 = vmatmul.mubr.f32.gmra.mrb[0].mxu0 %v1336
    %v5204 = vpop.f32.mrb[0].mxu0
    %v5205 = vadd.f32 %v5110, %v5204
    %v5206 = vpop.f32.mrb[0].mxu0
    %5207 = vdwg.mxu0
    %5208 = vmatprep.subr.mxu0 0.0
    %5209 = vmatpush1.xpose.msra.mxu0 %v4913
    %5210 = vmatprep.subr.mxu0 0.0
    %5211 = vmatpush1.xpose.msra.mxu0 0.0
    %5212 = vmatprep.subr.mxu0 0.0
    %5213 = vmatpush1.xpose.msra.mxu0 0.0
    %5214 = vmatprep.subr.mxu0 0.0
    %5215 = vmatpush1.xpose.msra.mxu0 0.0
    %5216 = vmatprep.subr.mxu0 0.0
    %5217 = vmatpush1.xpose.msra.mxu0 0.0
    %5218 = vmatprep.subr.mxu0 0.0
    %5219 = vmatpush1.xpose.msra.mxu0 0.0
    %5220 = vmatprep.subr.mxu0 0.0
    %5221 = vmatpush1.xpose.msra.mxu0 0.0
    %5222 = vmatprep.subr.mxu0 0.0
    %5223 = vmatpush1.xpose.msra.mxu0 0.0
    %5224 = vmatprep.subr.mxu0 0.0
    %5225 = vmatpush1.xpose.msra.mxu0 0.0
    %5226 = vmatprep.subr.mxu0 0.0
    %5227 = vmatpush1.xpose.msra.mxu0 0.0
    %5228 = vmatprep.subr.mxu0 0.0
    %5229 = vmatpush1.xpose.msra.mxu0 0.0
    %5230 = vmatprep.subr.mxu0 0.0
    %5231 = vmatpush1.xpose.msra.mxu0 0.0
    %5232 = vmatprep.subr.mxu0 0.0
    %5233 = vmatpush1.xpose.msra.mxu0 0.0
    %5234 = vmatprep.subr.mxu0 0.0
    %5235 = vmatpush1.xpose.msra.mxu0 0.0
    %5236 = vmatprep.subr.mxu0 0.0
    %5237 = vmatpush1.xpose.msra.mxu0 0.0
    %5238 = vmatprep.subr.mxu0 0.0
    %5239 = vmatpush1.xpose.msra.mxu0 0.0
    %5240 = vmatprep.subr.mxu0 0.0
    %5241 = vmatpush1.xpose.msra.mxu0 0.0
    %5242 = vmatprep.subr.mxu0 0.0
    %5243 = vmatpush1.xpose.msra.mxu0 0.0
    %5244 = vmatprep.subr.mxu0 0.0
    %5245 = vmatpush1.xpose.msra.mxu0 0.0
    %5246 = vmatprep.subr.mxu0 0.0
    %5247 = vmatpush1.xpose.msra.mxu0 0.0
    %5248 = vmatprep.subr.mxu0 0.0
    %5249 = vmatpush1.xpose.msra.mxu0 0.0
    %5250 = vmatprep.subr.mxu0 0.0
    %5251 = vmatpush1.xpose.msra.mxu0 0.0
    %5252 = vmatprep.subr.mxu0 0.0
    %5253 = vmatpush1.xpose.msra.mxu0 0.0
    %5254 = vmatprep.subr.mxu0 0.0
    %5255 = vmatpush1.xpose.msra.mxu0 0.0
    %5256 = vmatprep.subr.mxu0 0.0
    %5257 = vmatpush1.xpose.msra.mxu0 0.0
    %5258 = vmatprep.subr.mxu0 0.0
    %5259 = vmatpush1.xpose.msra.mxu0 0.0
    %5260 = vmatprep.subr.mxu0 0.0
    %5261 = vmatpush1.xpose.msra.mxu0 0.0
    %5262 = vmatprep.subr.mxu0 0.0
    %5263 = vmatpush1.xpose.msra.mxu0 0.0
    %5264 = vmatprep.subr.mxu0 0.0
    %5265 = vmatpush1.xpose.msra.mxu0 0.0
    %5266 = vmatprep.subr.mxu0 0.0
    %5267 = vmatpush1.xpose.msra.mxu0 0.0
    %5268 = vmatprep.subr.mxu0 0.0
    %5269 = vmatpush1.xpose.msra.mxu0 0.0
    %5270 = vmatprep.subr.mxu0 0.0
    %5271 = vmatpush1.xpose.msra.mxu0 0.0
    %5272 = vmatprep.mubr.f32.mxu0 0.0
    %5273 = vmatmul.mubr.f32.gmra.mrb[0].mxu0 %v1303
    %v5274 = vpop.f32.mrb[0].mxu0
    %v5275 = vadd.f32 %v5180, %v5274
    %v5276 = vpop.f32.mrb[0].mxu0
    %5277 = vmatprep.mubr.f32.mxu0 0.0
    %5278 = vmatmul.mubr.f32.gmra.mrb[0].mxu0 %v1310
    %v5279 = vpop.f32.mrb[0].mxu0
    %v5280 = vadd.f32 %v5185, %v5279
    %v5281 = vpop.f32.mrb[0].mxu0
    %5282 = vmatprep.mubr.f32.mxu0 0.0
    %5283 = vmatmul.mubr.f32.gmra.mrb[0].mxu0 %v1317
    %v5284 = vpop.f32.mrb[0].mxu0
    %v5285 = vadd.f32 %v5190, %v5284
    %v5286 = vpop.f32.mrb[0].mxu0
    %5287 = vmatprep.mubr.f32.mxu0 0.0
    %5288 = vmatmul.mubr.f32.gmra.mrb[0].mxu0 %v1324
    %v5289 = vpop.f32.mrb[0].mxu0
    %v5290 = vadd.f32 %v5195, %v5289
    %v5291 = vpop.f32.mrb[0].mxu0
    %5292 = vmatprep.mubr.f32.mxu0 0.0
    %5293 = vmatmul.mubr.f32.gmra.mrb[0].mxu0 %v1331
    %v5294 = vpop.f32.mrb[0].mxu0
    %v5295 = vadd.f32 %v5200, %v5294
    %v5296 = vpop.f32.mrb[0].mxu0
    %5297 = vmatprep.mubr.f32.mxu0 0.0
    %5298 = vmatmul.mubr.f32.gmra.mrb[0].mxu0 %v1338
    %v5299 = vpop.f32.mrb[0].mxu0
    %v5300 = vadd.f32 %v5205, %v5299
    %v5301 = vpop.f32.mrb[0].mxu0
    %5302 = vdwg.mxu0
    %v5303 = vmul.f32 %v5275, %v34
    %v5304 = vmul.f32 %v5280, %v35
    %v5305 = vmul.f32 %v5285, %v36
    %v5306 = vmul.f32 %v5290, %v37
    %v5307 = vmul.f32 %v5295, %v38
    %v5308 = vmul.f32 %v5300, %v39
    %v5309 = vsel %vm1899, %v5303, 0.0
    %5310 = vadd.xlane.f32.xlu0 %v5309
    %v5311 = vpop.xlane.xlu0 %5310
    %v5312 = vsel %vm1899, %v5304, 0.0
    %5313 = vadd.xlane.f32.xlu0 %v5312
    %v5314 = vpop.xlane.xlu0 %5313
    %v5315 = vsel %vm1899, %v5305, 0.0
    %5316 = vadd.xlane.f32.xlu0 %v5315
    %v5317 = vpop.xlane.xlu0 %5316
    %v5318 = vsel %vm1899, %v5306, 0.0
    %5319 = vadd.xlane.f32.xlu0 %v5318
    %v5320 = vpop.xlane.xlu0 %5319
    %v5321 = vsel %vm1899, %v5307, 0.0
    %5322 = vadd.xlane.f32.xlu0 %v5321
    %v5323 = vpop.xlane.xlu0 %5322
    %v5324 = vsel %vm1899, %v5308, 0.0
    %5325 = vadd.xlane.f32.xlu0 %v5324
    %v5326 = vpop.xlane.xlu0 %5325
    %v5327 = vmul.f32 %v5311, %v5311
    %v5328 = vmul.f32 %v5314, %v5314
    %v5329 = vmul.f32 %v5317, %v5317
    %v5330 = vmul.f32 %v5320, %v5320
    %v5331 = vmul.f32 %v5323, %v5323
    %v5332 = vmul.f32 %v5326, %v5326
    %5333 = vmatprep.subr.mxu0 0.0
    %5334 = vmatpush1.msra.mxu0 %v5327
    %5335 = vmatprep.subr.mxu0 0.0
    %5336 = vmatpush1.msra.mxu0 %v5328
    %5337 = vmatprep.subr.mxu0 0.0
    %5338 = vmatpush1.msra.mxu0 %v5329
    %5339 = vmatprep.subr.mxu0 0.0
    %5340 = vmatpush1.msra.mxu0 %v5330
    %5341 = vmatprep.subr.mxu0 0.0
    %5342 = vmatpush1.msra.mxu0 %v5331
    %5343 = vmatprep.subr.mxu0 0.0
    %5344 = vmatpush1.msra.mxu0 %v5332
    %5345 = vmatprep.subr.mxu0 0.0
    %5346 = vmatpush1.msra.mxu0 0.0
    %5347 = vmatprep.subr.mxu0 0.0
    %5348 = vmatpush1.msra.mxu0 0.0
    %5349 = vmatprep.subr.mxu0 0.0
    %5350 = vmatpush1.msra.mxu0 0.0
    %5351 = vmatprep.subr.mxu0 0.0
    %5352 = vmatpush1.msra.mxu0 0.0
    %5353 = vmatprep.subr.mxu0 0.0
    %5354 = vmatpush1.msra.mxu0 0.0
    %5355 = vmatprep.subr.mxu0 0.0
    %5356 = vmatpush1.msra.mxu0 0.0
    %5357 = vmatprep.subr.mxu0 0.0
    %5358 = vmatpush1.msra.mxu0 0.0
    %5359 = vmatprep.subr.mxu0 0.0
    %5360 = vmatpush1.msra.mxu0 0.0
    %5361 = vmatprep.subr.mxu0 0.0
    %5362 = vmatpush1.msra.mxu0 0.0
    %5363 = vmatprep.subr.mxu0 0.0
    %5364 = vmatpush1.msra.mxu0 0.0
    %5365 = vmatprep.subr.mxu0 0.0
    %5366 = vmatpush1.msra.mxu0 0.0
    %5367 = vmatprep.subr.mxu0 0.0
    %5368 = vmatpush1.msra.mxu0 0.0
    %5369 = vmatprep.subr.mxu0 0.0
    %5370 = vmatpush1.msra.mxu0 0.0
    %5371 = vmatprep.subr.mxu0 0.0
    %5372 = vmatpush1.msra.mxu0 0.0
    %5373 = vmatprep.subr.mxu0 0.0
    %5374 = vmatpush1.msra.mxu0 0.0
    %5375 = vmatprep.subr.mxu0 0.0
    %5376 = vmatpush1.msra.mxu0 0.0
    %5377 = vmatprep.subr.mxu0 0.0
    %5378 = vmatpush1.msra.mxu0 0.0
    %5379 = vmatprep.subr.mxu0 0.0
    %5380 = vmatpush1.msra.mxu0 0.0
    %5381 = vmatprep.subr.mxu0 0.0
    %5382 = vmatpush1.msra.mxu0 0.0
    %5383 = vmatprep.subr.mxu0 0.0
    %5384 = vmatpush1.msra.mxu0 0.0
    %5385 = vmatprep.subr.mxu0 0.0
    %5386 = vmatpush1.msra.mxu0 0.0
    %5387 = vmatprep.subr.mxu0 0.0
    %5388 = vmatpush1.msra.mxu0 0.0
    %5389 = vmatprep.subr.mxu0 0.0
    %5390 = vmatpush1.msra.mxu0 0.0
    %5391 = vmatprep.subr.mxu0 0.0
    %5392 = vmatpush1.msra.mxu0 0.0
    %5393 = vmatprep.subr.mxu0 0.0
    %5394 = vmatpush1.msra.mxu0 0.0
    %5395 = vmatprep.subr.mxu0 0.0
    %5396 = vmatpush1.msra.mxu0 0.0
    %5397 = vmatprep.mubr.f32.mxu0 0.0
    %5398 = vmatmul.mubr.f32.gmra.mrb[0].mxu0 %v1926
    %v5399 = vpop.f32.mrb[0].mxu0
    %v5400 = vadd.f32 0.0, %v5399
    %v5401 = vpop.f32.mrb[0].mxu0
    %5402 = vdwg.mxu0
    %v5403 = vadd.f32 %v5400, 1.0
    %v5404 = vrcp.pop %v5403
    %v5405 = vmul.f32 %v5400, %v5404
    %v5406 = vadd.f32 %v5400, 1e-08
    %v5407 = vrsqrt.pop %v5406
    %v5408 = vmul.f32 %v5405, %v5407
    %v5410 = vsel %vm1352, %v5408, 0
    %5412 = vmatprep.subr.mxu0 0.0
    %5413 = vmatpush1.msra.mxu0 %v5410
    %5414 = vmatprep.subr.mxu0 0.0
    %5415 = vmatpush1.msra.mxu0 0.0
    %5416 = vmatprep.subr.mxu0 0.0
    %5417 = vmatpush1.msra.mxu0 0.0
    %5418 = vmatprep.subr.mxu0 0.0
    %5419 = vmatpush1.msra.mxu0 0.0
    %5420 = vmatprep.subr.mxu0 0.0
    %5421 = vmatpush1.msra.mxu0 0.0
    %5422 = vmatprep.subr.mxu0 0.0
    %5423 = vmatpush1.msra.mxu0 0.0
    %5424 = vmatprep.subr.mxu0 0.0
    %5425 = vmatpush1.msra.mxu0 0.0
    %5426 = vmatprep.subr.mxu0 0.0
    %5427 = vmatpush1.msra.mxu0 0.0
    %5428 = vmatprep.subr.mxu0 0.0
    %5429 = vmatpush1.msra.mxu0 0.0
    %5430 = vmatprep.subr.mxu0 0.0
    %5431 = vmatpush1.msra.mxu0 0.0
    %5432 = vmatprep.subr.mxu0 0.0
    %5433 = vmatpush1.msra.mxu0 0.0
    %5434 = vmatprep.subr.mxu0 0.0
    %5435 = vmatpush1.msra.mxu0 0.0
    %5436 = vmatprep.subr.mxu0 0.0
    %5437 = vmatpush1.msra.mxu0 0.0
    %5438 = vmatprep.subr.mxu0 0.0
    %5439 = vmatpush1.msra.mxu0 0.0
    %5440 = vmatprep.subr.mxu0 0.0
    %5441 = vmatpush1.msra.mxu0 0.0
    %5442 = vmatprep.subr.mxu0 0.0
    %5443 = vmatpush1.msra.mxu0 0.0
    %5444 = vmatprep.subr.mxu0 0.0
    %5445 = vmatpush1.msra.mxu0 0.0
    %5446 = vmatprep.subr.mxu0 0.0
    %5447 = vmatpush1.msra.mxu0 0.0
    %5448 = vmatprep.subr.mxu0 0.0
    %5449 = vmatpush1.msra.mxu0 0.0
    %5450 = vmatprep.subr.mxu0 0.0
    %5451 = vmatpush1.msra.mxu0 0.0
    %5452 = vmatprep.subr.mxu0 0.0
    %5453 = vmatpush1.msra.mxu0 0.0
    %5454 = vmatprep.subr.mxu0 0.0
    %5455 = vmatpush1.msra.mxu0 0.0
    %5456 = vmatprep.subr.mxu0 0.0
    %5457 = vmatpush1.msra.mxu0 0.0
    %5458 = vmatprep.subr.mxu0 0.0
    %5459 = vmatpush1.msra.mxu0 0.0
    %5460 = vmatprep.subr.mxu0 0.0
    %5461 = vmatpush1.msra.mxu0 0.0
    %5462 = vmatprep.subr.mxu0 0.0
    %5463 = vmatpush1.msra.mxu0 0.0
    %5464 = vmatprep.subr.mxu0 0.0
    %5465 = vmatpush1.msra.mxu0 0.0
    %5466 = vmatprep.subr.mxu0 0.0
    %5467 = vmatpush1.msra.mxu0 0.0
    %5468 = vmatprep.subr.mxu0 0.0
    %5469 = vmatpush1.msra.mxu0 0.0
    %5470 = vmatprep.subr.mxu0 0.0
    %5471 = vmatpush1.msra.mxu0 0.0
    %5472 = vmatprep.subr.mxu0 0.0
    %5473 = vmatpush1.msra.mxu0 0.0
    %5474 = vmatprep.subr.mxu0 0.0
    %5475 = vmatpush1.msra.mxu0 0.0
    %5476 = vmatprep.mubr.f32.mxu0 0.0
    %5477 = vmatmul.mubr.f32.gmra.mrb[0].mxu0 %v2005
    %v5478 = vpop.f32.mrb[0].mxu0
    %v5479 = vadd.f32 0.0, %v5478
    %v5480 = vpop.f32.mrb[0].mxu0
    %5481 = vmatprep.mubr.f32.mxu0 0.0
    %5482 = vmatmul.mubr.f32.gmra.mrb[0].mxu0 %v2008
    %v5483 = vpop.f32.mrb[0].mxu0
    %v5484 = vadd.f32 0.0, %v5483
    %v5485 = vpop.f32.mrb[0].mxu0
    %5486 = vmatprep.mubr.f32.mxu0 0.0
    %5487 = vmatmul.mubr.f32.gmra.mrb[0].mxu0 %v2011
    %v5488 = vpop.f32.mrb[0].mxu0
    %v5489 = vadd.f32 0.0, %v5488
    %v5490 = vpop.f32.mrb[0].mxu0
    %5491 = vmatprep.mubr.f32.mxu0 0.0
    %5492 = vmatmul.mubr.f32.gmra.mrb[0].mxu0 %v2014
    %v5493 = vpop.f32.mrb[0].mxu0
    %v5494 = vadd.f32 0.0, %v5493
    %v5495 = vpop.f32.mrb[0].mxu0
    %5496 = vmatprep.mubr.f32.mxu0 0.0
    %5497 = vmatmul.mubr.f32.gmra.mrb[0].mxu0 %v2017
    %v5498 = vpop.f32.mrb[0].mxu0
    %v5499 = vadd.f32 0.0, %v5498
    %v5500 = vpop.f32.mrb[0].mxu0
    %5501 = vmatprep.mubr.f32.mxu0 0.0
    %5502 = vmatmul.mubr.f32.gmra.mrb[0].mxu0 %v2020
    %v5503 = vpop.f32.mrb[0].mxu0
    %v5504 = vadd.f32 0.0, %v5503
    %v5505 = vpop.f32.mrb[0].mxu0
    %5506 = vdwg.mxu0
    %v5507 = vmul.f32 %v5311, %v5479
    %v5508 = vmul.f32 %v5314, %v5484
    %v5509 = vmul.f32 %v5317, %v5489
    %v5510 = vmul.f32 %v5320, %v5494
    %v5511 = vmul.f32 %v5323, %v5499
    %v5512 = vmul.f32 %v5326, %v5504
    %s5513 = smul.u32 %s29, 48
    %s5514 = scalar_lea.vmem %s8, %s5513
    %vm5515 = vcmask 7168
    %5516 = vst.msk [vmem:[%s5514] sm:$0xff] %vm5515, %v5507
    %5517 = vst.msk [vmem:[%s5514 + $0x8] sm:$0xff] %vm5515, %v5508
    %5518 = vst.msk [vmem:[%s5514 + $0x10] sm:$0xff] %vm5515, %v5509
    %5519 = vst.msk [vmem:[%s5514 + $0x18] sm:$0xff] %vm5515, %v5510
    %5520 = vst.msk [vmem:[%s5514 + $0x20] sm:$0xff] %vm5515, %v5511
    %5521 = vst.msk [vmem:[%s5514 + $0x28] sm:$0xff] %vm5515, %v5512
    %v5522 = vld [vmem:[%s5] sm:$0x7]
    %v5523 = vld [vmem:[%s6] sm:$0x7]
    %v5525 = vsel %vm1924, %v5522, 0
    %5527 = vmatprep.subr.mxu0 0.0
    %5528 = vmatpush1.msra.mxu0 %v5507
    %5529 = vmatprep.subr.mxu0 0.0
    %5530 = vmatpush1.msra.mxu0 %v5508
    %5531 = vmatprep.subr.mxu0 0.0
    %5532 = vmatpush1.msra.mxu0 %v5509
    %5533 = vmatprep.subr.mxu0 0.0
    %5534 = vmatpush1.msra.mxu0 %v5510
    %5535 = vmatprep.subr.mxu0 0.0
    %5536 = vmatpush1.msra.mxu0 %v5511
    %5537 = vmatprep.subr.mxu0 0.0
    %5538 = vmatpush1.msra.mxu0 %v5512
    %5539 = vmatprep.subr.mxu0 0.0
    %5540 = vmatpush1.msra.mxu0 0.0
    %5541 = vmatprep.subr.mxu0 0.0
    %5542 = vmatpush1.msra.mxu0 0.0
    %5543 = vmatprep.subr.mxu0 0.0
    %5544 = vmatpush1.msra.mxu0 0.0
    %5545 = vmatprep.subr.mxu0 0.0
    %5546 = vmatpush1.msra.mxu0 0.0
    %5547 = vmatprep.subr.mxu0 0.0
    %5548 = vmatpush1.msra.mxu0 0.0
    %5549 = vmatprep.subr.mxu0 0.0
    %5550 = vmatpush1.msra.mxu0 0.0
    %5551 = vmatprep.subr.mxu0 0.0
    %5552 = vmatpush1.msra.mxu0 0.0
    %5553 = vmatprep.subr.mxu0 0.0
    %5554 = vmatpush1.msra.mxu0 0.0
    %5555 = vmatprep.subr.mxu0 0.0
    %5556 = vmatpush1.msra.mxu0 0.0
    %5557 = vmatprep.subr.mxu0 0.0
    %5558 = vmatpush1.msra.mxu0 0.0
    %5559 = vmatprep.subr.mxu0 0.0
    %5560 = vmatpush1.msra.mxu0 0.0
    %5561 = vmatprep.subr.mxu0 0.0
    %5562 = vmatpush1.msra.mxu0 0.0
    %5563 = vmatprep.subr.mxu0 0.0
    %5564 = vmatpush1.msra.mxu0 0.0
    %5565 = vmatprep.subr.mxu0 0.0
    %5566 = vmatpush1.msra.mxu0 0.0
    %5567 = vmatprep.subr.mxu0 0.0
    %5568 = vmatpush1.msra.mxu0 0.0
    %5569 = vmatprep.subr.mxu0 0.0
    %5570 = vmatpush1.msra.mxu0 0.0
    %5571 = vmatprep.subr.mxu0 0.0
    %5572 = vmatpush1.msra.mxu0 0.0
    %5573 = vmatprep.subr.mxu0 0.0
    %5574 = vmatpush1.msra.mxu0 0.0
    %5575 = vmatprep.subr.mxu0 0.0
    %5576 = vmatpush1.msra.mxu0 0.0
    %5577 = vmatprep.subr.mxu0 0.0
    %5578 = vmatpush1.msra.mxu0 0.0
    %5579 = vmatprep.subr.mxu0 0.0
    %5580 = vmatpush1.msra.mxu0 0.0
    %5581 = vmatprep.subr.mxu0 0.0
    %5582 = vmatpush1.msra.mxu0 0.0
    %5583 = vmatprep.subr.mxu0 0.0
    %5584 = vmatpush1.msra.mxu0 0.0
    %5585 = vmatprep.subr.mxu0 0.0
    %5586 = vmatpush1.msra.mxu0 0.0
    %5587 = vmatprep.subr.mxu0 0.0
    %5588 = vmatpush1.msra.mxu0 0.0
    %5589 = vmatprep.subr.mxu0 0.0
    %5590 = vmatpush1.msra.mxu0 0.0
    %5591 = vmatprep.mubr.f32.mxu0 0.0
    %5592 = vmatmul.mubr.f32.gmra.mrb[0].mxu0 %v5525
    %v5593 = vpop.f32.mrb[0].mxu0
    %v5594 = vadd.f32 %v5523, %v5593
    %v5595 = vpop.f32.mrb[0].mxu0
    %5596 = vdwg.mxu0
    %vm5597 = vcmask 2048
    %v5598 = vsel %vm5597, %v5594, -inf
    %v5599 = vrot.slane %v5598, 4
    %v5600 = vmax.f32 %v5598, %v5599
    %v5601 = vrot.slane %v5600, 2
    %v5602 = vmax.f32 %v5600, %v5601
    %v5603 = vrot.slane %v5602, 1
    %v5604 = vmax.f32 %v5602, %v5603
    %v5605 = vsub.f32 %v5594, %v5604
    %v5606 = vmul.f32 %v5605, 1.442695
    %v5607 = vpow.pop %v5606
    %v5608 = vsel %vm5597, %v5607, 0.0
    %v5609 = vrot.slane %v5608, 4
    %v5610 = vadd.f32 %v5608, %v5609
    %v5611 = vrot.slane %v5610, 2
    %v5612 = vadd.f32 %v5610, %v5611
    %v5613 = vrot.slane %v5612, 1
    %v5614 = vadd.f32 %v5612, %v5613
    %v5615 = vrcp.pop %v5614
    %v5616 = vmul.f32 %v5607, %v5615
    %s5617 = smul.u32 %s29, 4
    %s5618 = scalar_lea.vmem %s7, %s5617
    %5619 = vst.msk [vmem:[%s5618] sm:$0x7] %vm5597, %v5616
  $region34: #{selfnet_forward.7} parent=0 // loop_footer
    %s33 = sadd.s32 1, %s29
  $region35: #{selfnet_forward.7} parent=0 // loop_footer_branch
    %28 = sbr.rel target = $region31
  $region36: #{selfnet_forward.7} parent=0 // loop_exit
    _
  // Predicated region
  $region37: #{selfnet_forward.7} parent=0 // pred_check
    _
  $region38: #{selfnet_forward.7} parent=0 // pred_check_branch
    %5621 = sbr.rel (0) target = $region40
  $region39: #{selfnet_forward.7} parent=0 // pred_region
    _
  $region40: #{selfnet_forward.7} parent=0 // pred_fallthru
    _
  // Predicated region
  $region41: #{selfnet_forward.7} parent=0 // pred_check
    _
  $region42: #{selfnet_forward.7} parent=0 // pred_check_branch
    %5623 = sbr.rel (0) target = $region44
  $region43: #{selfnet_forward.7} parent=0 // pred_region
    _
  $region44: #{selfnet_forward.7} parent=0 // pred_fallthru
    _
  // Predicated region
  $region45: #{selfnet_forward.7} parent=0 // pred_check
    _
  $region46: #{selfnet_forward.7} parent=0 // pred_check_branch
    %5625 = sbr.rel (0) target = $region48
  $region47: #{selfnet_forward.7} parent=0 // pred_region
    _
  $region48: #{selfnet_forward.7} parent=0 // pred_fallthru
    _
  // Predicated region
  $region49: #{selfnet_forward.7} parent=0 // pred_check
    _
  $region50: #{selfnet_forward.7} parent=0 // pred_check_branch
    %5627 = sbr.rel (0) target = $region52
  $region51: #{selfnet_forward.7} parent=0 // pred_region
    _
  $region52: #{selfnet_forward.7} parent=0 // pred_fallthru
    _

</llo_original>
